<compile_context>
chip_gen: v7x
topology: tpu7x:2x2x1
jax: 0.10.0
libtpu: 0.0.40
codegen_flags: <defaults>
</compile_context>

<pallas_src>
import functools

import jax
import jax.numpy as jnp
from jax import lax
from jax.experimental import pallas as pl
from jax.experimental.pallas import tpu as pltpu

LEAKY_SLOPE = 0.2
BN_EPS = 1e-5
_VMEM_LIMIT = 32 * 1024 * 1024


# ------------------------------ small helpers -------------------------------

def _round_up(x, m):
    return ((x + m - 1) // m) * m


def _pick_tile(dim, target, align):
    """Largest multiple of `align` that divides `dim` and is <= target."""
    if dim <= target:
        return dim
    t = (target // align) * align
    while t >= align:
        if dim % t == 0:
            return t
        t -= align
    return dim


def _default_tile_n():
    # v7x has 2 TensorCores/chip: split the Cout ("parallel") axis into >=2
    # tiles so both cores get work on small layers.  v5e/v6e: single TC.
    try:
        kind = jax.devices()[0].device_kind.lower()
    except Exception:
        return 256
    return 128 if "7" in kind else 256


def _cparams(dims):
    return pltpu.CompilerParams(dimension_semantics=dims,
                                vmem_limit_bytes=_VMEM_LIMIT)


# ----------------------------- Pallas kernels ------------------------------

def _gemm_bias_act_kernel(x_ref, w_ref, b_ref, o_ref, *, leaky):
    # bf16 operands -> MXU, f32 accumulate; bias / activation in f32.
    y = jnp.dot(x_ref[...], w_ref[...], preferred_element_type=jnp.float32)
    y = y + b_ref[...]
    if leaky:
        y = jnp.where(y > 0, y, LEAKY_SLOPE * y)
    o_ref[...] = y.astype(o_ref.dtype)


def _gemm_bn_act_kernel(x_ref, w_ref, b_ref, g_ref, bt_ref, o_ref, *, inv_m):
    # Fused conv GEMM + bias + BatchNorm (batch stats) + LeakyReLU.
    # Full-M block is resident, so stats are exact and z never touches HBM.
    z = jnp.dot(x_ref[...], w_ref[...], preferred_element_type=jnp.float32)
    z = z + b_ref[...]
    mean = jnp.sum(z, axis=0, keepdims=True) * inv_m
    zc = z - mean
    var = jnp.sum(zc * zc, axis=0, keepdims=True) * inv_m
    y = zc * lax.rsqrt(var + BN_EPS) * g_ref[...] + bt_ref[...]
    o_ref[...] = jnp.where(y > 0, y, LEAKY_SLOPE * y).astype(o_ref.dtype)


def _gemm_bn_act_head_kernel(x_ref, w_ref, b_ref, g_ref, bt_ref,
                             hw_ref, hb_ref, o_ref, *, inv_m):
    # conv-5 GEMM + BN + LeakyReLU + fused mu/logvar linear head, one kernel.
    z = jnp.dot(x_ref[...], w_ref[...], preferred_element_type=jnp.float32)
    z = z + b_ref[...]
    mean = jnp.sum(z, axis=0, keepdims=True) * inv_m
    zc = z - mean
    var = jnp.sum(zc * zc, axis=0, keepdims=True) * inv_m
    y = zc * lax.rsqrt(var + BN_EPS) * g_ref[...] + bt_ref[...]
    y = jnp.where(y > 0, y, LEAKY_SLOPE * y)
    o_ref[...] = (jnp.dot(y.astype(jnp.bfloat16), hw_ref[...],
                          preferred_element_type=jnp.float32) + hb_ref[...])


# ----------------------------- kernel wrappers ------------------------------

def gemm_bias_act(x, w, b, *, leaky, out_dtype, tile_m=256, tile_n=None):
    """x: [M,K] bf16, w: [K,N] bf16, b: [1,N] f32 -> [M,N] out_dtype."""
    M, K = x.shape
    N = w.shape[1]
    tm = _pick_tile(M, tile_m, 8)
    tn = _pick_tile(N, tile_n or _default_tile_n(), 128)
    gm, gn = M // tm, N // tn
    out_bytes = jnp.dtype(out_dtype).itemsize
    cost = pl.CostEstimate(
        flops=2 * M * K * N, transcendentals=0,
        bytes_accessed=gn * M * K * 2 + gm * K * N * 2 + N * 4
        + M * N * out_bytes)
    return pl.pallas_call(
        functools.partial(_gemm_bias_act_kernel, leaky=leaky),
        out_shape=jax.ShapeDtypeStruct((M, N), out_dtype),
        grid=(gm, gn),
        in_specs=[pl.BlockSpec((tm, K), lambda i, j: (i, 0)),
                  pl.BlockSpec((K, tn), lambda i, j: (0, j)),
                  pl.BlockSpec((1, tn), lambda i, j: (0, j))],
        out_specs=pl.BlockSpec((tm, tn), lambda i, j: (i, j)),
        compiler_params=_cparams(("parallel", "parallel")),
        cost_estimate=cost,
    )(x, w, b)


def conv_bn_act(x, w, b, gamma, beta, *, tile_n=None):
    """Fused GEMM + BatchNorm(batch stats) + LeakyReLU, bf16 output.

    Full M per block (grid only over Cout tiles) so per-channel stats are
    complete without a second pass or an HBM z round-trip.
    """
    M, K = x.shape
    N = w.shape[1]
    tn = _pick_tile(N, tile_n or _default_tile_n(), 128)
    gn = N // tn
    # VMEM guard for the whole-M resident block (double-buffered x/w + z).
    # TODO(synk): tiled-stats two-pass fallback when this overflows (v7x 64MiB).
    assert (M * K * 2 + K * tn * 2) * 2 + M * tn * 6 < _VMEM_LIMIT
    cost = pl.CostEstimate(
        flops=2 * M * K * N + 10 * M * N, transcendentals=N,
        bytes_accessed=gn * M * K * 2 + K * N * 2 + 3 * N * 4 + M * N * 2)
    return pl.pallas_call(
        functools.partial(_gemm_bn_act_kernel, inv_m=1.0 / float(M)),
        out_shape=jax.ShapeDtypeStruct((M, N), jnp.bfloat16),
        grid=(gn,),
        in_specs=[pl.BlockSpec((M, K), lambda j: (0, 0)),
                  pl.BlockSpec((K, tn), lambda j: (0, j)),
                  pl.BlockSpec((1, tn), lambda j: (0, j)),
                  pl.BlockSpec((1, tn), lambda j: (0, j)),
                  pl.BlockSpec((1, tn), lambda j: (0, j))],
        out_specs=pl.BlockSpec((M, tn), lambda j: (0, j)),
        compiler_params=_cparams(("parallel",)),
        cost_estimate=cost,
    )(x, w, b, gamma, beta)


def conv_bn_act_head(x, w, b, gamma, beta, hw, hb):
    """conv-5 + BN + LeakyReLU + fused mu/logvar head in a single kernel."""
    M, K = x.shape
    N = w.shape[1]
    Nh = hw.shape[1]
    cost = pl.CostEstimate(
        flops=2 * M * K * N + 10 * M * N + 2 * M * N * Nh, transcendentals=N,
        bytes_accessed=M * K * 2 + K * N * 2 + 3 * N * 4 + N * Nh * 2
        + Nh * 4 + M * Nh * 4)
    return pl.pallas_call(
        functools.partial(_gemm_bn_act_head_kernel, inv_m=1.0 / float(M)),
        out_shape=jax.ShapeDtypeStruct((M, Nh), jnp.float32),
        grid=(1,),
        in_specs=[pl.BlockSpec((M, K), lambda i: (0, 0)),
                  pl.BlockSpec((K, N), lambda i: (0, 0)),
                  pl.BlockSpec((1, N), lambda i: (0, 0)),
                  pl.BlockSpec((1, N), lambda i: (0, 0)),
                  pl.BlockSpec((1, N), lambda i: (0, 0)),
                  pl.BlockSpec((N, Nh), lambda i: (0, 0)),
                  pl.BlockSpec((1, Nh), lambda i: (0, 0))],
        out_specs=pl.BlockSpec((M, Nh), lambda i: (0, 0)),
        compiler_params=_cparams(("arbitrary",)),
        cost_estimate=cost,
    )(x, w, b, gamma, beta, hw, hb)


# ------------------------------ JAX glue ------------------------------------

def im2col_nhwc(x, k=3, stride=2, pad=1):
    """x: NHWC (channels already lane-padded, bf16) ->
    patches [N*Ho*Wo, k*k*C] with feature order (kh, kw, C)."""
    # TODO(synk): replace with an in-kernel implicit GEMM (9 shifted
    # dot-accumulates over a VMEM tile of the padded NHWC input).
    N, H, W, C = x.shape
    xp = jnp.pad(x, ((0, 0), (pad, pad), (pad, pad), (0, 0)))
    Ho = (H + 2 * pad - k) // stride + 1
    Wo = (W + 2 * pad - k) // stride + 1
    cols = []
    for kh in range(k):
        for kw in range(k):
            cols.append(xp[:, kh:kh + stride * (Ho - 1) + 1:stride,
                            kw:kw + stride * (Wo - 1) + 1:stride, :])
    p = jnp.stack(cols, axis=3)                       # (N, Ho, Wo, 9, C)
    return p.reshape(N * Ho * Wo, k * k * C), Ho, Wo


def init_params(key, input_dim=32, n_out=16, in_channels=3):
    assert input_dim % 32 == 0, "encoder assumes 5 exact stride-2 halvings"
    chans = [in_channels, 32, 64, 128, 256, 512]
    conv_p, conv_cfg = [], []
    cin_pad = _round_up(in_channels, 128)             # input channels padded once
    for i in range(5):
        key, kw_key, kb_key = jax.random.split(key, 3)
        cin, cout = chans[i], chans[i + 1]
        cout_pad = _round_up(cout, 128)               # lane-dense outputs
        # PyTorch-layout weights (C_out, C_in, kh, kw), reorder once to the
        # NHWC im2col layout K=(kh, kw, C_in_pad) -> C_out_pad, zero rows /
        # cols for the dead (padded) channels.
        w = jax.random.normal(kw_key, (cout, cin, 3, 3), jnp.float32) * 0.05
        b = jax.random.normal(kb_key, (cout,), jnp.float32) * 0.05
        w_k = jnp.transpose(w, (2, 3, 1, 0))          # (kh, kw, Cin, Cout)
        w_k = jnp.pad(w_k, ((0, 0), (0, 0),
                            (0, cin_pad - cin), (0, cout_pad - cout)))
        w_k = w_k.reshape(9 * cin_pad, cout_pad).astype(jnp.bfloat16)
        b_p = jnp.pad(b, (0, cout_pad - cout)).reshape(1, cout_pad)
        gamma = jnp.pad(jnp.ones((cout,), jnp.float32), (0, cout_pad - cout))
        conv_p.append(dict(
            w=w_k,
            b=b_p.astype(jnp.float32),
            gamma=gamma.reshape(1, cout_pad),          # BatchNorm2d init
            beta=jnp.zeros((1, cout_pad), jnp.float32),
        ))
        conv_cfg.append(dict(cout=cout, cout_pad=cout_pad, cin_pad=cin_pad,
                             use_bn=(i != 0)))
        cin_pad = cout_pad

    flat_dim = 512 * (input_dim // 32) ** 2
    key, k0, kb0, k1, kb1 = jax.random.split(key, 5)
    lin0_w = jax.random.normal(k0, (n_out, flat_dim), jnp.float32) * 0.02
    lin1_w = jax.random.normal(k1, (n_out, flat_dim), jnp.float32) * 0.02
    lin0_b = jax.random.normal(kb0, (n_out,), jnp.float32) * 0.02
    lin1_b = jax.random.normal(kb1, (n_out,), jnp.float32) * 0.02
    # Fuse mu / logvar heads into one GEMM, lane-pad the output to 128.
    n2 = 2 * n_out
    n_pad = _round_up(n2, 128)
    head_w = jnp.concatenate([lin0_w.T, lin1_w.T], axis=1)   # (flat_dim, 2*n_out)
    head_b = jnp.concatenate([lin0_b, lin1_b]).reshape(1, n2)
    head_w = jnp.pad(head_w, ((0, 0), (0, n_pad - n2))).astype(jnp.bfloat16)
    head_b = jnp.pad(head_b, ((0, 0), (0, n_pad - n2))).astype(jnp.float32)

    params = dict(conv=conv_p, head_w=head_w, head_b=head_b)
    cfg = dict(conv=tuple(conv_cfg), n_out=n_out, flat_dim=flat_dim)
    return params, cfg


def encoder_forward(x, params, cfg):
    """x: NCHW float32 (same external convention as the PyTorch module)."""
    N = x.shape[0]
    n_out = cfg["n_out"]
    x = jnp.transpose(x, (0, 2, 3, 1)).astype(jnp.bfloat16)   # NCHW -> NHWC once
    cin_pad0 = cfg["conv"][0]["cin_pad"]
    x = jnp.pad(x, ((0, 0), (0, 0), (0, 0), (0, cin_pad0 - x.shape[-1])))

    n_layers = len(cfg["conv"])
    for idx, (lp, lc) in enumerate(zip(params["conv"], cfg["conv"])):
        patches, Ho, Wo = im2col_nhwc(x)
        last = idx == n_layers - 1
        if last and Ho * Wo == 1:
            # input_dim == 32: flatten of (N, 512, 1, 1) is a no-op, so fuse
            # conv-5 + BN + LeakyReLU + mu/logvar head in one kernel.
            head = conv_bn_act_head(patches, lp["w"], lp["b"],
                                    lp["gamma"], lp["beta"],
                                    params["head_w"], params["head_b"])
            return head[:, :n_out], head[:, n_out:2 * n_out]
        if lc["use_bn"]:
            y = conv_bn_act(patches, lp["w"], lp["b"], lp["gamma"], lp["beta"])
        else:
            y = gemm_bias_act(patches, lp["w"], lp["b"],
                              leaky=True, out_dtype=jnp.bfloat16)
        # Stay channel-padded between layers (no slice / re-pad); dead input
        # channels of the next layer have zero weight rows.
        x = y.reshape(N, Ho, Wo, lc["cout_pad"])

    # General tail (input_dim > 32): match torch.flatten on NCHW data.
    feat = jnp.transpose(x, (0, 3, 1, 2)).reshape(N, -1)
    assert feat.shape[1] == cfg["flat_dim"]
    head = gemm_bias_act(feat, params["head_w"], params["head_b"],
                         leaky=False, out_dtype=jnp.float32)
    return head[:, :n_out], head[:, n_out:2 * n_out]


if __name__ == "__main__":
    input_dim, n_out, in_channels, batch = 32, 16, 3, 2
    key = jax.random.PRNGKey(0)
    kx, kp = jax.random.split(key)
    x = jax.random.normal(kx, (batch, in_channels, input_dim, input_dim),
                          jnp.float32)
    params, cfg = init_params(kp, input_dim=input_dim, n_out=n_out,
                              in_channels=in_channels)

    fwd = jax.jit(lambda xx, pp: encoder_forward(xx, pp, cfg))
    mu, logvar = fwd(x, params)
    jax.block_until_ready((mu, logvar))

    assert mu.shape == (batch, n_out), mu.shape
    assert logvar.shape == (batch, n_out), logvar.shape
    assert mu.dtype == jnp.float32 and logvar.dtype == jnp.float32
    assert bool(jnp.all(jnp.isfinite(mu))) and bool(jnp.all(jnp.isfinite(logvar)))
    print("KERNEL_OK")
</pallas_src>

<mosaic_0001>
module attributes {stable_mosaic.version = 11 : i64} {
  func.func @_gemm_bias_act_kernel(%arg0: i32, %arg1: i32, %arg2: memref<256x1152xbf16, #tpu.memory_space<vmem>>, %arg3: memref<1152x128xbf16, #tpu.memory_space<vmem>>, %arg4: memref<1x128xf32, #tpu.memory_space<vmem>>, %arg5: memref<256x128xbf16, #tpu.memory_space<vmem>>) attributes {dimension_semantics = [#tpu.dimension_semantics<parallel>, #tpu.dimension_semantics<parallel>], iteration_bounds = array<i64: 2, 1>, scalar_prefetch = 0 : i64, scratch_operands = 0 : i64, tpu.core_type = #tpu.core_type<tc>, window_params = [{transform_indices = @transform_0, window_bounds = array<i64: 256, 1152>}, {transform_indices = @transform_1, window_bounds = array<i64: 1152, 128>}, {transform_indices = @transform_2, window_bounds = array<i64: 1, 128>}, {transform_indices = @transform_3, window_bounds = array<i64: 256, 128>}]} {
    %c0 = arith.constant 0 : index
    %c0_0 = arith.constant 0 : index
    %0 = vector.load %arg2[%c0, %c0_0] : memref<256x1152xbf16, #tpu.memory_space<vmem>>, vector<256x1152xbf16>
    %c0_1 = arith.constant 0 : index
    %c0_2 = arith.constant 0 : index
    %1 = vector.load %arg3[%c0_1, %c0_2] : memref<1152x128xbf16, #tpu.memory_space<vmem>>, vector<1152x128xbf16>
    %cst = arith.constant dense<0.000000e+00> : vector<256x128xf32>
    %2 = tpu.matmul %0, %1, %cst {dimension_numbers = #tpu.dot_dimension_numbers<[1], [0], [0], [1], [0, 0, 1, 1], [], []>} : vector<256x1152xbf16>, vector<1152x128xbf16>, vector<256x128xf32> -> vector<256x128xf32>
    %c0_3 = arith.constant 0 : index
    %c0_4 = arith.constant 0 : index
    %3 = vector.load %arg4[%c0_3, %c0_4] : memref<1x128xf32, #tpu.memory_space<vmem>>, vector<1x128xf32>
    %4 = vector.broadcast %3 : vector<1x128xf32> to vector<256x128xf32>
    %5 = arith.addf %2, %4 : vector<256x128xf32>
    %cst_5 = arith.constant 0.000000e+00 : f32
    %6 = vector.broadcast %cst_5 : f32 to vector<256x128xf32>
    %7 = arith.cmpf ogt, %5, %6 : vector<256x128xf32>
    %cst_6 = arith.constant 2.000000e-01 : f32
    %8 = vector.broadcast %cst_6 : f32 to vector<256x128xf32>
    %9 = arith.mulf %8, %5 : vector<256x128xf32>
    %10 = arith.select %7, %5, %9 : vector<256x128xi1>, vector<256x128xf32>
    %11 = arith.truncf %10 : vector<256x128xf32> to vector<256x128xbf16>
    %c0_7 = arith.constant 0 : index
    %c0_8 = arith.constant 0 : index
    %12 = vector.load %arg5[%c0_7, %c0_8] : memref<256x128xbf16, #tpu.memory_space<vmem>>, vector<256x128xbf16>
    tpu.vector_store %arg5[%c0_7, %c0_8], %11 {strides = array<i32>} : memref<256x128xbf16, #tpu.memory_space<vmem>>, vector<256x128xbf16>,
    return
  }
  func.func @transform_0(%arg0: i32, %arg1: i32) -> (i32, i32) {
    %c0_i32 = arith.constant 0 : i32
    %c0_i32_0 = arith.constant 0 : i32
    return %arg0, %c0_i32 : i32, i32
  }
  func.func @transform_1(%arg0: i32, %arg1: i32) -> (i32, i32) {
    %c0_i32 = arith.constant 0 : i32
    %c0_i32_0 = arith.constant 0 : i32
    return %c0_i32, %arg1 : i32, i32
  }
  func.func @transform_2(%arg0: i32, %arg1: i32) -> (i32, i32) {
    %c0_i32 = arith.constant 0 : i32
    %c0_i32_0 = arith.constant 0 : i32
    return %c0_i32, %arg1 : i32, i32
  }
  func.func @transform_3(%arg0: i32, %arg1: i32) -> (i32, i32) {
    %c0_i32 = arith.constant 0 : i32
    return %arg0, %arg1 : i32, i32
  }
}

module attributes {stable_mosaic.version = 11 : i64} {
  func.func @_gemm_bn_act_kernel(%arg0: i32, %arg1: memref<128x1152xbf16, #tpu.memory_space<vmem>>, %arg2: memref<1152x128xbf16, #tpu.memory_space<vmem>>, %arg3: memref<1x128xf32, #tpu.memory_space<vmem>>, %arg4: memref<1x128xf32, #tpu.memory_space<vmem>>, %arg5: memref<1x128xf32, #tpu.memory_space<vmem>>, %arg6: memref<128x128xbf16, #tpu.memory_space<vmem>>) attributes {dimension_semantics = [#tpu.dimension_semantics<parallel>], iteration_bounds = array<i64: 1>, scalar_prefetch = 0 : i64, scratch_operands = 0 : i64, tpu.core_type = #tpu.core_type<tc>, window_params = [{pipeline_mode = #tpu.pipeline_mode<synchronous>, transform_indices = @transform_0, window_bounds = array<i64: 128, 1152>}, {transform_indices = @transform_1, window_bounds = array<i64: 1152, 128>}, {transform_indices = @transform_2, window_bounds = array<i64: 1, 128>}, {transform_indices = @transform_3, window_bounds = array<i64: 1, 128>}, {transform_indices = @transform_4, window_bounds = array<i64: 1, 128>}, {transform_indices = @transform_5, window_bounds = array<i64: 128, 128>}]} {
    %c0 = arith.constant 0 : index
    %c0_0 = arith.constant 0 : index
    %0 = vector.load %arg1[%c0, %c0_0] : memref<128x1152xbf16, #tpu.memory_space<vmem>>, vector<128x1152xbf16>
    %c0_1 = arith.constant 0 : index
    %c0_2 = arith.constant 0 : index
    %1 = vector.load %arg2[%c0_1, %c0_2] : memref<1152x128xbf16, #tpu.memory_space<vmem>>, vector<1152x128xbf16>
    %cst = arith.constant dense<0.000000e+00> : vector<128x128xf32>
    %2 = tpu.matmul %0, %1, %cst {dimension_numbers = #tpu.dot_dimension_numbers<[1], [0], [0], [1], [0, 0, 1, 1], [], []>} : vector<128x1152xbf16>, vector<1152x128xbf16>, vector<128x128xf32> -> vector<128x128xf32>
    %c0_3 = arith.constant 0 : index
    %c0_4 = arith.constant 0 : index
    %3 = vector.load %arg3[%c0_3, %c0_4] : memref<1x128xf32, #tpu.memory_space<vmem>>, vector<1x128xf32>
    %4 = vector.broadcast %3 : vector<1x128xf32> to vector<128x128xf32>
    %5 = arith.addf %2, %4 : vector<128x128xf32>
    %cst_5 = arith.constant dense<0.000000e+00> : vector<128xf32>
    %6 = vector.multi_reduction <add>, %5, %cst_5 [0] : vector<128x128xf32> to vector<128xf32>
    %7 = vector.shape_cast %6 : vector<128xf32> to vector<1x128xf32>
    %cst_6 = arith.constant 7.812500e-03 : f32
    %8 = vector.broadcast %cst_6 : f32 to vector<1x128xf32>
    %9 = arith.mulf %7, %8 : vector<1x128xf32>
    %10 = vector.broadcast %9 : vector<1x128xf32> to vector<128x128xf32>
    %11 = arith.subf %5, %10 : vector<128x128xf32>
    %12 = arith.mulf %11, %11 : vector<128x128xf32>
    %cst_7 = arith.constant dense<0.000000e+00> : vector<128xf32>
    %13 = vector.multi_reduction <add>, %12, %cst_7 [0] : vector<128x128xf32> to vector<128xf32>
    %14 = vector.shape_cast %13 : vector<128xf32> to vector<1x128xf32>
    %cst_8 = arith.constant 7.812500e-03 : f32
    %15 = vector.broadcast %cst_8 : f32 to vector<1x128xf32>
    %16 = arith.mulf %14, %15 : vector<1x128xf32>
    %cst_9 = arith.constant 9.99999974E-6 : f32
    %17 = vector.broadcast %cst_9 : f32 to vector<1x128xf32>
    %18 = arith.addf %16, %17 : vector<1x128xf32>
    %19 = math.rsqrt %18 : vector<1x128xf32>
    %20 = vector.broadcast %19 : vector<1x128xf32> to vector<128x128xf32>
    %21 = arith.mulf %11, %20 : vector<128x128xf32>
    %c0_10 = arith.constant 0 : index
    %c0_11 = arith.constant 0 : index
    %22 = vector.load %arg4[%c0_10, %c0_11] : memref<1x128xf32, #tpu.memory_space<vmem>>, vector<1x128xf32>
    %23 = vector.broadcast %22 : vector<1x128xf32> to vector<128x128xf32>
    %24 = arith.mulf %21, %23 : vector<128x128xf32>
    %c0_12 = arith.constant 0 : index
    %c0_13 = arith.constant 0 : index
    %25 = vector.load %arg5[%c0_12, %c0_13] : memref<1x128xf32, #tpu.memory_space<vmem>>, vector<1x128xf32>
    %26 = vector.broadcast %25 : vector<1x128xf32> to vector<128x128xf32>
    %27 = arith.addf %24, %26 : vector<128x128xf32>
    %cst_14 = arith.constant 0.000000e+00 : f32
    %28 = vector.broadcast %cst_14 : f32 to vector<128x128xf32>
    %29 = arith.cmpf ogt, %27, %28 : vector<128x128xf32>
    %cst_15 = arith.constant 2.000000e-01 : f32
    %30 = vector.broadcast %cst_15 : f32 to vector<128x128xf32>
    %31 = arith.mulf %30, %27 : vector<128x128xf32>
    %32 = arith.select %29, %27, %31 : vector<128x128xi1>, vector<128x128xf32>
    %33 = arith.truncf %32 : vector<128x128xf32> to vector<128x128xbf16>
    %c0_16 = arith.constant 0 : index
    %c0_17 = arith.constant 0 : index
    %34 = vector.load %arg6[%c0_16, %c0_17] : memref<128x128xbf16, #tpu.memory_space<vmem>>, vector<128x128xbf16>
    tpu.vector_store %arg6[%c0_16, %c0_17], %33 {strides = array<i32>} : memref<128x128xbf16, #tpu.memory_space<vmem>>, vector<128x128xbf16>,
    return
  }
  func.func @transform_0(%arg0: i32) -> (i32, i32) {
    %c0_i32 = arith.constant 0 : i32
    %c0_i32_0 = arith.constant 0 : i32
    %c0_i32_1 = arith.constant 0 : i32
    return %c0_i32, %c0_i32_0 : i32, i32
  }
  func.func @transform_1(%arg0: i32) -> (i32, i32) {
    %c0_i32 = arith.constant 0 : i32
    %c0_i32_0 = arith.constant 0 : i32
    return %c0_i32, %arg0 : i32, i32
  }
  func.func @transform_2(%arg0: i32) -> (i32, i32) {
    %c0_i32 = arith.constant 0 : i32
    %c0_i32_0 = arith.constant 0 : i32
    return %c0_i32, %arg0 : i32, i32
  }
  func.func @transform_3(%arg0: i32) -> (i32, i32) {
    %c0_i32 = arith.constant 0 : i32
    %c0_i32_0 = arith.constant 0 : i32
    return %c0_i32, %arg0 : i32, i32
  }
  func.func @transform_4(%arg0: i32) -> (i32, i32) {
    %c0_i32 = arith.constant 0 : i32
    %c0_i32_0 = arith.constant 0 : i32
    return %c0_i32, %arg0 : i32, i32
  }
  func.func @transform_5(%arg0: i32) -> (i32, i32) {
    %c0_i32 = arith.constant 0 : i32
    %c0_i32_0 = arith.constant 0 : i32
    return %c0_i32, %arg0 : i32, i32
  }
}

module attributes {stable_mosaic.version = 11 : i64} {
  func.func @_gemm_bn_act_kernel(%arg0: i32, %arg1: memref<32x1152xbf16, #tpu.memory_space<vmem>>, %arg2: memref<1152x128xbf16, #tpu.memory_space<vmem>>, %arg3: memref<1x128xf32, #tpu.memory_space<vmem>>, %arg4: memref<1x128xf32, #tpu.memory_space<vmem>>, %arg5: memref<1x128xf32, #tpu.memory_space<vmem>>, %arg6: memref<32x128xbf16, #tpu.memory_space<vmem>>) attributes {dimension_semantics = [#tpu.dimension_semantics<parallel>], iteration_bounds = array<i64: 1>, scalar_prefetch = 0 : i64, scratch_operands = 0 : i64, tpu.core_type = #tpu.core_type<tc>, window_params = [{pipeline_mode = #tpu.pipeline_mode<synchronous>, transform_indices = @transform_0, window_bounds = array<i64: 32, 1152>}, {transform_indices = @transform_1, window_bounds = array<i64: 1152, 128>}, {transform_indices = @transform_2, window_bounds = array<i64: 1, 128>}, {transform_indices = @transform_3, window_bounds = array<i64: 1, 128>}, {transform_indices = @transform_4, window_bounds = array<i64: 1, 128>}, {transform_indices = @transform_5, window_bounds = array<i64: 32, 128>}]} {
    %c0 = arith.constant 0 : index
    %c0_0 = arith.constant 0 : index
    %0 = vector.load %arg1[%c0, %c0_0] : memref<32x1152xbf16, #tpu.memory_space<vmem>>, vector<32x1152xbf16>
    %c0_1 = arith.constant 0 : index
    %c0_2 = arith.constant 0 : index
    %1 = vector.load %arg2[%c0_1, %c0_2] : memref<1152x128xbf16, #tpu.memory_space<vmem>>, vector<1152x128xbf16>
    %cst = arith.constant dense<0.000000e+00> : vector<32x128xf32>
    %2 = tpu.matmul %0, %1, %cst {dimension_numbers = #tpu.dot_dimension_numbers<[1], [0], [0], [1], [0, 0, 1, 1], [], []>} : vector<32x1152xbf16>, vector<1152x128xbf16>, vector<32x128xf32> -> vector<32x128xf32>
    %c0_3 = arith.constant 0 : index
    %c0_4 = arith.constant 0 : index
    %3 = vector.load %arg3[%c0_3, %c0_4] : memref<1x128xf32, #tpu.memory_space<vmem>>, vector<1x128xf32>
    %4 = vector.broadcast %3 : vector<1x128xf32> to vector<32x128xf32>
    %5 = arith.addf %2, %4 : vector<32x128xf32>
    %cst_5 = arith.constant dense<0.000000e+00> : vector<128xf32>
    %6 = vector.multi_reduction <add>, %5, %cst_5 [0] : vector<32x128xf32> to vector<128xf32>
    %7 = vector.shape_cast %6 : vector<128xf32> to vector<1x128xf32>
    %cst_6 = arith.constant 3.125000e-02 : f32
    %8 = vector.broadcast %cst_6 : f32 to vector<1x128xf32>
    %9 = arith.mulf %7, %8 : vector<1x128xf32>
    %10 = vector.broadcast %9 : vector<1x128xf32> to vector<32x128xf32>
    %11 = arith.subf %5, %10 : vector<32x128xf32>
    %12 = arith.mulf %11, %11 : vector<32x128xf32>
    %cst_7 = arith.constant dense<0.000000e+00> : vector<128xf32>
    %13 = vector.multi_reduction <add>, %12, %cst_7 [0] : vector<32x128xf32> to vector<128xf32>
    %14 = vector.shape_cast %13 : vector<128xf32> to vector<1x128xf32>
    %cst_8 = arith.constant 3.125000e-02 : f32
    %15 = vector.broadcast %cst_8 : f32 to vector<1x128xf32>
    %16 = arith.mulf %14, %15 : vector<1x128xf32>
    %cst_9 = arith.constant 9.99999974E-6 : f32
    %17 = vector.broadcast %cst_9 : f32 to vector<1x128xf32>
    %18 = arith.addf %16, %17 : vector<1x128xf32>
    %19 = math.rsqrt %18 : vector<1x128xf32>
    %20 = vector.broadcast %19 : vector<1x128xf32> to vector<32x128xf32>
    %21 = arith.mulf %11, %20 : vector<32x128xf32>
    %c0_10 = arith.constant 0 : index
    %c0_11 = arith.constant 0 : index
    %22 = vector.load %arg4[%c0_10, %c0_11] : memref<1x128xf32, #tpu.memory_space<vmem>>, vector<1x128xf32>
    %23 = vector.broadcast %22 : vector<1x128xf32> to vector<32x128xf32>
    %24 = arith.mulf %21, %23 : vector<32x128xf32>
    %c0_12 = arith.constant 0 : index
    %c0_13 = arith.constant 0 : index
    %25 = vector.load %arg5[%c0_12, %c0_13] : memref<1x128xf32, #tpu.memory_space<vmem>>, vector<1x128xf32>
    %26 = vector.broadcast %25 : vector<1x128xf32> to vector<32x128xf32>
    %27 = arith.addf %24, %26 : vector<32x128xf32>
    %cst_14 = arith.constant 0.000000e+00 : f32
    %28 = vector.broadcast %cst_14 : f32 to vector<32x128xf32>
    %29 = arith.cmpf ogt, %27, %28 : vector<32x128xf32>
    %cst_15 = arith.constant 2.000000e-01 : f32
    %30 = vector.broadcast %cst_15 : f32 to vector<32x128xf32>
    %31 = arith.mulf %30, %27 : vector<32x128xf32>
    %32 = arith.select %29, %27, %31 : vector<32x128xi1>, vector<32x128xf32>
    %33 = arith.truncf %32 : vector<32x128xf32> to vector<32x128xbf16>
    %c0_16 = arith.constant 0 : index
    %c0_17 = arith.constant 0 : index
    %34 = vector.load %arg6[%c0_16, %c0_17] : memref<32x128xbf16, #tpu.memory_space<vmem>>, vector<32x128xbf16>
    tpu.vector_store %arg6[%c0_16, %c0_17], %33 {strides = array<i32>} : memref<32x128xbf16, #tpu.memory_space<vmem>>, vector<32x128xbf16>,
    return
  }
  func.func @transform_0(%arg0: i32) -> (i32, i32) {
    %c0_i32 = arith.constant 0 : i32
    %c0_i32_0 = arith.constant 0 : i32
    %c0_i32_1 = arith.constant 0 : i32
    return %c0_i32, %c0_i32_0 : i32, i32
  }
  func.func @transform_1(%arg0: i32) -> (i32, i32) {
    %c0_i32 = arith.constant 0 : i32
    %c0_i32_0 = arith.constant 0 : i32
    return %c0_i32, %arg0 : i32, i32
  }
  func.func @transform_2(%arg0: i32) -> (i32, i32) {
    %c0_i32 = arith.constant 0 : i32
    %c0_i32_0 = arith.constant 0 : i32
    return %c0_i32, %arg0 : i32, i32
  }
  func.func @transform_3(%arg0: i32) -> (i32, i32) {
    %c0_i32 = arith.constant 0 : i32
    %c0_i32_0 = arith.constant 0 : i32
    return %c0_i32, %arg0 : i32, i32
  }
  func.func @transform_4(%arg0: i32) -> (i32, i32) {
    %c0_i32 = arith.constant 0 : i32
    %c0_i32_0 = arith.constant 0 : i32
    return %c0_i32, %arg0 : i32, i32
  }
  func.func @transform_5(%arg0: i32) -> (i32, i32) {
    %c0_i32 = arith.constant 0 : i32
    %c0_i32_0 = arith.constant 0 : i32
    return %c0_i32, %arg0 : i32, i32
  }
}

module attributes {stable_mosaic.version = 11 : i64} {
  func.func @_gemm_bn_act_kernel(%arg0: i32, %arg1: memref<8x1152xbf16, #tpu.memory_space<vmem>>, %arg2: memref<1152x256xbf16, #tpu.memory_space<vmem>>, %arg3: memref<1x256xf32, #tpu.memory_space<vmem>>, %arg4: memref<1x256xf32, #tpu.memory_space<vmem>>, %arg5: memref<1x256xf32, #tpu.memory_space<vmem>>, %arg6: memref<8x256xbf16, #tpu.memory_space<vmem>>) attributes {dimension_semantics = [#tpu.dimension_semantics<parallel>], iteration_bounds = array<i64: 1>, scalar_prefetch = 0 : i64, scratch_operands = 0 : i64, tpu.core_type = #tpu.core_type<tc>, window_params = [{pipeline_mode = #tpu.pipeline_mode<synchronous>, transform_indices = @transform_0, window_bounds = array<i64: 8, 1152>}, {transform_indices = @transform_1, window_bounds = array<i64: 1152, 256>}, {transform_indices = @transform_2, window_bounds = array<i64: 1, 256>}, {transform_indices = @transform_3, window_bounds = array<i64: 1, 256>}, {transform_indices = @transform_4, window_bounds = array<i64: 1, 256>}, {transform_indices = @transform_5, window_bounds = array<i64: 8, 256>}]} {
    %c0 = arith.constant 0 : index
    %c0_0 = arith.constant 0 : index
    %0 = vector.load %arg1[%c0, %c0_0] : memref<8x1152xbf16, #tpu.memory_space<vmem>>, vector<8x1152xbf16>
    %c0_1 = arith.constant 0 : index
    %c0_2 = arith.constant 0 : index
    %1 = vector.load %arg2[%c0_1, %c0_2] : memref<1152x256xbf16, #tpu.memory_space<vmem>>, vector<1152x256xbf16>
    %cst = arith.constant dense<0.000000e+00> : vector<8x256xf32>
    %2 = tpu.matmul %0, %1, %cst {dimension_numbers = #tpu.dot_dimension_numbers<[1], [0], [0], [1], [0, 0, 1, 1], [], []>} : vector<8x1152xbf16>, vector<1152x256xbf16>, vector<8x256xf32> -> vector<8x256xf32>
    %c0_3 = arith.constant 0 : index
    %c0_4 = arith.constant 0 : index
    %3 = vector.load %arg3[%c0_3, %c0_4] : memref<1x256xf32, #tpu.memory_space<vmem>>, vector<1x256xf32>
    %4 = vector.broadcast %3 : vector<1x256xf32> to vector<8x256xf32>
    %5 = arith.addf %2, %4 : vector<8x256xf32>
    %cst_5 = arith.constant dense<0.000000e+00> : vector<256xf32>
    %6 = vector.multi_reduction <add>, %5, %cst_5 [0] : vector<8x256xf32> to vector<256xf32>
    %7 = vector.shape_cast %6 : vector<256xf32> to vector<1x256xf32>
    %cst_6 = arith.constant 1.250000e-01 : f32
    %8 = vector.broadcast %cst_6 : f32 to vector<1x256xf32>
    %9 = arith.mulf %7, %8 : vector<1x256xf32>
    %10 = vector.broadcast %9 : vector<1x256xf32> to vector<8x256xf32>
    %11 = arith.subf %5, %10 : vector<8x256xf32>
    %12 = arith.mulf %11, %11 : vector<8x256xf32>
    %cst_7 = arith.constant dense<0.000000e+00> : vector<256xf32>
    %13 = vector.multi_reduction <add>, %12, %cst_7 [0] : vector<8x256xf32> to vector<256xf32>
    %14 = vector.shape_cast %13 : vector<256xf32> to vector<1x256xf32>
    %cst_8 = arith.constant 1.250000e-01 : f32
    %15 = vector.broadcast %cst_8 : f32 to vector<1x256xf32>
    %16 = arith.mulf %14, %15 : vector<1x256xf32>
    %cst_9 = arith.constant 9.99999974E-6 : f32
    %17 = vector.broadcast %cst_9 : f32 to vector<1x256xf32>
    %18 = arith.addf %16, %17 : vector<1x256xf32>
    %19 = math.rsqrt %18 : vector<1x256xf32>
    %20 = vector.broadcast %19 : vector<1x256xf32> to vector<8x256xf32>
    %21 = arith.mulf %11, %20 : vector<8x256xf32>
    %c0_10 = arith.constant 0 : index
    %c0_11 = arith.constant 0 : index
    %22 = vector.load %arg4[%c0_10, %c0_11] : memref<1x256xf32, #tpu.memory_space<vmem>>, vector<1x256xf32>
    %23 = vector.broadcast %22 : vector<1x256xf32> to vector<8x256xf32>
    %24 = arith.mulf %21, %23 : vector<8x256xf32>
    %c0_12 = arith.constant 0 : index
    %c0_13 = arith.constant 0 : index
    %25 = vector.load %arg5[%c0_12, %c0_13] : memref<1x256xf32, #tpu.memory_space<vmem>>, vector<1x256xf32>
    %26 = vector.broadcast %25 : vector<1x256xf32> to vector<8x256xf32>
    %27 = arith.addf %24, %26 : vector<8x256xf32>
    %cst_14 = arith.constant 0.000000e+00 : f32
    %28 = vector.broadcast %cst_14 : f32 to vector<8x256xf32>
    %29 = arith.cmpf ogt, %27, %28 : vector<8x256xf32>
    %cst_15 = arith.constant 2.000000e-01 : f32
    %30 = vector.broadcast %cst_15 : f32 to vector<8x256xf32>
    %31 = arith.mulf %30, %27 : vector<8x256xf32>
    %32 = arith.select %29, %27, %31 : vector<8x256xi1>, vector<8x256xf32>
    %33 = arith.truncf %32 : vector<8x256xf32> to vector<8x256xbf16>
    %c0_16 = arith.constant 0 : index
    %c0_17 = arith.constant 0 : index
    %34 = vector.load %arg6[%c0_16, %c0_17] : memref<8x256xbf16, #tpu.memory_space<vmem>>, vector<8x256xbf16>
    tpu.vector_store %arg6[%c0_16, %c0_17], %33 {strides = array<i32>} : memref<8x256xbf16, #tpu.memory_space<vmem>>, vector<8x256xbf16>,
    return
  }
  func.func @transform_0(%arg0: i32) -> (i32, i32) {
    %c0_i32 = arith.constant 0 : i32
    %c0_i32_0 = arith.constant 0 : i32
    %c0_i32_1 = arith.constant 0 : i32
    return %c0_i32, %c0_i32_0 : i32, i32
  }
  func.func @transform_1(%arg0: i32) -> (i32, i32) {
    %c0_i32 = arith.constant 0 : i32
    %c0_i32_0 = arith.constant 0 : i32
    return %c0_i32, %arg0 : i32, i32
  }
  func.func @transform_2(%arg0: i32) -> (i32, i32) {
    %c0_i32 = arith.constant 0 : i32
    %c0_i32_0 = arith.constant 0 : i32
    return %c0_i32, %arg0 : i32, i32
  }
  func.func @transform_3(%arg0: i32) -> (i32, i32) {
    %c0_i32 = arith.constant 0 : i32
    %c0_i32_0 = arith.constant 0 : i32
    return %c0_i32, %arg0 : i32, i32
  }
  func.func @transform_4(%arg0: i32) -> (i32, i32) {
    %c0_i32 = arith.constant 0 : i32
    %c0_i32_0 = arith.constant 0 : i32
    return %c0_i32, %arg0 : i32, i32
  }
  func.func @transform_5(%arg0: i32) -> (i32, i32) {
    %c0_i32 = arith.constant 0 : i32
    %c0_i32_0 = arith.constant 0 : i32
    return %c0_i32, %arg0 : i32, i32
  }
}

module attributes {stable_mosaic.version = 11 : i64} {
  func.func @_gemm_bn_act_head_kernel(%arg0: i32, %arg1: memref<2x2304xbf16, #tpu.memory_space<vmem>>, %arg2: memref<2304x512xbf16, #tpu.memory_space<vmem>>, %arg3: memref<1x512xf32, #tpu.memory_space<vmem>>, %arg4: memref<1x512xf32, #tpu.memory_space<vmem>>, %arg5: memref<1x512xf32, #tpu.memory_space<vmem>>, %arg6: memref<512x128xbf16, #tpu.memory_space<vmem>>, %arg7: memref<1x128xf32, #tpu.memory_space<vmem>>, %arg8: memref<2x128xf32, #tpu.memory_space<vmem>>) attributes {dimension_semantics = [#tpu.dimension_semantics<arbitrary>], iteration_bounds = array<i64: 1>, scalar_prefetch = 0 : i64, scratch_operands = 0 : i64, tpu.core_type = #tpu.core_type<tc>, window_params = [{pipeline_mode = #tpu.pipeline_mode<synchronous>, transform_indices = @transform_0, window_bounds = array<i64: 2, 2304>}, {pipeline_mode = #tpu.pipeline_mode<synchronous>, transform_indices = @transform_1, window_bounds = array<i64: 2304, 512>}, {pipeline_mode = #tpu.pipeline_mode<synchronous>, transform_indices = @transform_2, window_bounds = array<i64: 1, 512>}, {pipeline_mode = #tpu.pipeline_mode<synchronous>, transform_indices = @transform_3, window_bounds = array<i64: 1, 512>}, {pipeline_mode = #tpu.pipeline_mode<synchronous>, transform_indices = @transform_4, window_bounds = array<i64: 1, 512>}, {pipeline_mode = #tpu.pipeline_mode<synchronous>, transform_indices = @transform_5, window_bounds = array<i64: 512, 128>}, {pipeline_mode = #tpu.pipeline_mode<synchronous>, transform_indices = @transform_6, window_bounds = array<i64: 1, 128>}, {pipeline_mode = #tpu.pipeline_mode<synchronous>, transform_indices = @transform_7, window_bounds = array<i64: 2, 128>}]} {
    %c0 = arith.constant 0 : index
    %c0_0 = arith.constant 0 : index
    %0 = vector.load %arg1[%c0, %c0_0] : memref<2x2304xbf16, #tpu.memory_space<vmem>>, vector<2x2304xbf16>
    %c0_1 = arith.constant 0 : index
    %c0_2 = arith.constant 0 : index
    %1 = vector.load %arg2[%c0_1, %c0_2] : memref<2304x512xbf16, #tpu.memory_space<vmem>>, vector<2304x512xbf16>
    %cst = arith.constant dense<0.000000e+00> : vector<2x512xf32>
    %2 = tpu.matmul %0, %1, %cst {dimension_numbers = #tpu.dot_dimension_numbers<[1], [0], [0], [1], [0, 0, 1, 1], [], []>} : vector<2x2304xbf16>, vector<2304x512xbf16>, vector<2x512xf32> -> vector<2x512xf32>
    %c0_3 = arith.constant 0 : index
    %c0_4 = arith.constant 0 : index
    %3 = vector.load %arg3[%c0_3, %c0_4] : memref<1x512xf32, #tpu.memory_space<vmem>>, vector<1x512xf32>
    %4 = vector.broadcast %3 : vector<1x512xf32> to vector<2x512xf32>
    %5 = arith.addf %2, %4 : vector<2x512xf32>
    %cst_5 = arith.constant dense<0.000000e+00> : vector<512xf32>
    %6 = vector.multi_reduction <add>, %5, %cst_5 [0] : vector<2x512xf32> to vector<512xf32>
    %7 = vector.shape_cast %6 : vector<512xf32> to vector<1x512xf32>
    %cst_6 = arith.constant 5.000000e-01 : f32
    %8 = vector.broadcast %cst_6 : f32 to vector<1x512xf32>
    %9 = arith.mulf %7, %8 : vector<1x512xf32>
    %10 = vector.broadcast %9 : vector<1x512xf32> to vector<2x512xf32>
    %11 = arith.subf %5, %10 : vector<2x512xf32>
    %12 = arith.mulf %11, %11 : vector<2x512xf32>
    %cst_7 = arith.constant dense<0.000000e+00> : vector<512xf32>
    %13 = vector.multi_reduction <add>, %12, %cst_7 [0] : vector<2x512xf32> to vector<512xf32>
    %14 = vector.shape_cast %13 : vector<512xf32> to vector<1x512xf32>
    %cst_8 = arith.constant 5.000000e-01 : f32
    %15 = vector.broadcast %cst_8 : f32 to vector<1x512xf32>
    %16 = arith.mulf %14, %15 : vector<1x512xf32>
    %cst_9 = arith.constant 9.99999974E-6 : f32
    %17 = vector.broadcast %cst_9 : f32 to vector<1x512xf32>
    %18 = arith.addf %16, %17 : vector<1x512xf32>
    %19 = math.rsqrt %18 : vector<1x512xf32>
    %20 = vector.broadcast %19 : vector<1x512xf32> to vector<2x512xf32>
    %21 = arith.mulf %11, %20 : vector<2x512xf32>
    %c0_10 = arith.constant 0 : index
    %c0_11 = arith.constant 0 : index
    %22 = vector.load %arg4[%c0_10, %c0_11] : memref<1x512xf32, #tpu.memory_space<vmem>>, vector<1x512xf32>
    %23 = vector.broadcast %22 : vector<1x512xf32> to vector<2x512xf32>
    %24 = arith.mulf %21, %23 : vector<2x512xf32>
    %c0_12 = arith.constant 0 : index
    %c0_13 = arith.constant 0 : index
    %25 = vector.load %arg5[%c0_12, %c0_13] : memref<1x512xf32, #tpu.memory_space<vmem>>, vector<1x512xf32>
    %26 = vector.broadcast %25 : vector<1x512xf32> to vector<2x512xf32>
    %27 = arith.addf %24, %26 : vector<2x512xf32>
    %cst_14 = arith.constant 0.000000e+00 : f32
    %28 = vector.broadcast %cst_14 : f32 to vector<2x512xf32>
    %29 = arith.cmpf ogt, %27, %28 : vector<2x512xf32>
    %cst_15 = arith.constant 2.000000e-01 : f32
    %30 = vector.broadcast %cst_15 : f32 to vector<2x512xf32>
    %31 = arith.mulf %30, %27 : vector<2x512xf32>
    %32 = arith.select %29, %27, %31 : vector<2x512xi1>, vector<2x512xf32>
    %33 = arith.truncf %32 : vector<2x512xf32> to vector<2x512xbf16>
    %c0_16 = arith.constant 0 : index
    %c0_17 = arith.constant 0 : index
    %34 = vector.load %arg6[%c0_16, %c0_17] : memref<512x128xbf16, #tpu.memory_space<vmem>>, vector<512x128xbf16>
    %cst_18 = arith.constant dense<0.000000e+00> : vector<2x128xf32>
    %35 = tpu.matmul %33, %34, %cst_18 {dimension_numbers = #tpu.dot_dimension_numbers<[1], [0], [0], [1], [0, 0, 1, 1], [], []>} : vector<2x512xbf16>, vector<512x128xbf16>, vector<2x128xf32> -> vector<2x128xf32>
    %c0_19 = arith.constant 0 : index
    %c0_20 = arith.constant 0 : index
    %36 = vector.load %arg7[%c0_19, %c0_20] : memref<1x128xf32, #tpu.memory_space<vmem>>, vector<1x128xf32>
    %37 = vector.broadcast %36 : vector<1x128xf32> to vector<2x128xf32>
    %38 = arith.addf %35, %37 : vector<2x128xf32>
    %c0_21 = arith.constant 0 : index
    %c0_22 = arith.constant 0 : index
    %39 = vector.load %arg8[%c0_21, %c0_22] : memref<2x128xf32, #tpu.memory_space<vmem>>, vector<2x128xf32>
    tpu.vector_store %arg8[%c0_21, %c0_22], %38 {strides = array<i32>} : memref<2x128xf32, #tpu.memory_space<vmem>>, vector<2x128xf32>,
    return
  }
  func.func @transform_0(%arg0: i32) -> (i32, i32) {
    %c0_i32 = arith.constant 0 : i32
    %c0_i32_0 = arith.constant 0 : i32
    %c0_i32_1 = arith.constant 0 : i32
    return %c0_i32, %c0_i32_0 : i32, i32
  }
  func.func @transform_1(%arg0: i32) -> (i32, i32) {
    %c0_i32 = arith.constant 0 : i32
    %c0_i32_0 = arith.constant 0 : i32
    %c0_i32_1 = arith.constant 0 : i32
    return %c0_i32, %c0_i32_0 : i32, i32
  }
  func.func @transform_2(%arg0: i32) -> (i32, i32) {
    %c0_i32 = arith.constant 0 : i32
    %c0_i32_0 = arith.constant 0 : i32
    %c0_i32_1 = arith.constant 0 : i32
    return %c0_i32, %c0_i32_0 : i32, i32
  }
  func.func @transform_3(%arg0: i32) -> (i32, i32) {
    %c0_i32 = arith.constant 0 : i32
    %c0_i32_0 = arith.constant 0 : i32
    %c0_i32_1 = arith.constant 0 : i32
    return %c0_i32, %c0_i32_0 : i32, i32
  }
  func.func @transform_4(%arg0: i32) -> (i32, i32) {
    %c0_i32 = arith.constant 0 : i32
    %c0_i32_0 = arith.constant 0 : i32
    %c0_i32_1 = arith.constant 0 : i32
    return %c0_i32, %c0_i32_0 : i32, i32
  }
  func.func @transform_5(%arg0: i32) -> (i32, i32) {
    %c0_i32 = arith.constant 0 : i32
    %c0_i32_0 = arith.constant 0 : i32
    %c0_i32_1 = arith.constant 0 : i32
    return %c0_i32, %c0_i32_0 : i32, i32
  }
  func.func @transform_6(%arg0: i32) -> (i32, i32) {
    %c0_i32 = arith.constant 0 : i32
    %c0_i32_0 = arith.constant 0 : i32
    %c0_i32_1 = arith.constant 0 : i32
    return %c0_i32, %c0_i32_0 : i32, i32
  }
  func.func @transform_7(%arg0: i32) -> (i32, i32) {
    %c0_i32 = arith.constant 0 : i32
    %c0_i32_0 = arith.constant 0 : i32
    %c0_i32_1 = arith.constant 0 : i32
    return %c0_i32, %c0_i32_0 : i32, i32
  }
}

</mosaic_0001>

<llo_original>
// kernel: _lambda_.5
$region0: #{_lambda_.5}
  #allocation0 [shape = 'u32[]', space=smem, size = 0x4, offset = 0x4, fixed_abs, tag = 'smem constant byte address 0x4 - core index']
  #allocation1 [shape = 'u32[144,128]{1,0:T(1,128)}', space=vmem, size = 0x12000, scoped, tag = 'internal scratch']
  %s0 = inlined_call_operand.vmem [shape: bf16[512,1152], index: 0, kind: input, shape index: {}]
  %s1 = inlined_call_operand.vmem [shape: bf16[1152,128], index: 1, kind: input, shape index: {}]
  %s2 = inlined_call_operand.vmem [shape: f32[1,128], index: 2, kind: input, shape index: {}]
  %s3 = inlined_call_operand.vmem [shape: bf16[512,128], index: 3, kind: output, shape index: {}]
  %s4 = sld [smem:[#allocation0]]
  $region45: #{_lambda_.5} parent=0
    _
  %s6 = ssub.s32 1, %s4
  %s7 = scalar_select 0, %s6, %s4
  loop: start=0, step=1, limit=4
  $region2: #{_lambda_.5} parent=0 // loop_pre_header
    _
  $region3: #{_lambda_.5} parent=0 // loop_header
    %s9 = sphi 0, %s13
    %p10 = scmp.ge.s32.totalorder %s9, 4
    %s16 = sphi 0, %s28
    %s17 = sphi 0, %s24
    %s18 = sphi 0, %s16
    %s19 = sphi 0, %s17
    %s20 = sphi 0, %s18
    %s21 = sphi 0, %s19
    %s31 = sphi 0, %s33
    %s34 = sphi 0, %s31
    %s35 = sphi 0, %s34
    %s51 = sphi 0, %s35
    %s57 = sphi 0, %s59
    %s60 = sphi 0, %s57
    %s61 = sphi 0, %s60
    %s77 = sphi 0, %s61
    %s83 = sphi 0, %s85
    %s86 = sphi 0, %s83
    %s87 = sphi 0, %s86
    %s103 = sphi 0, %s87
    %s111 = sphi 0, %s113
    %s114 = sphi 0, %s111
    %s115 = sphi 0, %s114
    %s131 = sphi 0, %s115
  $region4: #{_lambda_.5} parent=0 // loop_header_branch
    %12 = sbr.rel (%p10) target = $region8
  $region5: #{_lambda_.5} parent=0 // loop_body
    %s14 = ssub.s32 %s9, 1
    %s15 = ssub.s32 %s9, 2
    %s22 = sadd.s32 1, %s17
    %p23 = scmp.ge.s32.totalorder %s22, 1
    %s24 = scalar_select %p23, 0, %s22
    %s25 = sadd.s32 1, %s16
    %s26 = scalar_select %p23, %s25, %s16
    %p27 = scmp.ge.s32.totalorder %s26, 2
    %s28 = scalar_select %p27, 0, %s26
    %s29 = ssub.s32 %s16, %s28
    %p30 = scmp.eq.s32.totalorder %s29, 0
    %s32 = sadd.s32 %s31, 1
    %s33 = scalar_select %p30, %s31, %s32
    %p36 = pneg %p30
    %p37 = scmp.eq.s32.totalorder %s9, 1
    %p38 = por %p36, %p37
    %p39 = scmp.ne.s32.totalorder %s31, %s34
    %p40 = scmp.eq.s32.totalorder %s9, 0
    %p41 = por %p39, %p40
    %p42 = scmp.ne.s32.totalorder %s31, %s34
    %p43 = scmp.eq.s32.totalorder %s14, 1
    %p44 = por %p42, %p43
    %p45 = scmp.ne.s32.totalorder %s34, %s35
    %p46 = scmp.eq.s32.totalorder %s14, 0
    %p47 = por %p45, %p46
    %p48 = scmp.ne.s32.totalorder %s34, %s35
    %p49 = scmp.eq.s32.totalorder %s15, 1
    %p50 = por %p48, %p49
    %p52 = scmp.ne.s32.totalorder %s35, %s51
    %p53 = scmp.eq.s32.totalorder %s15, 0
    %p54 = por %p52, %p53
    %s55 = ssub.s32 %s17, %s24
    %p56 = scmp.eq.s32.totalorder %s55, 0
    %s58 = sadd.s32 %s57, 1
    %s59 = scalar_select %p56, %s57, %s58
    %p62 = pneg %p56
    %p63 = scmp.eq.s32.totalorder %s9, 1
    %p64 = por %p62, %p63
    %p65 = scmp.ne.s32.totalorder %s57, %s60
    %p66 = scmp.eq.s32.totalorder %s9, 0
    %p67 = por %p65, %p66
    %p68 = scmp.ne.s32.totalorder %s57, %s60
    %p69 = scmp.eq.s32.totalorder %s14, 1
    %p70 = por %p68, %p69
    %p71 = scmp.ne.s32.totalorder %s60, %s61
    %p72 = scmp.eq.s32.totalorder %s14, 0
    %p73 = por %p71, %p72
    %p74 = scmp.ne.s32.totalorder %s60, %s61
    %p75 = scmp.eq.s32.totalorder %s15, 1
    %p76 = por %p74, %p75
    %p78 = scmp.ne.s32.totalorder %s61, %s77
    %p79 = scmp.eq.s32.totalorder %s15, 0
    %p80 = por %p78, %p79
    %s81 = ssub.s32 %s17, %s24
    %p82 = scmp.eq.s32.totalorder %s81, 0
    %s84 = sadd.s32 %s83, 1
    %s85 = scalar_select %p82, %s83, %s84
    %p88 = pneg %p82
    %p89 = scmp.eq.s32.totalorder %s9, 1
    %p90 = por %p88, %p89
    %p91 = scmp.ne.s32.totalorder %s83, %s86
    %p92 = scmp.eq.s32.totalorder %s9, 0
    %p93 = por %p91, %p92
    %p94 = scmp.ne.s32.totalorder %s83, %s86
    %p95 = scmp.eq.s32.totalorder %s14, 1
    %p96 = por %p94, %p95
    %p97 = scmp.ne.s32.totalorder %s86, %s87
    %p98 = scmp.eq.s32.totalorder %s14, 0
    %p99 = por %p97, %p98
    %p100 = scmp.ne.s32.totalorder %s86, %s87
    %p101 = scmp.eq.s32.totalorder %s15, 1
    %p102 = por %p100, %p101
    %p104 = scmp.ne.s32.totalorder %s87, %s103
    %p105 = scmp.eq.s32.totalorder %s15, 0
    %p106 = por %p104, %p105
    %s107 = ssub.s32 %s16, %s28
    %s108 = ssub.s32 %s17, %s24
    %s109 = sor.u32 %s107, %s108
    %p110 = scmp.eq.s32.totalorder %s109, 0
    %s112 = sadd.s32 %s111, 1
    %s113 = scalar_select %p110, %s111, %s112
    %p116 = pneg %p110
    %p117 = scmp.eq.s32.totalorder %s9, 1
    %p118 = por %p116, %p117
    %p119 = scmp.ne.s32.totalorder %s111, %s114
    %p120 = scmp.eq.s32.totalorder %s9, 0
    %p121 = por %p119, %p120
    %p122 = scmp.ne.s32.totalorder %s111, %s114
    %p123 = scmp.eq.s32.totalorder %s14, 1
    %p124 = por %p122, %p123
    %p125 = scmp.ne.s32.totalorder %s114, %s115
    %p126 = scmp.eq.s32.totalorder %s14, 0
    %p127 = por %p125, %p126
    %p128 = scmp.ne.s32.totalorder %s114, %s115
    %p129 = scmp.eq.s32.totalorder %s15, 1
    %p130 = por %p128, %p129
    %p132 = scmp.ne.s32.totalorder %s115, %s131
    %p133 = scmp.eq.s32.totalorder %s15, 0
    %p134 = por %p132, %p133
    %p135 = scmp.le.s32.totalorder 1, %s9
    %p136 = scmp.lt.s32.totalorder %s9, 3
    %p137 = pnand %p135, %p136
    %p138 = pneg %p137
    // Predicated region
    $region9: #{_lambda_.5} parent=5 // pred_check
      _
    $region10: #{_lambda_.5} parent=5 // pred_check_branch
      %140 = sbr.rel (%p137) target = $region12
    $region11: #{_lambda_.5} parent=5 // pred_region
      %s141 = ssub.s32 %s9, 1
      // Predicated region
      $region13: #{_lambda_.5} parent=11 // pred_check
        %p142 = pneg %p73
      $region14: #{_lambda_.5} parent=11 // pred_check_branch
        %144 = sbr.rel (%p142) target = $region16
      $region15: #{_lambda_.5} parent=11 // pred_region
        %p145 = scmp.lt.s32.totalorder %s19, 0
        %s146 = scalar_select %p145, %s19, 0
        %s147 = smul.addr %s146, 4
        %s148 = scalar_lea.vmem %s1, %s147
      $region16: #{_lambda_.5} parent=11 // pred_fallthru
        _
      // Predicated region
      $region17: #{_lambda_.5} parent=11 // pred_check
        %p149 = pneg %p99
      $region18: #{_lambda_.5} parent=11 // pred_check_branch
        %151 = sbr.rel (%p149) target = $region20
      $region19: #{_lambda_.5} parent=11 // pred_region
        %p152 = scmp.lt.s32.totalorder %s19, 0
        %s153 = scalar_select %p152, %s19, 0
        %s154 = scalar_lea.vmem %s2, %s153
      $region20: #{_lambda_.5} parent=11 // pred_fallthru
        _
    $region12: #{_lambda_.5} parent=5 // pred_fallthru
      _
    %p155 = scmp.lt.s32.totalorder %s9, 2
    // Predicated region
    $region21: #{_lambda_.5} parent=5 // pred_check
      %p156 = pneg %p155
    $region22: #{_lambda_.5} parent=5 // pred_check_branch
      %158 = sbr.rel (%p156) target = $region24
    $region23: #{_lambda_.5} parent=5 // pred_region
      // Predicated region
      $region25: #{_lambda_.5} parent=23 // pred_check
        %p159 = pneg %p41
      $region26: #{_lambda_.5} parent=23 // pred_check_branch
        %161 = sbr.rel (%p159) target = $region28
      $region27: #{_lambda_.5} parent=23 // pred_region
        %s162 = smul.u32 32, %s16
        %p163 = scmp.lt.s32.totalorder %s162, 63
        %s164 = scalar_select %p163, %s162, 63
        %s165 = smul.addr %s164, 9
        %s166 = smul.addr %s165, 4
        %s167 = scalar_lea.vmem %s0, %s166
        %s168 = smul.u32 32, %s16
      $region28: #{_lambda_.5} parent=23 // pred_fallthru
        _
    $region24: #{_lambda_.5} parent=5 // pred_fallthru
      _
    %p169 = scmp.le.s32.totalorder 1, %s9
    %p170 = scmp.lt.s32.totalorder %s9, 3
    %p171 = pnand %p169, %p170
    %p172 = pneg %p171
    // Predicated region
    $region29: #{_lambda_.5} parent=5 // pred_check
      _
    $region30: #{_lambda_.5} parent=5 // pred_check_branch
      %174 = sbr.rel (%p171) target = $region32
    $region31: #{_lambda_.5} parent=5 // pred_region
      %s175 = ssub.s32 %s9, 1
      %s176 = smul.u32 32, %s18
      %p177 = scmp.lt.s32.totalorder %s176, 63
      %s178 = scalar_select %p177, %s176, 63
      %s179 = smul.addr %s178, 9
      %s180 = smul.addr %s179, 4
      %s181 = scalar_lea.vmem %s0, %s180
      %p182 = pneg %p47
      %p183 = pneg %p44
      %p184 = scmp.lt.s32.totalorder %s19, 0
      %s185 = scalar_select %p184, %s19, 0
      %s186 = smul.addr %s185, 4
      %s187 = scalar_lea.vmem %s1, %s186
      %p188 = pneg %p73
      %p189 = pneg %p70
      %p190 = scmp.lt.s32.totalorder %s19, 0
      %s191 = scalar_select %p190, %s19, 0
      %s192 = scalar_lea.vmem %s2, %s191
      %p193 = pneg %p99
      %p194 = pneg %p96
      %p195 = pneg %p127
      %p196 = pneg %p124
      %s197 = smul.u32 32, %s18
      %p198 = scmp.lt.s32.totalorder %s197, 63
      %s199 = scalar_select %p198, %s197, 63
      %p200 = scmp.lt.s32.totalorder %s19, 0
      %s201 = scalar_select %p200, %s19, 0
      %s202 = sadd.s32 %s201, %s199
      %s203 = smul.addr %s202, 4
      %s204 = scalar_lea.vmem %s3, %s203
      %s205 = smul.u32 32, %s18
      %p206 = scmp.lt.s32.totalorder %s205, 63
      %s207 = scalar_select %p206, %s205, 63
      %s208 = smul.addr %s207, 9
      %s209 = smul.addr %s208, 4
      %s210 = scalar_lea.vmem %s0, %s209
      %s211 = smul.u32 32, %s18
      %p212 = scmp.lt.s32.totalorder %s19, 0
      %s213 = scalar_select %p212, %s19, 0
      %s214 = smul.addr %s213, 4
      %s215 = scalar_lea.vmem %s1, %s214
      %p216 = scmp.lt.s32.totalorder %s19, 0
      %s217 = scalar_select %p216, %s19, 0
      %s218 = scalar_lea.vmem %s2, %s217
      %s219 = smul.u32 32, %s18
      %p220 = scmp.lt.s32.totalorder %s219, 63
      %s221 = scalar_select %p220, %s219, 63
      %p222 = scmp.lt.s32.totalorder %s19, 0
      %s223 = scalar_select %p222, %s19, 0
      %s224 = sadd.s32 %s223, %s221
      %s225 = smul.addr %s224, 4
      %s226 = scalar_lea.vmem %s3, %s225
      %s227 = smul.u32 32, %s18
      %v229 = vld [vmem:[%s210] sm:$0xff]
      %v230 = vld [vmem:[%s210 + $0x8] sm:$0xff]
      %v231 = vld [vmem:[%s210 + $0x10] sm:$0xff]
      %v232 = vld [vmem:[%s210 + $0x18] sm:$0xff]
      %v233 = vld [vmem:[%s210 + $0x20] sm:$0xf]
      %v234 = vld [vmem:[%s210 + $0x24] sm:$0xff]
      %v235 = vld [vmem:[%s210 + $0x2c] sm:$0xff]
      %v236 = vld [vmem:[%s210 + $0x34] sm:$0xff]
      %v237 = vld [vmem:[%s210 + $0x3c] sm:$0xff]
      %v238 = vld [vmem:[%s210 + $0x44] sm:$0xf]
      %v239 = vld [vmem:[%s210 + $0x48] sm:$0xff]
      %v240 = vld [vmem:[%s210 + $0x50] sm:$0xff]
      %v241 = vld [vmem:[%s210 + $0x58] sm:$0xff]
      %v242 = vld [vmem:[%s210 + $0x60] sm:$0xff]
      %v243 = vld [vmem:[%s210 + $0x68] sm:$0xf]
      %v244 = vld [vmem:[%s210 + $0x6c] sm:$0xff]
      %v245 = vld [vmem:[%s210 + $0x74] sm:$0xff]
      %v246 = vld [vmem:[%s210 + $0x7c] sm:$0xff]
      %v247 = vld [vmem:[%s210 + $0x84] sm:$0xff]
      %v248 = vld [vmem:[%s210 + $0x8c] sm:$0xf]
      %v249 = vld [vmem:[%s210 + $0x90] sm:$0xff]
      %v250 = vld [vmem:[%s210 + $0x98] sm:$0xff]
      %v251 = vld [vmem:[%s210 + $0xa0] sm:$0xff]
      %v252 = vld [vmem:[%s210 + $0xa8] sm:$0xff]
      %v253 = vld [vmem:[%s210 + $0xb0] sm:$0xf]
      %v254 = vld [vmem:[%s210 + $0xb4] sm:$0xff]
      %v255 = vld [vmem:[%s210 + $0xbc] sm:$0xff]
      %v256 = vld [vmem:[%s210 + $0xc4] sm:$0xff]
      %v257 = vld [vmem:[%s210 + $0xcc] sm:$0xff]
      %v258 = vld [vmem:[%s210 + $0xd4] sm:$0xf]
      %v259 = vld [vmem:[%s210 + $0xd8] sm:$0xff]
      %v260 = vld [vmem:[%s210 + $0xe0] sm:$0xff]
      %v261 = vld [vmem:[%s210 + $0xe8] sm:$0xff]
      %v262 = vld [vmem:[%s210 + $0xf0] sm:$0xff]
      %v263 = vld [vmem:[%s210 + $0xf8] sm:$0xf]
      %v264 = vld [vmem:[%s210 + $0xfc] sm:$0xff]
      %v265 = vld [vmem:[%s210 + $0x104] sm:$0xff]
      %v266 = vld [vmem:[%s210 + $0x10c] sm:$0xff]
      %v267 = vld [vmem:[%s210 + $0x114] sm:$0xff]
      %v268 = vld [vmem:[%s210 + $0x11c] sm:$0xf]
      %v269 = vld [vmem:[%s210 + $0x120] sm:$0xff]
      %v270 = vld [vmem:[%s210 + $0x128] sm:$0xff]
      %v271 = vld [vmem:[%s210 + $0x130] sm:$0xff]
      %v272 = vld [vmem:[%s210 + $0x138] sm:$0xff]
      %v273 = vld [vmem:[%s210 + $0x140] sm:$0xf]
      %v274 = vld [vmem:[%s210 + $0x144] sm:$0xff]
      %v275 = vld [vmem:[%s210 + $0x14c] sm:$0xff]
      %v276 = vld [vmem:[%s210 + $0x154] sm:$0xff]
      %v277 = vld [vmem:[%s210 + $0x15c] sm:$0xff]
      %v278 = vld [vmem:[%s210 + $0x164] sm:$0xf]
      %v279 = vld [vmem:[%s210 + $0x168] sm:$0xff]
      %v280 = vld [vmem:[%s210 + $0x170] sm:$0xff]
      %v281 = vld [vmem:[%s210 + $0x178] sm:$0xff]
      %v282 = vld [vmem:[%s210 + $0x180] sm:$0xff]
      %v283 = vld [vmem:[%s210 + $0x188] sm:$0xf]
      %v284 = vld [vmem:[%s210 + $0x18c] sm:$0xff]
      %v285 = vld [vmem:[%s210 + $0x194] sm:$0xff]
      %v286 = vld [vmem:[%s210 + $0x19c] sm:$0xff]
      %v287 = vld [vmem:[%s210 + $0x1a4] sm:$0xff]
      %v288 = vld [vmem:[%s210 + $0x1ac] sm:$0xf]
      %v289 = vld [vmem:[%s210 + $0x1b0] sm:$0xff]
      %v290 = vld [vmem:[%s210 + $0x1b8] sm:$0xff]
      %v291 = vld [vmem:[%s210 + $0x1c0] sm:$0xff]
      %v292 = vld [vmem:[%s210 + $0x1c8] sm:$0xff]
      %v293 = vld [vmem:[%s210 + $0x1d0] sm:$0xf]
      %v294 = vld [vmem:[%s210 + $0x1d4] sm:$0xff]
      %v295 = vld [vmem:[%s210 + $0x1dc] sm:$0xff]
      %v296 = vld [vmem:[%s210 + $0x1e4] sm:$0xff]
      %v297 = vld [vmem:[%s210 + $0x1ec] sm:$0xff]
      %v298 = vld [vmem:[%s210 + $0x1f4] sm:$0xf]
      %v299 = vld [vmem:[%s210 + $0x1f8] sm:$0xff]
      %v300 = vld [vmem:[%s210 + $0x200] sm:$0xff]
      %v301 = vld [vmem:[%s210 + $0x208] sm:$0xff]
      %v302 = vld [vmem:[%s210 + $0x210] sm:$0xff]
      %v303 = vld [vmem:[%s210 + $0x218] sm:$0xf]
      %v304 = vld [vmem:[%s210 + $0x21c] sm:$0xff]
      %v305 = vld [vmem:[%s210 + $0x224] sm:$0xff]
      %v306 = vld [vmem:[%s210 + $0x22c] sm:$0xff]
      %v307 = vld [vmem:[%s210 + $0x234] sm:$0xff]
      %v308 = vld [vmem:[%s210 + $0x23c] sm:$0xf]
      %v309 = vld [vmem:[%s210 + $0x240] sm:$0xff]
      %v310 = vld [vmem:[%s210 + $0x248] sm:$0xff]
      %v311 = vld [vmem:[%s210 + $0x250] sm:$0xff]
      %v312 = vld [vmem:[%s210 + $0x258] sm:$0xff]
      %v313 = vld [vmem:[%s210 + $0x260] sm:$0xf]
      %v314 = vld [vmem:[%s210 + $0x264] sm:$0xff]
      %v315 = vld [vmem:[%s210 + $0x26c] sm:$0xff]
      %v316 = vld [vmem:[%s210 + $0x274] sm:$0xff]
      %v317 = vld [vmem:[%s210 + $0x27c] sm:$0xff]
      %v318 = vld [vmem:[%s210 + $0x284] sm:$0xf]
      %v319 = vld [vmem:[%s210 + $0x288] sm:$0xff]
      %v320 = vld [vmem:[%s210 + $0x290] sm:$0xff]
      %v321 = vld [vmem:[%s210 + $0x298] sm:$0xff]
      %v322 = vld [vmem:[%s210 + $0x2a0] sm:$0xff]
      %v323 = vld [vmem:[%s210 + $0x2a8] sm:$0xf]
      %v324 = vld [vmem:[%s210 + $0x2ac] sm:$0xff]
      %v325 = vld [vmem:[%s210 + $0x2b4] sm:$0xff]
      %v326 = vld [vmem:[%s210 + $0x2bc] sm:$0xff]
      %v327 = vld [vmem:[%s210 + $0x2c4] sm:$0xff]
      %v328 = vld [vmem:[%s210 + $0x2cc] sm:$0xf]
      %v329 = vld [vmem:[%s210 + $0x2d0] sm:$0xff]
      %v330 = vld [vmem:[%s210 + $0x2d8] sm:$0xff]
      %v331 = vld [vmem:[%s210 + $0x2e0] sm:$0xff]
      %v332 = vld [vmem:[%s210 + $0x2e8] sm:$0xff]
      %v333 = vld [vmem:[%s210 + $0x2f0] sm:$0xf]
      %v334 = vld [vmem:[%s210 + $0x2f4] sm:$0xff]
      %v335 = vld [vmem:[%s210 + $0x2fc] sm:$0xff]
      %v336 = vld [vmem:[%s210 + $0x304] sm:$0xff]
      %v337 = vld [vmem:[%s210 + $0x30c] sm:$0xff]
      %v338 = vld [vmem:[%s210 + $0x314] sm:$0xf]
      %v339 = vld [vmem:[%s210 + $0x318] sm:$0xff]
      %v340 = vld [vmem:[%s210 + $0x320] sm:$0xff]
      %v341 = vld [vmem:[%s210 + $0x328] sm:$0xff]
      %v342 = vld [vmem:[%s210 + $0x330] sm:$0xff]
      %v343 = vld [vmem:[%s210 + $0x338] sm:$0xf]
      %v344 = vld [vmem:[%s210 + $0x33c] sm:$0xff]
      %v345 = vld [vmem:[%s210 + $0x344] sm:$0xff]
      %v346 = vld [vmem:[%s210 + $0x34c] sm:$0xff]
      %v347 = vld [vmem:[%s210 + $0x354] sm:$0xff]
      %v348 = vld [vmem:[%s210 + $0x35c] sm:$0xf]
      %v349 = vld [vmem:[%s210 + $0x360] sm:$0xff]
      %v350 = vld [vmem:[%s210 + $0x368] sm:$0xff]
      %v351 = vld [vmem:[%s210 + $0x370] sm:$0xff]
      %v352 = vld [vmem:[%s210 + $0x378] sm:$0xff]
      %v353 = vld [vmem:[%s210 + $0x380] sm:$0xf]
      %v354 = vld [vmem:[%s210 + $0x384] sm:$0xff]
      %v355 = vld [vmem:[%s210 + $0x38c] sm:$0xff]
      %v356 = vld [vmem:[%s210 + $0x394] sm:$0xff]
      %v357 = vld [vmem:[%s210 + $0x39c] sm:$0xff]
      %v358 = vld [vmem:[%s210 + $0x3a4] sm:$0xf]
      %v359 = vld [vmem:[%s210 + $0x3a8] sm:$0xff]
      %v360 = vld [vmem:[%s210 + $0x3b0] sm:$0xff]
      %v361 = vld [vmem:[%s210 + $0x3b8] sm:$0xff]
      %v362 = vld [vmem:[%s210 + $0x3c0] sm:$0xff]
      %v363 = vld [vmem:[%s210 + $0x3c8] sm:$0xf]
      %v364 = vld [vmem:[%s210 + $0x3cc] sm:$0xff]
      %v365 = vld [vmem:[%s210 + $0x3d4] sm:$0xff]
      %v366 = vld [vmem:[%s210 + $0x3dc] sm:$0xff]
      %v367 = vld [vmem:[%s210 + $0x3e4] sm:$0xff]
      %v368 = vld [vmem:[%s210 + $0x3ec] sm:$0xf]
      %v369 = vld [vmem:[%s210 + $0x3f0] sm:$0xff]
      %v370 = vld [vmem:[%s210 + $0x3f8] sm:$0xff]
      %v371 = vld [vmem:[%s210 + $0x400] sm:$0xff]
      %v372 = vld [vmem:[%s210 + $0x408] sm:$0xff]
      %v373 = vld [vmem:[%s210 + $0x410] sm:$0xf]
      %v374 = vld [vmem:[%s210 + $0x414] sm:$0xff]
      %v375 = vld [vmem:[%s210 + $0x41c] sm:$0xff]
      %v376 = vld [vmem:[%s210 + $0x424] sm:$0xff]
      %v377 = vld [vmem:[%s210 + $0x42c] sm:$0xff]
      %v378 = vld [vmem:[%s210 + $0x434] sm:$0xf]
      %v379 = vld [vmem:[%s210 + $0x438] sm:$0xff]
      %v380 = vld [vmem:[%s210 + $0x440] sm:$0xff]
      %v381 = vld [vmem:[%s210 + $0x448] sm:$0xff]
      %v382 = vld [vmem:[%s210 + $0x450] sm:$0xff]
      %v383 = vld [vmem:[%s210 + $0x458] sm:$0xf]
      %v384 = vld [vmem:[%s210 + $0x45c] sm:$0xff]
      %v385 = vld [vmem:[%s210 + $0x464] sm:$0xff]
      %v386 = vld [vmem:[%s210 + $0x46c] sm:$0xff]
      %v387 = vld [vmem:[%s210 + $0x474] sm:$0xff]
      %v388 = vld [vmem:[%s210 + $0x47c] sm:$0xf]
      %v389 = vld [vmem:[%s215] sm:$0xf]
      %v390 = vld [vmem:[%s215 + $0x4] sm:$0xf]
      %v391 = vld [vmem:[%s215 + $0x8] sm:$0xf]
      %v392 = vld [vmem:[%s215 + $0xc] sm:$0xf]
      %v393 = vld [vmem:[%s215 + $0x10] sm:$0xf]
      %v394 = vld [vmem:[%s215 + $0x14] sm:$0xf]
      %v395 = vld [vmem:[%s215 + $0x18] sm:$0xf]
      %v396 = vld [vmem:[%s215 + $0x1c] sm:$0xf]
      %v397 = vld [vmem:[%s215 + $0x20] sm:$0xf]
      %v398 = vld [vmem:[%s215 + $0x24] sm:$0xf]
      %v399 = vld [vmem:[%s215 + $0x28] sm:$0xf]
      %v400 = vld [vmem:[%s215 + $0x2c] sm:$0xf]
      %v401 = vld [vmem:[%s215 + $0x30] sm:$0xf]
      %v402 = vld [vmem:[%s215 + $0x34] sm:$0xf]
      %v403 = vld [vmem:[%s215 + $0x38] sm:$0xf]
      %v404 = vld [vmem:[%s215 + $0x3c] sm:$0xf]
      %v405 = vld [vmem:[%s215 + $0x40] sm:$0xf]
      %v406 = vld [vmem:[%s215 + $0x44] sm:$0xf]
      %v407 = vld [vmem:[%s215 + $0x48] sm:$0xf]
      %v408 = vld [vmem:[%s215 + $0x4c] sm:$0xf]
      %v409 = vld [vmem:[%s215 + $0x50] sm:$0xf]
      %v410 = vld [vmem:[%s215 + $0x54] sm:$0xf]
      %v411 = vld [vmem:[%s215 + $0x58] sm:$0xf]
      %v412 = vld [vmem:[%s215 + $0x5c] sm:$0xf]
      %v413 = vld [vmem:[%s215 + $0x60] sm:$0xf]
      %v414 = vld [vmem:[%s215 + $0x64] sm:$0xf]
      %v415 = vld [vmem:[%s215 + $0x68] sm:$0xf]
      %v416 = vld [vmem:[%s215 + $0x6c] sm:$0xf]
      %v417 = vld [vmem:[%s215 + $0x70] sm:$0xf]
      %v418 = vld [vmem:[%s215 + $0x74] sm:$0xf]
      %v419 = vld [vmem:[%s215 + $0x78] sm:$0xf]
      %v420 = vld [vmem:[%s215 + $0x7c] sm:$0xf]
      %v421 = vld [vmem:[%s215 + $0x80] sm:$0xf]
      %v422 = vld [vmem:[%s215 + $0x84] sm:$0xf]
      %v423 = vld [vmem:[%s215 + $0x88] sm:$0xf]
      %v424 = vld [vmem:[%s215 + $0x8c] sm:$0xf]
      %v425 = vld [vmem:[%s215 + $0x90] sm:$0xf]
      %v426 = vld [vmem:[%s215 + $0x94] sm:$0xf]
      %v427 = vld [vmem:[%s215 + $0x98] sm:$0xf]
      %v428 = vld [vmem:[%s215 + $0x9c] sm:$0xf]
      %v429 = vld [vmem:[%s215 + $0xa0] sm:$0xf]
      %v430 = vld [vmem:[%s215 + $0xa4] sm:$0xf]
      %v431 = vld [vmem:[%s215 + $0xa8] sm:$0xf]
      %v432 = vld [vmem:[%s215 + $0xac] sm:$0xf]
      %v433 = vld [vmem:[%s215 + $0xb0] sm:$0xf]
      %v434 = vld [vmem:[%s215 + $0xb4] sm:$0xf]
      %v435 = vld [vmem:[%s215 + $0xb8] sm:$0xf]
      %v436 = vld [vmem:[%s215 + $0xbc] sm:$0xf]
      %v437 = vld [vmem:[%s215 + $0xc0] sm:$0xf]
      %v438 = vld [vmem:[%s215 + $0xc4] sm:$0xf]
      %v439 = vld [vmem:[%s215 + $0xc8] sm:$0xf]
      %v440 = vld [vmem:[%s215 + $0xcc] sm:$0xf]
      %v441 = vld [vmem:[%s215 + $0xd0] sm:$0xf]
      %v442 = vld [vmem:[%s215 + $0xd4] sm:$0xf]
      %v443 = vld [vmem:[%s215 + $0xd8] sm:$0xf]
      %v444 = vld [vmem:[%s215 + $0xdc] sm:$0xf]
      %v445 = vld [vmem:[%s215 + $0xe0] sm:$0xf]
      %v446 = vld [vmem:[%s215 + $0xe4] sm:$0xf]
      %v447 = vld [vmem:[%s215 + $0xe8] sm:$0xf]
      %v448 = vld [vmem:[%s215 + $0xec] sm:$0xf]
      %v449 = vld [vmem:[%s215 + $0xf0] sm:$0xf]
      %v450 = vld [vmem:[%s215 + $0xf4] sm:$0xf]
      %v451 = vld [vmem:[%s215 + $0xf8] sm:$0xf]
      %v452 = vld [vmem:[%s215 + $0xfc] sm:$0xf]
      %v453 = vld [vmem:[%s215 + $0x100] sm:$0xf]
      %v454 = vld [vmem:[%s215 + $0x104] sm:$0xf]
      %v455 = vld [vmem:[%s215 + $0x108] sm:$0xf]
      %v456 = vld [vmem:[%s215 + $0x10c] sm:$0xf]
      %v457 = vld [vmem:[%s215 + $0x110] sm:$0xf]
      %v458 = vld [vmem:[%s215 + $0x114] sm:$0xf]
      %v459 = vld [vmem:[%s215 + $0x118] sm:$0xf]
      %v460 = vld [vmem:[%s215 + $0x11c] sm:$0xf]
      %v461 = vld [vmem:[%s215 + $0x120] sm:$0xf]
      %v462 = vld [vmem:[%s215 + $0x124] sm:$0xf]
      %v463 = vld [vmem:[%s215 + $0x128] sm:$0xf]
      %v464 = vld [vmem:[%s215 + $0x12c] sm:$0xf]
      %v465 = vld [vmem:[%s215 + $0x130] sm:$0xf]
      %v466 = vld [vmem:[%s215 + $0x134] sm:$0xf]
      %v467 = vld [vmem:[%s215 + $0x138] sm:$0xf]
      %v468 = vld [vmem:[%s215 + $0x13c] sm:$0xf]
      %v469 = vld [vmem:[%s215 + $0x140] sm:$0xf]
      %v470 = vld [vmem:[%s215 + $0x144] sm:$0xf]
      %v471 = vld [vmem:[%s215 + $0x148] sm:$0xf]
      %v472 = vld [vmem:[%s215 + $0x14c] sm:$0xf]
      %v473 = vld [vmem:[%s215 + $0x150] sm:$0xf]
      %v474 = vld [vmem:[%s215 + $0x154] sm:$0xf]
      %v475 = vld [vmem:[%s215 + $0x158] sm:$0xf]
      %v476 = vld [vmem:[%s215 + $0x15c] sm:$0xf]
      %v477 = vld [vmem:[%s215 + $0x160] sm:$0xf]
      %v478 = vld [vmem:[%s215 + $0x164] sm:$0xf]
      %v479 = vld [vmem:[%s215 + $0x168] sm:$0xf]
      %v480 = vld [vmem:[%s215 + $0x16c] sm:$0xf]
      %v481 = vld [vmem:[%s215 + $0x170] sm:$0xf]
      %v482 = vld [vmem:[%s215 + $0x174] sm:$0xf]
      %v483 = vld [vmem:[%s215 + $0x178] sm:$0xf]
      %v484 = vld [vmem:[%s215 + $0x17c] sm:$0xf]
      %v485 = vld [vmem:[%s215 + $0x180] sm:$0xf]
      %v486 = vld [vmem:[%s215 + $0x184] sm:$0xf]
      %v487 = vld [vmem:[%s215 + $0x188] sm:$0xf]
      %v488 = vld [vmem:[%s215 + $0x18c] sm:$0xf]
      %v489 = vld [vmem:[%s215 + $0x190] sm:$0xf]
      %v490 = vld [vmem:[%s215 + $0x194] sm:$0xf]
      %v491 = vld [vmem:[%s215 + $0x198] sm:$0xf]
      %v492 = vld [vmem:[%s215 + $0x19c] sm:$0xf]
      %v493 = vld [vmem:[%s215 + $0x1a0] sm:$0xf]
      %v494 = vld [vmem:[%s215 + $0x1a4] sm:$0xf]
      %v495 = vld [vmem:[%s215 + $0x1a8] sm:$0xf]
      %v496 = vld [vmem:[%s215 + $0x1ac] sm:$0xf]
      %v497 = vld [vmem:[%s215 + $0x1b0] sm:$0xf]
      %v498 = vld [vmem:[%s215 + $0x1b4] sm:$0xf]
      %v499 = vld [vmem:[%s215 + $0x1b8] sm:$0xf]
      %v500 = vld [vmem:[%s215 + $0x1bc] sm:$0xf]
      %v501 = vld [vmem:[%s215 + $0x1c0] sm:$0xf]
      %v502 = vld [vmem:[%s215 + $0x1c4] sm:$0xf]
      %v503 = vld [vmem:[%s215 + $0x1c8] sm:$0xf]
      %v504 = vld [vmem:[%s215 + $0x1cc] sm:$0xf]
      %v505 = vld [vmem:[%s215 + $0x1d0] sm:$0xf]
      %v506 = vld [vmem:[%s215 + $0x1d4] sm:$0xf]
      %v507 = vld [vmem:[%s215 + $0x1d8] sm:$0xf]
      %v508 = vld [vmem:[%s215 + $0x1dc] sm:$0xf]
      %v509 = vld [vmem:[%s215 + $0x1e0] sm:$0xf]
      %v510 = vld [vmem:[%s215 + $0x1e4] sm:$0xf]
      %v511 = vld [vmem:[%s215 + $0x1e8] sm:$0xf]
      %v512 = vld [vmem:[%s215 + $0x1ec] sm:$0xf]
      %v513 = vld [vmem:[%s215 + $0x1f0] sm:$0xf]
      %v514 = vld [vmem:[%s215 + $0x1f4] sm:$0xf]
      %v515 = vld [vmem:[%s215 + $0x1f8] sm:$0xf]
      %v516 = vld [vmem:[%s215 + $0x1fc] sm:$0xf]
      %v517 = vld [vmem:[%s215 + $0x200] sm:$0xf]
      %v518 = vld [vmem:[%s215 + $0x204] sm:$0xf]
      %v519 = vld [vmem:[%s215 + $0x208] sm:$0xf]
      %v520 = vld [vmem:[%s215 + $0x20c] sm:$0xf]
      %v521 = vld [vmem:[%s215 + $0x210] sm:$0xf]
      %v522 = vld [vmem:[%s215 + $0x214] sm:$0xf]
      %v523 = vld [vmem:[%s215 + $0x218] sm:$0xf]
      %v524 = vld [vmem:[%s215 + $0x21c] sm:$0xf]
      %v525 = vld [vmem:[%s215 + $0x220] sm:$0xf]
      %v526 = vld [vmem:[%s215 + $0x224] sm:$0xf]
      %v527 = vld [vmem:[%s215 + $0x228] sm:$0xf]
      %v528 = vld [vmem:[%s215 + $0x22c] sm:$0xf]
      %v529 = vld [vmem:[%s215 + $0x230] sm:$0xf]
      %v530 = vld [vmem:[%s215 + $0x234] sm:$0xf]
      %v531 = vld [vmem:[%s215 + $0x238] sm:$0xf]
      %v532 = vld [vmem:[%s215 + $0x23c] sm:$0xf]
      %v533 = vld [vmem:[%s218] sm:$0x1]
      %v535 = vlaneseq
      %v536 = vshrl.u32 %v535, 7
      %v537 = vsub.s32 0, %v536
      %v538 = vrot.slane %v533, %v537
      %v700 = vunpack.c.l.b16 %v229
      %v701 = vunpack.c.h.b16 %v229
      %v702 = vunpack.c.l.b16 %v230
      %v703 = vunpack.c.h.b16 %v230
      %v704 = vunpack.c.l.b16 %v231
      %v705 = vunpack.c.h.b16 %v231
      %v706 = vunpack.c.l.b16 %v232
      %v707 = vunpack.c.h.b16 %v232
      %v708 = vunpack.c.l.b16 %v233
      %v709 = vunpack.c.l.b16 %v234
      %v710 = vunpack.c.h.b16 %v234
      %v711 = vunpack.c.l.b16 %v235
      %v712 = vunpack.c.h.b16 %v235
      %v713 = vunpack.c.l.b16 %v236
      %v714 = vunpack.c.h.b16 %v236
      %v715 = vunpack.c.l.b16 %v237
      %v716 = vunpack.c.h.b16 %v237
      %v717 = vunpack.c.l.b16 %v238
      %v718 = vunpack.c.l.b16 %v239
      %v719 = vunpack.c.h.b16 %v239
      %v720 = vunpack.c.l.b16 %v240
      %v721 = vunpack.c.h.b16 %v240
      %v722 = vunpack.c.l.b16 %v241
      %v723 = vunpack.c.h.b16 %v241
      %v724 = vunpack.c.l.b16 %v242
      %v725 = vunpack.c.h.b16 %v242
      %v726 = vunpack.c.l.b16 %v243
      %v727 = vunpack.c.l.b16 %v244
      %v728 = vunpack.c.h.b16 %v244
      %v729 = vunpack.c.l.b16 %v245
      %v730 = vunpack.c.h.b16 %v245
      %v731 = vunpack.c.l.b16 %v246
      %v732 = vunpack.c.h.b16 %v246
      %v733 = vunpack.c.l.b16 %v247
      %v734 = vunpack.c.h.b16 %v247
      %v735 = vunpack.c.l.b16 %v248
      %v736 = vunpack.c.l.b16 %v249
      %v737 = vunpack.c.h.b16 %v249
      %v738 = vunpack.c.l.b16 %v250
      %v739 = vunpack.c.h.b16 %v250
      %v740 = vunpack.c.l.b16 %v251
      %v741 = vunpack.c.h.b16 %v251
      %v742 = vunpack.c.l.b16 %v252
      %v743 = vunpack.c.h.b16 %v252
      %v744 = vunpack.c.l.b16 %v253
      %v745 = vunpack.c.l.b16 %v254
      %v746 = vunpack.c.h.b16 %v254
      %v747 = vunpack.c.l.b16 %v255
      %v748 = vunpack.c.h.b16 %v255
      %v749 = vunpack.c.l.b16 %v256
      %v750 = vunpack.c.h.b16 %v256
      %v751 = vunpack.c.l.b16 %v257
      %v752 = vunpack.c.h.b16 %v257
      %v753 = vunpack.c.l.b16 %v258
      %v754 = vunpack.c.l.b16 %v259
      %v755 = vunpack.c.h.b16 %v259
      %v756 = vunpack.c.l.b16 %v260
      %v757 = vunpack.c.h.b16 %v260
      %v758 = vunpack.c.l.b16 %v261
      %v759 = vunpack.c.h.b16 %v261
      %v760 = vunpack.c.l.b16 %v262
      %v761 = vunpack.c.h.b16 %v262
      %v762 = vunpack.c.l.b16 %v263
      %v763 = vunpack.c.l.b16 %v264
      %v764 = vunpack.c.h.b16 %v264
      %v765 = vunpack.c.l.b16 %v265
      %v766 = vunpack.c.h.b16 %v265
      %v767 = vunpack.c.l.b16 %v266
      %v768 = vunpack.c.h.b16 %v266
      %v769 = vunpack.c.l.b16 %v267
      %v770 = vunpack.c.h.b16 %v267
      %v771 = vunpack.c.l.b16 %v268
      %v772 = vunpack.c.l.b16 %v269
      %v773 = vunpack.c.h.b16 %v269
      %v774 = vunpack.c.l.b16 %v270
      %v775 = vunpack.c.h.b16 %v270
      %v776 = vunpack.c.l.b16 %v271
      %v777 = vunpack.c.h.b16 %v271
      %v778 = vunpack.c.l.b16 %v272
      %v779 = vunpack.c.h.b16 %v272
      %v780 = vunpack.c.l.b16 %v273
      %v781 = vunpack.c.l.b16 %v274
      %v782 = vunpack.c.h.b16 %v274
      %v783 = vunpack.c.l.b16 %v275
      %v784 = vunpack.c.h.b16 %v275
      %v785 = vunpack.c.l.b16 %v276
      %v786 = vunpack.c.h.b16 %v276
      %v787 = vunpack.c.l.b16 %v277
      %v788 = vunpack.c.h.b16 %v277
      %v789 = vunpack.c.l.b16 %v278
      %v790 = vunpack.c.l.b16 %v279
      %v791 = vunpack.c.h.b16 %v279
      %v792 = vunpack.c.l.b16 %v280
      %v793 = vunpack.c.h.b16 %v280
      %v794 = vunpack.c.l.b16 %v281
      %v795 = vunpack.c.h.b16 %v281
      %v796 = vunpack.c.l.b16 %v282
      %v797 = vunpack.c.h.b16 %v282
      %v798 = vunpack.c.l.b16 %v283
      %v799 = vunpack.c.l.b16 %v284
      %v800 = vunpack.c.h.b16 %v284
      %v801 = vunpack.c.l.b16 %v285
      %v802 = vunpack.c.h.b16 %v285
      %v803 = vunpack.c.l.b16 %v286
      %v804 = vunpack.c.h.b16 %v286
      %v805 = vunpack.c.l.b16 %v287
      %v806 = vunpack.c.h.b16 %v287
      %v807 = vunpack.c.l.b16 %v288
      %v808 = vunpack.c.l.b16 %v289
      %v809 = vunpack.c.h.b16 %v289
      %v810 = vunpack.c.l.b16 %v290
      %v811 = vunpack.c.h.b16 %v290
      %v812 = vunpack.c.l.b16 %v291
      %v813 = vunpack.c.h.b16 %v291
      %v814 = vunpack.c.l.b16 %v292
      %v815 = vunpack.c.h.b16 %v292
      %v816 = vunpack.c.l.b16 %v293
      %v817 = vunpack.c.l.b16 %v294
      %v818 = vunpack.c.h.b16 %v294
      %v819 = vunpack.c.l.b16 %v295
      %v820 = vunpack.c.h.b16 %v295
      %v821 = vunpack.c.l.b16 %v296
      %v822 = vunpack.c.h.b16 %v296
      %v823 = vunpack.c.l.b16 %v297
      %v824 = vunpack.c.h.b16 %v297
      %v825 = vunpack.c.l.b16 %v298
      %v826 = vunpack.c.l.b16 %v299
      %v827 = vunpack.c.h.b16 %v299
      %v828 = vunpack.c.l.b16 %v300
      %v829 = vunpack.c.h.b16 %v300
      %v830 = vunpack.c.l.b16 %v301
      %v831 = vunpack.c.h.b16 %v301
      %v832 = vunpack.c.l.b16 %v302
      %v833 = vunpack.c.h.b16 %v302
      %v834 = vunpack.c.l.b16 %v303
      %v835 = vunpack.c.l.b16 %v304
      %v836 = vunpack.c.h.b16 %v304
      %v837 = vunpack.c.l.b16 %v305
      %v838 = vunpack.c.h.b16 %v305
      %v839 = vunpack.c.l.b16 %v306
      %v840 = vunpack.c.h.b16 %v306
      %v841 = vunpack.c.l.b16 %v307
      %v842 = vunpack.c.h.b16 %v307
      %v843 = vunpack.c.l.b16 %v308
      %v844 = vunpack.c.l.b16 %v309
      %v845 = vunpack.c.h.b16 %v309
      %v846 = vunpack.c.l.b16 %v310
      %v847 = vunpack.c.h.b16 %v310
      %v848 = vunpack.c.l.b16 %v311
      %v849 = vunpack.c.h.b16 %v311
      %v850 = vunpack.c.l.b16 %v312
      %v851 = vunpack.c.h.b16 %v312
      %v852 = vunpack.c.l.b16 %v313
      %v853 = vunpack.c.l.b16 %v314
      %v854 = vunpack.c.h.b16 %v314
      %v855 = vunpack.c.l.b16 %v315
      %v856 = vunpack.c.h.b16 %v315
      %v857 = vunpack.c.l.b16 %v316
      %v858 = vunpack.c.h.b16 %v316
      %v859 = vunpack.c.l.b16 %v317
      %v860 = vunpack.c.h.b16 %v317
      %v861 = vunpack.c.l.b16 %v318
      %v862 = vunpack.c.l.b16 %v319
      %v863 = vunpack.c.h.b16 %v319
      %v864 = vunpack.c.l.b16 %v320
      %v865 = vunpack.c.h.b16 %v320
      %v866 = vunpack.c.l.b16 %v321
      %v867 = vunpack.c.h.b16 %v321
      %v868 = vunpack.c.l.b16 %v322
      %v869 = vunpack.c.h.b16 %v322
      %v870 = vunpack.c.l.b16 %v323
      %v871 = vunpack.c.l.b16 %v324
      %v872 = vunpack.c.h.b16 %v324
      %v873 = vunpack.c.l.b16 %v325
      %v874 = vunpack.c.h.b16 %v325
      %v875 = vunpack.c.l.b16 %v326
      %v876 = vunpack.c.h.b16 %v326
      %v877 = vunpack.c.l.b16 %v327
      %v878 = vunpack.c.h.b16 %v327
      %v879 = vunpack.c.l.b16 %v328
      %v880 = vunpack.c.l.b16 %v329
      %v881 = vunpack.c.h.b16 %v329
      %v882 = vunpack.c.l.b16 %v330
      %v883 = vunpack.c.h.b16 %v330
      %v884 = vunpack.c.l.b16 %v331
      %v885 = vunpack.c.h.b16 %v331
      %v886 = vunpack.c.l.b16 %v332
      %v887 = vunpack.c.h.b16 %v332
      %v888 = vunpack.c.l.b16 %v333
      %v889 = vunpack.c.l.b16 %v334
      %v890 = vunpack.c.h.b16 %v334
      %v891 = vunpack.c.l.b16 %v335
      %v892 = vunpack.c.h.b16 %v335
      %v893 = vunpack.c.l.b16 %v336
      %v894 = vunpack.c.h.b16 %v336
      %v895 = vunpack.c.l.b16 %v337
      %v896 = vunpack.c.h.b16 %v337
      %v897 = vunpack.c.l.b16 %v338
      %v898 = vunpack.c.l.b16 %v339
      %v899 = vunpack.c.h.b16 %v339
      %v900 = vunpack.c.l.b16 %v340
      %v901 = vunpack.c.h.b16 %v340
      %v902 = vunpack.c.l.b16 %v341
      %v903 = vunpack.c.h.b16 %v341
      %v904 = vunpack.c.l.b16 %v342
      %v905 = vunpack.c.h.b16 %v342
      %v906 = vunpack.c.l.b16 %v343
      %v907 = vunpack.c.l.b16 %v344
      %v908 = vunpack.c.h.b16 %v344
      %v909 = vunpack.c.l.b16 %v345
      %v910 = vunpack.c.h.b16 %v345
      %v911 = vunpack.c.l.b16 %v346
      %v912 = vunpack.c.h.b16 %v346
      %v913 = vunpack.c.l.b16 %v347
      %v914 = vunpack.c.h.b16 %v347
      %v915 = vunpack.c.l.b16 %v348
      %v916 = vunpack.c.l.b16 %v349
      %v917 = vunpack.c.h.b16 %v349
      %v918 = vunpack.c.l.b16 %v350
      %v919 = vunpack.c.h.b16 %v350
      %v920 = vunpack.c.l.b16 %v351
      %v921 = vunpack.c.h.b16 %v351
      %v922 = vunpack.c.l.b16 %v352
      %v923 = vunpack.c.h.b16 %v352
      %v924 = vunpack.c.l.b16 %v353
      %v925 = vunpack.c.l.b16 %v354
      %v926 = vunpack.c.h.b16 %v354
      %v927 = vunpack.c.l.b16 %v355
      %v928 = vunpack.c.h.b16 %v355
      %v929 = vunpack.c.l.b16 %v356
      %v930 = vunpack.c.h.b16 %v356
      %v931 = vunpack.c.l.b16 %v357
      %v932 = vunpack.c.h.b16 %v357
      %v933 = vunpack.c.l.b16 %v358
      %v934 = vunpack.c.l.b16 %v359
      %v935 = vunpack.c.h.b16 %v359
      %v936 = vunpack.c.l.b16 %v360
      %v937 = vunpack.c.h.b16 %v360
      %v938 = vunpack.c.l.b16 %v361
      %v939 = vunpack.c.h.b16 %v361
      %v940 = vunpack.c.l.b16 %v362
      %v941 = vunpack.c.h.b16 %v362
      %v942 = vunpack.c.l.b16 %v363
      %v943 = vunpack.c.l.b16 %v364
      %v944 = vunpack.c.h.b16 %v364
      %v945 = vunpack.c.l.b16 %v365
      %v946 = vunpack.c.h.b16 %v365
      %v947 = vunpack.c.l.b16 %v366
      %v948 = vunpack.c.h.b16 %v366
      %v949 = vunpack.c.l.b16 %v367
      %v950 = vunpack.c.h.b16 %v367
      %v951 = vunpack.c.l.b16 %v368
      %v952 = vunpack.c.l.b16 %v369
      %v953 = vunpack.c.h.b16 %v369
      %v954 = vunpack.c.l.b16 %v370
      %v955 = vunpack.c.h.b16 %v370
      %v956 = vunpack.c.l.b16 %v371
      %v957 = vunpack.c.h.b16 %v371
      %v958 = vunpack.c.l.b16 %v372
      %v959 = vunpack.c.h.b16 %v372
      %v960 = vunpack.c.l.b16 %v373
      %v961 = vunpack.c.l.b16 %v374
      %v962 = vunpack.c.h.b16 %v374
      %v963 = vunpack.c.l.b16 %v375
      %v964 = vunpack.c.h.b16 %v375
      %v965 = vunpack.c.l.b16 %v376
      %v966 = vunpack.c.h.b16 %v376
      %v967 = vunpack.c.l.b16 %v377
      %v968 = vunpack.c.h.b16 %v377
      %v969 = vunpack.c.l.b16 %v378
      %v970 = vunpack.c.l.b16 %v379
      %v971 = vunpack.c.h.b16 %v379
      %v972 = vunpack.c.l.b16 %v380
      %v973 = vunpack.c.h.b16 %v380
      %v974 = vunpack.c.l.b16 %v381
      %v975 = vunpack.c.h.b16 %v381
      %v976 = vunpack.c.l.b16 %v382
      %v977 = vunpack.c.h.b16 %v382
      %v978 = vunpack.c.l.b16 %v383
      %v979 = vunpack.c.l.b16 %v384
      %v980 = vunpack.c.h.b16 %v384
      %v981 = vunpack.c.l.b16 %v385
      %v982 = vunpack.c.h.b16 %v385
      %v983 = vunpack.c.l.b16 %v386
      %v984 = vunpack.c.h.b16 %v386
      %v985 = vunpack.c.l.b16 %v387
      %v986 = vunpack.c.h.b16 %v387
      %v987 = vunpack.c.l.b16 %v388
      %v988 = vpack.c.b16 %v709, %v700
      %v989 = vpack.c.b16 %v710, %v701
      %v990 = vpack.c.b16 %v711, %v702
      %v991 = vpack.c.b16 %v712, %v703
      %v992 = vpack.c.b16 %v713, %v704
      %v993 = vpack.c.b16 %v714, %v705
      %v994 = vpack.c.b16 %v715, %v706
      %v995 = vpack.c.b16 %v716, %v707
      %v996 = vpack.c.b16 %v717, %v708
      %v997 = vpack.c.b16 %v727, %v718
      %v998 = vpack.c.b16 %v728, %v719
      %v999 = vpack.c.b16 %v729, %v720
      %v1000 = vpack.c.b16 %v730, %v721
      %v1001 = vpack.c.b16 %v731, %v722
      %v1002 = vpack.c.b16 %v732, %v723
      %v1003 = vpack.c.b16 %v733, %v724
      %v1004 = vpack.c.b16 %v734, %v725
      %v1005 = vpack.c.b16 %v735, %v726
      %v1006 = vpack.c.b16 %v745, %v736
      %v1007 = vpack.c.b16 %v746, %v737
      %v1008 = vpack.c.b16 %v747, %v738
      %v1009 = vpack.c.b16 %v748, %v739
      %v1010 = vpack.c.b16 %v749, %v740
      %v1011 = vpack.c.b16 %v750, %v741
      %v1012 = vpack.c.b16 %v751, %v742
      %v1013 = vpack.c.b16 %v752, %v743
      %v1014 = vpack.c.b16 %v753, %v744
      %v1015 = vpack.c.b16 %v763, %v754
      %v1016 = vpack.c.b16 %v764, %v755
      %v1017 = vpack.c.b16 %v765, %v756
      %v1018 = vpack.c.b16 %v766, %v757
      %v1019 = vpack.c.b16 %v767, %v758
      %v1020 = vpack.c.b16 %v768, %v759
      %v1021 = vpack.c.b16 %v769, %v760
      %v1022 = vpack.c.b16 %v770, %v761
      %v1023 = vpack.c.b16 %v771, %v762
      %v1024 = vpack.c.b16 %v781, %v772
      %v1025 = vpack.c.b16 %v782, %v773
      %v1026 = vpack.c.b16 %v783, %v774
      %v1027 = vpack.c.b16 %v784, %v775
      %v1028 = vpack.c.b16 %v785, %v776
      %v1029 = vpack.c.b16 %v786, %v777
      %v1030 = vpack.c.b16 %v787, %v778
      %v1031 = vpack.c.b16 %v788, %v779
      %v1032 = vpack.c.b16 %v789, %v780
      %v1033 = vpack.c.b16 %v799, %v790
      %v1034 = vpack.c.b16 %v800, %v791
      %v1035 = vpack.c.b16 %v801, %v792
      %v1036 = vpack.c.b16 %v802, %v793
      %v1037 = vpack.c.b16 %v803, %v794
      %v1038 = vpack.c.b16 %v804, %v795
      %v1039 = vpack.c.b16 %v805, %v796
      %v1040 = vpack.c.b16 %v806, %v797
      %v1041 = vpack.c.b16 %v807, %v798
      %v1042 = vpack.c.b16 %v817, %v808
      %v1043 = vpack.c.b16 %v818, %v809
      %v1044 = vpack.c.b16 %v819, %v810
      %v1045 = vpack.c.b16 %v820, %v811
      %v1046 = vpack.c.b16 %v821, %v812
      %v1047 = vpack.c.b16 %v822, %v813
      %v1048 = vpack.c.b16 %v823, %v814
      %v1049 = vpack.c.b16 %v824, %v815
      %v1050 = vpack.c.b16 %v825, %v816
      %v1051 = vpack.c.b16 %v835, %v826
      %v1052 = vpack.c.b16 %v836, %v827
      %v1053 = vpack.c.b16 %v837, %v828
      %v1054 = vpack.c.b16 %v838, %v829
      %v1055 = vpack.c.b16 %v839, %v830
      %v1056 = vpack.c.b16 %v840, %v831
      %v1057 = vpack.c.b16 %v841, %v832
      %v1058 = vpack.c.b16 %v842, %v833
      %v1059 = vpack.c.b16 %v843, %v834
      %v1060 = vpack.c.b16 %v853, %v844
      %v1061 = vpack.c.b16 %v854, %v845
      %v1062 = vpack.c.b16 %v855, %v846
      %v1063 = vpack.c.b16 %v856, %v847
      %v1064 = vpack.c.b16 %v857, %v848
      %v1065 = vpack.c.b16 %v858, %v849
      %v1066 = vpack.c.b16 %v859, %v850
      %v1067 = vpack.c.b16 %v860, %v851
      %v1068 = vpack.c.b16 %v861, %v852
      %v1069 = vpack.c.b16 %v871, %v862
      %v1070 = vpack.c.b16 %v872, %v863
      %v1071 = vpack.c.b16 %v873, %v864
      %v1072 = vpack.c.b16 %v874, %v865
      %v1073 = vpack.c.b16 %v875, %v866
      %v1074 = vpack.c.b16 %v876, %v867
      %v1075 = vpack.c.b16 %v877, %v868
      %v1076 = vpack.c.b16 %v878, %v869
      %v1077 = vpack.c.b16 %v879, %v870
      %v1078 = vpack.c.b16 %v889, %v880
      %v1079 = vpack.c.b16 %v890, %v881
      %v1080 = vpack.c.b16 %v891, %v882
      %v1081 = vpack.c.b16 %v892, %v883
      %v1082 = vpack.c.b16 %v893, %v884
      %v1083 = vpack.c.b16 %v894, %v885
      %v1084 = vpack.c.b16 %v895, %v886
      %v1085 = vpack.c.b16 %v896, %v887
      %v1086 = vpack.c.b16 %v897, %v888
      %v1087 = vpack.c.b16 %v907, %v898
      %v1088 = vpack.c.b16 %v908, %v899
      %v1089 = vpack.c.b16 %v909, %v900
      %v1090 = vpack.c.b16 %v910, %v901
      %v1091 = vpack.c.b16 %v911, %v902
      %v1092 = vpack.c.b16 %v912, %v903
      %v1093 = vpack.c.b16 %v913, %v904
      %v1094 = vpack.c.b16 %v914, %v905
      %v1095 = vpack.c.b16 %v915, %v906
      %v1096 = vpack.c.b16 %v925, %v916
      %v1097 = vpack.c.b16 %v926, %v917
      %v1098 = vpack.c.b16 %v927, %v918
      %v1099 = vpack.c.b16 %v928, %v919
      %v1100 = vpack.c.b16 %v929, %v920
      %v1101 = vpack.c.b16 %v930, %v921
      %v1102 = vpack.c.b16 %v931, %v922
      %v1103 = vpack.c.b16 %v932, %v923
      %v1104 = vpack.c.b16 %v933, %v924
      %v1105 = vpack.c.b16 %v943, %v934
      %v1106 = vpack.c.b16 %v944, %v935
      %v1107 = vpack.c.b16 %v945, %v936
      %v1108 = vpack.c.b16 %v946, %v937
      %v1109 = vpack.c.b16 %v947, %v938
      %v1110 = vpack.c.b16 %v948, %v939
      %v1111 = vpack.c.b16 %v949, %v940
      %v1112 = vpack.c.b16 %v950, %v941
      %v1113 = vpack.c.b16 %v951, %v942
      %v1114 = vpack.c.b16 %v961, %v952
      %v1115 = vpack.c.b16 %v962, %v953
      %v1116 = vpack.c.b16 %v963, %v954
      %v1117 = vpack.c.b16 %v964, %v955
      %v1118 = vpack.c.b16 %v965, %v956
      %v1119 = vpack.c.b16 %v966, %v957
      %v1120 = vpack.c.b16 %v967, %v958
      %v1121 = vpack.c.b16 %v968, %v959
      %v1122 = vpack.c.b16 %v969, %v960
      %v1123 = vpack.c.b16 %v979, %v970
      %v1124 = vpack.c.b16 %v980, %v971
      %v1125 = vpack.c.b16 %v981, %v972
      %v1126 = vpack.c.b16 %v982, %v973
      %v1127 = vpack.c.b16 %v983, %v974
      %v1128 = vpack.c.b16 %v984, %v975
      %v1129 = vpack.c.b16 %v985, %v976
      %v1130 = vpack.c.b16 %v986, %v977
      %v1131 = vpack.c.b16 %v987, %v978
      %v1420 = vunpack.c.l.b16 %v389
      %v1421 = vunpack.c.l.b16 %v390
      %v1422 = vunpack.c.l.b16 %v391
      %v1423 = vunpack.c.l.b16 %v392
      %v1424 = vunpack.c.l.b16 %v393
      %v1425 = vunpack.c.l.b16 %v394
      %v1426 = vunpack.c.l.b16 %v395
      %v1427 = vunpack.c.l.b16 %v396
      %v1428 = vunpack.c.l.b16 %v397
      %v1429 = vunpack.c.l.b16 %v398
      %v1430 = vunpack.c.l.b16 %v399
      %v1431 = vunpack.c.l.b16 %v400
      %v1432 = vunpack.c.l.b16 %v401
      %v1433 = vunpack.c.l.b16 %v402
      %v1434 = vunpack.c.l.b16 %v403
      %v1435 = vunpack.c.l.b16 %v404
      %v1436 = vunpack.c.l.b16 %v405
      %v1437 = vunpack.c.l.b16 %v406
      %v1438 = vunpack.c.l.b16 %v407
      %v1439 = vunpack.c.l.b16 %v408
      %v1440 = vunpack.c.l.b16 %v409
      %v1441 = vunpack.c.l.b16 %v410
      %v1442 = vunpack.c.l.b16 %v411
      %v1443 = vunpack.c.l.b16 %v412
      %v1444 = vunpack.c.l.b16 %v413
      %v1445 = vunpack.c.l.b16 %v414
      %v1446 = vunpack.c.l.b16 %v415
      %v1447 = vunpack.c.l.b16 %v416
      %v1448 = vunpack.c.l.b16 %v417
      %v1449 = vunpack.c.l.b16 %v418
      %v1450 = vunpack.c.l.b16 %v419
      %v1451 = vunpack.c.l.b16 %v420
      %v1452 = vunpack.c.l.b16 %v421
      %v1453 = vunpack.c.l.b16 %v422
      %v1454 = vunpack.c.l.b16 %v423
      %v1455 = vunpack.c.l.b16 %v424
      %v1456 = vunpack.c.l.b16 %v425
      %v1457 = vunpack.c.l.b16 %v426
      %v1458 = vunpack.c.l.b16 %v427
      %v1459 = vunpack.c.l.b16 %v428
      %v1460 = vunpack.c.l.b16 %v429
      %v1461 = vunpack.c.l.b16 %v430
      %v1462 = vunpack.c.l.b16 %v431
      %v1463 = vunpack.c.l.b16 %v432
      %v1464 = vunpack.c.l.b16 %v433
      %v1465 = vunpack.c.l.b16 %v434
      %v1466 = vunpack.c.l.b16 %v435
      %v1467 = vunpack.c.l.b16 %v436
      %v1468 = vunpack.c.l.b16 %v437
      %v1469 = vunpack.c.l.b16 %v438
      %v1470 = vunpack.c.l.b16 %v439
      %v1471 = vunpack.c.l.b16 %v440
      %v1472 = vunpack.c.l.b16 %v441
      %v1473 = vunpack.c.l.b16 %v442
      %v1474 = vunpack.c.l.b16 %v443
      %v1475 = vunpack.c.l.b16 %v444
      %v1476 = vunpack.c.l.b16 %v445
      %v1477 = vunpack.c.l.b16 %v446
      %v1478 = vunpack.c.l.b16 %v447
      %v1479 = vunpack.c.l.b16 %v448
      %v1480 = vunpack.c.l.b16 %v449
      %v1481 = vunpack.c.l.b16 %v450
      %v1482 = vunpack.c.l.b16 %v451
      %v1483 = vunpack.c.l.b16 %v452
      %v1484 = vunpack.c.l.b16 %v453
      %v1485 = vunpack.c.l.b16 %v454
      %v1486 = vunpack.c.l.b16 %v455
      %v1487 = vunpack.c.l.b16 %v456
      %v1488 = vunpack.c.l.b16 %v457
      %v1489 = vunpack.c.l.b16 %v458
      %v1490 = vunpack.c.l.b16 %v459
      %v1491 = vunpack.c.l.b16 %v460
      %v1492 = vunpack.c.l.b16 %v461
      %v1493 = vunpack.c.l.b16 %v462
      %v1494 = vunpack.c.l.b16 %v463
      %v1495 = vunpack.c.l.b16 %v464
      %v1496 = vunpack.c.l.b16 %v465
      %v1497 = vunpack.c.l.b16 %v466
      %v1498 = vunpack.c.l.b16 %v467
      %v1499 = vunpack.c.l.b16 %v468
      %v1500 = vunpack.c.l.b16 %v469
      %v1501 = vunpack.c.l.b16 %v470
      %v1502 = vunpack.c.l.b16 %v471
      %v1503 = vunpack.c.l.b16 %v472
      %v1504 = vunpack.c.l.b16 %v473
      %v1505 = vunpack.c.l.b16 %v474
      %v1506 = vunpack.c.l.b16 %v475
      %v1507 = vunpack.c.l.b16 %v476
      %v1508 = vunpack.c.l.b16 %v477
      %v1509 = vunpack.c.l.b16 %v478
      %v1510 = vunpack.c.l.b16 %v479
      %v1511 = vunpack.c.l.b16 %v480
      %v1512 = vunpack.c.l.b16 %v481
      %v1513 = vunpack.c.l.b16 %v482
      %v1514 = vunpack.c.l.b16 %v483
      %v1515 = vunpack.c.l.b16 %v484
      %v1516 = vunpack.c.l.b16 %v485
      %v1517 = vunpack.c.l.b16 %v486
      %v1518 = vunpack.c.l.b16 %v487
      %v1519 = vunpack.c.l.b16 %v488
      %v1520 = vunpack.c.l.b16 %v489
      %v1521 = vunpack.c.l.b16 %v490
      %v1522 = vunpack.c.l.b16 %v491
      %v1523 = vunpack.c.l.b16 %v492
      %v1524 = vunpack.c.l.b16 %v493
      %v1525 = vunpack.c.l.b16 %v494
      %v1526 = vunpack.c.l.b16 %v495
      %v1527 = vunpack.c.l.b16 %v496
      %v1528 = vunpack.c.l.b16 %v497
      %v1529 = vunpack.c.l.b16 %v498
      %v1530 = vunpack.c.l.b16 %v499
      %v1531 = vunpack.c.l.b16 %v500
      %v1532 = vunpack.c.l.b16 %v501
      %v1533 = vunpack.c.l.b16 %v502
      %v1534 = vunpack.c.l.b16 %v503
      %v1535 = vunpack.c.l.b16 %v504
      %v1536 = vunpack.c.l.b16 %v505
      %v1537 = vunpack.c.l.b16 %v506
      %v1538 = vunpack.c.l.b16 %v507
      %v1539 = vunpack.c.l.b16 %v508
      %v1540 = vunpack.c.l.b16 %v509
      %v1541 = vunpack.c.l.b16 %v510
      %v1542 = vunpack.c.l.b16 %v511
      %v1543 = vunpack.c.l.b16 %v512
      %v1544 = vunpack.c.l.b16 %v513
      %v1545 = vunpack.c.l.b16 %v514
      %v1546 = vunpack.c.l.b16 %v515
      %v1547 = vunpack.c.l.b16 %v516
      %v1548 = vunpack.c.l.b16 %v517
      %v1549 = vunpack.c.l.b16 %v518
      %v1550 = vunpack.c.l.b16 %v519
      %v1551 = vunpack.c.l.b16 %v520
      %v1552 = vunpack.c.l.b16 %v521
      %v1553 = vunpack.c.l.b16 %v522
      %v1554 = vunpack.c.l.b16 %v523
      %v1555 = vunpack.c.l.b16 %v524
      %v1556 = vunpack.c.l.b16 %v525
      %v1557 = vunpack.c.l.b16 %v526
      %v1558 = vunpack.c.l.b16 %v527
      %v1559 = vunpack.c.l.b16 %v528
      %v1560 = vunpack.c.l.b16 %v529
      %v1561 = vunpack.c.l.b16 %v530
      %v1562 = vunpack.c.l.b16 %v531
      %v1563 = vunpack.c.l.b16 %v532
      %v1564 = vpack.c.b16 %v1421, %v1420
      %v1565 = vpack.c.b16 %v1423, %v1422
      %v1566 = vpack.c.b16 %v1425, %v1424
      %v1567 = vpack.c.b16 %v1427, %v1426
      %v1568 = vpack.c.b16 %v1429, %v1428
      %v1569 = vpack.c.b16 %v1431, %v1430
      %v1570 = vpack.c.b16 %v1433, %v1432
      %v1571 = vpack.c.b16 %v1435, %v1434
      %v1572 = vpack.c.b16 %v1437, %v1436
      %v1573 = vpack.c.b16 %v1439, %v1438
      %v1574 = vpack.c.b16 %v1441, %v1440
      %v1575 = vpack.c.b16 %v1443, %v1442
      %v1576 = vpack.c.b16 %v1445, %v1444
      %v1577 = vpack.c.b16 %v1447, %v1446
      %v1578 = vpack.c.b16 %v1449, %v1448
      %v1579 = vpack.c.b16 %v1451, %v1450
      %v1580 = vpack.c.b16 %v1453, %v1452
      %v1581 = vpack.c.b16 %v1455, %v1454
      %v1582 = vpack.c.b16 %v1457, %v1456
      %v1583 = vpack.c.b16 %v1459, %v1458
      %v1584 = vpack.c.b16 %v1461, %v1460
      %v1585 = vpack.c.b16 %v1463, %v1462
      %v1586 = vpack.c.b16 %v1465, %v1464
      %v1587 = vpack.c.b16 %v1467, %v1466
      %v1588 = vpack.c.b16 %v1469, %v1468
      %v1589 = vpack.c.b16 %v1471, %v1470
      %v1590 = vpack.c.b16 %v1473, %v1472
      %v1591 = vpack.c.b16 %v1475, %v1474
      %v1592 = vpack.c.b16 %v1477, %v1476
      %v1593 = vpack.c.b16 %v1479, %v1478
      %v1594 = vpack.c.b16 %v1481, %v1480
      %v1595 = vpack.c.b16 %v1483, %v1482
      %v1596 = vpack.c.b16 %v1485, %v1484
      %v1597 = vpack.c.b16 %v1487, %v1486
      %v1598 = vpack.c.b16 %v1489, %v1488
      %v1599 = vpack.c.b16 %v1491, %v1490
      %v1600 = vpack.c.b16 %v1493, %v1492
      %v1601 = vpack.c.b16 %v1495, %v1494
      %v1602 = vpack.c.b16 %v1497, %v1496
      %v1603 = vpack.c.b16 %v1499, %v1498
      %v1604 = vpack.c.b16 %v1501, %v1500
      %v1605 = vpack.c.b16 %v1503, %v1502
      %v1606 = vpack.c.b16 %v1505, %v1504
      %v1607 = vpack.c.b16 %v1507, %v1506
      %v1608 = vpack.c.b16 %v1509, %v1508
      %v1609 = vpack.c.b16 %v1511, %v1510
      %v1610 = vpack.c.b16 %v1513, %v1512
      %v1611 = vpack.c.b16 %v1515, %v1514
      %v1612 = vpack.c.b16 %v1517, %v1516
      %v1613 = vpack.c.b16 %v1519, %v1518
      %v1614 = vpack.c.b16 %v1521, %v1520
      %v1615 = vpack.c.b16 %v1523, %v1522
      %v1616 = vpack.c.b16 %v1525, %v1524
      %v1617 = vpack.c.b16 %v1527, %v1526
      %v1618 = vpack.c.b16 %v1529, %v1528
      %v1619 = vpack.c.b16 %v1531, %v1530
      %v1620 = vpack.c.b16 %v1533, %v1532
      %v1621 = vpack.c.b16 %v1535, %v1534
      %v1622 = vpack.c.b16 %v1537, %v1536
      %v1623 = vpack.c.b16 %v1539, %v1538
      %v1624 = vpack.c.b16 %v1541, %v1540
      %v1625 = vpack.c.b16 %v1543, %v1542
      %v1626 = vpack.c.b16 %v1545, %v1544
      %v1627 = vpack.c.b16 %v1547, %v1546
      %v1628 = vpack.c.b16 %v1549, %v1548
      %v1629 = vpack.c.b16 %v1551, %v1550
      %v1630 = vpack.c.b16 %v1553, %v1552
      %v1631 = vpack.c.b16 %v1555, %v1554
      %v1632 = vpack.c.b16 %v1557, %v1556
      %v1633 = vpack.c.b16 %v1559, %v1558
      %v1634 = vpack.c.b16 %v1561, %v1560
      %v1635 = vpack.c.b16 %v1563, %v1562
      %1708 = vmatprep.subr.bf16.mxu0 0
      %1709 = vmatpush1.bf16.msra.mxu0 %v1564
      %1710 = vmatprep.subr.bf16.mxu0 0
      %1711 = vmatpush1.bf16.msra.mxu0 %v1565
      %1712 = vmatprep.subr.bf16.mxu0 0
      %1713 = vmatpush1.bf16.msra.mxu0 %v1566
      %1714 = vmatprep.subr.bf16.mxu0 0
      %1715 = vmatpush1.bf16.msra.mxu0 %v1567
      %1716 = vmatprep.subr.bf16.mxu0 0
      %1717 = vmatpush1.bf16.msra.mxu0 %v1568
      %1718 = vmatprep.subr.bf16.mxu0 0
      %1719 = vmatpush1.bf16.msra.mxu0 %v1569
      %1720 = vmatprep.subr.bf16.mxu0 0
      %1721 = vmatpush1.bf16.msra.mxu0 %v1570
      %1722 = vmatprep.subr.bf16.mxu0 0
      %1723 = vmatpush1.bf16.msra.mxu0 %v1571
      %1724 = vmatprep.subr.bf16.mxu0 0
      %1725 = vmatpush1.bf16.msra.mxu0 %v1572
      %1726 = vmatprep.subr.bf16.mxu0 0
      %1727 = vmatpush1.bf16.msra.mxu0 %v1573
      %1728 = vmatprep.subr.bf16.mxu0 0
      %1729 = vmatpush1.bf16.msra.mxu0 %v1574
      %1730 = vmatprep.subr.bf16.mxu0 0
      %1731 = vmatpush1.bf16.msra.mxu0 %v1575
      %1732 = vmatprep.subr.bf16.mxu0 0
      %1733 = vmatpush1.bf16.msra.mxu0 %v1576
      %1734 = vmatprep.subr.bf16.mxu0 0
      %1735 = vmatpush1.bf16.msra.mxu0 %v1577
      %1736 = vmatprep.subr.bf16.mxu0 0
      %1737 = vmatpush1.bf16.msra.mxu0 %v1578
      %1738 = vmatprep.subr.bf16.mxu0 0
      %1739 = vmatpush1.bf16.msra.mxu0 %v1579
      %1740 = vmatprep.mubr.bf16.mxu0 %v989
      %1741 = vmatmul.mubr.bf16.gmra.mrb[0].mxu0 %v988
      %v1742 = vpop.f32.mrb[0].mxu0
      %v1743 = vadd.f32 %v538, %v1742
      %v1744 = vpop.f32.mrb[0].mxu0
      %v1745 = vpop.f32.mrb[0].mxu0
      %v1746 = vadd.f32 %v538, %v1745
      %v1747 = vpop.f32.mrb[0].mxu0
      %1748 = vmatprep.mubr.bf16.mxu0 %v998
      %1749 = vmatmul.mubr.bf16.gmra.mrb[0].mxu0 %v997
      %v1750 = vpop.f32.mrb[0].mxu0
      %v1751 = vadd.f32 %v538, %v1750
      %v1752 = vpop.f32.mrb[0].mxu0
      %v1753 = vpop.f32.mrb[0].mxu0
      %v1754 = vadd.f32 %v538, %v1753
      %v1755 = vpop.f32.mrb[0].mxu0
      %1756 = vmatprep.mubr.bf16.mxu0 %v1007
      %1757 = vmatmul.mubr.bf16.gmra.mrb[0].mxu0 %v1006
      %v1758 = vpop.f32.mrb[0].mxu0
      %v1759 = vadd.f32 %v538, %v1758
      %v1760 = vpop.f32.mrb[0].mxu0
      %v1761 = vpop.f32.mrb[0].mxu0
      %v1762 = vadd.f32 %v538, %v1761
      %v1763 = vpop.f32.mrb[0].mxu0
      %1764 = vmatprep.mubr.bf16.mxu0 %v1016
      %1765 = vmatmul.mubr.bf16.gmra.mrb[0].mxu0 %v1015
      %v1766 = vpop.f32.mrb[0].mxu0
      %v1767 = vadd.f32 %v538, %v1766
      %v1768 = vpop.f32.mrb[0].mxu0
      %v1769 = vpop.f32.mrb[0].mxu0
      %v1770 = vadd.f32 %v538, %v1769
      %v1771 = vpop.f32.mrb[0].mxu0
      %1772 = vmatprep.mubr.bf16.mxu0 %v1025
      %1773 = vmatmul.mubr.bf16.gmra.mrb[0].mxu0 %v1024
      %v1774 = vpop.f32.mrb[0].mxu0
      %v1775 = vadd.f32 %v538, %v1774
      %v1776 = vpop.f32.mrb[0].mxu0
      %v1777 = vpop.f32.mrb[0].mxu0
      %v1778 = vadd.f32 %v538, %v1777
      %v1779 = vpop.f32.mrb[0].mxu0
      %1780 = vmatprep.mubr.bf16.mxu0 %v1034
      %1781 = vmatmul.mubr.bf16.gmra.mrb[0].mxu0 %v1033
      %v1782 = vpop.f32.mrb[0].mxu0
      %v1783 = vadd.f32 %v538, %v1782
      %v1784 = vpop.f32.mrb[0].mxu0
      %v1785 = vpop.f32.mrb[0].mxu0
      %v1786 = vadd.f32 %v538, %v1785
      %v1787 = vpop.f32.mrb[0].mxu0
      %1788 = vmatprep.mubr.bf16.mxu0 %v1043
      %1789 = vmatmul.mubr.bf16.gmra.mrb[0].mxu0 %v1042
      %v1790 = vpop.f32.mrb[0].mxu0
      %v1791 = vadd.f32 %v538, %v1790
      %v1792 = vpop.f32.mrb[0].mxu0
      %v1793 = vpop.f32.mrb[0].mxu0
      %v1794 = vadd.f32 %v538, %v1793
      %v1795 = vpop.f32.mrb[0].mxu0
      %1796 = vmatprep.mubr.bf16.mxu0 %v1052
      %1797 = vmatmul.mubr.bf16.gmra.mrb[0].mxu0 %v1051
      %v1798 = vpop.f32.mrb[0].mxu0
      %v1799 = vadd.f32 %v538, %v1798
      %v1800 = vpop.f32.mrb[0].mxu0
      %v1801 = vpop.f32.mrb[0].mxu0
      %v1802 = vadd.f32 %v538, %v1801
      %v1803 = vpop.f32.mrb[0].mxu0
      %1804 = vmatprep.mubr.bf16.mxu0 %v1061
      %1805 = vmatmul.mubr.bf16.gmra.mrb[0].mxu0 %v1060
      %v1806 = vpop.f32.mrb[0].mxu0
      %v1807 = vadd.f32 %v538, %v1806
      %v1808 = vpop.f32.mrb[0].mxu0
      %v1809 = vpop.f32.mrb[0].mxu0
      %v1810 = vadd.f32 %v538, %v1809
      %v1811 = vpop.f32.mrb[0].mxu0
      %1812 = vmatprep.mubr.bf16.mxu0 %v1070
      %1813 = vmatmul.mubr.bf16.gmra.mrb[0].mxu0 %v1069
      %v1814 = vpop.f32.mrb[0].mxu0
      %v1815 = vadd.f32 %v538, %v1814
      %v1816 = vpop.f32.mrb[0].mxu0
      %v1817 = vpop.f32.mrb[0].mxu0
      %v1818 = vadd.f32 %v538, %v1817
      %v1819 = vpop.f32.mrb[0].mxu0
      %1820 = vmatprep.mubr.bf16.mxu0 %v1079
      %1821 = vmatmul.mubr.bf16.gmra.mrb[0].mxu0 %v1078
      %v1822 = vpop.f32.mrb[0].mxu0
      %v1823 = vadd.f32 %v538, %v1822
      %v1824 = vpop.f32.mrb[0].mxu0
      %v1825 = vpop.f32.mrb[0].mxu0
      %v1826 = vadd.f32 %v538, %v1825
      %v1827 = vpop.f32.mrb[0].mxu0
      %1828 = vmatprep.mubr.bf16.mxu0 %v1088
      %1829 = vmatmul.mubr.bf16.gmra.mrb[0].mxu0 %v1087
      %v1830 = vpop.f32.mrb[0].mxu0
      %v1831 = vadd.f32 %v538, %v1830
      %v1832 = vpop.f32.mrb[0].mxu0
      %v1833 = vpop.f32.mrb[0].mxu0
      %v1834 = vadd.f32 %v538, %v1833
      %v1835 = vpop.f32.mrb[0].mxu0
      %1836 = vmatprep.mubr.bf16.mxu0 %v1097
      %1837 = vmatmul.mubr.bf16.gmra.mrb[0].mxu0 %v1096
      %v1838 = vpop.f32.mrb[0].mxu0
      %v1839 = vadd.f32 %v538, %v1838
      %v1840 = vpop.f32.mrb[0].mxu0
      %v1841 = vpop.f32.mrb[0].mxu0
      %v1842 = vadd.f32 %v538, %v1841
      %v1843 = vpop.f32.mrb[0].mxu0
      %1844 = vmatprep.mubr.bf16.mxu0 %v1106
      %1845 = vmatmul.mubr.bf16.gmra.mrb[0].mxu0 %v1105
      %v1846 = vpop.f32.mrb[0].mxu0
      %v1847 = vadd.f32 %v538, %v1846
      %v1848 = vpop.f32.mrb[0].mxu0
      %v1849 = vpop.f32.mrb[0].mxu0
      %v1850 = vadd.f32 %v538, %v1849
      %v1851 = vpop.f32.mrb[0].mxu0
      %1852 = vmatprep.mubr.bf16.mxu0 %v1115
      %1853 = vmatmul.mubr.bf16.gmra.mrb[0].mxu0 %v1114
      %v1854 = vpop.f32.mrb[0].mxu0
      %v1855 = vadd.f32 %v538, %v1854
      %v1856 = vpop.f32.mrb[0].mxu0
      %v1857 = vpop.f32.mrb[0].mxu0
      %v1858 = vadd.f32 %v538, %v1857
      %v1859 = vpop.f32.mrb[0].mxu0
      %1860 = vmatprep.mubr.bf16.mxu0 %v1124
      %1861 = vmatmul.mubr.bf16.gmra.mrb[0].mxu0 %v1123
      %v1862 = vpop.f32.mrb[0].mxu0
      %v1863 = vadd.f32 %v538, %v1862
      %v1864 = vpop.f32.mrb[0].mxu0
      %v1865 = vpop.f32.mrb[0].mxu0
      %v1866 = vadd.f32 %v538, %v1865
      %v1867 = vpop.f32.mrb[0].mxu0
      %1868 = vdwg.mxu0
      %1869 = vmatprep.subr.bf16.mxu0 0
      %1870 = vmatpush1.bf16.msra.mxu0 %v1580
      %1871 = vmatprep.subr.bf16.mxu0 0
      %1872 = vmatpush1.bf16.msra.mxu0 %v1581
      %1873 = vmatprep.subr.bf16.mxu0 0
      %1874 = vmatpush1.bf16.msra.mxu0 %v1582
      %1875 = vmatprep.subr.bf16.mxu0 0
      %1876 = vmatpush1.bf16.msra.mxu0 %v1583
      %1877 = vmatprep.subr.bf16.mxu0 0
      %1878 = vmatpush1.bf16.msra.mxu0 %v1584
      %1879 = vmatprep.subr.bf16.mxu0 0
      %1880 = vmatpush1.bf16.msra.mxu0 %v1585
      %1881 = vmatprep.subr.bf16.mxu0 0
      %1882 = vmatpush1.bf16.msra.mxu0 %v1586
      %1883 = vmatprep.subr.bf16.mxu0 0
      %1884 = vmatpush1.bf16.msra.mxu0 %v1587
      %1885 = vmatprep.subr.bf16.mxu0 0
      %1886 = vmatpush1.bf16.msra.mxu0 %v1588
      %1887 = vmatprep.subr.bf16.mxu0 0
      %1888 = vmatpush1.bf16.msra.mxu0 %v1589
      %1889 = vmatprep.subr.bf16.mxu0 0
      %1890 = vmatpush1.bf16.msra.mxu0 %v1590
      %1891 = vmatprep.subr.bf16.mxu0 0
      %1892 = vmatpush1.bf16.msra.mxu0 %v1591
      %1893 = vmatprep.subr.bf16.mxu0 0
      %1894 = vmatpush1.bf16.msra.mxu0 %v1592
      %1895 = vmatprep.subr.bf16.mxu0 0
      %1896 = vmatpush1.bf16.msra.mxu0 %v1593
      %1897 = vmatprep.subr.bf16.mxu0 0
      %1898 = vmatpush1.bf16.msra.mxu0 %v1594
      %1899 = vmatprep.subr.bf16.mxu0 0
      %1900 = vmatpush1.bf16.msra.mxu0 %v1595
      %1901 = vmatprep.mubr.bf16.mxu0 %v991
      %1902 = vmatmul.mubr.bf16.gmra.mrb[0].mxu0 %v990
      %v1903 = vpop.f32.mrb[0].mxu0
      %v1904 = vadd.f32 %v1743, %v1903
      %v1905 = vpop.f32.mrb[0].mxu0
      %v1906 = vpop.f32.mrb[0].mxu0
      %v1907 = vadd.f32 %v1746, %v1906
      %v1908 = vpop.f32.mrb[0].mxu0
      %1909 = vmatprep.mubr.bf16.mxu0 %v1000
      %1910 = vmatmul.mubr.bf16.gmra.mrb[0].mxu0 %v999
      %v1911 = vpop.f32.mrb[0].mxu0
      %v1912 = vadd.f32 %v1751, %v1911
      %v1913 = vpop.f32.mrb[0].mxu0
      %v1914 = vpop.f32.mrb[0].mxu0
      %v1915 = vadd.f32 %v1754, %v1914
      %v1916 = vpop.f32.mrb[0].mxu0
      %1917 = vmatprep.mubr.bf16.mxu0 %v1009
      %1918 = vmatmul.mubr.bf16.gmra.mrb[0].mxu0 %v1008
      %v1919 = vpop.f32.mrb[0].mxu0
      %v1920 = vadd.f32 %v1759, %v1919
      %v1921 = vpop.f32.mrb[0].mxu0
      %v1922 = vpop.f32.mrb[0].mxu0
      %v1923 = vadd.f32 %v1762, %v1922
      %v1924 = vpop.f32.mrb[0].mxu0
      %1925 = vmatprep.mubr.bf16.mxu0 %v1018
      %1926 = vmatmul.mubr.bf16.gmra.mrb[0].mxu0 %v1017
      %v1927 = vpop.f32.mrb[0].mxu0
      %v1928 = vadd.f32 %v1767, %v1927
      %v1929 = vpop.f32.mrb[0].mxu0
      %v1930 = vpop.f32.mrb[0].mxu0
      %v1931 = vadd.f32 %v1770, %v1930
      %v1932 = vpop.f32.mrb[0].mxu0
      %1933 = vmatprep.mubr.bf16.mxu0 %v1027
      %1934 = vmatmul.mubr.bf16.gmra.mrb[0].mxu0 %v1026
      %v1935 = vpop.f32.mrb[0].mxu0
      %v1936 = vadd.f32 %v1775, %v1935
      %v1937 = vpop.f32.mrb[0].mxu0
      %v1938 = vpop.f32.mrb[0].mxu0
      %v1939 = vadd.f32 %v1778, %v1938
      %v1940 = vpop.f32.mrb[0].mxu0
      %1941 = vmatprep.mubr.bf16.mxu0 %v1036
      %1942 = vmatmul.mubr.bf16.gmra.mrb[0].mxu0 %v1035
      %v1943 = vpop.f32.mrb[0].mxu0
      %v1944 = vadd.f32 %v1783, %v1943
      %v1945 = vpop.f32.mrb[0].mxu0
      %v1946 = vpop.f32.mrb[0].mxu0
      %v1947 = vadd.f32 %v1786, %v1946
      %v1948 = vpop.f32.mrb[0].mxu0
      %1949 = vmatprep.mubr.bf16.mxu0 %v1045
      %1950 = vmatmul.mubr.bf16.gmra.mrb[0].mxu0 %v1044
      %v1951 = vpop.f32.mrb[0].mxu0
      %v1952 = vadd.f32 %v1791, %v1951
      %v1953 = vpop.f32.mrb[0].mxu0
      %v1954 = vpop.f32.mrb[0].mxu0
      %v1955 = vadd.f32 %v1794, %v1954
      %v1956 = vpop.f32.mrb[0].mxu0
      %1957 = vmatprep.mubr.bf16.mxu0 %v1054
      %1958 = vmatmul.mubr.bf16.gmra.mrb[0].mxu0 %v1053
      %v1959 = vpop.f32.mrb[0].mxu0
      %v1960 = vadd.f32 %v1799, %v1959
      %v1961 = vpop.f32.mrb[0].mxu0
      %v1962 = vpop.f32.mrb[0].mxu0
      %v1963 = vadd.f32 %v1802, %v1962
      %v1964 = vpop.f32.mrb[0].mxu0
      %1965 = vmatprep.mubr.bf16.mxu0 %v1063
      %1966 = vmatmul.mubr.bf16.gmra.mrb[0].mxu0 %v1062
      %v1967 = vpop.f32.mrb[0].mxu0
      %v1968 = vadd.f32 %v1807, %v1967
      %v1969 = vpop.f32.mrb[0].mxu0
      %v1970 = vpop.f32.mrb[0].mxu0
      %v1971 = vadd.f32 %v1810, %v1970
      %v1972 = vpop.f32.mrb[0].mxu0
      %1973 = vmatprep.mubr.bf16.mxu0 %v1072
      %1974 = vmatmul.mubr.bf16.gmra.mrb[0].mxu0 %v1071
      %v1975 = vpop.f32.mrb[0].mxu0
      %v1976 = vadd.f32 %v1815, %v1975
      %v1977 = vpop.f32.mrb[0].mxu0
      %v1978 = vpop.f32.mrb[0].mxu0
      %v1979 = vadd.f32 %v1818, %v1978
      %v1980 = vpop.f32.mrb[0].mxu0
      %1981 = vmatprep.mubr.bf16.mxu0 %v1081
      %1982 = vmatmul.mubr.bf16.gmra.mrb[0].mxu0 %v1080
      %v1983 = vpop.f32.mrb[0].mxu0
      %v1984 = vadd.f32 %v1823, %v1983
      %v1985 = vpop.f32.mrb[0].mxu0
      %v1986 = vpop.f32.mrb[0].mxu0
      %v1987 = vadd.f32 %v1826, %v1986
      %v1988 = vpop.f32.mrb[0].mxu0
      %1989 = vmatprep.mubr.bf16.mxu0 %v1090
      %1990 = vmatmul.mubr.bf16.gmra.mrb[0].mxu0 %v1089
      %v1991 = vpop.f32.mrb[0].mxu0
      %v1992 = vadd.f32 %v1831, %v1991
      %v1993 = vpop.f32.mrb[0].mxu0
      %v1994 = vpop.f32.mrb[0].mxu0
      %v1995 = vadd.f32 %v1834, %v1994
      %v1996 = vpop.f32.mrb[0].mxu0
      %1997 = vmatprep.mubr.bf16.mxu0 %v1099
      %1998 = vmatmul.mubr.bf16.gmra.mrb[0].mxu0 %v1098
      %v1999 = vpop.f32.mrb[0].mxu0
      %v2000 = vadd.f32 %v1839, %v1999
      %v2001 = vpop.f32.mrb[0].mxu0
      %v2002 = vpop.f32.mrb[0].mxu0
      %v2003 = vadd.f32 %v1842, %v2002
      %v2004 = vpop.f32.mrb[0].mxu0
      %2005 = vmatprep.mubr.bf16.mxu0 %v1108
      %2006 = vmatmul.mubr.bf16.gmra.mrb[0].mxu0 %v1107
      %v2007 = vpop.f32.mrb[0].mxu0
      %v2008 = vadd.f32 %v1847, %v2007
      %v2009 = vpop.f32.mrb[0].mxu0
      %v2010 = vpop.f32.mrb[0].mxu0
      %v2011 = vadd.f32 %v1850, %v2010
      %v2012 = vpop.f32.mrb[0].mxu0
      %2013 = vmatprep.mubr.bf16.mxu0 %v1117
      %2014 = vmatmul.mubr.bf16.gmra.mrb[0].mxu0 %v1116
      %v2015 = vpop.f32.mrb[0].mxu0
      %v2016 = vadd.f32 %v1855, %v2015
      %v2017 = vpop.f32.mrb[0].mxu0
      %v2018 = vpop.f32.mrb[0].mxu0
      %v2019 = vadd.f32 %v1858, %v2018
      %v2020 = vpop.f32.mrb[0].mxu0
      %2021 = vmatprep.mubr.bf16.mxu0 %v1126
      %2022 = vmatmul.mubr.bf16.gmra.mrb[0].mxu0 %v1125
      %v2023 = vpop.f32.mrb[0].mxu0
      %v2024 = vadd.f32 %v1863, %v2023
      %v2025 = vpop.f32.mrb[0].mxu0
      %v2026 = vpop.f32.mrb[0].mxu0
      %v2027 = vadd.f32 %v1866, %v2026
      %v2028 = vpop.f32.mrb[0].mxu0
      %2029 = vdwg.mxu0
      %2030 = vmatprep.subr.bf16.mxu0 0
      %2031 = vmatpush1.bf16.msra.mxu0 %v1596
      %2032 = vmatprep.subr.bf16.mxu0 0
      %2033 = vmatpush1.bf16.msra.mxu0 %v1597
      %2034 = vmatprep.subr.bf16.mxu0 0
      %2035 = vmatpush1.bf16.msra.mxu0 %v1598
      %2036 = vmatprep.subr.bf16.mxu0 0
      %2037 = vmatpush1.bf16.msra.mxu0 %v1599
      %2038 = vmatprep.subr.bf16.mxu0 0
      %2039 = vmatpush1.bf16.msra.mxu0 %v1600
      %2040 = vmatprep.subr.bf16.mxu0 0
      %2041 = vmatpush1.bf16.msra.mxu0 %v1601
      %2042 = vmatprep.subr.bf16.mxu0 0
      %2043 = vmatpush1.bf16.msra.mxu0 %v1602
      %2044 = vmatprep.subr.bf16.mxu0 0
      %2045 = vmatpush1.bf16.msra.mxu0 %v1603
      %2046 = vmatprep.subr.bf16.mxu0 0
      %2047 = vmatpush1.bf16.msra.mxu0 %v1604
      %2048 = vmatprep.subr.bf16.mxu0 0
      %2049 = vmatpush1.bf16.msra.mxu0 %v1605
      %2050 = vmatprep.subr.bf16.mxu0 0
      %2051 = vmatpush1.bf16.msra.mxu0 %v1606
      %2052 = vmatprep.subr.bf16.mxu0 0
      %2053 = vmatpush1.bf16.msra.mxu0 %v1607
      %2054 = vmatprep.subr.bf16.mxu0 0
      %2055 = vmatpush1.bf16.msra.mxu0 %v1608
      %2056 = vmatprep.subr.bf16.mxu0 0
      %2057 = vmatpush1.bf16.msra.mxu0 %v1609
      %2058 = vmatprep.subr.bf16.mxu0 0
      %2059 = vmatpush1.bf16.msra.mxu0 %v1610
      %2060 = vmatprep.subr.bf16.mxu0 0
      %2061 = vmatpush1.bf16.msra.mxu0 %v1611
      %2062 = vmatprep.mubr.bf16.mxu0 %v993
      %2063 = vmatmul.mubr.bf16.gmra.mrb[0].mxu0 %v992
      %v2064 = vpop.f32.mrb[0].mxu0
      %v2065 = vadd.f32 %v1904, %v2064
      %v2066 = vpop.f32.mrb[0].mxu0
      %v2067 = vpop.f32.mrb[0].mxu0
      %v2068 = vadd.f32 %v1907, %v2067
      %v2069 = vpop.f32.mrb[0].mxu0
      %2070 = vmatprep.mubr.bf16.mxu0 %v1002
      %2071 = vmatmul.mubr.bf16.gmra.mrb[0].mxu0 %v1001
      %v2072 = vpop.f32.mrb[0].mxu0
      %v2073 = vadd.f32 %v1912, %v2072
      %v2074 = vpop.f32.mrb[0].mxu0
      %v2075 = vpop.f32.mrb[0].mxu0
      %v2076 = vadd.f32 %v1915, %v2075
      %v2077 = vpop.f32.mrb[0].mxu0
      %2078 = vmatprep.mubr.bf16.mxu0 %v1011
      %2079 = vmatmul.mubr.bf16.gmra.mrb[0].mxu0 %v1010
      %v2080 = vpop.f32.mrb[0].mxu0
      %v2081 = vadd.f32 %v1920, %v2080
      %v2082 = vpop.f32.mrb[0].mxu0
      %v2083 = vpop.f32.mrb[0].mxu0
      %v2084 = vadd.f32 %v1923, %v2083
      %v2085 = vpop.f32.mrb[0].mxu0
      %2086 = vmatprep.mubr.bf16.mxu0 %v1020
      %2087 = vmatmul.mubr.bf16.gmra.mrb[0].mxu0 %v1019
      %v2088 = vpop.f32.mrb[0].mxu0
      %v2089 = vadd.f32 %v1928, %v2088
      %v2090 = vpop.f32.mrb[0].mxu0
      %v2091 = vpop.f32.mrb[0].mxu0
      %v2092 = vadd.f32 %v1931, %v2091
      %v2093 = vpop.f32.mrb[0].mxu0
      %2094 = vmatprep.mubr.bf16.mxu0 %v1029
      %2095 = vmatmul.mubr.bf16.gmra.mrb[0].mxu0 %v1028
      %v2096 = vpop.f32.mrb[0].mxu0
      %v2097 = vadd.f32 %v1936, %v2096
      %v2098 = vpop.f32.mrb[0].mxu0
      %v2099 = vpop.f32.mrb[0].mxu0
      %v2100 = vadd.f32 %v1939, %v2099
      %v2101 = vpop.f32.mrb[0].mxu0
      %2102 = vmatprep.mubr.bf16.mxu0 %v1038
      %2103 = vmatmul.mubr.bf16.gmra.mrb[0].mxu0 %v1037
      %v2104 = vpop.f32.mrb[0].mxu0
      %v2105 = vadd.f32 %v1944, %v2104
      %v2106 = vpop.f32.mrb[0].mxu0
      %v2107 = vpop.f32.mrb[0].mxu0
      %v2108 = vadd.f32 %v1947, %v2107
      %v2109 = vpop.f32.mrb[0].mxu0
      %2110 = vmatprep.mubr.bf16.mxu0 %v1047
      %2111 = vmatmul.mubr.bf16.gmra.mrb[0].mxu0 %v1046
      %v2112 = vpop.f32.mrb[0].mxu0
      %v2113 = vadd.f32 %v1952, %v2112
      %v2114 = vpop.f32.mrb[0].mxu0
      %v2115 = vpop.f32.mrb[0].mxu0
      %v2116 = vadd.f32 %v1955, %v2115
      %v2117 = vpop.f32.mrb[0].mxu0
      %2118 = vmatprep.mubr.bf16.mxu0 %v1056
      %2119 = vmatmul.mubr.bf16.gmra.mrb[0].mxu0 %v1055
      %v2120 = vpop.f32.mrb[0].mxu0
      %v2121 = vadd.f32 %v1960, %v2120
      %v2122 = vpop.f32.mrb[0].mxu0
      %v2123 = vpop.f32.mrb[0].mxu0
      %v2124 = vadd.f32 %v1963, %v2123
      %v2125 = vpop.f32.mrb[0].mxu0
      %2126 = vmatprep.mubr.bf16.mxu0 %v1065
      %2127 = vmatmul.mubr.bf16.gmra.mrb[0].mxu0 %v1064
      %v2128 = vpop.f32.mrb[0].mxu0
      %v2129 = vadd.f32 %v1968, %v2128
      %v2130 = vpop.f32.mrb[0].mxu0
      %v2131 = vpop.f32.mrb[0].mxu0
      %v2132 = vadd.f32 %v1971, %v2131
      %v2133 = vpop.f32.mrb[0].mxu0
      %2134 = vmatprep.mubr.bf16.mxu0 %v1074
      %2135 = vmatmul.mubr.bf16.gmra.mrb[0].mxu0 %v1073
      %v2136 = vpop.f32.mrb[0].mxu0
      %v2137 = vadd.f32 %v1976, %v2136
      %v2138 = vpop.f32.mrb[0].mxu0
      %v2139 = vpop.f32.mrb[0].mxu0
      %v2140 = vadd.f32 %v1979, %v2139
      %v2141 = vpop.f32.mrb[0].mxu0
      %2142 = vmatprep.mubr.bf16.mxu0 %v1083
      %2143 = vmatmul.mubr.bf16.gmra.mrb[0].mxu0 %v1082
      %v2144 = vpop.f32.mrb[0].mxu0
      %v2145 = vadd.f32 %v1984, %v2144
      %v2146 = vpop.f32.mrb[0].mxu0
      %v2147 = vpop.f32.mrb[0].mxu0
      %v2148 = vadd.f32 %v1987, %v2147
      %v2149 = vpop.f32.mrb[0].mxu0
      %2150 = vmatprep.mubr.bf16.mxu0 %v1092
      %2151 = vmatmul.mubr.bf16.gmra.mrb[0].mxu0 %v1091
      %v2152 = vpop.f32.mrb[0].mxu0
      %v2153 = vadd.f32 %v1992, %v2152
      %v2154 = vpop.f32.mrb[0].mxu0
      %v2155 = vpop.f32.mrb[0].mxu0
      %v2156 = vadd.f32 %v1995, %v2155
      %v2157 = vpop.f32.mrb[0].mxu0
      %2158 = vmatprep.mubr.bf16.mxu0 %v1101
      %2159 = vmatmul.mubr.bf16.gmra.mrb[0].mxu0 %v1100
      %v2160 = vpop.f32.mrb[0].mxu0
      %v2161 = vadd.f32 %v2000, %v2160
      %v2162 = vpop.f32.mrb[0].mxu0
      %v2163 = vpop.f32.mrb[0].mxu0
      %v2164 = vadd.f32 %v2003, %v2163
      %v2165 = vpop.f32.mrb[0].mxu0
      %2166 = vmatprep.mubr.bf16.mxu0 %v1110
      %2167 = vmatmul.mubr.bf16.gmra.mrb[0].mxu0 %v1109
      %v2168 = vpop.f32.mrb[0].mxu0
      %v2169 = vadd.f32 %v2008, %v2168
      %v2170 = vpop.f32.mrb[0].mxu0
      %v2171 = vpop.f32.mrb[0].mxu0
      %v2172 = vadd.f32 %v2011, %v2171
      %v2173 = vpop.f32.mrb[0].mxu0
      %2174 = vmatprep.mubr.bf16.mxu0 %v1119
      %2175 = vmatmul.mubr.bf16.gmra.mrb[0].mxu0 %v1118
      %v2176 = vpop.f32.mrb[0].mxu0
      %v2177 = vadd.f32 %v2016, %v2176
      %v2178 = vpop.f32.mrb[0].mxu0
      %v2179 = vpop.f32.mrb[0].mxu0
      %v2180 = vadd.f32 %v2019, %v2179
      %v2181 = vpop.f32.mrb[0].mxu0
      %2182 = vmatprep.mubr.bf16.mxu0 %v1128
      %2183 = vmatmul.mubr.bf16.gmra.mrb[0].mxu0 %v1127
      %v2184 = vpop.f32.mrb[0].mxu0
      %v2185 = vadd.f32 %v2024, %v2184
      %v2186 = vpop.f32.mrb[0].mxu0
      %v2187 = vpop.f32.mrb[0].mxu0
      %v2188 = vadd.f32 %v2027, %v2187
      %v2189 = vpop.f32.mrb[0].mxu0
      %2190 = vdwg.mxu0
      %2191 = vmatprep.subr.bf16.mxu0 0
      %2192 = vmatpush1.bf16.msra.mxu0 %v1612
      %2193 = vmatprep.subr.bf16.mxu0 0
      %2194 = vmatpush1.bf16.msra.mxu0 %v1613
      %2195 = vmatprep.subr.bf16.mxu0 0
      %2196 = vmatpush1.bf16.msra.mxu0 %v1614
      %2197 = vmatprep.subr.bf16.mxu0 0
      %2198 = vmatpush1.bf16.msra.mxu0 %v1615
      %2199 = vmatprep.subr.bf16.mxu0 0
      %2200 = vmatpush1.bf16.msra.mxu0 %v1616
      %2201 = vmatprep.subr.bf16.mxu0 0
      %2202 = vmatpush1.bf16.msra.mxu0 %v1617
      %2203 = vmatprep.subr.bf16.mxu0 0
      %2204 = vmatpush1.bf16.msra.mxu0 %v1618
      %2205 = vmatprep.subr.bf16.mxu0 0
      %2206 = vmatpush1.bf16.msra.mxu0 %v1619
      %2207 = vmatprep.subr.bf16.mxu0 0
      %2208 = vmatpush1.bf16.msra.mxu0 %v1620
      %2209 = vmatprep.subr.bf16.mxu0 0
      %2210 = vmatpush1.bf16.msra.mxu0 %v1621
      %2211 = vmatprep.subr.bf16.mxu0 0
      %2212 = vmatpush1.bf16.msra.mxu0 %v1622
      %2213 = vmatprep.subr.bf16.mxu0 0
      %2214 = vmatpush1.bf16.msra.mxu0 %v1623
      %2215 = vmatprep.subr.bf16.mxu0 0
      %2216 = vmatpush1.bf16.msra.mxu0 %v1624
      %2217 = vmatprep.subr.bf16.mxu0 0
      %2218 = vmatpush1.bf16.msra.mxu0 %v1625
      %2219 = vmatprep.subr.bf16.mxu0 0
      %2220 = vmatpush1.bf16.msra.mxu0 %v1626
      %2221 = vmatprep.subr.bf16.mxu0 0
      %2222 = vmatpush1.bf16.msra.mxu0 %v1627
      %2223 = vmatprep.mubr.bf16.mxu0 %v995
      %2224 = vmatmul.mubr.bf16.gmra.mrb[0].mxu0 %v994
      %v2225 = vpop.f32.mrb[0].mxu0
      %v2226 = vadd.f32 %v2065, %v2225
      %v2227 = vpop.f32.mrb[0].mxu0
      %v2228 = vpop.f32.mrb[0].mxu0
      %v2229 = vadd.f32 %v2068, %v2228
      %v2230 = vpop.f32.mrb[0].mxu0
      %2231 = vmatprep.mubr.bf16.mxu0 %v1004
      %2232 = vmatmul.mubr.bf16.gmra.mrb[0].mxu0 %v1003
      %v2233 = vpop.f32.mrb[0].mxu0
      %v2234 = vadd.f32 %v2073, %v2233
      %v2235 = vpop.f32.mrb[0].mxu0
      %v2236 = vpop.f32.mrb[0].mxu0
      %v2237 = vadd.f32 %v2076, %v2236
      %v2238 = vpop.f32.mrb[0].mxu0
      %2239 = vmatprep.mubr.bf16.mxu0 %v1013
      %2240 = vmatmul.mubr.bf16.gmra.mrb[0].mxu0 %v1012
      %v2241 = vpop.f32.mrb[0].mxu0
      %v2242 = vadd.f32 %v2081, %v2241
      %v2243 = vpop.f32.mrb[0].mxu0
      %v2244 = vpop.f32.mrb[0].mxu0
      %v2245 = vadd.f32 %v2084, %v2244
      %v2246 = vpop.f32.mrb[0].mxu0
      %2247 = vmatprep.mubr.bf16.mxu0 %v1022
      %2248 = vmatmul.mubr.bf16.gmra.mrb[0].mxu0 %v1021
      %v2249 = vpop.f32.mrb[0].mxu0
      %v2250 = vadd.f32 %v2089, %v2249
      %v2251 = vpop.f32.mrb[0].mxu0
      %v2252 = vpop.f32.mrb[0].mxu0
      %v2253 = vadd.f32 %v2092, %v2252
      %v2254 = vpop.f32.mrb[0].mxu0
      %2255 = vmatprep.mubr.bf16.mxu0 %v1031
      %2256 = vmatmul.mubr.bf16.gmra.mrb[0].mxu0 %v1030
      %v2257 = vpop.f32.mrb[0].mxu0
      %v2258 = vadd.f32 %v2097, %v2257
      %v2259 = vpop.f32.mrb[0].mxu0
      %v2260 = vpop.f32.mrb[0].mxu0
      %v2261 = vadd.f32 %v2100, %v2260
      %v2262 = vpop.f32.mrb[0].mxu0
      %2263 = vmatprep.mubr.bf16.mxu0 %v1040
      %2264 = vmatmul.mubr.bf16.gmra.mrb[0].mxu0 %v1039
      %v2265 = vpop.f32.mrb[0].mxu0
      %v2266 = vadd.f32 %v2105, %v2265
      %v2267 = vpop.f32.mrb[0].mxu0
      %v2268 = vpop.f32.mrb[0].mxu0
      %v2269 = vadd.f32 %v2108, %v2268
      %v2270 = vpop.f32.mrb[0].mxu0
      %2271 = vmatprep.mubr.bf16.mxu0 %v1049
      %2272 = vmatmul.mubr.bf16.gmra.mrb[0].mxu0 %v1048
      %v2273 = vpop.f32.mrb[0].mxu0
      %v2274 = vadd.f32 %v2113, %v2273
      %v2275 = vpop.f32.mrb[0].mxu0
      %v2276 = vpop.f32.mrb[0].mxu0
      %v2277 = vadd.f32 %v2116, %v2276
      %v2278 = vpop.f32.mrb[0].mxu0
      %2279 = vmatprep.mubr.bf16.mxu0 %v1058
      %2280 = vmatmul.mubr.bf16.gmra.mrb[0].mxu0 %v1057
      %v2281 = vpop.f32.mrb[0].mxu0
      %v2282 = vadd.f32 %v2121, %v2281
      %v2283 = vpop.f32.mrb[0].mxu0
      %v2284 = vpop.f32.mrb[0].mxu0
      %v2285 = vadd.f32 %v2124, %v2284
      %v2286 = vpop.f32.mrb[0].mxu0
      %2287 = vmatprep.mubr.bf16.mxu0 %v1067
      %2288 = vmatmul.mubr.bf16.gmra.mrb[0].mxu0 %v1066
      %v2289 = vpop.f32.mrb[0].mxu0
      %v2290 = vadd.f32 %v2129, %v2289
      %v2291 = vpop.f32.mrb[0].mxu0
      %v2292 = vpop.f32.mrb[0].mxu0
      %v2293 = vadd.f32 %v2132, %v2292
      %v2294 = vpop.f32.mrb[0].mxu0
      %2295 = vmatprep.mubr.bf16.mxu0 %v1076
      %2296 = vmatmul.mubr.bf16.gmra.mrb[0].mxu0 %v1075
      %v2297 = vpop.f32.mrb[0].mxu0
      %v2298 = vadd.f32 %v2137, %v2297
      %v2299 = vpop.f32.mrb[0].mxu0
      %v2300 = vpop.f32.mrb[0].mxu0
      %v2301 = vadd.f32 %v2140, %v2300
      %v2302 = vpop.f32.mrb[0].mxu0
      %2303 = vmatprep.mubr.bf16.mxu0 %v1085
      %2304 = vmatmul.mubr.bf16.gmra.mrb[0].mxu0 %v1084
      %v2305 = vpop.f32.mrb[0].mxu0
      %v2306 = vadd.f32 %v2145, %v2305
      %v2307 = vpop.f32.mrb[0].mxu0
      %v2308 = vpop.f32.mrb[0].mxu0
      %v2309 = vadd.f32 %v2148, %v2308
      %v2310 = vpop.f32.mrb[0].mxu0
      %2311 = vmatprep.mubr.bf16.mxu0 %v1094
      %2312 = vmatmul.mubr.bf16.gmra.mrb[0].mxu0 %v1093
      %v2313 = vpop.f32.mrb[0].mxu0
      %v2314 = vadd.f32 %v2153, %v2313
      %v2315 = vpop.f32.mrb[0].mxu0
      %v2316 = vpop.f32.mrb[0].mxu0
      %v2317 = vadd.f32 %v2156, %v2316
      %v2318 = vpop.f32.mrb[0].mxu0
      %2319 = vmatprep.mubr.bf16.mxu0 %v1103
      %2320 = vmatmul.mubr.bf16.gmra.mrb[0].mxu0 %v1102
      %v2321 = vpop.f32.mrb[0].mxu0
      %v2322 = vadd.f32 %v2161, %v2321
      %v2323 = vpop.f32.mrb[0].mxu0
      %v2324 = vpop.f32.mrb[0].mxu0
      %v2325 = vadd.f32 %v2164, %v2324
      %v2326 = vpop.f32.mrb[0].mxu0
      %2327 = vmatprep.mubr.bf16.mxu0 %v1112
      %2328 = vmatmul.mubr.bf16.gmra.mrb[0].mxu0 %v1111
      %v2329 = vpop.f32.mrb[0].mxu0
      %v2330 = vadd.f32 %v2169, %v2329
      %v2331 = vpop.f32.mrb[0].mxu0
      %v2332 = vpop.f32.mrb[0].mxu0
      %v2333 = vadd.f32 %v2172, %v2332
      %v2334 = vpop.f32.mrb[0].mxu0
      %2335 = vmatprep.mubr.bf16.mxu0 %v1121
      %2336 = vmatmul.mubr.bf16.gmra.mrb[0].mxu0 %v1120
      %v2337 = vpop.f32.mrb[0].mxu0
      %v2338 = vadd.f32 %v2177, %v2337
      %v2339 = vpop.f32.mrb[0].mxu0
      %v2340 = vpop.f32.mrb[0].mxu0
      %v2341 = vadd.f32 %v2180, %v2340
      %v2342 = vpop.f32.mrb[0].mxu0
      %2343 = vmatprep.mubr.bf16.mxu0 %v1130
      %2344 = vmatmul.mubr.bf16.gmra.mrb[0].mxu0 %v1129
      %v2345 = vpop.f32.mrb[0].mxu0
      %v2346 = vadd.f32 %v2185, %v2345
      %v2347 = vpop.f32.mrb[0].mxu0
      %v2348 = vpop.f32.mrb[0].mxu0
      %v2349 = vadd.f32 %v2188, %v2348
      %v2350 = vpop.f32.mrb[0].mxu0
      %2351 = vdwg.mxu0
      %2352 = vmatprep.subr.bf16.mxu0 0
      %2353 = vmatpush1.bf16.msra.mxu0 %v1628
      %2354 = vmatprep.subr.bf16.mxu0 0
      %2355 = vmatpush1.bf16.msra.mxu0 %v1629
      %2356 = vmatprep.subr.bf16.mxu0 0
      %2357 = vmatpush1.bf16.msra.mxu0 %v1630
      %2358 = vmatprep.subr.bf16.mxu0 0
      %2359 = vmatpush1.bf16.msra.mxu0 %v1631
      %2360 = vmatprep.subr.bf16.mxu0 0
      %2361 = vmatpush1.bf16.msra.mxu0 %v1632
      %2362 = vmatprep.subr.bf16.mxu0 0
      %2363 = vmatpush1.bf16.msra.mxu0 %v1633
      %2364 = vmatprep.subr.bf16.mxu0 0
      %2365 = vmatpush1.bf16.msra.mxu0 %v1634
      %2366 = vmatprep.subr.bf16.mxu0 0
      %2367 = vmatpush1.bf16.msra.mxu0 %v1635
      %2368 = vmatprep.subr.bf16.mxu0 0
      %2369 = vmatpush1.bf16.msra.mxu0 0
      %2370 = vmatprep.subr.bf16.mxu0 0
      %2371 = vmatpush1.bf16.msra.mxu0 0
      %2372 = vmatprep.subr.bf16.mxu0 0
      %2373 = vmatpush1.bf16.msra.mxu0 0
      %2374 = vmatprep.subr.bf16.mxu0 0
      %2375 = vmatpush1.bf16.msra.mxu0 0
      %2376 = vmatprep.subr.bf16.mxu0 0
      %2377 = vmatpush1.bf16.msra.mxu0 0
      %2378 = vmatprep.subr.bf16.mxu0 0
      %2379 = vmatpush1.bf16.msra.mxu0 0
      %2380 = vmatprep.subr.bf16.mxu0 0
      %2381 = vmatpush1.bf16.msra.mxu0 0
      %2382 = vmatprep.subr.bf16.mxu0 0
      %2383 = vmatpush1.bf16.msra.mxu0 0
      %2384 = vmatprep.mubr.bf16.mxu0 0
      %2385 = vmatmul.mubr.bf16.gmra.mrb[0].mxu0 %v996
      %v2386 = vpop.f32.mrb[0].mxu0
      %v2387 = vadd.f32 %v2226, %v2386
      %v2388 = vpop.f32.mrb[0].mxu0
      %v2389 = vpop.f32.mrb[0].mxu0
      %v2390 = vadd.f32 %v2229, %v2389
      %v2391 = vpop.f32.mrb[0].mxu0
      %2392 = vmatprep.mubr.bf16.mxu0 0
      %2393 = vmatmul.mubr.bf16.gmra.mrb[0].mxu0 %v1005
      %v2394 = vpop.f32.mrb[0].mxu0
      %v2395 = vadd.f32 %v2234, %v2394
      %v2396 = vpop.f32.mrb[0].mxu0
      %v2397 = vpop.f32.mrb[0].mxu0
      %v2398 = vadd.f32 %v2237, %v2397
      %v2399 = vpop.f32.mrb[0].mxu0
      %2400 = vmatprep.mubr.bf16.mxu0 0
      %2401 = vmatmul.mubr.bf16.gmra.mrb[0].mxu0 %v1014
      %v2402 = vpop.f32.mrb[0].mxu0
      %v2403 = vadd.f32 %v2242, %v2402
      %v2404 = vpop.f32.mrb[0].mxu0
      %v2405 = vpop.f32.mrb[0].mxu0
      %v2406 = vadd.f32 %v2245, %v2405
      %v2407 = vpop.f32.mrb[0].mxu0
      %2408 = vmatprep.mubr.bf16.mxu0 0
      %2409 = vmatmul.mubr.bf16.gmra.mrb[0].mxu0 %v1023
      %v2410 = vpop.f32.mrb[0].mxu0
      %v2411 = vadd.f32 %v2250, %v2410
      %v2412 = vpop.f32.mrb[0].mxu0
      %v2413 = vpop.f32.mrb[0].mxu0
      %v2414 = vadd.f32 %v2253, %v2413
      %v2415 = vpop.f32.mrb[0].mxu0
      %2416 = vmatprep.mubr.bf16.mxu0 0
      %2417 = vmatmul.mubr.bf16.gmra.mrb[0].mxu0 %v1032
      %v2418 = vpop.f32.mrb[0].mxu0
      %v2419 = vadd.f32 %v2258, %v2418
      %v2420 = vpop.f32.mrb[0].mxu0
      %v2421 = vpop.f32.mrb[0].mxu0
      %v2422 = vadd.f32 %v2261, %v2421
      %v2423 = vpop.f32.mrb[0].mxu0
      %2424 = vmatprep.mubr.bf16.mxu0 0
      %2425 = vmatmul.mubr.bf16.gmra.mrb[0].mxu0 %v1041
      %v2426 = vpop.f32.mrb[0].mxu0
      %v2427 = vadd.f32 %v2266, %v2426
      %v2428 = vpop.f32.mrb[0].mxu0
      %v2429 = vpop.f32.mrb[0].mxu0
      %v2430 = vadd.f32 %v2269, %v2429
      %v2431 = vpop.f32.mrb[0].mxu0
      %2432 = vmatprep.mubr.bf16.mxu0 0
      %2433 = vmatmul.mubr.bf16.gmra.mrb[0].mxu0 %v1050
      %v2434 = vpop.f32.mrb[0].mxu0
      %v2435 = vadd.f32 %v2274, %v2434
      %v2436 = vpop.f32.mrb[0].mxu0
      %v2437 = vpop.f32.mrb[0].mxu0
      %v2438 = vadd.f32 %v2277, %v2437
      %v2439 = vpop.f32.mrb[0].mxu0
      %2440 = vmatprep.mubr.bf16.mxu0 0
      %2441 = vmatmul.mubr.bf16.gmra.mrb[0].mxu0 %v1059
      %v2442 = vpop.f32.mrb[0].mxu0
      %v2443 = vadd.f32 %v2282, %v2442
      %v2444 = vpop.f32.mrb[0].mxu0
      %v2445 = vpop.f32.mrb[0].mxu0
      %v2446 = vadd.f32 %v2285, %v2445
      %v2447 = vpop.f32.mrb[0].mxu0
      %2448 = vmatprep.mubr.bf16.mxu0 0
      %2449 = vmatmul.mubr.bf16.gmra.mrb[0].mxu0 %v1068
      %v2450 = vpop.f32.mrb[0].mxu0
      %v2451 = vadd.f32 %v2290, %v2450
      %v2452 = vpop.f32.mrb[0].mxu0
      %v2453 = vpop.f32.mrb[0].mxu0
      %v2454 = vadd.f32 %v2293, %v2453
      %v2455 = vpop.f32.mrb[0].mxu0
      %2456 = vmatprep.mubr.bf16.mxu0 0
      %2457 = vmatmul.mubr.bf16.gmra.mrb[0].mxu0 %v1077
      %v2458 = vpop.f32.mrb[0].mxu0
      %v2459 = vadd.f32 %v2298, %v2458
      %v2460 = vpop.f32.mrb[0].mxu0
      %v2461 = vpop.f32.mrb[0].mxu0
      %v2462 = vadd.f32 %v2301, %v2461
      %v2463 = vpop.f32.mrb[0].mxu0
      %2464 = vmatprep.mubr.bf16.mxu0 0
      %2465 = vmatmul.mubr.bf16.gmra.mrb[0].mxu0 %v1086
      %v2466 = vpop.f32.mrb[0].mxu0
      %v2467 = vadd.f32 %v2306, %v2466
      %v2468 = vpop.f32.mrb[0].mxu0
      %v2469 = vpop.f32.mrb[0].mxu0
      %v2470 = vadd.f32 %v2309, %v2469
      %v2471 = vpop.f32.mrb[0].mxu0
      %2472 = vmatprep.mubr.bf16.mxu0 0
      %2473 = vmatmul.mubr.bf16.gmra.mrb[0].mxu0 %v1095
      %v2474 = vpop.f32.mrb[0].mxu0
      %v2475 = vadd.f32 %v2314, %v2474
      %v2476 = vpop.f32.mrb[0].mxu0
      %v2477 = vpop.f32.mrb[0].mxu0
      %v2478 = vadd.f32 %v2317, %v2477
      %v2479 = vpop.f32.mrb[0].mxu0
      %2480 = vmatprep.mubr.bf16.mxu0 0
      %2481 = vmatmul.mubr.bf16.gmra.mrb[0].mxu0 %v1104
      %v2482 = vpop.f32.mrb[0].mxu0
      %v2483 = vadd.f32 %v2322, %v2482
      %v2484 = vpop.f32.mrb[0].mxu0
      %v2485 = vpop.f32.mrb[0].mxu0
      %v2486 = vadd.f32 %v2325, %v2485
      %v2487 = vpop.f32.mrb[0].mxu0
      %2488 = vmatprep.mubr.bf16.mxu0 0
      %2489 = vmatmul.mubr.bf16.gmra.mrb[0].mxu0 %v1113
      %v2490 = vpop.f32.mrb[0].mxu0
      %v2491 = vadd.f32 %v2330, %v2490
      %v2492 = vpop.f32.mrb[0].mxu0
      %v2493 = vpop.f32.mrb[0].mxu0
      %v2494 = vadd.f32 %v2333, %v2493
      %v2495 = vpop.f32.mrb[0].mxu0
      %2496 = vmatprep.mubr.bf16.mxu0 0
      %2497 = vmatmul.mubr.bf16.gmra.mrb[0].mxu0 %v1122
      %v2498 = vpop.f32.mrb[0].mxu0
      %v2499 = vadd.f32 %v2338, %v2498
      %v2500 = vpop.f32.mrb[0].mxu0
      %v2501 = vpop.f32.mrb[0].mxu0
      %v2502 = vadd.f32 %v2341, %v2501
      %v2503 = vpop.f32.mrb[0].mxu0
      %2504 = vmatprep.mubr.bf16.mxu0 0
      %2505 = vmatmul.mubr.bf16.gmra.mrb[0].mxu0 %v1131
      %v2506 = vpop.f32.mrb[0].mxu0
      %v2507 = vadd.f32 %v2346, %v2506
      %v2508 = vpop.f32.mrb[0].mxu0
      %v2509 = vpop.f32.mrb[0].mxu0
      %v2510 = vadd.f32 %v2349, %v2509
      %v2511 = vpop.f32.mrb[0].mxu0
      %2512 = vdwg.mxu0
      %vm2513 = vcmp.gt.f32.partialorder %v2387, 0.0
      %vm2514 = vcmp.gt.f32.partialorder %v2390, 0.0
      %vm2515 = vcmp.gt.f32.partialorder %v2395, 0.0
      %vm2516 = vcmp.gt.f32.partialorder %v2398, 0.0
      %vm2517 = vcmp.gt.f32.partialorder %v2403, 0.0
      %vm2518 = vcmp.gt.f32.partialorder %v2406, 0.0
      %vm2519 = vcmp.gt.f32.partialorder %v2411, 0.0
      %vm2520 = vcmp.gt.f32.partialorder %v2414, 0.0
      %vm2521 = vcmp.gt.f32.partialorder %v2419, 0.0
      %vm2522 = vcmp.gt.f32.partialorder %v2422, 0.0
      %vm2523 = vcmp.gt.f32.partialorder %v2427, 0.0
      %vm2524 = vcmp.gt.f32.partialorder %v2430, 0.0
      %vm2525 = vcmp.gt.f32.partialorder %v2435, 0.0
      %vm2526 = vcmp.gt.f32.partialorder %v2438, 0.0
      %vm2527 = vcmp.gt.f32.partialorder %v2443, 0.0
      %vm2528 = vcmp.gt.f32.partialorder %v2446, 0.0
      %vm2529 = vcmp.gt.f32.partialorder %v2451, 0.0
      %vm2530 = vcmp.gt.f32.partialorder %v2454, 0.0
      %vm2531 = vcmp.gt.f32.partialorder %v2459, 0.0
      %vm2532 = vcmp.gt.f32.partialorder %v2462, 0.0
      %vm2533 = vcmp.gt.f32.partialorder %v2467, 0.0
      %vm2534 = vcmp.gt.f32.partialorder %v2470, 0.0
      %vm2535 = vcmp.gt.f32.partialorder %v2475, 0.0
      %vm2536 = vcmp.gt.f32.partialorder %v2478, 0.0
      %vm2537 = vcmp.gt.f32.partialorder %v2483, 0.0
      %vm2538 = vcmp.gt.f32.partialorder %v2486, 0.0
      %vm2539 = vcmp.gt.f32.partialorder %v2491, 0.0
      %vm2540 = vcmp.gt.f32.partialorder %v2494, 0.0
      %vm2541 = vcmp.gt.f32.partialorder %v2499, 0.0
      %vm2542 = vcmp.gt.f32.partialorder %v2502, 0.0
      %vm2543 = vcmp.gt.f32.partialorder %v2507, 0.0
      %vm2544 = vcmp.gt.f32.partialorder %v2510, 0.0
      %v2545 = vmul.f32 %v2387, 0.2
      %v2546 = vmul.f32 %v2390, 0.2
      %v2547 = vmul.f32 %v2395, 0.2
      %v2548 = vmul.f32 %v2398, 0.2
      %v2549 = vmul.f32 %v2403, 0.2
      %v2550 = vmul.f32 %v2406, 0.2
      %v2551 = vmul.f32 %v2411, 0.2
      %v2552 = vmul.f32 %v2414, 0.2
      %v2553 = vmul.f32 %v2419, 0.2
      %v2554 = vmul.f32 %v2422, 0.2
      %v2555 = vmul.f32 %v2427, 0.2
      %v2556 = vmul.f32 %v2430, 0.2
      %v2557 = vmul.f32 %v2435, 0.2
      %v2558 = vmul.f32 %v2438, 0.2
      %v2559 = vmul.f32 %v2443, 0.2
      %v2560 = vmul.f32 %v2446, 0.2
      %v2561 = vmul.f32 %v2451, 0.2
      %v2562 = vmul.f32 %v2454, 0.2
      %v2563 = vmul.f32 %v2459, 0.2
      %v2564 = vmul.f32 %v2462, 0.2
      %v2565 = vmul.f32 %v2467, 0.2
      %v2566 = vmul.f32 %v2470, 0.2
      %v2567 = vmul.f32 %v2475, 0.2
      %v2568 = vmul.f32 %v2478, 0.2
      %v2569 = vmul.f32 %v2483, 0.2
      %v2570 = vmul.f32 %v2486, 0.2
      %v2571 = vmul.f32 %v2491, 0.2
      %v2572 = vmul.f32 %v2494, 0.2
      %v2573 = vmul.f32 %v2499, 0.2
      %v2574 = vmul.f32 %v2502, 0.2
      %v2575 = vmul.f32 %v2507, 0.2
      %v2576 = vmul.f32 %v2510, 0.2
      %v2577 = vsel %vm2513, %v2387, %v2545
      %v2578 = vsel %vm2514, %v2390, %v2546
      %v2579 = vsel %vm2515, %v2395, %v2547
      %v2580 = vsel %vm2516, %v2398, %v2548
      %v2581 = vsel %vm2517, %v2403, %v2549
      %v2582 = vsel %vm2518, %v2406, %v2550
      %v2583 = vsel %vm2519, %v2411, %v2551
      %v2584 = vsel %vm2520, %v2414, %v2552
      %v2585 = vsel %vm2521, %v2419, %v2553
      %v2586 = vsel %vm2522, %v2422, %v2554
      %v2587 = vsel %vm2523, %v2427, %v2555
      %v2588 = vsel %vm2524, %v2430, %v2556
      %v2589 = vsel %vm2525, %v2435, %v2557
      %v2590 = vsel %vm2526, %v2438, %v2558
      %v2591 = vsel %vm2527, %v2443, %v2559
      %v2592 = vsel %vm2528, %v2446, %v2560
      %v2593 = vsel %vm2529, %v2451, %v2561
      %v2594 = vsel %vm2530, %v2454, %v2562
      %v2595 = vsel %vm2531, %v2459, %v2563
      %v2596 = vsel %vm2532, %v2462, %v2564
      %v2597 = vsel %vm2533, %v2467, %v2565
      %v2598 = vsel %vm2534, %v2470, %v2566
      %v2599 = vsel %vm2535, %v2475, %v2567
      %v2600 = vsel %vm2536, %v2478, %v2568
      %v2601 = vsel %vm2537, %v2483, %v2569
      %v2602 = vsel %vm2538, %v2486, %v2570
      %v2603 = vsel %vm2539, %v2491, %v2571
      %v2604 = vsel %vm2540, %v2494, %v2572
      %v2605 = vsel %vm2541, %v2499, %v2573
      %v2606 = vsel %vm2542, %v2502, %v2574
      %v2607 = vsel %vm2543, %v2507, %v2575
      %v2608 = vsel %vm2544, %v2510, %v2576
      %v2609 = vpack.c.bf16 %v2578, %v2577
      %v2610 = vpack.c.bf16 %v2580, %v2579
      %v2611 = vpack.c.bf16 %v2582, %v2581
      %v2612 = vpack.c.bf16 %v2584, %v2583
      %v2613 = vpack.c.bf16 %v2586, %v2585
      %v2614 = vpack.c.bf16 %v2588, %v2587
      %v2615 = vpack.c.bf16 %v2590, %v2589
      %v2616 = vpack.c.bf16 %v2592, %v2591
      %v2617 = vpack.c.bf16 %v2594, %v2593
      %v2618 = vpack.c.bf16 %v2596, %v2595
      %v2619 = vpack.c.bf16 %v2598, %v2597
      %v2620 = vpack.c.bf16 %v2600, %v2599
      %v2621 = vpack.c.bf16 %v2602, %v2601
      %v2622 = vpack.c.bf16 %v2604, %v2603
      %v2623 = vpack.c.bf16 %v2606, %v2605
      %v2624 = vpack.c.bf16 %v2608, %v2607
      %v2641 = vunpack.c.l.b16 %v2609
      %v2642 = vunpack.c.h.b16 %v2609
      %v2643 = vunpack.c.l.b16 %v2610
      %v2644 = vunpack.c.h.b16 %v2610
      %v2645 = vunpack.c.l.b16 %v2611
      %v2646 = vunpack.c.h.b16 %v2611
      %v2647 = vunpack.c.l.b16 %v2612
      %v2648 = vunpack.c.h.b16 %v2612
      %v2649 = vunpack.c.l.b16 %v2613
      %v2650 = vunpack.c.h.b16 %v2613
      %v2651 = vunpack.c.l.b16 %v2614
      %v2652 = vunpack.c.h.b16 %v2614
      %v2653 = vunpack.c.l.b16 %v2615
      %v2654 = vunpack.c.h.b16 %v2615
      %v2655 = vunpack.c.l.b16 %v2616
      %v2656 = vunpack.c.h.b16 %v2616
      %v2657 = vunpack.c.l.b16 %v2617
      %v2658 = vunpack.c.h.b16 %v2617
      %v2659 = vunpack.c.l.b16 %v2618
      %v2660 = vunpack.c.h.b16 %v2618
      %v2661 = vunpack.c.l.b16 %v2619
      %v2662 = vunpack.c.h.b16 %v2619
      %v2663 = vunpack.c.l.b16 %v2620
      %v2664 = vunpack.c.h.b16 %v2620
      %v2665 = vunpack.c.l.b16 %v2621
      %v2666 = vunpack.c.h.b16 %v2621
      %v2667 = vunpack.c.l.b16 %v2622
      %v2668 = vunpack.c.h.b16 %v2622
      %v2669 = vunpack.c.l.b16 %v2623
      %v2670 = vunpack.c.h.b16 %v2623
      %v2671 = vunpack.c.l.b16 %v2624
      %v2672 = vunpack.c.h.b16 %v2624
      %v2673 = vpack.c.b16 %v2641, %v2641
      %v2674 = vpack.c.b16 %v2642, %v2642
      %v2675 = vpack.c.b16 %v2643, %v2643
      %v2676 = vpack.c.b16 %v2644, %v2644
      %v2677 = vpack.c.b16 %v2645, %v2645
      %v2678 = vpack.c.b16 %v2646, %v2646
      %v2679 = vpack.c.b16 %v2647, %v2647
      %v2680 = vpack.c.b16 %v2648, %v2648
      %v2681 = vpack.c.b16 %v2649, %v2649
      %v2682 = vpack.c.b16 %v2650, %v2650
      %v2683 = vpack.c.b16 %v2651, %v2651
      %v2684 = vpack.c.b16 %v2652, %v2652
      %v2685 = vpack.c.b16 %v2653, %v2653
      %v2686 = vpack.c.b16 %v2654, %v2654
      %v2687 = vpack.c.b16 %v2655, %v2655
      %v2688 = vpack.c.b16 %v2656, %v2656
      %v2689 = vpack.c.b16 %v2657, %v2657
      %v2690 = vpack.c.b16 %v2658, %v2658
      %v2691 = vpack.c.b16 %v2659, %v2659
      %v2692 = vpack.c.b16 %v2660, %v2660
      %v2693 = vpack.c.b16 %v2661, %v2661
      %v2694 = vpack.c.b16 %v2662, %v2662
      %v2695 = vpack.c.b16 %v2663, %v2663
      %v2696 = vpack.c.b16 %v2664, %v2664
      %v2697 = vpack.c.b16 %v2665, %v2665
      %v2698 = vpack.c.b16 %v2666, %v2666
      %v2699 = vpack.c.b16 %v2667, %v2667
      %v2700 = vpack.c.b16 %v2668, %v2668
      %v2701 = vpack.c.b16 %v2669, %v2669
      %v2702 = vpack.c.b16 %v2670, %v2670
      %v2703 = vpack.c.b16 %v2671, %v2671
      %v2704 = vpack.c.b16 %v2672, %v2672
      %2737 = vst [vmem:[%s226] sm:$0xf] %v2673
      %2738 = vst [vmem:[%s226 + $0x4] sm:$0xf] %v2674
      %2739 = vst [vmem:[%s226 + $0x8] sm:$0xf] %v2675
      %2740 = vst [vmem:[%s226 + $0xc] sm:$0xf] %v2676
      %2741 = vst [vmem:[%s226 + $0x10] sm:$0xf] %v2677
      %2742 = vst [vmem:[%s226 + $0x14] sm:$0xf] %v2678
      %2743 = vst [vmem:[%s226 + $0x18] sm:$0xf] %v2679
      %2744 = vst [vmem:[%s226 + $0x1c] sm:$0xf] %v2680
      %2745 = vst [vmem:[%s226 + $0x20] sm:$0xf] %v2681
      %2746 = vst [vmem:[%s226 + $0x24] sm:$0xf] %v2682
      %2747 = vst [vmem:[%s226 + $0x28] sm:$0xf] %v2683
      %2748 = vst [vmem:[%s226 + $0x2c] sm:$0xf] %v2684
      %2749 = vst [vmem:[%s226 + $0x30] sm:$0xf] %v2685
      %2750 = vst [vmem:[%s226 + $0x34] sm:$0xf] %v2686
      %2751 = vst [vmem:[%s226 + $0x38] sm:$0xf] %v2687
      %2752 = vst [vmem:[%s226 + $0x3c] sm:$0xf] %v2688
      %2753 = vst [vmem:[%s226 + $0x40] sm:$0xf] %v2689
      %2754 = vst [vmem:[%s226 + $0x44] sm:$0xf] %v2690
      %2755 = vst [vmem:[%s226 + $0x48] sm:$0xf] %v2691
      %2756 = vst [vmem:[%s226 + $0x4c] sm:$0xf] %v2692
      %2757 = vst [vmem:[%s226 + $0x50] sm:$0xf] %v2693
      %2758 = vst [vmem:[%s226 + $0x54] sm:$0xf] %v2694
      %2759 = vst [vmem:[%s226 + $0x58] sm:$0xf] %v2695
      %2760 = vst [vmem:[%s226 + $0x5c] sm:$0xf] %v2696
      %2761 = vst [vmem:[%s226 + $0x60] sm:$0xf] %v2697
      %2762 = vst [vmem:[%s226 + $0x64] sm:$0xf] %v2698
      %2763 = vst [vmem:[%s226 + $0x68] sm:$0xf] %v2699
      %2764 = vst [vmem:[%s226 + $0x6c] sm:$0xf] %v2700
      %2765 = vst [vmem:[%s226 + $0x70] sm:$0xf] %v2701
      %2766 = vst [vmem:[%s226 + $0x74] sm:$0xf] %v2702
      %2767 = vst [vmem:[%s226 + $0x78] sm:$0xf] %v2703
      %2768 = vst [vmem:[%s226 + $0x7c] sm:$0xf] %v2704
      %s2769 = smul.u32 32, %s18
      %p2770 = scmp.lt.s32.totalorder %s2769, 63
      %s2771 = scalar_select %p2770, %s2769, 63
      %p2772 = scmp.lt.s32.totalorder %s19, 0
      %s2773 = scalar_select %p2772, %s19, 0
      %s2774 = sadd.s32 %s2773, %s2771
      %s2775 = smul.addr %s2774, 4
      %s2776 = scalar_lea.vmem %s3, %s2775
      // Predicated region
      $region33: #{_lambda_.5} parent=31 // pred_check
        %p2777 = pneg %p124
      $region34: #{_lambda_.5} parent=31 // pred_check_branch
        %2779 = sbr.rel (%p2777) target = $region36
      $region35: #{_lambda_.5} parent=31 // pred_region
        %s2780 = smul.u32 32, %s18
      $region36: #{_lambda_.5} parent=31 // pred_fallthru
        _
    $region32: #{_lambda_.5} parent=5 // pred_fallthru
      _
    %p2781 = scmp.le.s32.totalorder 2, %s9
    // Predicated region
    $region37: #{_lambda_.5} parent=5 // pred_check
      %p2782 = pneg %p2781
    $region38: #{_lambda_.5} parent=5 // pred_check_branch
      %2784 = sbr.rel (%p2782) target = $region40
    $region39: #{_lambda_.5} parent=5 // pred_region
      %s2785 = ssub.s32 %s9, 2
      // Predicated region
      $region41: #{_lambda_.5} parent=39 // pred_check
        %p2786 = pneg %p130
      $region42: #{_lambda_.5} parent=39 // pred_check_branch
        %2788 = sbr.rel (%p2786) target = $region44
      $region43: #{_lambda_.5} parent=39 // pred_region
        %s2789 = smul.u32 32, %s20
        %p2790 = scmp.lt.s32.totalorder %s2789, 63
        %s2791 = scalar_select %p2790, %s2789, 63
        %p2792 = scmp.lt.s32.totalorder %s21, 0
        %s2793 = scalar_select %p2792, %s21, 0
        %s2794 = sadd.s32 %s2793, %s2791
        %s2795 = smul.addr %s2794, 4
        %s2796 = scalar_lea.vmem %s3, %s2795
      $region44: #{_lambda_.5} parent=39 // pred_fallthru
        _
    $region40: #{_lambda_.5} parent=5 // pred_fallthru
      _
  $region6: #{_lambda_.5} parent=0 // loop_footer
    %s13 = sadd.s32 1, %s9
  $region7: #{_lambda_.5} parent=0 // loop_footer_branch
    %8 = sbr.rel target = $region3
  $region8: #{_lambda_.5} parent=0 // loop_exit
    _

// kernel: _lambda_.6
$region0: #{_lambda_.6}
  #allocation0 [shape = 'u32[]', space=smem, size = 0x4, offset = 0x4, fixed_abs, tag = 'smem constant byte address 0x4 - core index']
  #allocation1 [shape = 'u32[144,128]{1,0:T(1,128)}', space=vmem, size = 0x12000, scoped, tag = 'internal scratch']
  %s0 = inlined_call_operand.vmem [shape: bf16[128,1152], index: 0, kind: input, shape index: {}]
  %s1 = inlined_call_operand.vmem [shape: bf16[1152,128], index: 1, kind: input, shape index: {}]
  %s2 = inlined_call_operand.vmem [shape: f32[1,128], index: 2, kind: input, shape index: {}]
  %s3 = inlined_call_operand.vmem [shape: f32[1,128], index: 3, kind: input, shape index: {}]
  %s4 = inlined_call_operand.vmem [shape: f32[1,128], index: 4, kind: input, shape index: {}]
  %s5 = inlined_call_operand.vmem [shape: bf16[128,128], index: 5, kind: output, shape index: {}]
  %s6 = sld [smem:[#allocation0]]
  $region30: #{_lambda_.6} parent=0
    _
  %s8 = ssub.s32 1, %s6
  %s9 = scalar_select 0, %s8, %s6
  // Predicated region
  $region2: #{_lambda_.6} parent=0 // pred_check
    _
  $region3: #{_lambda_.6} parent=0 // pred_check_branch
    %11 = sbr.rel (0) target = $region5
  $region4: #{_lambda_.6} parent=0 // pred_region
    _
  $region5: #{_lambda_.6} parent=0 // pred_fallthru
    _
  // Predicated region
  $region6: #{_lambda_.6} parent=0 // pred_check
    _
  $region7: #{_lambda_.6} parent=0 // pred_check_branch
    %13 = sbr.rel (0) target = $region9
  $region8: #{_lambda_.6} parent=0 // pred_region
    _
  $region9: #{_lambda_.6} parent=0 // pred_fallthru
    _
  // Predicated region
  $region10: #{_lambda_.6} parent=0 // pred_check
    _
  $region11: #{_lambda_.6} parent=0 // pred_check_branch
    %15 = sbr.rel (0) target = $region13
  $region12: #{_lambda_.6} parent=0 // pred_region
    _
  $region13: #{_lambda_.6} parent=0 // pred_fallthru
    _
  // Predicated region
  $region14: #{_lambda_.6} parent=0 // pred_check
    _
  $region15: #{_lambda_.6} parent=0 // pred_check_branch
    %17 = sbr.rel (0) target = $region17
  $region16: #{_lambda_.6} parent=0 // pred_region
    _
  $region17: #{_lambda_.6} parent=0 // pred_fallthru
    _
  // Predicated region
  $region18: #{_lambda_.6} parent=0 // pred_check
    _
  $region19: #{_lambda_.6} parent=0 // pred_check_branch
    %19 = sbr.rel (0) target = $region21
  $region20: #{_lambda_.6} parent=0 // pred_region
    _
  $region21: #{_lambda_.6} parent=0 // pred_fallthru
    _
  %v21 = vld [vmem:[%s0] sm:$0xff]
  %v22 = vld [vmem:[%s0 + $0x8] sm:$0xff]
  %v23 = vld [vmem:[%s0 + $0x10] sm:$0xff]
  %v24 = vld [vmem:[%s0 + $0x18] sm:$0xff]
  %v25 = vld [vmem:[%s0 + $0x20] sm:$0xf]
  %v26 = vld [vmem:[%s0 + $0x24] sm:$0xff]
  %v27 = vld [vmem:[%s0 + $0x2c] sm:$0xff]
  %v28 = vld [vmem:[%s0 + $0x34] sm:$0xff]
  %v29 = vld [vmem:[%s0 + $0x3c] sm:$0xff]
  %v30 = vld [vmem:[%s0 + $0x44] sm:$0xf]
  %v31 = vld [vmem:[%s0 + $0x48] sm:$0xff]
  %v32 = vld [vmem:[%s0 + $0x50] sm:$0xff]
  %v33 = vld [vmem:[%s0 + $0x58] sm:$0xff]
  %v34 = vld [vmem:[%s0 + $0x60] sm:$0xff]
  %v35 = vld [vmem:[%s0 + $0x68] sm:$0xf]
  %v36 = vld [vmem:[%s0 + $0x6c] sm:$0xff]
  %v37 = vld [vmem:[%s0 + $0x74] sm:$0xff]
  %v38 = vld [vmem:[%s0 + $0x7c] sm:$0xff]
  %v39 = vld [vmem:[%s0 + $0x84] sm:$0xff]
  %v40 = vld [vmem:[%s0 + $0x8c] sm:$0xf]
  %v41 = vld [vmem:[%s0 + $0x90] sm:$0xff]
  %v42 = vld [vmem:[%s0 + $0x98] sm:$0xff]
  %v43 = vld [vmem:[%s0 + $0xa0] sm:$0xff]
  %v44 = vld [vmem:[%s0 + $0xa8] sm:$0xff]
  %v45 = vld [vmem:[%s0 + $0xb0] sm:$0xf]
  %v46 = vld [vmem:[%s0 + $0xb4] sm:$0xff]
  %v47 = vld [vmem:[%s0 + $0xbc] sm:$0xff]
  %v48 = vld [vmem:[%s0 + $0xc4] sm:$0xff]
  %v49 = vld [vmem:[%s0 + $0xcc] sm:$0xff]
  %v50 = vld [vmem:[%s0 + $0xd4] sm:$0xf]
  %v51 = vld [vmem:[%s0 + $0xd8] sm:$0xff]
  %v52 = vld [vmem:[%s0 + $0xe0] sm:$0xff]
  %v53 = vld [vmem:[%s0 + $0xe8] sm:$0xff]
  %v54 = vld [vmem:[%s0 + $0xf0] sm:$0xff]
  %v55 = vld [vmem:[%s0 + $0xf8] sm:$0xf]
  %v56 = vld [vmem:[%s0 + $0xfc] sm:$0xff]
  %v57 = vld [vmem:[%s0 + $0x104] sm:$0xff]
  %v58 = vld [vmem:[%s0 + $0x10c] sm:$0xff]
  %v59 = vld [vmem:[%s0 + $0x114] sm:$0xff]
  %v60 = vld [vmem:[%s0 + $0x11c] sm:$0xf]
  %v61 = vld [vmem:[%s0 + $0x120] sm:$0xff]
  %v62 = vld [vmem:[%s0 + $0x128] sm:$0xff]
  %v63 = vld [vmem:[%s0 + $0x130] sm:$0xff]
  %v64 = vld [vmem:[%s0 + $0x138] sm:$0xff]
  %v65 = vld [vmem:[%s0 + $0x140] sm:$0xf]
  %v66 = vld [vmem:[%s0 + $0x144] sm:$0xff]
  %v67 = vld [vmem:[%s0 + $0x14c] sm:$0xff]
  %v68 = vld [vmem:[%s0 + $0x154] sm:$0xff]
  %v69 = vld [vmem:[%s0 + $0x15c] sm:$0xff]
  %v70 = vld [vmem:[%s0 + $0x164] sm:$0xf]
  %v71 = vld [vmem:[%s0 + $0x168] sm:$0xff]
  %v72 = vld [vmem:[%s0 + $0x170] sm:$0xff]
  %v73 = vld [vmem:[%s0 + $0x178] sm:$0xff]
  %v74 = vld [vmem:[%s0 + $0x180] sm:$0xff]
  %v75 = vld [vmem:[%s0 + $0x188] sm:$0xf]
  %v76 = vld [vmem:[%s0 + $0x18c] sm:$0xff]
  %v77 = vld [vmem:[%s0 + $0x194] sm:$0xff]
  %v78 = vld [vmem:[%s0 + $0x19c] sm:$0xff]
  %v79 = vld [vmem:[%s0 + $0x1a4] sm:$0xff]
  %v80 = vld [vmem:[%s0 + $0x1ac] sm:$0xf]
  %v81 = vld [vmem:[%s0 + $0x1b0] sm:$0xff]
  %v82 = vld [vmem:[%s0 + $0x1b8] sm:$0xff]
  %v83 = vld [vmem:[%s0 + $0x1c0] sm:$0xff]
  %v84 = vld [vmem:[%s0 + $0x1c8] sm:$0xff]
  %v85 = vld [vmem:[%s0 + $0x1d0] sm:$0xf]
  %v86 = vld [vmem:[%s0 + $0x1d4] sm:$0xff]
  %v87 = vld [vmem:[%s0 + $0x1dc] sm:$0xff]
  %v88 = vld [vmem:[%s0 + $0x1e4] sm:$0xff]
  %v89 = vld [vmem:[%s0 + $0x1ec] sm:$0xff]
  %v90 = vld [vmem:[%s0 + $0x1f4] sm:$0xf]
  %v91 = vld [vmem:[%s0 + $0x1f8] sm:$0xff]
  %v92 = vld [vmem:[%s0 + $0x200] sm:$0xff]
  %v93 = vld [vmem:[%s0 + $0x208] sm:$0xff]
  %v94 = vld [vmem:[%s0 + $0x210] sm:$0xff]
  %v95 = vld [vmem:[%s0 + $0x218] sm:$0xf]
  %v96 = vld [vmem:[%s0 + $0x21c] sm:$0xff]
  %v97 = vld [vmem:[%s0 + $0x224] sm:$0xff]
  %v98 = vld [vmem:[%s0 + $0x22c] sm:$0xff]
  %v99 = vld [vmem:[%s0 + $0x234] sm:$0xff]
  %v100 = vld [vmem:[%s0 + $0x23c] sm:$0xf]
  %v101 = vld [vmem:[%s1] sm:$0xf]
  %v102 = vld [vmem:[%s1 + $0x4] sm:$0xf]
  %v103 = vld [vmem:[%s1 + $0x8] sm:$0xf]
  %v104 = vld [vmem:[%s1 + $0xc] sm:$0xf]
  %v105 = vld [vmem:[%s1 + $0x10] sm:$0xf]
  %v106 = vld [vmem:[%s1 + $0x14] sm:$0xf]
  %v107 = vld [vmem:[%s1 + $0x18] sm:$0xf]
  %v108 = vld [vmem:[%s1 + $0x1c] sm:$0xf]
  %v109 = vld [vmem:[%s1 + $0x20] sm:$0xf]
  %v110 = vld [vmem:[%s1 + $0x24] sm:$0xf]
  %v111 = vld [vmem:[%s1 + $0x28] sm:$0xf]
  %v112 = vld [vmem:[%s1 + $0x2c] sm:$0xf]
  %v113 = vld [vmem:[%s1 + $0x30] sm:$0xf]
  %v114 = vld [vmem:[%s1 + $0x34] sm:$0xf]
  %v115 = vld [vmem:[%s1 + $0x38] sm:$0xf]
  %v116 = vld [vmem:[%s1 + $0x3c] sm:$0xf]
  %v117 = vld [vmem:[%s1 + $0x40] sm:$0xf]
  %v118 = vld [vmem:[%s1 + $0x44] sm:$0xf]
  %v119 = vld [vmem:[%s1 + $0x48] sm:$0xf]
  %v120 = vld [vmem:[%s1 + $0x4c] sm:$0xf]
  %v121 = vld [vmem:[%s1 + $0x50] sm:$0xf]
  %v122 = vld [vmem:[%s1 + $0x54] sm:$0xf]
  %v123 = vld [vmem:[%s1 + $0x58] sm:$0xf]
  %v124 = vld [vmem:[%s1 + $0x5c] sm:$0xf]
  %v125 = vld [vmem:[%s1 + $0x60] sm:$0xf]
  %v126 = vld [vmem:[%s1 + $0x64] sm:$0xf]
  %v127 = vld [vmem:[%s1 + $0x68] sm:$0xf]
  %v128 = vld [vmem:[%s1 + $0x6c] sm:$0xf]
  %v129 = vld [vmem:[%s1 + $0x70] sm:$0xf]
  %v130 = vld [vmem:[%s1 + $0x74] sm:$0xf]
  %v131 = vld [vmem:[%s1 + $0x78] sm:$0xf]
  %v132 = vld [vmem:[%s1 + $0x7c] sm:$0xf]
  %v133 = vld [vmem:[%s1 + $0x80] sm:$0xf]
  %v134 = vld [vmem:[%s1 + $0x84] sm:$0xf]
  %v135 = vld [vmem:[%s1 + $0x88] sm:$0xf]
  %v136 = vld [vmem:[%s1 + $0x8c] sm:$0xf]
  %v137 = vld [vmem:[%s1 + $0x90] sm:$0xf]
  %v138 = vld [vmem:[%s1 + $0x94] sm:$0xf]
  %v139 = vld [vmem:[%s1 + $0x98] sm:$0xf]
  %v140 = vld [vmem:[%s1 + $0x9c] sm:$0xf]
  %v141 = vld [vmem:[%s1 + $0xa0] sm:$0xf]
  %v142 = vld [vmem:[%s1 + $0xa4] sm:$0xf]
  %v143 = vld [vmem:[%s1 + $0xa8] sm:$0xf]
  %v144 = vld [vmem:[%s1 + $0xac] sm:$0xf]
  %v145 = vld [vmem:[%s1 + $0xb0] sm:$0xf]
  %v146 = vld [vmem:[%s1 + $0xb4] sm:$0xf]
  %v147 = vld [vmem:[%s1 + $0xb8] sm:$0xf]
  %v148 = vld [vmem:[%s1 + $0xbc] sm:$0xf]
  %v149 = vld [vmem:[%s1 + $0xc0] sm:$0xf]
  %v150 = vld [vmem:[%s1 + $0xc4] sm:$0xf]
  %v151 = vld [vmem:[%s1 + $0xc8] sm:$0xf]
  %v152 = vld [vmem:[%s1 + $0xcc] sm:$0xf]
  %v153 = vld [vmem:[%s1 + $0xd0] sm:$0xf]
  %v154 = vld [vmem:[%s1 + $0xd4] sm:$0xf]
  %v155 = vld [vmem:[%s1 + $0xd8] sm:$0xf]
  %v156 = vld [vmem:[%s1 + $0xdc] sm:$0xf]
  %v157 = vld [vmem:[%s1 + $0xe0] sm:$0xf]
  %v158 = vld [vmem:[%s1 + $0xe4] sm:$0xf]
  %v159 = vld [vmem:[%s1 + $0xe8] sm:$0xf]
  %v160 = vld [vmem:[%s1 + $0xec] sm:$0xf]
  %v161 = vld [vmem:[%s1 + $0xf0] sm:$0xf]
  %v162 = vld [vmem:[%s1 + $0xf4] sm:$0xf]
  %v163 = vld [vmem:[%s1 + $0xf8] sm:$0xf]
  %v164 = vld [vmem:[%s1 + $0xfc] sm:$0xf]
  %v165 = vld [vmem:[%s1 + $0x100] sm:$0xf]
  %v166 = vld [vmem:[%s1 + $0x104] sm:$0xf]
  %v167 = vld [vmem:[%s1 + $0x108] sm:$0xf]
  %v168 = vld [vmem:[%s1 + $0x10c] sm:$0xf]
  %v169 = vld [vmem:[%s1 + $0x110] sm:$0xf]
  %v170 = vld [vmem:[%s1 + $0x114] sm:$0xf]
  %v171 = vld [vmem:[%s1 + $0x118] sm:$0xf]
  %v172 = vld [vmem:[%s1 + $0x11c] sm:$0xf]
  %v173 = vld [vmem:[%s1 + $0x120] sm:$0xf]
  %v174 = vld [vmem:[%s1 + $0x124] sm:$0xf]
  %v175 = vld [vmem:[%s1 + $0x128] sm:$0xf]
  %v176 = vld [vmem:[%s1 + $0x12c] sm:$0xf]
  %v177 = vld [vmem:[%s1 + $0x130] sm:$0xf]
  %v178 = vld [vmem:[%s1 + $0x134] sm:$0xf]
  %v179 = vld [vmem:[%s1 + $0x138] sm:$0xf]
  %v180 = vld [vmem:[%s1 + $0x13c] sm:$0xf]
  %v181 = vld [vmem:[%s1 + $0x140] sm:$0xf]
  %v182 = vld [vmem:[%s1 + $0x144] sm:$0xf]
  %v183 = vld [vmem:[%s1 + $0x148] sm:$0xf]
  %v184 = vld [vmem:[%s1 + $0x14c] sm:$0xf]
  %v185 = vld [vmem:[%s1 + $0x150] sm:$0xf]
  %v186 = vld [vmem:[%s1 + $0x154] sm:$0xf]
  %v187 = vld [vmem:[%s1 + $0x158] sm:$0xf]
  %v188 = vld [vmem:[%s1 + $0x15c] sm:$0xf]
  %v189 = vld [vmem:[%s1 + $0x160] sm:$0xf]
  %v190 = vld [vmem:[%s1 + $0x164] sm:$0xf]
  %v191 = vld [vmem:[%s1 + $0x168] sm:$0xf]
  %v192 = vld [vmem:[%s1 + $0x16c] sm:$0xf]
  %v193 = vld [vmem:[%s1 + $0x170] sm:$0xf]
  %v194 = vld [vmem:[%s1 + $0x174] sm:$0xf]
  %v195 = vld [vmem:[%s1 + $0x178] sm:$0xf]
  %v196 = vld [vmem:[%s1 + $0x17c] sm:$0xf]
  %v197 = vld [vmem:[%s1 + $0x180] sm:$0xf]
  %v198 = vld [vmem:[%s1 + $0x184] sm:$0xf]
  %v199 = vld [vmem:[%s1 + $0x188] sm:$0xf]
  %v200 = vld [vmem:[%s1 + $0x18c] sm:$0xf]
  %v201 = vld [vmem:[%s1 + $0x190] sm:$0xf]
  %v202 = vld [vmem:[%s1 + $0x194] sm:$0xf]
  %v203 = vld [vmem:[%s1 + $0x198] sm:$0xf]
  %v204 = vld [vmem:[%s1 + $0x19c] sm:$0xf]
  %v205 = vld [vmem:[%s1 + $0x1a0] sm:$0xf]
  %v206 = vld [vmem:[%s1 + $0x1a4] sm:$0xf]
  %v207 = vld [vmem:[%s1 + $0x1a8] sm:$0xf]
  %v208 = vld [vmem:[%s1 + $0x1ac] sm:$0xf]
  %v209 = vld [vmem:[%s1 + $0x1b0] sm:$0xf]
  %v210 = vld [vmem:[%s1 + $0x1b4] sm:$0xf]
  %v211 = vld [vmem:[%s1 + $0x1b8] sm:$0xf]
  %v212 = vld [vmem:[%s1 + $0x1bc] sm:$0xf]
  %v213 = vld [vmem:[%s1 + $0x1c0] sm:$0xf]
  %v214 = vld [vmem:[%s1 + $0x1c4] sm:$0xf]
  %v215 = vld [vmem:[%s1 + $0x1c8] sm:$0xf]
  %v216 = vld [vmem:[%s1 + $0x1cc] sm:$0xf]
  %v217 = vld [vmem:[%s1 + $0x1d0] sm:$0xf]
  %v218 = vld [vmem:[%s1 + $0x1d4] sm:$0xf]
  %v219 = vld [vmem:[%s1 + $0x1d8] sm:$0xf]
  %v220 = vld [vmem:[%s1 + $0x1dc] sm:$0xf]
  %v221 = vld [vmem:[%s1 + $0x1e0] sm:$0xf]
  %v222 = vld [vmem:[%s1 + $0x1e4] sm:$0xf]
  %v223 = vld [vmem:[%s1 + $0x1e8] sm:$0xf]
  %v224 = vld [vmem:[%s1 + $0x1ec] sm:$0xf]
  %v225 = vld [vmem:[%s1 + $0x1f0] sm:$0xf]
  %v226 = vld [vmem:[%s1 + $0x1f4] sm:$0xf]
  %v227 = vld [vmem:[%s1 + $0x1f8] sm:$0xf]
  %v228 = vld [vmem:[%s1 + $0x1fc] sm:$0xf]
  %v229 = vld [vmem:[%s1 + $0x200] sm:$0xf]
  %v230 = vld [vmem:[%s1 + $0x204] sm:$0xf]
  %v231 = vld [vmem:[%s1 + $0x208] sm:$0xf]
  %v232 = vld [vmem:[%s1 + $0x20c] sm:$0xf]
  %v233 = vld [vmem:[%s1 + $0x210] sm:$0xf]
  %v234 = vld [vmem:[%s1 + $0x214] sm:$0xf]
  %v235 = vld [vmem:[%s1 + $0x218] sm:$0xf]
  %v236 = vld [vmem:[%s1 + $0x21c] sm:$0xf]
  %v237 = vld [vmem:[%s1 + $0x220] sm:$0xf]
  %v238 = vld [vmem:[%s1 + $0x224] sm:$0xf]
  %v239 = vld [vmem:[%s1 + $0x228] sm:$0xf]
  %v240 = vld [vmem:[%s1 + $0x22c] sm:$0xf]
  %v241 = vld [vmem:[%s1 + $0x230] sm:$0xf]
  %v242 = vld [vmem:[%s1 + $0x234] sm:$0xf]
  %v243 = vld [vmem:[%s1 + $0x238] sm:$0xf]
  %v244 = vld [vmem:[%s1 + $0x23c] sm:$0xf]
  %v245 = vld [vmem:[%s2] sm:$0x1]
  %v247 = vlaneseq
  %v248 = vshrl.u32 %v247, 7
  %v249 = vsub.s32 0, %v248
  %v250 = vrot.slane %v245, %v249
  %v332 = vunpack.c.l.b16 %v21
  %v333 = vunpack.c.h.b16 %v21
  %v334 = vunpack.c.l.b16 %v22
  %v335 = vunpack.c.h.b16 %v22
  %v336 = vunpack.c.l.b16 %v23
  %v337 = vunpack.c.h.b16 %v23
  %v338 = vunpack.c.l.b16 %v24
  %v339 = vunpack.c.h.b16 %v24
  %v340 = vunpack.c.l.b16 %v25
  %v341 = vunpack.c.l.b16 %v26
  %v342 = vunpack.c.h.b16 %v26
  %v343 = vunpack.c.l.b16 %v27
  %v344 = vunpack.c.h.b16 %v27
  %v345 = vunpack.c.l.b16 %v28
  %v346 = vunpack.c.h.b16 %v28
  %v347 = vunpack.c.l.b16 %v29
  %v348 = vunpack.c.h.b16 %v29
  %v349 = vunpack.c.l.b16 %v30
  %v350 = vunpack.c.l.b16 %v31
  %v351 = vunpack.c.h.b16 %v31
  %v352 = vunpack.c.l.b16 %v32
  %v353 = vunpack.c.h.b16 %v32
  %v354 = vunpack.c.l.b16 %v33
  %v355 = vunpack.c.h.b16 %v33
  %v356 = vunpack.c.l.b16 %v34
  %v357 = vunpack.c.h.b16 %v34
  %v358 = vunpack.c.l.b16 %v35
  %v359 = vunpack.c.l.b16 %v36
  %v360 = vunpack.c.h.b16 %v36
  %v361 = vunpack.c.l.b16 %v37
  %v362 = vunpack.c.h.b16 %v37
  %v363 = vunpack.c.l.b16 %v38
  %v364 = vunpack.c.h.b16 %v38
  %v365 = vunpack.c.l.b16 %v39
  %v366 = vunpack.c.h.b16 %v39
  %v367 = vunpack.c.l.b16 %v40
  %v368 = vunpack.c.l.b16 %v41
  %v369 = vunpack.c.h.b16 %v41
  %v370 = vunpack.c.l.b16 %v42
  %v371 = vunpack.c.h.b16 %v42
  %v372 = vunpack.c.l.b16 %v43
  %v373 = vunpack.c.h.b16 %v43
  %v374 = vunpack.c.l.b16 %v44
  %v375 = vunpack.c.h.b16 %v44
  %v376 = vunpack.c.l.b16 %v45
  %v377 = vunpack.c.l.b16 %v46
  %v378 = vunpack.c.h.b16 %v46
  %v379 = vunpack.c.l.b16 %v47
  %v380 = vunpack.c.h.b16 %v47
  %v381 = vunpack.c.l.b16 %v48
  %v382 = vunpack.c.h.b16 %v48
  %v383 = vunpack.c.l.b16 %v49
  %v384 = vunpack.c.h.b16 %v49
  %v385 = vunpack.c.l.b16 %v50
  %v386 = vunpack.c.l.b16 %v51
  %v387 = vunpack.c.h.b16 %v51
  %v388 = vunpack.c.l.b16 %v52
  %v389 = vunpack.c.h.b16 %v52
  %v390 = vunpack.c.l.b16 %v53
  %v391 = vunpack.c.h.b16 %v53
  %v392 = vunpack.c.l.b16 %v54
  %v393 = vunpack.c.h.b16 %v54
  %v394 = vunpack.c.l.b16 %v55
  %v395 = vunpack.c.l.b16 %v56
  %v396 = vunpack.c.h.b16 %v56
  %v397 = vunpack.c.l.b16 %v57
  %v398 = vunpack.c.h.b16 %v57
  %v399 = vunpack.c.l.b16 %v58
  %v400 = vunpack.c.h.b16 %v58
  %v401 = vunpack.c.l.b16 %v59
  %v402 = vunpack.c.h.b16 %v59
  %v403 = vunpack.c.l.b16 %v60
  %v404 = vunpack.c.l.b16 %v61
  %v405 = vunpack.c.h.b16 %v61
  %v406 = vunpack.c.l.b16 %v62
  %v407 = vunpack.c.h.b16 %v62
  %v408 = vunpack.c.l.b16 %v63
  %v409 = vunpack.c.h.b16 %v63
  %v410 = vunpack.c.l.b16 %v64
  %v411 = vunpack.c.h.b16 %v64
  %v412 = vunpack.c.l.b16 %v65
  %v413 = vunpack.c.l.b16 %v66
  %v414 = vunpack.c.h.b16 %v66
  %v415 = vunpack.c.l.b16 %v67
  %v416 = vunpack.c.h.b16 %v67
  %v417 = vunpack.c.l.b16 %v68
  %v418 = vunpack.c.h.b16 %v68
  %v419 = vunpack.c.l.b16 %v69
  %v420 = vunpack.c.h.b16 %v69
  %v421 = vunpack.c.l.b16 %v70
  %v422 = vunpack.c.l.b16 %v71
  %v423 = vunpack.c.h.b16 %v71
  %v424 = vunpack.c.l.b16 %v72
  %v425 = vunpack.c.h.b16 %v72
  %v426 = vunpack.c.l.b16 %v73
  %v427 = vunpack.c.h.b16 %v73
  %v428 = vunpack.c.l.b16 %v74
  %v429 = vunpack.c.h.b16 %v74
  %v430 = vunpack.c.l.b16 %v75
  %v431 = vunpack.c.l.b16 %v76
  %v432 = vunpack.c.h.b16 %v76
  %v433 = vunpack.c.l.b16 %v77
  %v434 = vunpack.c.h.b16 %v77
  %v435 = vunpack.c.l.b16 %v78
  %v436 = vunpack.c.h.b16 %v78
  %v437 = vunpack.c.l.b16 %v79
  %v438 = vunpack.c.h.b16 %v79
  %v439 = vunpack.c.l.b16 %v80
  %v440 = vunpack.c.l.b16 %v81
  %v441 = vunpack.c.h.b16 %v81
  %v442 = vunpack.c.l.b16 %v82
  %v443 = vunpack.c.h.b16 %v82
  %v444 = vunpack.c.l.b16 %v83
  %v445 = vunpack.c.h.b16 %v83
  %v446 = vunpack.c.l.b16 %v84
  %v447 = vunpack.c.h.b16 %v84
  %v448 = vunpack.c.l.b16 %v85
  %v449 = vunpack.c.l.b16 %v86
  %v450 = vunpack.c.h.b16 %v86
  %v451 = vunpack.c.l.b16 %v87
  %v452 = vunpack.c.h.b16 %v87
  %v453 = vunpack.c.l.b16 %v88
  %v454 = vunpack.c.h.b16 %v88
  %v455 = vunpack.c.l.b16 %v89
  %v456 = vunpack.c.h.b16 %v89
  %v457 = vunpack.c.l.b16 %v90
  %v458 = vunpack.c.l.b16 %v91
  %v459 = vunpack.c.h.b16 %v91
  %v460 = vunpack.c.l.b16 %v92
  %v461 = vunpack.c.h.b16 %v92
  %v462 = vunpack.c.l.b16 %v93
  %v463 = vunpack.c.h.b16 %v93
  %v464 = vunpack.c.l.b16 %v94
  %v465 = vunpack.c.h.b16 %v94
  %v466 = vunpack.c.l.b16 %v95
  %v467 = vunpack.c.l.b16 %v96
  %v468 = vunpack.c.h.b16 %v96
  %v469 = vunpack.c.l.b16 %v97
  %v470 = vunpack.c.h.b16 %v97
  %v471 = vunpack.c.l.b16 %v98
  %v472 = vunpack.c.h.b16 %v98
  %v473 = vunpack.c.l.b16 %v99
  %v474 = vunpack.c.h.b16 %v99
  %v475 = vunpack.c.l.b16 %v100
  %v476 = vpack.c.b16 %v341, %v332
  %v477 = vpack.c.b16 %v342, %v333
  %v478 = vpack.c.b16 %v343, %v334
  %v479 = vpack.c.b16 %v344, %v335
  %v480 = vpack.c.b16 %v345, %v336
  %v481 = vpack.c.b16 %v346, %v337
  %v482 = vpack.c.b16 %v347, %v338
  %v483 = vpack.c.b16 %v348, %v339
  %v484 = vpack.c.b16 %v349, %v340
  %v485 = vpack.c.b16 %v359, %v350
  %v486 = vpack.c.b16 %v360, %v351
  %v487 = vpack.c.b16 %v361, %v352
  %v488 = vpack.c.b16 %v362, %v353
  %v489 = vpack.c.b16 %v363, %v354
  %v490 = vpack.c.b16 %v364, %v355
  %v491 = vpack.c.b16 %v365, %v356
  %v492 = vpack.c.b16 %v366, %v357
  %v493 = vpack.c.b16 %v367, %v358
  %v494 = vpack.c.b16 %v377, %v368
  %v495 = vpack.c.b16 %v378, %v369
  %v496 = vpack.c.b16 %v379, %v370
  %v497 = vpack.c.b16 %v380, %v371
  %v498 = vpack.c.b16 %v381, %v372
  %v499 = vpack.c.b16 %v382, %v373
  %v500 = vpack.c.b16 %v383, %v374
  %v501 = vpack.c.b16 %v384, %v375
  %v502 = vpack.c.b16 %v385, %v376
  %v503 = vpack.c.b16 %v395, %v386
  %v504 = vpack.c.b16 %v396, %v387
  %v505 = vpack.c.b16 %v397, %v388
  %v506 = vpack.c.b16 %v398, %v389
  %v507 = vpack.c.b16 %v399, %v390
  %v508 = vpack.c.b16 %v400, %v391
  %v509 = vpack.c.b16 %v401, %v392
  %v510 = vpack.c.b16 %v402, %v393
  %v511 = vpack.c.b16 %v403, %v394
  %v512 = vpack.c.b16 %v413, %v404
  %v513 = vpack.c.b16 %v414, %v405
  %v514 = vpack.c.b16 %v415, %v406
  %v515 = vpack.c.b16 %v416, %v407
  %v516 = vpack.c.b16 %v417, %v408
  %v517 = vpack.c.b16 %v418, %v409
  %v518 = vpack.c.b16 %v419, %v410
  %v519 = vpack.c.b16 %v420, %v411
  %v520 = vpack.c.b16 %v421, %v412
  %v521 = vpack.c.b16 %v431, %v422
  %v522 = vpack.c.b16 %v432, %v423
  %v523 = vpack.c.b16 %v433, %v424
  %v524 = vpack.c.b16 %v434, %v425
  %v525 = vpack.c.b16 %v435, %v426
  %v526 = vpack.c.b16 %v436, %v427
  %v527 = vpack.c.b16 %v437, %v428
  %v528 = vpack.c.b16 %v438, %v429
  %v529 = vpack.c.b16 %v439, %v430
  %v530 = vpack.c.b16 %v449, %v440
  %v531 = vpack.c.b16 %v450, %v441
  %v532 = vpack.c.b16 %v451, %v442
  %v533 = vpack.c.b16 %v452, %v443
  %v534 = vpack.c.b16 %v453, %v444
  %v535 = vpack.c.b16 %v454, %v445
  %v536 = vpack.c.b16 %v455, %v446
  %v537 = vpack.c.b16 %v456, %v447
  %v538 = vpack.c.b16 %v457, %v448
  %v539 = vpack.c.b16 %v467, %v458
  %v540 = vpack.c.b16 %v468, %v459
  %v541 = vpack.c.b16 %v469, %v460
  %v542 = vpack.c.b16 %v470, %v461
  %v543 = vpack.c.b16 %v471, %v462
  %v544 = vpack.c.b16 %v472, %v463
  %v545 = vpack.c.b16 %v473, %v464
  %v546 = vpack.c.b16 %v474, %v465
  %v547 = vpack.c.b16 %v475, %v466
  %v764 = vunpack.c.l.b16 %v101
  %v765 = vunpack.c.l.b16 %v102
  %v766 = vunpack.c.l.b16 %v103
  %v767 = vunpack.c.l.b16 %v104
  %v768 = vunpack.c.l.b16 %v105
  %v769 = vunpack.c.l.b16 %v106
  %v770 = vunpack.c.l.b16 %v107
  %v771 = vunpack.c.l.b16 %v108
  %v772 = vunpack.c.l.b16 %v109
  %v773 = vunpack.c.l.b16 %v110
  %v774 = vunpack.c.l.b16 %v111
  %v775 = vunpack.c.l.b16 %v112
  %v776 = vunpack.c.l.b16 %v113
  %v777 = vunpack.c.l.b16 %v114
  %v778 = vunpack.c.l.b16 %v115
  %v779 = vunpack.c.l.b16 %v116
  %v780 = vunpack.c.l.b16 %v117
  %v781 = vunpack.c.l.b16 %v118
  %v782 = vunpack.c.l.b16 %v119
  %v783 = vunpack.c.l.b16 %v120
  %v784 = vunpack.c.l.b16 %v121
  %v785 = vunpack.c.l.b16 %v122
  %v786 = vunpack.c.l.b16 %v123
  %v787 = vunpack.c.l.b16 %v124
  %v788 = vunpack.c.l.b16 %v125
  %v789 = vunpack.c.l.b16 %v126
  %v790 = vunpack.c.l.b16 %v127
  %v791 = vunpack.c.l.b16 %v128
  %v792 = vunpack.c.l.b16 %v129
  %v793 = vunpack.c.l.b16 %v130
  %v794 = vunpack.c.l.b16 %v131
  %v795 = vunpack.c.l.b16 %v132
  %v796 = vunpack.c.l.b16 %v133
  %v797 = vunpack.c.l.b16 %v134
  %v798 = vunpack.c.l.b16 %v135
  %v799 = vunpack.c.l.b16 %v136
  %v800 = vunpack.c.l.b16 %v137
  %v801 = vunpack.c.l.b16 %v138
  %v802 = vunpack.c.l.b16 %v139
  %v803 = vunpack.c.l.b16 %v140
  %v804 = vunpack.c.l.b16 %v141
  %v805 = vunpack.c.l.b16 %v142
  %v806 = vunpack.c.l.b16 %v143
  %v807 = vunpack.c.l.b16 %v144
  %v808 = vunpack.c.l.b16 %v145
  %v809 = vunpack.c.l.b16 %v146
  %v810 = vunpack.c.l.b16 %v147
  %v811 = vunpack.c.l.b16 %v148
  %v812 = vunpack.c.l.b16 %v149
  %v813 = vunpack.c.l.b16 %v150
  %v814 = vunpack.c.l.b16 %v151
  %v815 = vunpack.c.l.b16 %v152
  %v816 = vunpack.c.l.b16 %v153
  %v817 = vunpack.c.l.b16 %v154
  %v818 = vunpack.c.l.b16 %v155
  %v819 = vunpack.c.l.b16 %v156
  %v820 = vunpack.c.l.b16 %v157
  %v821 = vunpack.c.l.b16 %v158
  %v822 = vunpack.c.l.b16 %v159
  %v823 = vunpack.c.l.b16 %v160
  %v824 = vunpack.c.l.b16 %v161
  %v825 = vunpack.c.l.b16 %v162
  %v826 = vunpack.c.l.b16 %v163
  %v827 = vunpack.c.l.b16 %v164
  %v828 = vunpack.c.l.b16 %v165
  %v829 = vunpack.c.l.b16 %v166
  %v830 = vunpack.c.l.b16 %v167
  %v831 = vunpack.c.l.b16 %v168
  %v832 = vunpack.c.l.b16 %v169
  %v833 = vunpack.c.l.b16 %v170
  %v834 = vunpack.c.l.b16 %v171
  %v835 = vunpack.c.l.b16 %v172
  %v836 = vunpack.c.l.b16 %v173
  %v837 = vunpack.c.l.b16 %v174
  %v838 = vunpack.c.l.b16 %v175
  %v839 = vunpack.c.l.b16 %v176
  %v840 = vunpack.c.l.b16 %v177
  %v841 = vunpack.c.l.b16 %v178
  %v842 = vunpack.c.l.b16 %v179
  %v843 = vunpack.c.l.b16 %v180
  %v844 = vunpack.c.l.b16 %v181
  %v845 = vunpack.c.l.b16 %v182
  %v846 = vunpack.c.l.b16 %v183
  %v847 = vunpack.c.l.b16 %v184
  %v848 = vunpack.c.l.b16 %v185
  %v849 = vunpack.c.l.b16 %v186
  %v850 = vunpack.c.l.b16 %v187
  %v851 = vunpack.c.l.b16 %v188
  %v852 = vunpack.c.l.b16 %v189
  %v853 = vunpack.c.l.b16 %v190
  %v854 = vunpack.c.l.b16 %v191
  %v855 = vunpack.c.l.b16 %v192
  %v856 = vunpack.c.l.b16 %v193
  %v857 = vunpack.c.l.b16 %v194
  %v858 = vunpack.c.l.b16 %v195
  %v859 = vunpack.c.l.b16 %v196
  %v860 = vunpack.c.l.b16 %v197
  %v861 = vunpack.c.l.b16 %v198
  %v862 = vunpack.c.l.b16 %v199
  %v863 = vunpack.c.l.b16 %v200
  %v864 = vunpack.c.l.b16 %v201
  %v865 = vunpack.c.l.b16 %v202
  %v866 = vunpack.c.l.b16 %v203
  %v867 = vunpack.c.l.b16 %v204
  %v868 = vunpack.c.l.b16 %v205
  %v869 = vunpack.c.l.b16 %v206
  %v870 = vunpack.c.l.b16 %v207
  %v871 = vunpack.c.l.b16 %v208
  %v872 = vunpack.c.l.b16 %v209
  %v873 = vunpack.c.l.b16 %v210
  %v874 = vunpack.c.l.b16 %v211
  %v875 = vunpack.c.l.b16 %v212
  %v876 = vunpack.c.l.b16 %v213
  %v877 = vunpack.c.l.b16 %v214
  %v878 = vunpack.c.l.b16 %v215
  %v879 = vunpack.c.l.b16 %v216
  %v880 = vunpack.c.l.b16 %v217
  %v881 = vunpack.c.l.b16 %v218
  %v882 = vunpack.c.l.b16 %v219
  %v883 = vunpack.c.l.b16 %v220
  %v884 = vunpack.c.l.b16 %v221
  %v885 = vunpack.c.l.b16 %v222
  %v886 = vunpack.c.l.b16 %v223
  %v887 = vunpack.c.l.b16 %v224
  %v888 = vunpack.c.l.b16 %v225
  %v889 = vunpack.c.l.b16 %v226
  %v890 = vunpack.c.l.b16 %v227
  %v891 = vunpack.c.l.b16 %v228
  %v892 = vunpack.c.l.b16 %v229
  %v893 = vunpack.c.l.b16 %v230
  %v894 = vunpack.c.l.b16 %v231
  %v895 = vunpack.c.l.b16 %v232
  %v896 = vunpack.c.l.b16 %v233
  %v897 = vunpack.c.l.b16 %v234
  %v898 = vunpack.c.l.b16 %v235
  %v899 = vunpack.c.l.b16 %v236
  %v900 = vunpack.c.l.b16 %v237
  %v901 = vunpack.c.l.b16 %v238
  %v902 = vunpack.c.l.b16 %v239
  %v903 = vunpack.c.l.b16 %v240
  %v904 = vunpack.c.l.b16 %v241
  %v905 = vunpack.c.l.b16 %v242
  %v906 = vunpack.c.l.b16 %v243
  %v907 = vunpack.c.l.b16 %v244
  %v908 = vpack.c.b16 %v765, %v764
  %v909 = vpack.c.b16 %v767, %v766
  %v910 = vpack.c.b16 %v769, %v768
  %v911 = vpack.c.b16 %v771, %v770
  %v912 = vpack.c.b16 %v773, %v772
  %v913 = vpack.c.b16 %v775, %v774
  %v914 = vpack.c.b16 %v777, %v776
  %v915 = vpack.c.b16 %v779, %v778
  %v916 = vpack.c.b16 %v781, %v780
  %v917 = vpack.c.b16 %v783, %v782
  %v918 = vpack.c.b16 %v785, %v784
  %v919 = vpack.c.b16 %v787, %v786
  %v920 = vpack.c.b16 %v789, %v788
  %v921 = vpack.c.b16 %v791, %v790
  %v922 = vpack.c.b16 %v793, %v792
  %v923 = vpack.c.b16 %v795, %v794
  %v924 = vpack.c.b16 %v797, %v796
  %v925 = vpack.c.b16 %v799, %v798
  %v926 = vpack.c.b16 %v801, %v800
  %v927 = vpack.c.b16 %v803, %v802
  %v928 = vpack.c.b16 %v805, %v804
  %v929 = vpack.c.b16 %v807, %v806
  %v930 = vpack.c.b16 %v809, %v808
  %v931 = vpack.c.b16 %v811, %v810
  %v932 = vpack.c.b16 %v813, %v812
  %v933 = vpack.c.b16 %v815, %v814
  %v934 = vpack.c.b16 %v817, %v816
  %v935 = vpack.c.b16 %v819, %v818
  %v936 = vpack.c.b16 %v821, %v820
  %v937 = vpack.c.b16 %v823, %v822
  %v938 = vpack.c.b16 %v825, %v824
  %v939 = vpack.c.b16 %v827, %v826
  %v940 = vpack.c.b16 %v829, %v828
  %v941 = vpack.c.b16 %v831, %v830
  %v942 = vpack.c.b16 %v833, %v832
  %v943 = vpack.c.b16 %v835, %v834
  %v944 = vpack.c.b16 %v837, %v836
  %v945 = vpack.c.b16 %v839, %v838
  %v946 = vpack.c.b16 %v841, %v840
  %v947 = vpack.c.b16 %v843, %v842
  %v948 = vpack.c.b16 %v845, %v844
  %v949 = vpack.c.b16 %v847, %v846
  %v950 = vpack.c.b16 %v849, %v848
  %v951 = vpack.c.b16 %v851, %v850
  %v952 = vpack.c.b16 %v853, %v852
  %v953 = vpack.c.b16 %v855, %v854
  %v954 = vpack.c.b16 %v857, %v856
  %v955 = vpack.c.b16 %v859, %v858
  %v956 = vpack.c.b16 %v861, %v860
  %v957 = vpack.c.b16 %v863, %v862
  %v958 = vpack.c.b16 %v865, %v864
  %v959 = vpack.c.b16 %v867, %v866
  %v960 = vpack.c.b16 %v869, %v868
  %v961 = vpack.c.b16 %v871, %v870
  %v962 = vpack.c.b16 %v873, %v872
  %v963 = vpack.c.b16 %v875, %v874
  %v964 = vpack.c.b16 %v877, %v876
  %v965 = vpack.c.b16 %v879, %v878
  %v966 = vpack.c.b16 %v881, %v880
  %v967 = vpack.c.b16 %v883, %v882
  %v968 = vpack.c.b16 %v885, %v884
  %v969 = vpack.c.b16 %v887, %v886
  %v970 = vpack.c.b16 %v889, %v888
  %v971 = vpack.c.b16 %v891, %v890
  %v972 = vpack.c.b16 %v893, %v892
  %v973 = vpack.c.b16 %v895, %v894
  %v974 = vpack.c.b16 %v897, %v896
  %v975 = vpack.c.b16 %v899, %v898
  %v976 = vpack.c.b16 %v901, %v900
  %v977 = vpack.c.b16 %v903, %v902
  %v978 = vpack.c.b16 %v905, %v904
  %v979 = vpack.c.b16 %v907, %v906
  %1052 = vmatprep.subr.bf16.mxu0 0
  %1053 = vmatpush1.bf16.msra.mxu0 %v908
  %1054 = vmatprep.subr.bf16.mxu0 0
  %1055 = vmatpush1.bf16.msra.mxu0 %v909
  %1056 = vmatprep.subr.bf16.mxu0 0
  %1057 = vmatpush1.bf16.msra.mxu0 %v910
  %1058 = vmatprep.subr.bf16.mxu0 0
  %1059 = vmatpush1.bf16.msra.mxu0 %v911
  %1060 = vmatprep.subr.bf16.mxu0 0
  %1061 = vmatpush1.bf16.msra.mxu0 %v912
  %1062 = vmatprep.subr.bf16.mxu0 0
  %1063 = vmatpush1.bf16.msra.mxu0 %v913
  %1064 = vmatprep.subr.bf16.mxu0 0
  %1065 = vmatpush1.bf16.msra.mxu0 %v914
  %1066 = vmatprep.subr.bf16.mxu0 0
  %1067 = vmatpush1.bf16.msra.mxu0 %v915
  %1068 = vmatprep.subr.bf16.mxu0 0
  %1069 = vmatpush1.bf16.msra.mxu0 %v916
  %1070 = vmatprep.subr.bf16.mxu0 0
  %1071 = vmatpush1.bf16.msra.mxu0 %v917
  %1072 = vmatprep.subr.bf16.mxu0 0
  %1073 = vmatpush1.bf16.msra.mxu0 %v918
  %1074 = vmatprep.subr.bf16.mxu0 0
  %1075 = vmatpush1.bf16.msra.mxu0 %v919
  %1076 = vmatprep.subr.bf16.mxu0 0
  %1077 = vmatpush1.bf16.msra.mxu0 %v920
  %1078 = vmatprep.subr.bf16.mxu0 0
  %1079 = vmatpush1.bf16.msra.mxu0 %v921
  %1080 = vmatprep.subr.bf16.mxu0 0
  %1081 = vmatpush1.bf16.msra.mxu0 %v922
  %1082 = vmatprep.subr.bf16.mxu0 0
  %1083 = vmatpush1.bf16.msra.mxu0 %v923
  %1084 = vmatprep.mubr.bf16.mxu0 %v477
  %1085 = vmatmul.mubr.bf16.gmra.mrb[0].mxu0 %v476
  %v1086 = vpop.f32.mrb[0].mxu0
  %v1087 = vadd.f32 %v250, %v1086
  %v1088 = vpop.f32.mrb[0].mxu0
  %v1089 = vpop.f32.mrb[0].mxu0
  %v1090 = vadd.f32 %v250, %v1089
  %v1091 = vpop.f32.mrb[0].mxu0
  %1092 = vmatprep.mubr.bf16.mxu0 %v486
  %1093 = vmatmul.mubr.bf16.gmra.mrb[0].mxu0 %v485
  %v1094 = vpop.f32.mrb[0].mxu0
  %v1095 = vadd.f32 %v250, %v1094
  %v1096 = vpop.f32.mrb[0].mxu0
  %v1097 = vpop.f32.mrb[0].mxu0
  %v1098 = vadd.f32 %v250, %v1097
  %v1099 = vpop.f32.mrb[0].mxu0
  %1100 = vmatprep.mubr.bf16.mxu0 %v495
  %1101 = vmatmul.mubr.bf16.gmra.mrb[0].mxu0 %v494
  %v1102 = vpop.f32.mrb[0].mxu0
  %v1103 = vadd.f32 %v250, %v1102
  %v1104 = vpop.f32.mrb[0].mxu0
  %v1105 = vpop.f32.mrb[0].mxu0
  %v1106 = vadd.f32 %v250, %v1105
  %v1107 = vpop.f32.mrb[0].mxu0
  %1108 = vmatprep.mubr.bf16.mxu0 %v504
  %1109 = vmatmul.mubr.bf16.gmra.mrb[0].mxu0 %v503
  %v1110 = vpop.f32.mrb[0].mxu0
  %v1111 = vadd.f32 %v250, %v1110
  %v1112 = vpop.f32.mrb[0].mxu0
  %v1113 = vpop.f32.mrb[0].mxu0
  %v1114 = vadd.f32 %v250, %v1113
  %v1115 = vpop.f32.mrb[0].mxu0
  %1116 = vmatprep.mubr.bf16.mxu0 %v513
  %1117 = vmatmul.mubr.bf16.gmra.mrb[0].mxu0 %v512
  %v1118 = vpop.f32.mrb[0].mxu0
  %v1119 = vadd.f32 %v250, %v1118
  %v1120 = vpop.f32.mrb[0].mxu0
  %v1121 = vpop.f32.mrb[0].mxu0
  %v1122 = vadd.f32 %v250, %v1121
  %v1123 = vpop.f32.mrb[0].mxu0
  %1124 = vmatprep.mubr.bf16.mxu0 %v522
  %1125 = vmatmul.mubr.bf16.gmra.mrb[0].mxu0 %v521
  %v1126 = vpop.f32.mrb[0].mxu0
  %v1127 = vadd.f32 %v250, %v1126
  %v1128 = vpop.f32.mrb[0].mxu0
  %v1129 = vpop.f32.mrb[0].mxu0
  %v1130 = vadd.f32 %v250, %v1129
  %v1131 = vpop.f32.mrb[0].mxu0
  %1132 = vmatprep.mubr.bf16.mxu0 %v531
  %1133 = vmatmul.mubr.bf16.gmra.mrb[0].mxu0 %v530
  %v1134 = vpop.f32.mrb[0].mxu0
  %v1135 = vadd.f32 %v250, %v1134
  %v1136 = vpop.f32.mrb[0].mxu0
  %v1137 = vpop.f32.mrb[0].mxu0
  %v1138 = vadd.f32 %v250, %v1137
  %v1139 = vpop.f32.mrb[0].mxu0
  %1140 = vmatprep.mubr.bf16.mxu0 %v540
  %1141 = vmatmul.mubr.bf16.gmra.mrb[0].mxu0 %v539
  %v1142 = vpop.f32.mrb[0].mxu0
  %v1143 = vadd.f32 %v250, %v1142
  %v1144 = vpop.f32.mrb[0].mxu0
  %v1145 = vpop.f32.mrb[0].mxu0
  %v1146 = vadd.f32 %v250, %v1145
  %v1147 = vpop.f32.mrb[0].mxu0
  %1148 = vdwg.mxu0
  %1149 = vmatprep.subr.bf16.mxu0 0
  %1150 = vmatpush1.bf16.msra.mxu0 %v924
  %1151 = vmatprep.subr.bf16.mxu0 0
  %1152 = vmatpush1.bf16.msra.mxu0 %v925
  %1153 = vmatprep.subr.bf16.mxu0 0
  %1154 = vmatpush1.bf16.msra.mxu0 %v926
  %1155 = vmatprep.subr.bf16.mxu0 0
  %1156 = vmatpush1.bf16.msra.mxu0 %v927
  %1157 = vmatprep.subr.bf16.mxu0 0
  %1158 = vmatpush1.bf16.msra.mxu0 %v928
  %1159 = vmatprep.subr.bf16.mxu0 0
  %1160 = vmatpush1.bf16.msra.mxu0 %v929
  %1161 = vmatprep.subr.bf16.mxu0 0
  %1162 = vmatpush1.bf16.msra.mxu0 %v930
  %1163 = vmatprep.subr.bf16.mxu0 0
  %1164 = vmatpush1.bf16.msra.mxu0 %v931
  %1165 = vmatprep.subr.bf16.mxu0 0
  %1166 = vmatpush1.bf16.msra.mxu0 %v932
  %1167 = vmatprep.subr.bf16.mxu0 0
  %1168 = vmatpush1.bf16.msra.mxu0 %v933
  %1169 = vmatprep.subr.bf16.mxu0 0
  %1170 = vmatpush1.bf16.msra.mxu0 %v934
  %1171 = vmatprep.subr.bf16.mxu0 0
  %1172 = vmatpush1.bf16.msra.mxu0 %v935
  %1173 = vmatprep.subr.bf16.mxu0 0
  %1174 = vmatpush1.bf16.msra.mxu0 %v936
  %1175 = vmatprep.subr.bf16.mxu0 0
  %1176 = vmatpush1.bf16.msra.mxu0 %v937
  %1177 = vmatprep.subr.bf16.mxu0 0
  %1178 = vmatpush1.bf16.msra.mxu0 %v938
  %1179 = vmatprep.subr.bf16.mxu0 0
  %1180 = vmatpush1.bf16.msra.mxu0 %v939
  %1181 = vmatprep.mubr.bf16.mxu0 %v479
  %1182 = vmatmul.mubr.bf16.gmra.mrb[0].mxu0 %v478
  %v1183 = vpop.f32.mrb[0].mxu0
  %v1184 = vadd.f32 %v1087, %v1183
  %v1185 = vpop.f32.mrb[0].mxu0
  %v1186 = vpop.f32.mrb[0].mxu0
  %v1187 = vadd.f32 %v1090, %v1186
  %v1188 = vpop.f32.mrb[0].mxu0
  %1189 = vmatprep.mubr.bf16.mxu0 %v488
  %1190 = vmatmul.mubr.bf16.gmra.mrb[0].mxu0 %v487
  %v1191 = vpop.f32.mrb[0].mxu0
  %v1192 = vadd.f32 %v1095, %v1191
  %v1193 = vpop.f32.mrb[0].mxu0
  %v1194 = vpop.f32.mrb[0].mxu0
  %v1195 = vadd.f32 %v1098, %v1194
  %v1196 = vpop.f32.mrb[0].mxu0
  %1197 = vmatprep.mubr.bf16.mxu0 %v497
  %1198 = vmatmul.mubr.bf16.gmra.mrb[0].mxu0 %v496
  %v1199 = vpop.f32.mrb[0].mxu0
  %v1200 = vadd.f32 %v1103, %v1199
  %v1201 = vpop.f32.mrb[0].mxu0
  %v1202 = vpop.f32.mrb[0].mxu0
  %v1203 = vadd.f32 %v1106, %v1202
  %v1204 = vpop.f32.mrb[0].mxu0
  %1205 = vmatprep.mubr.bf16.mxu0 %v506
  %1206 = vmatmul.mubr.bf16.gmra.mrb[0].mxu0 %v505
  %v1207 = vpop.f32.mrb[0].mxu0
  %v1208 = vadd.f32 %v1111, %v1207
  %v1209 = vpop.f32.mrb[0].mxu0
  %v1210 = vpop.f32.mrb[0].mxu0
  %v1211 = vadd.f32 %v1114, %v1210
  %v1212 = vpop.f32.mrb[0].mxu0
  %1213 = vmatprep.mubr.bf16.mxu0 %v515
  %1214 = vmatmul.mubr.bf16.gmra.mrb[0].mxu0 %v514
  %v1215 = vpop.f32.mrb[0].mxu0
  %v1216 = vadd.f32 %v1119, %v1215
  %v1217 = vpop.f32.mrb[0].mxu0
  %v1218 = vpop.f32.mrb[0].mxu0
  %v1219 = vadd.f32 %v1122, %v1218
  %v1220 = vpop.f32.mrb[0].mxu0
  %1221 = vmatprep.mubr.bf16.mxu0 %v524
  %1222 = vmatmul.mubr.bf16.gmra.mrb[0].mxu0 %v523
  %v1223 = vpop.f32.mrb[0].mxu0
  %v1224 = vadd.f32 %v1127, %v1223
  %v1225 = vpop.f32.mrb[0].mxu0
  %v1226 = vpop.f32.mrb[0].mxu0
  %v1227 = vadd.f32 %v1130, %v1226
  %v1228 = vpop.f32.mrb[0].mxu0
  %1229 = vmatprep.mubr.bf16.mxu0 %v533
  %1230 = vmatmul.mubr.bf16.gmra.mrb[0].mxu0 %v532
  %v1231 = vpop.f32.mrb[0].mxu0
  %v1232 = vadd.f32 %v1135, %v1231
  %v1233 = vpop.f32.mrb[0].mxu0
  %v1234 = vpop.f32.mrb[0].mxu0
  %v1235 = vadd.f32 %v1138, %v1234
  %v1236 = vpop.f32.mrb[0].mxu0
  %1237 = vmatprep.mubr.bf16.mxu0 %v542
  %1238 = vmatmul.mubr.bf16.gmra.mrb[0].mxu0 %v541
  %v1239 = vpop.f32.mrb[0].mxu0
  %v1240 = vadd.f32 %v1143, %v1239
  %v1241 = vpop.f32.mrb[0].mxu0
  %v1242 = vpop.f32.mrb[0].mxu0
  %v1243 = vadd.f32 %v1146, %v1242
  %v1244 = vpop.f32.mrb[0].mxu0
  %1245 = vdwg.mxu0
  %1246 = vmatprep.subr.bf16.mxu0 0
  %1247 = vmatpush1.bf16.msra.mxu0 %v940
  %1248 = vmatprep.subr.bf16.mxu0 0
  %1249 = vmatpush1.bf16.msra.mxu0 %v941
  %1250 = vmatprep.subr.bf16.mxu0 0
  %1251 = vmatpush1.bf16.msra.mxu0 %v942
  %1252 = vmatprep.subr.bf16.mxu0 0
  %1253 = vmatpush1.bf16.msra.mxu0 %v943
  %1254 = vmatprep.subr.bf16.mxu0 0
  %1255 = vmatpush1.bf16.msra.mxu0 %v944
  %1256 = vmatprep.subr.bf16.mxu0 0
  %1257 = vmatpush1.bf16.msra.mxu0 %v945
  %1258 = vmatprep.subr.bf16.mxu0 0
  %1259 = vmatpush1.bf16.msra.mxu0 %v946
  %1260 = vmatprep.subr.bf16.mxu0 0
  %1261 = vmatpush1.bf16.msra.mxu0 %v947
  %1262 = vmatprep.subr.bf16.mxu0 0
  %1263 = vmatpush1.bf16.msra.mxu0 %v948
  %1264 = vmatprep.subr.bf16.mxu0 0
  %1265 = vmatpush1.bf16.msra.mxu0 %v949
  %1266 = vmatprep.subr.bf16.mxu0 0
  %1267 = vmatpush1.bf16.msra.mxu0 %v950
  %1268 = vmatprep.subr.bf16.mxu0 0
  %1269 = vmatpush1.bf16.msra.mxu0 %v951
  %1270 = vmatprep.subr.bf16.mxu0 0
  %1271 = vmatpush1.bf16.msra.mxu0 %v952
  %1272 = vmatprep.subr.bf16.mxu0 0
  %1273 = vmatpush1.bf16.msra.mxu0 %v953
  %1274 = vmatprep.subr.bf16.mxu0 0
  %1275 = vmatpush1.bf16.msra.mxu0 %v954
  %1276 = vmatprep.subr.bf16.mxu0 0
  %1277 = vmatpush1.bf16.msra.mxu0 %v955
  %1278 = vmatprep.mubr.bf16.mxu0 %v481
  %1279 = vmatmul.mubr.bf16.gmra.mrb[0].mxu0 %v480
  %v1280 = vpop.f32.mrb[0].mxu0
  %v1281 = vadd.f32 %v1184, %v1280
  %v1282 = vpop.f32.mrb[0].mxu0
  %v1283 = vpop.f32.mrb[0].mxu0
  %v1284 = vadd.f32 %v1187, %v1283
  %v1285 = vpop.f32.mrb[0].mxu0
  %1286 = vmatprep.mubr.bf16.mxu0 %v490
  %1287 = vmatmul.mubr.bf16.gmra.mrb[0].mxu0 %v489
  %v1288 = vpop.f32.mrb[0].mxu0
  %v1289 = vadd.f32 %v1192, %v1288
  %v1290 = vpop.f32.mrb[0].mxu0
  %v1291 = vpop.f32.mrb[0].mxu0
  %v1292 = vadd.f32 %v1195, %v1291
  %v1293 = vpop.f32.mrb[0].mxu0
  %1294 = vmatprep.mubr.bf16.mxu0 %v499
  %1295 = vmatmul.mubr.bf16.gmra.mrb[0].mxu0 %v498
  %v1296 = vpop.f32.mrb[0].mxu0
  %v1297 = vadd.f32 %v1200, %v1296
  %v1298 = vpop.f32.mrb[0].mxu0
  %v1299 = vpop.f32.mrb[0].mxu0
  %v1300 = vadd.f32 %v1203, %v1299
  %v1301 = vpop.f32.mrb[0].mxu0
  %1302 = vmatprep.mubr.bf16.mxu0 %v508
  %1303 = vmatmul.mubr.bf16.gmra.mrb[0].mxu0 %v507
  %v1304 = vpop.f32.mrb[0].mxu0
  %v1305 = vadd.f32 %v1208, %v1304
  %v1306 = vpop.f32.mrb[0].mxu0
  %v1307 = vpop.f32.mrb[0].mxu0
  %v1308 = vadd.f32 %v1211, %v1307
  %v1309 = vpop.f32.mrb[0].mxu0
  %1310 = vmatprep.mubr.bf16.mxu0 %v517
  %1311 = vmatmul.mubr.bf16.gmra.mrb[0].mxu0 %v516
  %v1312 = vpop.f32.mrb[0].mxu0
  %v1313 = vadd.f32 %v1216, %v1312
  %v1314 = vpop.f32.mrb[0].mxu0
  %v1315 = vpop.f32.mrb[0].mxu0
  %v1316 = vadd.f32 %v1219, %v1315
  %v1317 = vpop.f32.mrb[0].mxu0
  %1318 = vmatprep.mubr.bf16.mxu0 %v526
  %1319 = vmatmul.mubr.bf16.gmra.mrb[0].mxu0 %v525
  %v1320 = vpop.f32.mrb[0].mxu0
  %v1321 = vadd.f32 %v1224, %v1320
  %v1322 = vpop.f32.mrb[0].mxu0
  %v1323 = vpop.f32.mrb[0].mxu0
  %v1324 = vadd.f32 %v1227, %v1323
  %v1325 = vpop.f32.mrb[0].mxu0
  %1326 = vmatprep.mubr.bf16.mxu0 %v535
  %1327 = vmatmul.mubr.bf16.gmra.mrb[0].mxu0 %v534
  %v1328 = vpop.f32.mrb[0].mxu0
  %v1329 = vadd.f32 %v1232, %v1328
  %v1330 = vpop.f32.mrb[0].mxu0
  %v1331 = vpop.f32.mrb[0].mxu0
  %v1332 = vadd.f32 %v1235, %v1331
  %v1333 = vpop.f32.mrb[0].mxu0
  %1334 = vmatprep.mubr.bf16.mxu0 %v544
  %1335 = vmatmul.mubr.bf16.gmra.mrb[0].mxu0 %v543
  %v1336 = vpop.f32.mrb[0].mxu0
  %v1337 = vadd.f32 %v1240, %v1336
  %v1338 = vpop.f32.mrb[0].mxu0
  %v1339 = vpop.f32.mrb[0].mxu0
  %v1340 = vadd.f32 %v1243, %v1339
  %v1341 = vpop.f32.mrb[0].mxu0
  %1342 = vdwg.mxu0
  %1343 = vmatprep.subr.bf16.mxu0 0
  %1344 = vmatpush1.bf16.msra.mxu0 %v956
  %1345 = vmatprep.subr.bf16.mxu0 0
  %1346 = vmatpush1.bf16.msra.mxu0 %v957
  %1347 = vmatprep.subr.bf16.mxu0 0
  %1348 = vmatpush1.bf16.msra.mxu0 %v958
  %1349 = vmatprep.subr.bf16.mxu0 0
  %1350 = vmatpush1.bf16.msra.mxu0 %v959
  %1351 = vmatprep.subr.bf16.mxu0 0
  %1352 = vmatpush1.bf16.msra.mxu0 %v960
  %1353 = vmatprep.subr.bf16.mxu0 0
  %1354 = vmatpush1.bf16.msra.mxu0 %v961
  %1355 = vmatprep.subr.bf16.mxu0 0
  %1356 = vmatpush1.bf16.msra.mxu0 %v962
  %1357 = vmatprep.subr.bf16.mxu0 0
  %1358 = vmatpush1.bf16.msra.mxu0 %v963
  %1359 = vmatprep.subr.bf16.mxu0 0
  %1360 = vmatpush1.bf16.msra.mxu0 %v964
  %1361 = vmatprep.subr.bf16.mxu0 0
  %1362 = vmatpush1.bf16.msra.mxu0 %v965
  %1363 = vmatprep.subr.bf16.mxu0 0
  %1364 = vmatpush1.bf16.msra.mxu0 %v966
  %1365 = vmatprep.subr.bf16.mxu0 0
  %1366 = vmatpush1.bf16.msra.mxu0 %v967
  %1367 = vmatprep.subr.bf16.mxu0 0
  %1368 = vmatpush1.bf16.msra.mxu0 %v968
  %1369 = vmatprep.subr.bf16.mxu0 0
  %1370 = vmatpush1.bf16.msra.mxu0 %v969
  %1371 = vmatprep.subr.bf16.mxu0 0
  %1372 = vmatpush1.bf16.msra.mxu0 %v970
  %1373 = vmatprep.subr.bf16.mxu0 0
  %1374 = vmatpush1.bf16.msra.mxu0 %v971
  %1375 = vmatprep.mubr.bf16.mxu0 %v483
  %1376 = vmatmul.mubr.bf16.gmra.mrb[0].mxu0 %v482
  %v1377 = vpop.f32.mrb[0].mxu0
  %v1378 = vadd.f32 %v1281, %v1377
  %v1379 = vpop.f32.mrb[0].mxu0
  %v1380 = vpop.f32.mrb[0].mxu0
  %v1381 = vadd.f32 %v1284, %v1380
  %v1382 = vpop.f32.mrb[0].mxu0
  %1383 = vmatprep.mubr.bf16.mxu0 %v492
  %1384 = vmatmul.mubr.bf16.gmra.mrb[0].mxu0 %v491
  %v1385 = vpop.f32.mrb[0].mxu0
  %v1386 = vadd.f32 %v1289, %v1385
  %v1387 = vpop.f32.mrb[0].mxu0
  %v1388 = vpop.f32.mrb[0].mxu0
  %v1389 = vadd.f32 %v1292, %v1388
  %v1390 = vpop.f32.mrb[0].mxu0
  %1391 = vmatprep.mubr.bf16.mxu0 %v501
  %1392 = vmatmul.mubr.bf16.gmra.mrb[0].mxu0 %v500
  %v1393 = vpop.f32.mrb[0].mxu0
  %v1394 = vadd.f32 %v1297, %v1393
  %v1395 = vpop.f32.mrb[0].mxu0
  %v1396 = vpop.f32.mrb[0].mxu0
  %v1397 = vadd.f32 %v1300, %v1396
  %v1398 = vpop.f32.mrb[0].mxu0
  %1399 = vmatprep.mubr.bf16.mxu0 %v510
  %1400 = vmatmul.mubr.bf16.gmra.mrb[0].mxu0 %v509
  %v1401 = vpop.f32.mrb[0].mxu0
  %v1402 = vadd.f32 %v1305, %v1401
  %v1403 = vpop.f32.mrb[0].mxu0
  %v1404 = vpop.f32.mrb[0].mxu0
  %v1405 = vadd.f32 %v1308, %v1404
  %v1406 = vpop.f32.mrb[0].mxu0
  %1407 = vmatprep.mubr.bf16.mxu0 %v519
  %1408 = vmatmul.mubr.bf16.gmra.mrb[0].mxu0 %v518
  %v1409 = vpop.f32.mrb[0].mxu0
  %v1410 = vadd.f32 %v1313, %v1409
  %v1411 = vpop.f32.mrb[0].mxu0
  %v1412 = vpop.f32.mrb[0].mxu0
  %v1413 = vadd.f32 %v1316, %v1412
  %v1414 = vpop.f32.mrb[0].mxu0
  %1415 = vmatprep.mubr.bf16.mxu0 %v528
  %1416 = vmatmul.mubr.bf16.gmra.mrb[0].mxu0 %v527
  %v1417 = vpop.f32.mrb[0].mxu0
  %v1418 = vadd.f32 %v1321, %v1417
  %v1419 = vpop.f32.mrb[0].mxu0
  %v1420 = vpop.f32.mrb[0].mxu0
  %v1421 = vadd.f32 %v1324, %v1420
  %v1422 = vpop.f32.mrb[0].mxu0
  %1423 = vmatprep.mubr.bf16.mxu0 %v537
  %1424 = vmatmul.mubr.bf16.gmra.mrb[0].mxu0 %v536
  %v1425 = vpop.f32.mrb[0].mxu0
  %v1426 = vadd.f32 %v1329, %v1425
  %v1427 = vpop.f32.mrb[0].mxu0
  %v1428 = vpop.f32.mrb[0].mxu0
  %v1429 = vadd.f32 %v1332, %v1428
  %v1430 = vpop.f32.mrb[0].mxu0
  %1431 = vmatprep.mubr.bf16.mxu0 %v546
  %1432 = vmatmul.mubr.bf16.gmra.mrb[0].mxu0 %v545
  %v1433 = vpop.f32.mrb[0].mxu0
  %v1434 = vadd.f32 %v1337, %v1433
  %v1435 = vpop.f32.mrb[0].mxu0
  %v1436 = vpop.f32.mrb[0].mxu0
  %v1437 = vadd.f32 %v1340, %v1436
  %v1438 = vpop.f32.mrb[0].mxu0
  %1439 = vdwg.mxu0
  %1440 = vmatprep.subr.bf16.mxu0 0
  %1441 = vmatpush1.bf16.msra.mxu0 %v972
  %1442 = vmatprep.subr.bf16.mxu0 0
  %1443 = vmatpush1.bf16.msra.mxu0 %v973
  %1444 = vmatprep.subr.bf16.mxu0 0
  %1445 = vmatpush1.bf16.msra.mxu0 %v974
  %1446 = vmatprep.subr.bf16.mxu0 0
  %1447 = vmatpush1.bf16.msra.mxu0 %v975
  %1448 = vmatprep.subr.bf16.mxu0 0
  %1449 = vmatpush1.bf16.msra.mxu0 %v976
  %1450 = vmatprep.subr.bf16.mxu0 0
  %1451 = vmatpush1.bf16.msra.mxu0 %v977
  %1452 = vmatprep.subr.bf16.mxu0 0
  %1453 = vmatpush1.bf16.msra.mxu0 %v978
  %1454 = vmatprep.subr.bf16.mxu0 0
  %1455 = vmatpush1.bf16.msra.mxu0 %v979
  %1456 = vmatprep.subr.bf16.mxu0 0
  %1457 = vmatpush1.bf16.msra.mxu0 0
  %1458 = vmatprep.subr.bf16.mxu0 0
  %1459 = vmatpush1.bf16.msra.mxu0 0
  %1460 = vmatprep.subr.bf16.mxu0 0
  %1461 = vmatpush1.bf16.msra.mxu0 0
  %1462 = vmatprep.subr.bf16.mxu0 0
  %1463 = vmatpush1.bf16.msra.mxu0 0
  %1464 = vmatprep.subr.bf16.mxu0 0
  %1465 = vmatpush1.bf16.msra.mxu0 0
  %1466 = vmatprep.subr.bf16.mxu0 0
  %1467 = vmatpush1.bf16.msra.mxu0 0
  %1468 = vmatprep.subr.bf16.mxu0 0
  %1469 = vmatpush1.bf16.msra.mxu0 0
  %1470 = vmatprep.subr.bf16.mxu0 0
  %1471 = vmatpush1.bf16.msra.mxu0 0
  %1472 = vmatprep.mubr.bf16.mxu0 0
  %1473 = vmatmul.mubr.bf16.gmra.mrb[0].mxu0 %v484
  %v1474 = vpop.f32.mrb[0].mxu0
  %v1475 = vadd.f32 %v1378, %v1474
  %v1476 = vpop.f32.mrb[0].mxu0
  %v1477 = vpop.f32.mrb[0].mxu0
  %v1478 = vadd.f32 %v1381, %v1477
  %v1479 = vpop.f32.mrb[0].mxu0
  %1480 = vmatprep.mubr.bf16.mxu0 0
  %1481 = vmatmul.mubr.bf16.gmra.mrb[0].mxu0 %v493
  %v1482 = vpop.f32.mrb[0].mxu0
  %v1483 = vadd.f32 %v1386, %v1482
  %v1484 = vpop.f32.mrb[0].mxu0
  %v1485 = vpop.f32.mrb[0].mxu0
  %v1486 = vadd.f32 %v1389, %v1485
  %v1487 = vpop.f32.mrb[0].mxu0
  %1488 = vmatprep.mubr.bf16.mxu0 0
  %1489 = vmatmul.mubr.bf16.gmra.mrb[0].mxu0 %v502
  %v1490 = vpop.f32.mrb[0].mxu0
  %v1491 = vadd.f32 %v1394, %v1490
  %v1492 = vpop.f32.mrb[0].mxu0
  %v1493 = vpop.f32.mrb[0].mxu0
  %v1494 = vadd.f32 %v1397, %v1493
  %v1495 = vpop.f32.mrb[0].mxu0
  %1496 = vmatprep.mubr.bf16.mxu0 0
  %1497 = vmatmul.mubr.bf16.gmra.mrb[0].mxu0 %v511
  %v1498 = vpop.f32.mrb[0].mxu0
  %v1499 = vadd.f32 %v1402, %v1498
  %v1500 = vpop.f32.mrb[0].mxu0
  %v1501 = vpop.f32.mrb[0].mxu0
  %v1502 = vadd.f32 %v1405, %v1501
  %v1503 = vpop.f32.mrb[0].mxu0
  %1504 = vmatprep.mubr.bf16.mxu0 0
  %1505 = vmatmul.mubr.bf16.gmra.mrb[0].mxu0 %v520
  %v1506 = vpop.f32.mrb[0].mxu0
  %v1507 = vadd.f32 %v1410, %v1506
  %v1508 = vpop.f32.mrb[0].mxu0
  %v1509 = vpop.f32.mrb[0].mxu0
  %v1510 = vadd.f32 %v1413, %v1509
  %v1511 = vpop.f32.mrb[0].mxu0
  %1512 = vmatprep.mubr.bf16.mxu0 0
  %1513 = vmatmul.mubr.bf16.gmra.mrb[0].mxu0 %v529
  %v1514 = vpop.f32.mrb[0].mxu0
  %v1515 = vadd.f32 %v1418, %v1514
  %v1516 = vpop.f32.mrb[0].mxu0
  %v1517 = vpop.f32.mrb[0].mxu0
  %v1518 = vadd.f32 %v1421, %v1517
  %v1519 = vpop.f32.mrb[0].mxu0
  %1520 = vmatprep.mubr.bf16.mxu0 0
  %1521 = vmatmul.mubr.bf16.gmra.mrb[0].mxu0 %v538
  %v1522 = vpop.f32.mrb[0].mxu0
  %v1523 = vadd.f32 %v1426, %v1522
  %v1524 = vpop.f32.mrb[0].mxu0
  %v1525 = vpop.f32.mrb[0].mxu0
  %v1526 = vadd.f32 %v1429, %v1525
  %v1527 = vpop.f32.mrb[0].mxu0
  %1528 = vmatprep.mubr.bf16.mxu0 0
  %1529 = vmatmul.mubr.bf16.gmra.mrb[0].mxu0 %v547
  %v1530 = vpop.f32.mrb[0].mxu0
  %v1531 = vadd.f32 %v1434, %v1530
  %v1532 = vpop.f32.mrb[0].mxu0
  %v1533 = vpop.f32.mrb[0].mxu0
  %v1534 = vadd.f32 %v1437, %v1533
  %v1535 = vpop.f32.mrb[0].mxu0
  %1536 = vdwg.mxu0
  %v1537 = vadd.f32 %v1475, %v1478
  %v1538 = vadd.f32 %v1537, %v1483
  %v1539 = vadd.f32 %v1538, %v1486
  %v1540 = vadd.f32 %v1539, %v1491
  %v1541 = vadd.f32 %v1540, %v1494
  %v1542 = vadd.f32 %v1541, %v1499
  %v1543 = vadd.f32 %v1542, %v1502
  %v1544 = vadd.f32 %v1543, %v1507
  %v1545 = vadd.f32 %v1544, %v1510
  %v1546 = vadd.f32 %v1545, %v1515
  %v1547 = vadd.f32 %v1546, %v1518
  %v1548 = vadd.f32 %v1547, %v1523
  %v1549 = vadd.f32 %v1548, %v1526
  %v1550 = vadd.f32 %v1549, %v1531
  %v1551 = vadd.f32 %v1550, %v1534
  %v1552 = vrot.slane %v1551, 4
  %v1553 = vadd.f32 %v1551, %v1552
  %v1554 = vrot.slane %v1553, 2
  %v1555 = vadd.f32 %v1553, %v1554
  %v1556 = vrot.slane %v1555, 1
  %v1557 = vadd.f32 %v1555, %v1556
  %v1558 = vmul.f32 %v1557, 0.0078125
  %v1559 = vsub.f32 %v1475, %v1558
  %v1560 = vsub.f32 %v1478, %v1558
  %v1561 = vsub.f32 %v1483, %v1558
  %v1562 = vsub.f32 %v1486, %v1558
  %v1563 = vsub.f32 %v1491, %v1558
  %v1564 = vsub.f32 %v1494, %v1558
  %v1565 = vsub.f32 %v1499, %v1558
  %v1566 = vsub.f32 %v1502, %v1558
  %v1567 = vsub.f32 %v1507, %v1558
  %v1568 = vsub.f32 %v1510, %v1558
  %v1569 = vsub.f32 %v1515, %v1558
  %v1570 = vsub.f32 %v1518, %v1558
  %v1571 = vsub.f32 %v1523, %v1558
  %v1572 = vsub.f32 %v1526, %v1558
  %v1573 = vsub.f32 %v1531, %v1558
  %v1574 = vsub.f32 %v1534, %v1558
  %v1575 = vmul.f32 %v1559, %v1559
  %v1576 = vmul.f32 %v1560, %v1560
  %v1577 = vmul.f32 %v1561, %v1561
  %v1578 = vmul.f32 %v1562, %v1562
  %v1579 = vmul.f32 %v1563, %v1563
  %v1580 = vmul.f32 %v1564, %v1564
  %v1581 = vmul.f32 %v1565, %v1565
  %v1582 = vmul.f32 %v1566, %v1566
  %v1583 = vmul.f32 %v1567, %v1567
  %v1584 = vmul.f32 %v1568, %v1568
  %v1585 = vmul.f32 %v1569, %v1569
  %v1586 = vmul.f32 %v1570, %v1570
  %v1587 = vmul.f32 %v1571, %v1571
  %v1588 = vmul.f32 %v1572, %v1572
  %v1589 = vmul.f32 %v1573, %v1573
  %v1590 = vmul.f32 %v1574, %v1574
  %v1591 = vadd.f32 %v1575, %v1576
  %v1592 = vadd.f32 %v1591, %v1577
  %v1593 = vadd.f32 %v1592, %v1578
  %v1594 = vadd.f32 %v1593, %v1579
  %v1595 = vadd.f32 %v1594, %v1580
  %v1596 = vadd.f32 %v1595, %v1581
  %v1597 = vadd.f32 %v1596, %v1582
  %v1598 = vadd.f32 %v1597, %v1583
  %v1599 = vadd.f32 %v1598, %v1584
  %v1600 = vadd.f32 %v1599, %v1585
  %v1601 = vadd.f32 %v1600, %v1586
  %v1602 = vadd.f32 %v1601, %v1587
  %v1603 = vadd.f32 %v1602, %v1588
  %v1604 = vadd.f32 %v1603, %v1589
  %v1605 = vadd.f32 %v1604, %v1590
  %v1606 = vrot.slane %v1605, 4
  %v1607 = vadd.f32 %v1605, %v1606
  %v1608 = vrot.slane %v1607, 2
  %v1609 = vadd.f32 %v1607, %v1608
  %v1610 = vrot.slane %v1609, 1
  %v1611 = vadd.f32 %v1609, %v1610
  %v1612 = vmul.f32 %v1611, 0.0078125
  %v1613 = vadd.f32 %v1612, 1e-05
  %v1614 = vrsqrt.pop %v1613
  %v1615 = vmul.f32 %v1559, %v1614
  %v1616 = vmul.f32 %v1560, %v1614
  %v1617 = vmul.f32 %v1561, %v1614
  %v1618 = vmul.f32 %v1562, %v1614
  %v1619 = vmul.f32 %v1563, %v1614
  %v1620 = vmul.f32 %v1564, %v1614
  %v1621 = vmul.f32 %v1565, %v1614
  %v1622 = vmul.f32 %v1566, %v1614
  %v1623 = vmul.f32 %v1567, %v1614
  %v1624 = vmul.f32 %v1568, %v1614
  %v1625 = vmul.f32 %v1569, %v1614
  %v1626 = vmul.f32 %v1570, %v1614
  %v1627 = vmul.f32 %v1571, %v1614
  %v1628 = vmul.f32 %v1572, %v1614
  %v1629 = vmul.f32 %v1573, %v1614
  %v1630 = vmul.f32 %v1574, %v1614
  %v1631 = vld [vmem:[%s3] sm:$0x1]
  %v1633 = vlaneseq
  %v1634 = vshrl.u32 %v1633, 7
  %v1635 = vsub.s32 0, %v1634
  %v1636 = vrot.slane %v1631, %v1635
  %v1638 = vmul.f32 %v1615, %v1636
  %v1639 = vmul.f32 %v1616, %v1636
  %v1640 = vmul.f32 %v1617, %v1636
  %v1641 = vmul.f32 %v1618, %v1636
  %v1642 = vmul.f32 %v1619, %v1636
  %v1643 = vmul.f32 %v1620, %v1636
  %v1644 = vmul.f32 %v1621, %v1636
  %v1645 = vmul.f32 %v1622, %v1636
  %v1646 = vmul.f32 %v1623, %v1636
  %v1647 = vmul.f32 %v1624, %v1636
  %v1648 = vmul.f32 %v1625, %v1636
  %v1649 = vmul.f32 %v1626, %v1636
  %v1650 = vmul.f32 %v1627, %v1636
  %v1651 = vmul.f32 %v1628, %v1636
  %v1652 = vmul.f32 %v1629, %v1636
  %v1653 = vmul.f32 %v1630, %v1636
  %v1654 = vld [vmem:[%s4] sm:$0x1]
  %v1656 = vlaneseq
  %v1657 = vshrl.u32 %v1656, 7
  %v1658 = vsub.s32 0, %v1657
  %v1659 = vrot.slane %v1654, %v1658
  %v1661 = vadd.f32 %v1638, %v1659
  %v1662 = vadd.f32 %v1639, %v1659
  %v1663 = vadd.f32 %v1640, %v1659
  %v1664 = vadd.f32 %v1641, %v1659
  %v1665 = vadd.f32 %v1642, %v1659
  %v1666 = vadd.f32 %v1643, %v1659
  %v1667 = vadd.f32 %v1644, %v1659
  %v1668 = vadd.f32 %v1645, %v1659
  %v1669 = vadd.f32 %v1646, %v1659
  %v1670 = vadd.f32 %v1647, %v1659
  %v1671 = vadd.f32 %v1648, %v1659
  %v1672 = vadd.f32 %v1649, %v1659
  %v1673 = vadd.f32 %v1650, %v1659
  %v1674 = vadd.f32 %v1651, %v1659
  %v1675 = vadd.f32 %v1652, %v1659
  %v1676 = vadd.f32 %v1653, %v1659
  %vm1677 = vcmp.gt.f32.partialorder %v1661, 0.0
  %vm1678 = vcmp.gt.f32.partialorder %v1662, 0.0
  %vm1679 = vcmp.gt.f32.partialorder %v1663, 0.0
  %vm1680 = vcmp.gt.f32.partialorder %v1664, 0.0
  %vm1681 = vcmp.gt.f32.partialorder %v1665, 0.0
  %vm1682 = vcmp.gt.f32.partialorder %v1666, 0.0
  %vm1683 = vcmp.gt.f32.partialorder %v1667, 0.0
  %vm1684 = vcmp.gt.f32.partialorder %v1668, 0.0
  %vm1685 = vcmp.gt.f32.partialorder %v1669, 0.0
  %vm1686 = vcmp.gt.f32.partialorder %v1670, 0.0
  %vm1687 = vcmp.gt.f32.partialorder %v1671, 0.0
  %vm1688 = vcmp.gt.f32.partialorder %v1672, 0.0
  %vm1689 = vcmp.gt.f32.partialorder %v1673, 0.0
  %vm1690 = vcmp.gt.f32.partialorder %v1674, 0.0
  %vm1691 = vcmp.gt.f32.partialorder %v1675, 0.0
  %vm1692 = vcmp.gt.f32.partialorder %v1676, 0.0
  %v1693 = vmul.f32 %v1661, 0.2
  %v1694 = vmul.f32 %v1662, 0.2
  %v1695 = vmul.f32 %v1663, 0.2
  %v1696 = vmul.f32 %v1664, 0.2
  %v1697 = vmul.f32 %v1665, 0.2
  %v1698 = vmul.f32 %v1666, 0.2
  %v1699 = vmul.f32 %v1667, 0.2
  %v1700 = vmul.f32 %v1668, 0.2
  %v1701 = vmul.f32 %v1669, 0.2
  %v1702 = vmul.f32 %v1670, 0.2
  %v1703 = vmul.f32 %v1671, 0.2
  %v1704 = vmul.f32 %v1672, 0.2
  %v1705 = vmul.f32 %v1673, 0.2
  %v1706 = vmul.f32 %v1674, 0.2
  %v1707 = vmul.f32 %v1675, 0.2
  %v1708 = vmul.f32 %v1676, 0.2
  %v1709 = vsel %vm1677, %v1661, %v1693
  %v1710 = vsel %vm1678, %v1662, %v1694
  %v1711 = vsel %vm1679, %v1663, %v1695
  %v1712 = vsel %vm1680, %v1664, %v1696
  %v1713 = vsel %vm1681, %v1665, %v1697
  %v1714 = vsel %vm1682, %v1666, %v1698
  %v1715 = vsel %vm1683, %v1667, %v1699
  %v1716 = vsel %vm1684, %v1668, %v1700
  %v1717 = vsel %vm1685, %v1669, %v1701
  %v1718 = vsel %vm1686, %v1670, %v1702
  %v1719 = vsel %vm1687, %v1671, %v1703
  %v1720 = vsel %vm1688, %v1672, %v1704
  %v1721 = vsel %vm1689, %v1673, %v1705
  %v1722 = vsel %vm1690, %v1674, %v1706
  %v1723 = vsel %vm1691, %v1675, %v1707
  %v1724 = vsel %vm1692, %v1676, %v1708
  %v1725 = vpack.c.bf16 %v1710, %v1709
  %v1726 = vpack.c.bf16 %v1712, %v1711
  %v1727 = vpack.c.bf16 %v1714, %v1713
  %v1728 = vpack.c.bf16 %v1716, %v1715
  %v1729 = vpack.c.bf16 %v1718, %v1717
  %v1730 = vpack.c.bf16 %v1720, %v1719
  %v1731 = vpack.c.bf16 %v1722, %v1721
  %v1732 = vpack.c.bf16 %v1724, %v1723
  %v1741 = vunpack.c.l.b16 %v1725
  %v1742 = vunpack.c.h.b16 %v1725
  %v1743 = vunpack.c.l.b16 %v1726
  %v1744 = vunpack.c.h.b16 %v1726
  %v1745 = vunpack.c.l.b16 %v1727
  %v1746 = vunpack.c.h.b16 %v1727
  %v1747 = vunpack.c.l.b16 %v1728
  %v1748 = vunpack.c.h.b16 %v1728
  %v1749 = vunpack.c.l.b16 %v1729
  %v1750 = vunpack.c.h.b16 %v1729
  %v1751 = vunpack.c.l.b16 %v1730
  %v1752 = vunpack.c.h.b16 %v1730
  %v1753 = vunpack.c.l.b16 %v1731
  %v1754 = vunpack.c.h.b16 %v1731
  %v1755 = vunpack.c.l.b16 %v1732
  %v1756 = vunpack.c.h.b16 %v1732
  %v1757 = vpack.c.b16 %v1741, %v1741
  %v1758 = vpack.c.b16 %v1742, %v1742
  %v1759 = vpack.c.b16 %v1743, %v1743
  %v1760 = vpack.c.b16 %v1744, %v1744
  %v1761 = vpack.c.b16 %v1745, %v1745
  %v1762 = vpack.c.b16 %v1746, %v1746
  %v1763 = vpack.c.b16 %v1747, %v1747
  %v1764 = vpack.c.b16 %v1748, %v1748
  %v1765 = vpack.c.b16 %v1749, %v1749
  %v1766 = vpack.c.b16 %v1750, %v1750
  %v1767 = vpack.c.b16 %v1751, %v1751
  %v1768 = vpack.c.b16 %v1752, %v1752
  %v1769 = vpack.c.b16 %v1753, %v1753
  %v1770 = vpack.c.b16 %v1754, %v1754
  %v1771 = vpack.c.b16 %v1755, %v1755
  %v1772 = vpack.c.b16 %v1756, %v1756
  %1789 = vst [vmem:[%s5] sm:$0xf] %v1757
  %1790 = vst [vmem:[%s5 + $0x4] sm:$0xf] %v1758
  %1791 = vst [vmem:[%s5 + $0x8] sm:$0xf] %v1759
  %1792 = vst [vmem:[%s5 + $0xc] sm:$0xf] %v1760
  %1793 = vst [vmem:[%s5 + $0x10] sm:$0xf] %v1761
  %1794 = vst [vmem:[%s5 + $0x14] sm:$0xf] %v1762
  %1795 = vst [vmem:[%s5 + $0x18] sm:$0xf] %v1763
  %1796 = vst [vmem:[%s5 + $0x1c] sm:$0xf] %v1764
  %1797 = vst [vmem:[%s5 + $0x20] sm:$0xf] %v1765
  %1798 = vst [vmem:[%s5 + $0x24] sm:$0xf] %v1766
  %1799 = vst [vmem:[%s5 + $0x28] sm:$0xf] %v1767
  %1800 = vst [vmem:[%s5 + $0x2c] sm:$0xf] %v1768
  %1801 = vst [vmem:[%s5 + $0x30] sm:$0xf] %v1769
  %1802 = vst [vmem:[%s5 + $0x34] sm:$0xf] %v1770
  %1803 = vst [vmem:[%s5 + $0x38] sm:$0xf] %v1771
  %1804 = vst [vmem:[%s5 + $0x3c] sm:$0xf] %v1772
  // Predicated region
  $region22: #{_lambda_.6} parent=0 // pred_check
    _
  $region23: #{_lambda_.6} parent=0 // pred_check_branch
    %1806 = sbr.rel (0) target = $region25
  $region24: #{_lambda_.6} parent=0 // pred_region
    _
  $region25: #{_lambda_.6} parent=0 // pred_fallthru
    _
  // Predicated region
  $region26: #{_lambda_.6} parent=0 // pred_check
    _
  $region27: #{_lambda_.6} parent=0 // pred_check_branch
    %1808 = sbr.rel (0) target = $region29
  $region28: #{_lambda_.6} parent=0 // pred_region
    _
  $region29: #{_lambda_.6} parent=0 // pred_fallthru
    _

// kernel: _lambda_.7
$region0: #{_lambda_.7}
  #allocation0 [shape = 'u32[]', space=smem, size = 0x4, offset = 0x4, fixed_abs, tag = 'smem constant byte address 0x4 - core index']
  #allocation1 [shape = 'u32[144,128]{1,0:T(1,128)}', space=vmem, size = 0x12000, scoped, tag = 'internal scratch']
  %s0 = inlined_call_operand.vmem [shape: bf16[32,1152], index: 0, kind: input, shape index: {}]
  %s1 = inlined_call_operand.vmem [shape: bf16[1152,128], index: 1, kind: input, shape index: {}]
  %s2 = inlined_call_operand.vmem [shape: f32[1,128], index: 2, kind: input, shape index: {}]
  %s3 = inlined_call_operand.vmem [shape: f32[1,128], index: 3, kind: input, shape index: {}]
  %s4 = inlined_call_operand.vmem [shape: f32[1,128], index: 4, kind: input, shape index: {}]
  %s5 = inlined_call_operand.vmem [shape: bf16[32,128], index: 5, kind: output, shape index: {}]
  %s6 = sld [smem:[#allocation0]]
  $region30: #{_lambda_.7} parent=0
    _
  %s8 = ssub.s32 1, %s6
  %s9 = scalar_select 0, %s8, %s6
  // Predicated region
  $region2: #{_lambda_.7} parent=0 // pred_check
    _
  $region3: #{_lambda_.7} parent=0 // pred_check_branch
    %11 = sbr.rel (0) target = $region5
  $region4: #{_lambda_.7} parent=0 // pred_region
    _
  $region5: #{_lambda_.7} parent=0 // pred_fallthru
    _
  // Predicated region
  $region6: #{_lambda_.7} parent=0 // pred_check
    _
  $region7: #{_lambda_.7} parent=0 // pred_check_branch
    %13 = sbr.rel (0) target = $region9
  $region8: #{_lambda_.7} parent=0 // pred_region
    _
  $region9: #{_lambda_.7} parent=0 // pred_fallthru
    _
  // Predicated region
  $region10: #{_lambda_.7} parent=0 // pred_check
    _
  $region11: #{_lambda_.7} parent=0 // pred_check_branch
    %15 = sbr.rel (0) target = $region13
  $region12: #{_lambda_.7} parent=0 // pred_region
    _
  $region13: #{_lambda_.7} parent=0 // pred_fallthru
    _
  // Predicated region
  $region14: #{_lambda_.7} parent=0 // pred_check
    _
  $region15: #{_lambda_.7} parent=0 // pred_check_branch
    %17 = sbr.rel (0) target = $region17
  $region16: #{_lambda_.7} parent=0 // pred_region
    _
  $region17: #{_lambda_.7} parent=0 // pred_fallthru
    _
  // Predicated region
  $region18: #{_lambda_.7} parent=0 // pred_check
    _
  $region19: #{_lambda_.7} parent=0 // pred_check_branch
    %19 = sbr.rel (0) target = $region21
  $region20: #{_lambda_.7} parent=0 // pred_region
    _
  $region21: #{_lambda_.7} parent=0 // pred_fallthru
    _
  %v21 = vld [vmem:[%s0] sm:$0xff]
  %v22 = vld [vmem:[%s0 + $0x8] sm:$0xff]
  %v23 = vld [vmem:[%s0 + $0x10] sm:$0xff]
  %v24 = vld [vmem:[%s0 + $0x18] sm:$0xff]
  %v25 = vld [vmem:[%s0 + $0x20] sm:$0xf]
  %v26 = vld [vmem:[%s0 + $0x24] sm:$0xff]
  %v27 = vld [vmem:[%s0 + $0x2c] sm:$0xff]
  %v28 = vld [vmem:[%s0 + $0x34] sm:$0xff]
  %v29 = vld [vmem:[%s0 + $0x3c] sm:$0xff]
  %v30 = vld [vmem:[%s0 + $0x44] sm:$0xf]
  %v31 = vld [vmem:[%s0 + $0x48] sm:$0xff]
  %v32 = vld [vmem:[%s0 + $0x50] sm:$0xff]
  %v33 = vld [vmem:[%s0 + $0x58] sm:$0xff]
  %v34 = vld [vmem:[%s0 + $0x60] sm:$0xff]
  %v35 = vld [vmem:[%s0 + $0x68] sm:$0xf]
  %v36 = vld [vmem:[%s0 + $0x6c] sm:$0xff]
  %v37 = vld [vmem:[%s0 + $0x74] sm:$0xff]
  %v38 = vld [vmem:[%s0 + $0x7c] sm:$0xff]
  %v39 = vld [vmem:[%s0 + $0x84] sm:$0xff]
  %v40 = vld [vmem:[%s0 + $0x8c] sm:$0xf]
  %v41 = vld [vmem:[%s1] sm:$0xf]
  %v42 = vld [vmem:[%s1 + $0x4] sm:$0xf]
  %v43 = vld [vmem:[%s1 + $0x8] sm:$0xf]
  %v44 = vld [vmem:[%s1 + $0xc] sm:$0xf]
  %v45 = vld [vmem:[%s1 + $0x10] sm:$0xf]
  %v46 = vld [vmem:[%s1 + $0x14] sm:$0xf]
  %v47 = vld [vmem:[%s1 + $0x18] sm:$0xf]
  %v48 = vld [vmem:[%s1 + $0x1c] sm:$0xf]
  %v49 = vld [vmem:[%s1 + $0x20] sm:$0xf]
  %v50 = vld [vmem:[%s1 + $0x24] sm:$0xf]
  %v51 = vld [vmem:[%s1 + $0x28] sm:$0xf]
  %v52 = vld [vmem:[%s1 + $0x2c] sm:$0xf]
  %v53 = vld [vmem:[%s1 + $0x30] sm:$0xf]
  %v54 = vld [vmem:[%s1 + $0x34] sm:$0xf]
  %v55 = vld [vmem:[%s1 + $0x38] sm:$0xf]
  %v56 = vld [vmem:[%s1 + $0x3c] sm:$0xf]
  %v57 = vld [vmem:[%s1 + $0x40] sm:$0xf]
  %v58 = vld [vmem:[%s1 + $0x44] sm:$0xf]
  %v59 = vld [vmem:[%s1 + $0x48] sm:$0xf]
  %v60 = vld [vmem:[%s1 + $0x4c] sm:$0xf]
  %v61 = vld [vmem:[%s1 + $0x50] sm:$0xf]
  %v62 = vld [vmem:[%s1 + $0x54] sm:$0xf]
  %v63 = vld [vmem:[%s1 + $0x58] sm:$0xf]
  %v64 = vld [vmem:[%s1 + $0x5c] sm:$0xf]
  %v65 = vld [vmem:[%s1 + $0x60] sm:$0xf]
  %v66 = vld [vmem:[%s1 + $0x64] sm:$0xf]
  %v67 = vld [vmem:[%s1 + $0x68] sm:$0xf]
  %v68 = vld [vmem:[%s1 + $0x6c] sm:$0xf]
  %v69 = vld [vmem:[%s1 + $0x70] sm:$0xf]
  %v70 = vld [vmem:[%s1 + $0x74] sm:$0xf]
  %v71 = vld [vmem:[%s1 + $0x78] sm:$0xf]
  %v72 = vld [vmem:[%s1 + $0x7c] sm:$0xf]
  %v73 = vld [vmem:[%s1 + $0x80] sm:$0xf]
  %v74 = vld [vmem:[%s1 + $0x84] sm:$0xf]
  %v75 = vld [vmem:[%s1 + $0x88] sm:$0xf]
  %v76 = vld [vmem:[%s1 + $0x8c] sm:$0xf]
  %v77 = vld [vmem:[%s1 + $0x90] sm:$0xf]
  %v78 = vld [vmem:[%s1 + $0x94] sm:$0xf]
  %v79 = vld [vmem:[%s1 + $0x98] sm:$0xf]
  %v80 = vld [vmem:[%s1 + $0x9c] sm:$0xf]
  %v81 = vld [vmem:[%s1 + $0xa0] sm:$0xf]
  %v82 = vld [vmem:[%s1 + $0xa4] sm:$0xf]
  %v83 = vld [vmem:[%s1 + $0xa8] sm:$0xf]
  %v84 = vld [vmem:[%s1 + $0xac] sm:$0xf]
  %v85 = vld [vmem:[%s1 + $0xb0] sm:$0xf]
  %v86 = vld [vmem:[%s1 + $0xb4] sm:$0xf]
  %v87 = vld [vmem:[%s1 + $0xb8] sm:$0xf]
  %v88 = vld [vmem:[%s1 + $0xbc] sm:$0xf]
  %v89 = vld [vmem:[%s1 + $0xc0] sm:$0xf]
  %v90 = vld [vmem:[%s1 + $0xc4] sm:$0xf]
  %v91 = vld [vmem:[%s1 + $0xc8] sm:$0xf]
  %v92 = vld [vmem:[%s1 + $0xcc] sm:$0xf]
  %v93 = vld [vmem:[%s1 + $0xd0] sm:$0xf]
  %v94 = vld [vmem:[%s1 + $0xd4] sm:$0xf]
  %v95 = vld [vmem:[%s1 + $0xd8] sm:$0xf]
  %v96 = vld [vmem:[%s1 + $0xdc] sm:$0xf]
  %v97 = vld [vmem:[%s1 + $0xe0] sm:$0xf]
  %v98 = vld [vmem:[%s1 + $0xe4] sm:$0xf]
  %v99 = vld [vmem:[%s1 + $0xe8] sm:$0xf]
  %v100 = vld [vmem:[%s1 + $0xec] sm:$0xf]
  %v101 = vld [vmem:[%s1 + $0xf0] sm:$0xf]
  %v102 = vld [vmem:[%s1 + $0xf4] sm:$0xf]
  %v103 = vld [vmem:[%s1 + $0xf8] sm:$0xf]
  %v104 = vld [vmem:[%s1 + $0xfc] sm:$0xf]
  %v105 = vld [vmem:[%s1 + $0x100] sm:$0xf]
  %v106 = vld [vmem:[%s1 + $0x104] sm:$0xf]
  %v107 = vld [vmem:[%s1 + $0x108] sm:$0xf]
  %v108 = vld [vmem:[%s1 + $0x10c] sm:$0xf]
  %v109 = vld [vmem:[%s1 + $0x110] sm:$0xf]
  %v110 = vld [vmem:[%s1 + $0x114] sm:$0xf]
  %v111 = vld [vmem:[%s1 + $0x118] sm:$0xf]
  %v112 = vld [vmem:[%s1 + $0x11c] sm:$0xf]
  %v113 = vld [vmem:[%s1 + $0x120] sm:$0xf]
  %v114 = vld [vmem:[%s1 + $0x124] sm:$0xf]
  %v115 = vld [vmem:[%s1 + $0x128] sm:$0xf]
  %v116 = vld [vmem:[%s1 + $0x12c] sm:$0xf]
  %v117 = vld [vmem:[%s1 + $0x130] sm:$0xf]
  %v118 = vld [vmem:[%s1 + $0x134] sm:$0xf]
  %v119 = vld [vmem:[%s1 + $0x138] sm:$0xf]
  %v120 = vld [vmem:[%s1 + $0x13c] sm:$0xf]
  %v121 = vld [vmem:[%s1 + $0x140] sm:$0xf]
  %v122 = vld [vmem:[%s1 + $0x144] sm:$0xf]
  %v123 = vld [vmem:[%s1 + $0x148] sm:$0xf]
  %v124 = vld [vmem:[%s1 + $0x14c] sm:$0xf]
  %v125 = vld [vmem:[%s1 + $0x150] sm:$0xf]
  %v126 = vld [vmem:[%s1 + $0x154] sm:$0xf]
  %v127 = vld [vmem:[%s1 + $0x158] sm:$0xf]
  %v128 = vld [vmem:[%s1 + $0x15c] sm:$0xf]
  %v129 = vld [vmem:[%s1 + $0x160] sm:$0xf]
  %v130 = vld [vmem:[%s1 + $0x164] sm:$0xf]
  %v131 = vld [vmem:[%s1 + $0x168] sm:$0xf]
  %v132 = vld [vmem:[%s1 + $0x16c] sm:$0xf]
  %v133 = vld [vmem:[%s1 + $0x170] sm:$0xf]
  %v134 = vld [vmem:[%s1 + $0x174] sm:$0xf]
  %v135 = vld [vmem:[%s1 + $0x178] sm:$0xf]
  %v136 = vld [vmem:[%s1 + $0x17c] sm:$0xf]
  %v137 = vld [vmem:[%s1 + $0x180] sm:$0xf]
  %v138 = vld [vmem:[%s1 + $0x184] sm:$0xf]
  %v139 = vld [vmem:[%s1 + $0x188] sm:$0xf]
  %v140 = vld [vmem:[%s1 + $0x18c] sm:$0xf]
  %v141 = vld [vmem:[%s1 + $0x190] sm:$0xf]
  %v142 = vld [vmem:[%s1 + $0x194] sm:$0xf]
  %v143 = vld [vmem:[%s1 + $0x198] sm:$0xf]
  %v144 = vld [vmem:[%s1 + $0x19c] sm:$0xf]
  %v145 = vld [vmem:[%s1 + $0x1a0] sm:$0xf]
  %v146 = vld [vmem:[%s1 + $0x1a4] sm:$0xf]
  %v147 = vld [vmem:[%s1 + $0x1a8] sm:$0xf]
  %v148 = vld [vmem:[%s1 + $0x1ac] sm:$0xf]
  %v149 = vld [vmem:[%s1 + $0x1b0] sm:$0xf]
  %v150 = vld [vmem:[%s1 + $0x1b4] sm:$0xf]
  %v151 = vld [vmem:[%s1 + $0x1b8] sm:$0xf]
  %v152 = vld [vmem:[%s1 + $0x1bc] sm:$0xf]
  %v153 = vld [vmem:[%s1 + $0x1c0] sm:$0xf]
  %v154 = vld [vmem:[%s1 + $0x1c4] sm:$0xf]
  %v155 = vld [vmem:[%s1 + $0x1c8] sm:$0xf]
  %v156 = vld [vmem:[%s1 + $0x1cc] sm:$0xf]
  %v157 = vld [vmem:[%s1 + $0x1d0] sm:$0xf]
  %v158 = vld [vmem:[%s1 + $0x1d4] sm:$0xf]
  %v159 = vld [vmem:[%s1 + $0x1d8] sm:$0xf]
  %v160 = vld [vmem:[%s1 + $0x1dc] sm:$0xf]
  %v161 = vld [vmem:[%s1 + $0x1e0] sm:$0xf]
  %v162 = vld [vmem:[%s1 + $0x1e4] sm:$0xf]
  %v163 = vld [vmem:[%s1 + $0x1e8] sm:$0xf]
  %v164 = vld [vmem:[%s1 + $0x1ec] sm:$0xf]
  %v165 = vld [vmem:[%s1 + $0x1f0] sm:$0xf]
  %v166 = vld [vmem:[%s1 + $0x1f4] sm:$0xf]
  %v167 = vld [vmem:[%s1 + $0x1f8] sm:$0xf]
  %v168 = vld [vmem:[%s1 + $0x1fc] sm:$0xf]
  %v169 = vld [vmem:[%s1 + $0x200] sm:$0xf]
  %v170 = vld [vmem:[%s1 + $0x204] sm:$0xf]
  %v171 = vld [vmem:[%s1 + $0x208] sm:$0xf]
  %v172 = vld [vmem:[%s1 + $0x20c] sm:$0xf]
  %v173 = vld [vmem:[%s1 + $0x210] sm:$0xf]
  %v174 = vld [vmem:[%s1 + $0x214] sm:$0xf]
  %v175 = vld [vmem:[%s1 + $0x218] sm:$0xf]
  %v176 = vld [vmem:[%s1 + $0x21c] sm:$0xf]
  %v177 = vld [vmem:[%s1 + $0x220] sm:$0xf]
  %v178 = vld [vmem:[%s1 + $0x224] sm:$0xf]
  %v179 = vld [vmem:[%s1 + $0x228] sm:$0xf]
  %v180 = vld [vmem:[%s1 + $0x22c] sm:$0xf]
  %v181 = vld [vmem:[%s1 + $0x230] sm:$0xf]
  %v182 = vld [vmem:[%s1 + $0x234] sm:$0xf]
  %v183 = vld [vmem:[%s1 + $0x238] sm:$0xf]
  %v184 = vld [vmem:[%s1 + $0x23c] sm:$0xf]
  %v185 = vld [vmem:[%s2] sm:$0x1]
  %v187 = vlaneseq
  %v188 = vshrl.u32 %v187, 7
  %v189 = vsub.s32 0, %v188
  %v190 = vrot.slane %v185, %v189
  %v212 = vunpack.c.l.b16 %v21
  %v213 = vunpack.c.h.b16 %v21
  %v214 = vunpack.c.l.b16 %v22
  %v215 = vunpack.c.h.b16 %v22
  %v216 = vunpack.c.l.b16 %v23
  %v217 = vunpack.c.h.b16 %v23
  %v218 = vunpack.c.l.b16 %v24
  %v219 = vunpack.c.h.b16 %v24
  %v220 = vunpack.c.l.b16 %v25
  %v221 = vunpack.c.l.b16 %v26
  %v222 = vunpack.c.h.b16 %v26
  %v223 = vunpack.c.l.b16 %v27
  %v224 = vunpack.c.h.b16 %v27
  %v225 = vunpack.c.l.b16 %v28
  %v226 = vunpack.c.h.b16 %v28
  %v227 = vunpack.c.l.b16 %v29
  %v228 = vunpack.c.h.b16 %v29
  %v229 = vunpack.c.l.b16 %v30
  %v230 = vunpack.c.l.b16 %v31
  %v231 = vunpack.c.h.b16 %v31
  %v232 = vunpack.c.l.b16 %v32
  %v233 = vunpack.c.h.b16 %v32
  %v234 = vunpack.c.l.b16 %v33
  %v235 = vunpack.c.h.b16 %v33
  %v236 = vunpack.c.l.b16 %v34
  %v237 = vunpack.c.h.b16 %v34
  %v238 = vunpack.c.l.b16 %v35
  %v239 = vunpack.c.l.b16 %v36
  %v240 = vunpack.c.h.b16 %v36
  %v241 = vunpack.c.l.b16 %v37
  %v242 = vunpack.c.h.b16 %v37
  %v243 = vunpack.c.l.b16 %v38
  %v244 = vunpack.c.h.b16 %v38
  %v245 = vunpack.c.l.b16 %v39
  %v246 = vunpack.c.h.b16 %v39
  %v247 = vunpack.c.l.b16 %v40
  %v248 = vpack.c.b16 %v221, %v212
  %v249 = vpack.c.b16 %v222, %v213
  %v250 = vpack.c.b16 %v223, %v214
  %v251 = vpack.c.b16 %v224, %v215
  %v252 = vpack.c.b16 %v225, %v216
  %v253 = vpack.c.b16 %v226, %v217
  %v254 = vpack.c.b16 %v227, %v218
  %v255 = vpack.c.b16 %v228, %v219
  %v256 = vpack.c.b16 %v229, %v220
  %v257 = vpack.c.b16 %v239, %v230
  %v258 = vpack.c.b16 %v240, %v231
  %v259 = vpack.c.b16 %v241, %v232
  %v260 = vpack.c.b16 %v242, %v233
  %v261 = vpack.c.b16 %v243, %v234
  %v262 = vpack.c.b16 %v244, %v235
  %v263 = vpack.c.b16 %v245, %v236
  %v264 = vpack.c.b16 %v246, %v237
  %v265 = vpack.c.b16 %v247, %v238
  %v428 = vunpack.c.l.b16 %v41
  %v429 = vunpack.c.l.b16 %v42
  %v430 = vunpack.c.l.b16 %v43
  %v431 = vunpack.c.l.b16 %v44
  %v432 = vunpack.c.l.b16 %v45
  %v433 = vunpack.c.l.b16 %v46
  %v434 = vunpack.c.l.b16 %v47
  %v435 = vunpack.c.l.b16 %v48
  %v436 = vunpack.c.l.b16 %v49
  %v437 = vunpack.c.l.b16 %v50
  %v438 = vunpack.c.l.b16 %v51
  %v439 = vunpack.c.l.b16 %v52
  %v440 = vunpack.c.l.b16 %v53
  %v441 = vunpack.c.l.b16 %v54
  %v442 = vunpack.c.l.b16 %v55
  %v443 = vunpack.c.l.b16 %v56
  %v444 = vunpack.c.l.b16 %v57
  %v445 = vunpack.c.l.b16 %v58
  %v446 = vunpack.c.l.b16 %v59
  %v447 = vunpack.c.l.b16 %v60
  %v448 = vunpack.c.l.b16 %v61
  %v449 = vunpack.c.l.b16 %v62
  %v450 = vunpack.c.l.b16 %v63
  %v451 = vunpack.c.l.b16 %v64
  %v452 = vunpack.c.l.b16 %v65
  %v453 = vunpack.c.l.b16 %v66
  %v454 = vunpack.c.l.b16 %v67
  %v455 = vunpack.c.l.b16 %v68
  %v456 = vunpack.c.l.b16 %v69
  %v457 = vunpack.c.l.b16 %v70
  %v458 = vunpack.c.l.b16 %v71
  %v459 = vunpack.c.l.b16 %v72
  %v460 = vunpack.c.l.b16 %v73
  %v461 = vunpack.c.l.b16 %v74
  %v462 = vunpack.c.l.b16 %v75
  %v463 = vunpack.c.l.b16 %v76
  %v464 = vunpack.c.l.b16 %v77
  %v465 = vunpack.c.l.b16 %v78
  %v466 = vunpack.c.l.b16 %v79
  %v467 = vunpack.c.l.b16 %v80
  %v468 = vunpack.c.l.b16 %v81
  %v469 = vunpack.c.l.b16 %v82
  %v470 = vunpack.c.l.b16 %v83
  %v471 = vunpack.c.l.b16 %v84
  %v472 = vunpack.c.l.b16 %v85
  %v473 = vunpack.c.l.b16 %v86
  %v474 = vunpack.c.l.b16 %v87
  %v475 = vunpack.c.l.b16 %v88
  %v476 = vunpack.c.l.b16 %v89
  %v477 = vunpack.c.l.b16 %v90
  %v478 = vunpack.c.l.b16 %v91
  %v479 = vunpack.c.l.b16 %v92
  %v480 = vunpack.c.l.b16 %v93
  %v481 = vunpack.c.l.b16 %v94
  %v482 = vunpack.c.l.b16 %v95
  %v483 = vunpack.c.l.b16 %v96
  %v484 = vunpack.c.l.b16 %v97
  %v485 = vunpack.c.l.b16 %v98
  %v486 = vunpack.c.l.b16 %v99
  %v487 = vunpack.c.l.b16 %v100
  %v488 = vunpack.c.l.b16 %v101
  %v489 = vunpack.c.l.b16 %v102
  %v490 = vunpack.c.l.b16 %v103
  %v491 = vunpack.c.l.b16 %v104
  %v492 = vunpack.c.l.b16 %v105
  %v493 = vunpack.c.l.b16 %v106
  %v494 = vunpack.c.l.b16 %v107
  %v495 = vunpack.c.l.b16 %v108
  %v496 = vunpack.c.l.b16 %v109
  %v497 = vunpack.c.l.b16 %v110
  %v498 = vunpack.c.l.b16 %v111
  %v499 = vunpack.c.l.b16 %v112
  %v500 = vunpack.c.l.b16 %v113
  %v501 = vunpack.c.l.b16 %v114
  %v502 = vunpack.c.l.b16 %v115
  %v503 = vunpack.c.l.b16 %v116
  %v504 = vunpack.c.l.b16 %v117
  %v505 = vunpack.c.l.b16 %v118
  %v506 = vunpack.c.l.b16 %v119
  %v507 = vunpack.c.l.b16 %v120
  %v508 = vunpack.c.l.b16 %v121
  %v509 = vunpack.c.l.b16 %v122
  %v510 = vunpack.c.l.b16 %v123
  %v511 = vunpack.c.l.b16 %v124
  %v512 = vunpack.c.l.b16 %v125
  %v513 = vunpack.c.l.b16 %v126
  %v514 = vunpack.c.l.b16 %v127
  %v515 = vunpack.c.l.b16 %v128
  %v516 = vunpack.c.l.b16 %v129
  %v517 = vunpack.c.l.b16 %v130
  %v518 = vunpack.c.l.b16 %v131
  %v519 = vunpack.c.l.b16 %v132
  %v520 = vunpack.c.l.b16 %v133
  %v521 = vunpack.c.l.b16 %v134
  %v522 = vunpack.c.l.b16 %v135
  %v523 = vunpack.c.l.b16 %v136
  %v524 = vunpack.c.l.b16 %v137
  %v525 = vunpack.c.l.b16 %v138
  %v526 = vunpack.c.l.b16 %v139
  %v527 = vunpack.c.l.b16 %v140
  %v528 = vunpack.c.l.b16 %v141
  %v529 = vunpack.c.l.b16 %v142
  %v530 = vunpack.c.l.b16 %v143
  %v531 = vunpack.c.l.b16 %v144
  %v532 = vunpack.c.l.b16 %v145
  %v533 = vunpack.c.l.b16 %v146
  %v534 = vunpack.c.l.b16 %v147
  %v535 = vunpack.c.l.b16 %v148
  %v536 = vunpack.c.l.b16 %v149
  %v537 = vunpack.c.l.b16 %v150
  %v538 = vunpack.c.l.b16 %v151
  %v539 = vunpack.c.l.b16 %v152
  %v540 = vunpack.c.l.b16 %v153
  %v541 = vunpack.c.l.b16 %v154
  %v542 = vunpack.c.l.b16 %v155
  %v543 = vunpack.c.l.b16 %v156
  %v544 = vunpack.c.l.b16 %v157
  %v545 = vunpack.c.l.b16 %v158
  %v546 = vunpack.c.l.b16 %v159
  %v547 = vunpack.c.l.b16 %v160
  %v548 = vunpack.c.l.b16 %v161
  %v549 = vunpack.c.l.b16 %v162
  %v550 = vunpack.c.l.b16 %v163
  %v551 = vunpack.c.l.b16 %v164
  %v552 = vunpack.c.l.b16 %v165
  %v553 = vunpack.c.l.b16 %v166
  %v554 = vunpack.c.l.b16 %v167
  %v555 = vunpack.c.l.b16 %v168
  %v556 = vunpack.c.l.b16 %v169
  %v557 = vunpack.c.l.b16 %v170
  %v558 = vunpack.c.l.b16 %v171
  %v559 = vunpack.c.l.b16 %v172
  %v560 = vunpack.c.l.b16 %v173
  %v561 = vunpack.c.l.b16 %v174
  %v562 = vunpack.c.l.b16 %v175
  %v563 = vunpack.c.l.b16 %v176
  %v564 = vunpack.c.l.b16 %v177
  %v565 = vunpack.c.l.b16 %v178
  %v566 = vunpack.c.l.b16 %v179
  %v567 = vunpack.c.l.b16 %v180
  %v568 = vunpack.c.l.b16 %v181
  %v569 = vunpack.c.l.b16 %v182
  %v570 = vunpack.c.l.b16 %v183
  %v571 = vunpack.c.l.b16 %v184
  %v572 = vpack.c.b16 %v429, %v428
  %v573 = vpack.c.b16 %v431, %v430
  %v574 = vpack.c.b16 %v433, %v432
  %v575 = vpack.c.b16 %v435, %v434
  %v576 = vpack.c.b16 %v437, %v436
  %v577 = vpack.c.b16 %v439, %v438
  %v578 = vpack.c.b16 %v441, %v440
  %v579 = vpack.c.b16 %v443, %v442
  %v580 = vpack.c.b16 %v445, %v444
  %v581 = vpack.c.b16 %v447, %v446
  %v582 = vpack.c.b16 %v449, %v448
  %v583 = vpack.c.b16 %v451, %v450
  %v584 = vpack.c.b16 %v453, %v452
  %v585 = vpack.c.b16 %v455, %v454
  %v586 = vpack.c.b16 %v457, %v456
  %v587 = vpack.c.b16 %v459, %v458
  %v588 = vpack.c.b16 %v461, %v460
  %v589 = vpack.c.b16 %v463, %v462
  %v590 = vpack.c.b16 %v465, %v464
  %v591 = vpack.c.b16 %v467, %v466
  %v592 = vpack.c.b16 %v469, %v468
  %v593 = vpack.c.b16 %v471, %v470
  %v594 = vpack.c.b16 %v473, %v472
  %v595 = vpack.c.b16 %v475, %v474
  %v596 = vpack.c.b16 %v477, %v476
  %v597 = vpack.c.b16 %v479, %v478
  %v598 = vpack.c.b16 %v481, %v480
  %v599 = vpack.c.b16 %v483, %v482
  %v600 = vpack.c.b16 %v485, %v484
  %v601 = vpack.c.b16 %v487, %v486
  %v602 = vpack.c.b16 %v489, %v488
  %v603 = vpack.c.b16 %v491, %v490
  %v604 = vpack.c.b16 %v493, %v492
  %v605 = vpack.c.b16 %v495, %v494
  %v606 = vpack.c.b16 %v497, %v496
  %v607 = vpack.c.b16 %v499, %v498
  %v608 = vpack.c.b16 %v501, %v500
  %v609 = vpack.c.b16 %v503, %v502
  %v610 = vpack.c.b16 %v505, %v504
  %v611 = vpack.c.b16 %v507, %v506
  %v612 = vpack.c.b16 %v509, %v508
  %v613 = vpack.c.b16 %v511, %v510
  %v614 = vpack.c.b16 %v513, %v512
  %v615 = vpack.c.b16 %v515, %v514
  %v616 = vpack.c.b16 %v517, %v516
  %v617 = vpack.c.b16 %v519, %v518
  %v618 = vpack.c.b16 %v521, %v520
  %v619 = vpack.c.b16 %v523, %v522
  %v620 = vpack.c.b16 %v525, %v524
  %v621 = vpack.c.b16 %v527, %v526
  %v622 = vpack.c.b16 %v529, %v528
  %v623 = vpack.c.b16 %v531, %v530
  %v624 = vpack.c.b16 %v533, %v532
  %v625 = vpack.c.b16 %v535, %v534
  %v626 = vpack.c.b16 %v537, %v536
  %v627 = vpack.c.b16 %v539, %v538
  %v628 = vpack.c.b16 %v541, %v540
  %v629 = vpack.c.b16 %v543, %v542
  %v630 = vpack.c.b16 %v545, %v544
  %v631 = vpack.c.b16 %v547, %v546
  %v632 = vpack.c.b16 %v549, %v548
  %v633 = vpack.c.b16 %v551, %v550
  %v634 = vpack.c.b16 %v553, %v552
  %v635 = vpack.c.b16 %v555, %v554
  %v636 = vpack.c.b16 %v557, %v556
  %v637 = vpack.c.b16 %v559, %v558
  %v638 = vpack.c.b16 %v561, %v560
  %v639 = vpack.c.b16 %v563, %v562
  %v640 = vpack.c.b16 %v565, %v564
  %v641 = vpack.c.b16 %v567, %v566
  %v642 = vpack.c.b16 %v569, %v568
  %v643 = vpack.c.b16 %v571, %v570
  %716 = vmatprep.subr.bf16.mxu0 0
  %717 = vmatpush1.bf16.msra.mxu0 %v572
  %718 = vmatprep.subr.bf16.mxu0 0
  %719 = vmatpush1.bf16.msra.mxu0 %v573
  %720 = vmatprep.subr.bf16.mxu0 0
  %721 = vmatpush1.bf16.msra.mxu0 %v574
  %722 = vmatprep.subr.bf16.mxu0 0
  %723 = vmatpush1.bf16.msra.mxu0 %v575
  %724 = vmatprep.subr.bf16.mxu0 0
  %725 = vmatpush1.bf16.msra.mxu0 %v576
  %726 = vmatprep.subr.bf16.mxu0 0
  %727 = vmatpush1.bf16.msra.mxu0 %v577
  %728 = vmatprep.subr.bf16.mxu0 0
  %729 = vmatpush1.bf16.msra.mxu0 %v578
  %730 = vmatprep.subr.bf16.mxu0 0
  %731 = vmatpush1.bf16.msra.mxu0 %v579
  %732 = vmatprep.subr.bf16.mxu0 0
  %733 = vmatpush1.bf16.msra.mxu0 %v580
  %734 = vmatprep.subr.bf16.mxu0 0
  %735 = vmatpush1.bf16.msra.mxu0 %v581
  %736 = vmatprep.subr.bf16.mxu0 0
  %737 = vmatpush1.bf16.msra.mxu0 %v582
  %738 = vmatprep.subr.bf16.mxu0 0
  %739 = vmatpush1.bf16.msra.mxu0 %v583
  %740 = vmatprep.subr.bf16.mxu0 0
  %741 = vmatpush1.bf16.msra.mxu0 %v584
  %742 = vmatprep.subr.bf16.mxu0 0
  %743 = vmatpush1.bf16.msra.mxu0 %v585
  %744 = vmatprep.subr.bf16.mxu0 0
  %745 = vmatpush1.bf16.msra.mxu0 %v586
  %746 = vmatprep.subr.bf16.mxu0 0
  %747 = vmatpush1.bf16.msra.mxu0 %v587
  %748 = vmatprep.mubr.bf16.mxu0 %v249
  %749 = vmatmul.mubr.bf16.gmra.mrb[0].mxu0 %v248
  %v750 = vpop.f32.mrb[0].mxu0
  %v751 = vadd.f32 %v190, %v750
  %v752 = vpop.f32.mrb[0].mxu0
  %v753 = vpop.f32.mrb[0].mxu0
  %v754 = vadd.f32 %v190, %v753
  %v755 = vpop.f32.mrb[0].mxu0
  %756 = vmatprep.mubr.bf16.mxu0 %v258
  %757 = vmatmul.mubr.bf16.gmra.mrb[0].mxu0 %v257
  %v758 = vpop.f32.mrb[0].mxu0
  %v759 = vadd.f32 %v190, %v758
  %v760 = vpop.f32.mrb[0].mxu0
  %v761 = vpop.f32.mrb[0].mxu0
  %v762 = vadd.f32 %v190, %v761
  %v763 = vpop.f32.mrb[0].mxu0
  %764 = vdwg.mxu0
  %765 = vmatprep.subr.bf16.mxu0 0
  %766 = vmatpush1.bf16.msra.mxu0 %v588
  %767 = vmatprep.subr.bf16.mxu0 0
  %768 = vmatpush1.bf16.msra.mxu0 %v589
  %769 = vmatprep.subr.bf16.mxu0 0
  %770 = vmatpush1.bf16.msra.mxu0 %v590
  %771 = vmatprep.subr.bf16.mxu0 0
  %772 = vmatpush1.bf16.msra.mxu0 %v591
  %773 = vmatprep.subr.bf16.mxu0 0
  %774 = vmatpush1.bf16.msra.mxu0 %v592
  %775 = vmatprep.subr.bf16.mxu0 0
  %776 = vmatpush1.bf16.msra.mxu0 %v593
  %777 = vmatprep.subr.bf16.mxu0 0
  %778 = vmatpush1.bf16.msra.mxu0 %v594
  %779 = vmatprep.subr.bf16.mxu0 0
  %780 = vmatpush1.bf16.msra.mxu0 %v595
  %781 = vmatprep.subr.bf16.mxu0 0
  %782 = vmatpush1.bf16.msra.mxu0 %v596
  %783 = vmatprep.subr.bf16.mxu0 0
  %784 = vmatpush1.bf16.msra.mxu0 %v597
  %785 = vmatprep.subr.bf16.mxu0 0
  %786 = vmatpush1.bf16.msra.mxu0 %v598
  %787 = vmatprep.subr.bf16.mxu0 0
  %788 = vmatpush1.bf16.msra.mxu0 %v599
  %789 = vmatprep.subr.bf16.mxu0 0
  %790 = vmatpush1.bf16.msra.mxu0 %v600
  %791 = vmatprep.subr.bf16.mxu0 0
  %792 = vmatpush1.bf16.msra.mxu0 %v601
  %793 = vmatprep.subr.bf16.mxu0 0
  %794 = vmatpush1.bf16.msra.mxu0 %v602
  %795 = vmatprep.subr.bf16.mxu0 0
  %796 = vmatpush1.bf16.msra.mxu0 %v603
  %797 = vmatprep.mubr.bf16.mxu0 %v251
  %798 = vmatmul.mubr.bf16.gmra.mrb[0].mxu0 %v250
  %v799 = vpop.f32.mrb[0].mxu0
  %v800 = vadd.f32 %v751, %v799
  %v801 = vpop.f32.mrb[0].mxu0
  %v802 = vpop.f32.mrb[0].mxu0
  %v803 = vadd.f32 %v754, %v802
  %v804 = vpop.f32.mrb[0].mxu0
  %805 = vmatprep.mubr.bf16.mxu0 %v260
  %806 = vmatmul.mubr.bf16.gmra.mrb[0].mxu0 %v259
  %v807 = vpop.f32.mrb[0].mxu0
  %v808 = vadd.f32 %v759, %v807
  %v809 = vpop.f32.mrb[0].mxu0
  %v810 = vpop.f32.mrb[0].mxu0
  %v811 = vadd.f32 %v762, %v810
  %v812 = vpop.f32.mrb[0].mxu0
  %813 = vdwg.mxu0
  %814 = vmatprep.subr.bf16.mxu0 0
  %815 = vmatpush1.bf16.msra.mxu0 %v604
  %816 = vmatprep.subr.bf16.mxu0 0
  %817 = vmatpush1.bf16.msra.mxu0 %v605
  %818 = vmatprep.subr.bf16.mxu0 0
  %819 = vmatpush1.bf16.msra.mxu0 %v606
  %820 = vmatprep.subr.bf16.mxu0 0
  %821 = vmatpush1.bf16.msra.mxu0 %v607
  %822 = vmatprep.subr.bf16.mxu0 0
  %823 = vmatpush1.bf16.msra.mxu0 %v608
  %824 = vmatprep.subr.bf16.mxu0 0
  %825 = vmatpush1.bf16.msra.mxu0 %v609
  %826 = vmatprep.subr.bf16.mxu0 0
  %827 = vmatpush1.bf16.msra.mxu0 %v610
  %828 = vmatprep.subr.bf16.mxu0 0
  %829 = vmatpush1.bf16.msra.mxu0 %v611
  %830 = vmatprep.subr.bf16.mxu0 0
  %831 = vmatpush1.bf16.msra.mxu0 %v612
  %832 = vmatprep.subr.bf16.mxu0 0
  %833 = vmatpush1.bf16.msra.mxu0 %v613
  %834 = vmatprep.subr.bf16.mxu0 0
  %835 = vmatpush1.bf16.msra.mxu0 %v614
  %836 = vmatprep.subr.bf16.mxu0 0
  %837 = vmatpush1.bf16.msra.mxu0 %v615
  %838 = vmatprep.subr.bf16.mxu0 0
  %839 = vmatpush1.bf16.msra.mxu0 %v616
  %840 = vmatprep.subr.bf16.mxu0 0
  %841 = vmatpush1.bf16.msra.mxu0 %v617
  %842 = vmatprep.subr.bf16.mxu0 0
  %843 = vmatpush1.bf16.msra.mxu0 %v618
  %844 = vmatprep.subr.bf16.mxu0 0
  %845 = vmatpush1.bf16.msra.mxu0 %v619
  %846 = vmatprep.mubr.bf16.mxu0 %v253
  %847 = vmatmul.mubr.bf16.gmra.mrb[0].mxu0 %v252
  %v848 = vpop.f32.mrb[0].mxu0
  %v849 = vadd.f32 %v800, %v848
  %v850 = vpop.f32.mrb[0].mxu0
  %v851 = vpop.f32.mrb[0].mxu0
  %v852 = vadd.f32 %v803, %v851
  %v853 = vpop.f32.mrb[0].mxu0
  %854 = vmatprep.mubr.bf16.mxu0 %v262
  %855 = vmatmul.mubr.bf16.gmra.mrb[0].mxu0 %v261
  %v856 = vpop.f32.mrb[0].mxu0
  %v857 = vadd.f32 %v808, %v856
  %v858 = vpop.f32.mrb[0].mxu0
  %v859 = vpop.f32.mrb[0].mxu0
  %v860 = vadd.f32 %v811, %v859
  %v861 = vpop.f32.mrb[0].mxu0
  %862 = vdwg.mxu0
  %863 = vmatprep.subr.bf16.mxu0 0
  %864 = vmatpush1.bf16.msra.mxu0 %v620
  %865 = vmatprep.subr.bf16.mxu0 0
  %866 = vmatpush1.bf16.msra.mxu0 %v621
  %867 = vmatprep.subr.bf16.mxu0 0
  %868 = vmatpush1.bf16.msra.mxu0 %v622
  %869 = vmatprep.subr.bf16.mxu0 0
  %870 = vmatpush1.bf16.msra.mxu0 %v623
  %871 = vmatprep.subr.bf16.mxu0 0
  %872 = vmatpush1.bf16.msra.mxu0 %v624
  %873 = vmatprep.subr.bf16.mxu0 0
  %874 = vmatpush1.bf16.msra.mxu0 %v625
  %875 = vmatprep.subr.bf16.mxu0 0
  %876 = vmatpush1.bf16.msra.mxu0 %v626
  %877 = vmatprep.subr.bf16.mxu0 0
  %878 = vmatpush1.bf16.msra.mxu0 %v627
  %879 = vmatprep.subr.bf16.mxu0 0
  %880 = vmatpush1.bf16.msra.mxu0 %v628
  %881 = vmatprep.subr.bf16.mxu0 0
  %882 = vmatpush1.bf16.msra.mxu0 %v629
  %883 = vmatprep.subr.bf16.mxu0 0
  %884 = vmatpush1.bf16.msra.mxu0 %v630
  %885 = vmatprep.subr.bf16.mxu0 0
  %886 = vmatpush1.bf16.msra.mxu0 %v631
  %887 = vmatprep.subr.bf16.mxu0 0
  %888 = vmatpush1.bf16.msra.mxu0 %v632
  %889 = vmatprep.subr.bf16.mxu0 0
  %890 = vmatpush1.bf16.msra.mxu0 %v633
  %891 = vmatprep.subr.bf16.mxu0 0
  %892 = vmatpush1.bf16.msra.mxu0 %v634
  %893 = vmatprep.subr.bf16.mxu0 0
  %894 = vmatpush1.bf16.msra.mxu0 %v635
  %895 = vmatprep.mubr.bf16.mxu0 %v255
  %896 = vmatmul.mubr.bf16.gmra.mrb[0].mxu0 %v254
  %v897 = vpop.f32.mrb[0].mxu0
  %v898 = vadd.f32 %v849, %v897
  %v899 = vpop.f32.mrb[0].mxu0
  %v900 = vpop.f32.mrb[0].mxu0
  %v901 = vadd.f32 %v852, %v900
  %v902 = vpop.f32.mrb[0].mxu0
  %903 = vmatprep.mubr.bf16.mxu0 %v264
  %904 = vmatmul.mubr.bf16.gmra.mrb[0].mxu0 %v263
  %v905 = vpop.f32.mrb[0].mxu0
  %v906 = vadd.f32 %v857, %v905
  %v907 = vpop.f32.mrb[0].mxu0
  %v908 = vpop.f32.mrb[0].mxu0
  %v909 = vadd.f32 %v860, %v908
  %v910 = vpop.f32.mrb[0].mxu0
  %911 = vdwg.mxu0
  %912 = vmatprep.subr.bf16.mxu0 0
  %913 = vmatpush1.bf16.msra.mxu0 %v636
  %914 = vmatprep.subr.bf16.mxu0 0
  %915 = vmatpush1.bf16.msra.mxu0 %v637
  %916 = vmatprep.subr.bf16.mxu0 0
  %917 = vmatpush1.bf16.msra.mxu0 %v638
  %918 = vmatprep.subr.bf16.mxu0 0
  %919 = vmatpush1.bf16.msra.mxu0 %v639
  %920 = vmatprep.subr.bf16.mxu0 0
  %921 = vmatpush1.bf16.msra.mxu0 %v640
  %922 = vmatprep.subr.bf16.mxu0 0
  %923 = vmatpush1.bf16.msra.mxu0 %v641
  %924 = vmatprep.subr.bf16.mxu0 0
  %925 = vmatpush1.bf16.msra.mxu0 %v642
  %926 = vmatprep.subr.bf16.mxu0 0
  %927 = vmatpush1.bf16.msra.mxu0 %v643
  %928 = vmatprep.subr.bf16.mxu0 0
  %929 = vmatpush1.bf16.msra.mxu0 0
  %930 = vmatprep.subr.bf16.mxu0 0
  %931 = vmatpush1.bf16.msra.mxu0 0
  %932 = vmatprep.subr.bf16.mxu0 0
  %933 = vmatpush1.bf16.msra.mxu0 0
  %934 = vmatprep.subr.bf16.mxu0 0
  %935 = vmatpush1.bf16.msra.mxu0 0
  %936 = vmatprep.subr.bf16.mxu0 0
  %937 = vmatpush1.bf16.msra.mxu0 0
  %938 = vmatprep.subr.bf16.mxu0 0
  %939 = vmatpush1.bf16.msra.mxu0 0
  %940 = vmatprep.subr.bf16.mxu0 0
  %941 = vmatpush1.bf16.msra.mxu0 0
  %942 = vmatprep.subr.bf16.mxu0 0
  %943 = vmatpush1.bf16.msra.mxu0 0
  %944 = vmatprep.mubr.bf16.mxu0 0
  %945 = vmatmul.mubr.bf16.gmra.mrb[0].mxu0 %v256
  %v946 = vpop.f32.mrb[0].mxu0
  %v947 = vadd.f32 %v898, %v946
  %v948 = vpop.f32.mrb[0].mxu0
  %v949 = vpop.f32.mrb[0].mxu0
  %v950 = vadd.f32 %v901, %v949
  %v951 = vpop.f32.mrb[0].mxu0
  %952 = vmatprep.mubr.bf16.mxu0 0
  %953 = vmatmul.mubr.bf16.gmra.mrb[0].mxu0 %v265
  %v954 = vpop.f32.mrb[0].mxu0
  %v955 = vadd.f32 %v906, %v954
  %v956 = vpop.f32.mrb[0].mxu0
  %v957 = vpop.f32.mrb[0].mxu0
  %v958 = vadd.f32 %v909, %v957
  %v959 = vpop.f32.mrb[0].mxu0
  %960 = vdwg.mxu0
  %v961 = vadd.f32 %v947, %v950
  %v962 = vadd.f32 %v961, %v955
  %v963 = vadd.f32 %v962, %v958
  %v964 = vrot.slane %v963, 4
  %v965 = vadd.f32 %v963, %v964
  %v966 = vrot.slane %v965, 2
  %v967 = vadd.f32 %v965, %v966
  %v968 = vrot.slane %v967, 1
  %v969 = vadd.f32 %v967, %v968
  %v970 = vmul.f32 %v969, 0.03125
  %v971 = vsub.f32 %v947, %v970
  %v972 = vsub.f32 %v950, %v970
  %v973 = vsub.f32 %v955, %v970
  %v974 = vsub.f32 %v958, %v970
  %v975 = vmul.f32 %v971, %v971
  %v976 = vmul.f32 %v972, %v972
  %v977 = vmul.f32 %v973, %v973
  %v978 = vmul.f32 %v974, %v974
  %v979 = vadd.f32 %v975, %v976
  %v980 = vadd.f32 %v979, %v977
  %v981 = vadd.f32 %v980, %v978
  %v982 = vrot.slane %v981, 4
  %v983 = vadd.f32 %v981, %v982
  %v984 = vrot.slane %v983, 2
  %v985 = vadd.f32 %v983, %v984
  %v986 = vrot.slane %v985, 1
  %v987 = vadd.f32 %v985, %v986
  %v988 = vmul.f32 %v987, 0.03125
  %v989 = vadd.f32 %v988, 1e-05
  %v990 = vrsqrt.pop %v989
  %v991 = vmul.f32 %v971, %v990
  %v992 = vmul.f32 %v972, %v990
  %v993 = vmul.f32 %v973, %v990
  %v994 = vmul.f32 %v974, %v990
  %v995 = vld [vmem:[%s3] sm:$0x1]
  %v997 = vlaneseq
  %v998 = vshrl.u32 %v997, 7
  %v999 = vsub.s32 0, %v998
  %v1000 = vrot.slane %v995, %v999
  %v1002 = vmul.f32 %v991, %v1000
  %v1003 = vmul.f32 %v992, %v1000
  %v1004 = vmul.f32 %v993, %v1000
  %v1005 = vmul.f32 %v994, %v1000
  %v1006 = vld [vmem:[%s4] sm:$0x1]
  %v1008 = vlaneseq
  %v1009 = vshrl.u32 %v1008, 7
  %v1010 = vsub.s32 0, %v1009
  %v1011 = vrot.slane %v1006, %v1010
  %v1013 = vadd.f32 %v1002, %v1011
  %v1014 = vadd.f32 %v1003, %v1011
  %v1015 = vadd.f32 %v1004, %v1011
  %v1016 = vadd.f32 %v1005, %v1011
  %vm1017 = vcmp.gt.f32.partialorder %v1013, 0.0
  %vm1018 = vcmp.gt.f32.partialorder %v1014, 0.0
  %vm1019 = vcmp.gt.f32.partialorder %v1015, 0.0
  %vm1020 = vcmp.gt.f32.partialorder %v1016, 0.0
  %v1021 = vmul.f32 %v1013, 0.2
  %v1022 = vmul.f32 %v1014, 0.2
  %v1023 = vmul.f32 %v1015, 0.2
  %v1024 = vmul.f32 %v1016, 0.2
  %v1025 = vsel %vm1017, %v1013, %v1021
  %v1026 = vsel %vm1018, %v1014, %v1022
  %v1027 = vsel %vm1019, %v1015, %v1023
  %v1028 = vsel %vm1020, %v1016, %v1024
  %v1029 = vpack.c.bf16 %v1026, %v1025
  %v1030 = vpack.c.bf16 %v1028, %v1027
  %v1033 = vunpack.c.l.b16 %v1029
  %v1034 = vunpack.c.h.b16 %v1029
  %v1035 = vunpack.c.l.b16 %v1030
  %v1036 = vunpack.c.h.b16 %v1030
  %v1037 = vpack.c.b16 %v1033, %v1033
  %v1038 = vpack.c.b16 %v1034, %v1034
  %v1039 = vpack.c.b16 %v1035, %v1035
  %v1040 = vpack.c.b16 %v1036, %v1036
  %1045 = vst [vmem:[%s5] sm:$0xf] %v1037
  %1046 = vst [vmem:[%s5 + $0x4] sm:$0xf] %v1038
  %1047 = vst [vmem:[%s5 + $0x8] sm:$0xf] %v1039
  %1048 = vst [vmem:[%s5 + $0xc] sm:$0xf] %v1040
  // Predicated region
  $region22: #{_lambda_.7} parent=0 // pred_check
    _
  $region23: #{_lambda_.7} parent=0 // pred_check_branch
    %1050 = sbr.rel (0) target = $region25
  $region24: #{_lambda_.7} parent=0 // pred_region
    _
  $region25: #{_lambda_.7} parent=0 // pred_fallthru
    _
  // Predicated region
  $region26: #{_lambda_.7} parent=0 // pred_check
    _
  $region27: #{_lambda_.7} parent=0 // pred_check_branch
    %1052 = sbr.rel (0) target = $region29
  $region28: #{_lambda_.7} parent=0 // pred_region
    _
  $region29: #{_lambda_.7} parent=0 // pred_fallthru
    _

// kernel: _lambda_.8
$region0: #{_lambda_.8}
  #allocation0 [shape = 'u32[]', space=smem, size = 0x4, offset = 0x4, fixed_abs, tag = 'smem constant byte address 0x4 - core index']
  #allocation1 [shape = 'u32[144,128]{1,0:T(1,128)}', space=vmem, size = 0x12000, scoped, tag = 'internal scratch']
  %s0 = inlined_call_operand.vmem [shape: bf16[8,1152], index: 0, kind: input, shape index: {}]
  %s1 = inlined_call_operand.vmem [shape: bf16[1152,256], index: 1, kind: input, shape index: {}]
  %s2 = inlined_call_operand.vmem [shape: f32[1,256], index: 2, kind: input, shape index: {}]
  %s3 = inlined_call_operand.vmem [shape: f32[1,256], index: 3, kind: input, shape index: {}]
  %s4 = inlined_call_operand.vmem [shape: f32[1,256], index: 4, kind: input, shape index: {}]
  %s5 = inlined_call_operand.vmem [shape: bf16[8,256], index: 5, kind: output, shape index: {}]
  %s6 = sld [smem:[#allocation0]]
  $region30: #{_lambda_.8} parent=0
    _
  %s8 = ssub.s32 1, %s6
  %s9 = scalar_select 0, %s8, %s6
  // Predicated region
  $region2: #{_lambda_.8} parent=0 // pred_check
    _
  $region3: #{_lambda_.8} parent=0 // pred_check_branch
    %11 = sbr.rel (0) target = $region5
  $region4: #{_lambda_.8} parent=0 // pred_region
    _
  $region5: #{_lambda_.8} parent=0 // pred_fallthru
    _
  // Predicated region
  $region6: #{_lambda_.8} parent=0 // pred_check
    _
  $region7: #{_lambda_.8} parent=0 // pred_check_branch
    %13 = sbr.rel (0) target = $region9
  $region8: #{_lambda_.8} parent=0 // pred_region
    _
  $region9: #{_lambda_.8} parent=0 // pred_fallthru
    _
  // Predicated region
  $region10: #{_lambda_.8} parent=0 // pred_check
    _
  $region11: #{_lambda_.8} parent=0 // pred_check_branch
    %15 = sbr.rel (0) target = $region13
  $region12: #{_lambda_.8} parent=0 // pred_region
    _
  $region13: #{_lambda_.8} parent=0 // pred_fallthru
    _
  // Predicated region
  $region14: #{_lambda_.8} parent=0 // pred_check
    _
  $region15: #{_lambda_.8} parent=0 // pred_check_branch
    %17 = sbr.rel (0) target = $region17
  $region16: #{_lambda_.8} parent=0 // pred_region
    _
  $region17: #{_lambda_.8} parent=0 // pred_fallthru
    _
  // Predicated region
  $region18: #{_lambda_.8} parent=0 // pred_check
    _
  $region19: #{_lambda_.8} parent=0 // pred_check_branch
    %19 = sbr.rel (0) target = $region21
  $region20: #{_lambda_.8} parent=0 // pred_region
    _
  $region21: #{_lambda_.8} parent=0 // pred_fallthru
    _
  %v21 = vld [vmem:[%s0] sm:$0xff]
  %v22 = vld [vmem:[%s0 + $0x8] sm:$0xff]
  %v23 = vld [vmem:[%s0 + $0x10] sm:$0xff]
  %v24 = vld [vmem:[%s0 + $0x18] sm:$0xff]
  %v25 = vld [vmem:[%s0 + $0x20] sm:$0xf]
  %v26 = vld [vmem:[%s1] sm:$0xff]
  %v27 = vld [vmem:[%s1 + $0x8] sm:$0xff]
  %v28 = vld [vmem:[%s1 + $0x10] sm:$0xff]
  %v29 = vld [vmem:[%s1 + $0x18] sm:$0xff]
  %v30 = vld [vmem:[%s1 + $0x20] sm:$0xff]
  %v31 = vld [vmem:[%s1 + $0x28] sm:$0xff]
  %v32 = vld [vmem:[%s1 + $0x30] sm:$0xff]
  %v33 = vld [vmem:[%s1 + $0x38] sm:$0xff]
  %v34 = vld [vmem:[%s1 + $0x40] sm:$0xff]
  %v35 = vld [vmem:[%s1 + $0x48] sm:$0xff]
  %v36 = vld [vmem:[%s1 + $0x50] sm:$0xff]
  %v37 = vld [vmem:[%s1 + $0x58] sm:$0xff]
  %v38 = vld [vmem:[%s1 + $0x60] sm:$0xff]
  %v39 = vld [vmem:[%s1 + $0x68] sm:$0xff]
  %v40 = vld [vmem:[%s1 + $0x70] sm:$0xff]
  %v41 = vld [vmem:[%s1 + $0x78] sm:$0xff]
  %v42 = vld [vmem:[%s1 + $0x80] sm:$0xff]
  %v43 = vld [vmem:[%s1 + $0x88] sm:$0xff]
  %v44 = vld [vmem:[%s1 + $0x90] sm:$0xff]
  %v45 = vld [vmem:[%s1 + $0x98] sm:$0xff]
  %v46 = vld [vmem:[%s1 + $0xa0] sm:$0xff]
  %v47 = vld [vmem:[%s1 + $0xa8] sm:$0xff]
  %v48 = vld [vmem:[%s1 + $0xb0] sm:$0xff]
  %v49 = vld [vmem:[%s1 + $0xb8] sm:$0xff]
  %v50 = vld [vmem:[%s1 + $0xc0] sm:$0xff]
  %v51 = vld [vmem:[%s1 + $0xc8] sm:$0xff]
  %v52 = vld [vmem:[%s1 + $0xd0] sm:$0xff]
  %v53 = vld [vmem:[%s1 + $0xd8] sm:$0xff]
  %v54 = vld [vmem:[%s1 + $0xe0] sm:$0xff]
  %v55 = vld [vmem:[%s1 + $0xe8] sm:$0xff]
  %v56 = vld [vmem:[%s1 + $0xf0] sm:$0xff]
  %v57 = vld [vmem:[%s1 + $0xf8] sm:$0xff]
  %v58 = vld [vmem:[%s1 + $0x100] sm:$0xff]
  %v59 = vld [vmem:[%s1 + $0x108] sm:$0xff]
  %v60 = vld [vmem:[%s1 + $0x110] sm:$0xff]
  %v61 = vld [vmem:[%s1 + $0x118] sm:$0xff]
  %v62 = vld [vmem:[%s1 + $0x120] sm:$0xff]
  %v63 = vld [vmem:[%s1 + $0x128] sm:$0xff]
  %v64 = vld [vmem:[%s1 + $0x130] sm:$0xff]
  %v65 = vld [vmem:[%s1 + $0x138] sm:$0xff]
  %v66 = vld [vmem:[%s1 + $0x140] sm:$0xff]
  %v67 = vld [vmem:[%s1 + $0x148] sm:$0xff]
  %v68 = vld [vmem:[%s1 + $0x150] sm:$0xff]
  %v69 = vld [vmem:[%s1 + $0x158] sm:$0xff]
  %v70 = vld [vmem:[%s1 + $0x160] sm:$0xff]
  %v71 = vld [vmem:[%s1 + $0x168] sm:$0xff]
  %v72 = vld [vmem:[%s1 + $0x170] sm:$0xff]
  %v73 = vld [vmem:[%s1 + $0x178] sm:$0xff]
  %v74 = vld [vmem:[%s1 + $0x180] sm:$0xff]
  %v75 = vld [vmem:[%s1 + $0x188] sm:$0xff]
  %v76 = vld [vmem:[%s1 + $0x190] sm:$0xff]
  %v77 = vld [vmem:[%s1 + $0x198] sm:$0xff]
  %v78 = vld [vmem:[%s1 + $0x1a0] sm:$0xff]
  %v79 = vld [vmem:[%s1 + $0x1a8] sm:$0xff]
  %v80 = vld [vmem:[%s1 + $0x1b0] sm:$0xff]
  %v81 = vld [vmem:[%s1 + $0x1b8] sm:$0xff]
  %v82 = vld [vmem:[%s1 + $0x1c0] sm:$0xff]
  %v83 = vld [vmem:[%s1 + $0x1c8] sm:$0xff]
  %v84 = vld [vmem:[%s1 + $0x1d0] sm:$0xff]
  %v85 = vld [vmem:[%s1 + $0x1d8] sm:$0xff]
  %v86 = vld [vmem:[%s1 + $0x1e0] sm:$0xff]
  %v87 = vld [vmem:[%s1 + $0x1e8] sm:$0xff]
  %v88 = vld [vmem:[%s1 + $0x1f0] sm:$0xff]
  %v89 = vld [vmem:[%s1 + $0x1f8] sm:$0xff]
  %v90 = vld [vmem:[%s1 + $0x200] sm:$0xff]
  %v91 = vld [vmem:[%s1 + $0x208] sm:$0xff]
  %v92 = vld [vmem:[%s1 + $0x210] sm:$0xff]
  %v93 = vld [vmem:[%s1 + $0x218] sm:$0xff]
  %v94 = vld [vmem:[%s1 + $0x220] sm:$0xff]
  %v95 = vld [vmem:[%s1 + $0x228] sm:$0xff]
  %v96 = vld [vmem:[%s1 + $0x230] sm:$0xff]
  %v97 = vld [vmem:[%s1 + $0x238] sm:$0xff]
  %v98 = vld [vmem:[%s1 + $0x240] sm:$0xff]
  %v99 = vld [vmem:[%s1 + $0x248] sm:$0xff]
  %v100 = vld [vmem:[%s1 + $0x250] sm:$0xff]
  %v101 = vld [vmem:[%s1 + $0x258] sm:$0xff]
  %v102 = vld [vmem:[%s1 + $0x260] sm:$0xff]
  %v103 = vld [vmem:[%s1 + $0x268] sm:$0xff]
  %v104 = vld [vmem:[%s1 + $0x270] sm:$0xff]
  %v105 = vld [vmem:[%s1 + $0x278] sm:$0xff]
  %v106 = vld [vmem:[%s1 + $0x280] sm:$0xff]
  %v107 = vld [vmem:[%s1 + $0x288] sm:$0xff]
  %v108 = vld [vmem:[%s1 + $0x290] sm:$0xff]
  %v109 = vld [vmem:[%s1 + $0x298] sm:$0xff]
  %v110 = vld [vmem:[%s1 + $0x2a0] sm:$0xff]
  %v111 = vld [vmem:[%s1 + $0x2a8] sm:$0xff]
  %v112 = vld [vmem:[%s1 + $0x2b0] sm:$0xff]
  %v113 = vld [vmem:[%s1 + $0x2b8] sm:$0xff]
  %v114 = vld [vmem:[%s1 + $0x2c0] sm:$0xff]
  %v115 = vld [vmem:[%s1 + $0x2c8] sm:$0xff]
  %v116 = vld [vmem:[%s1 + $0x2d0] sm:$0xff]
  %v117 = vld [vmem:[%s1 + $0x2d8] sm:$0xff]
  %v118 = vld [vmem:[%s1 + $0x2e0] sm:$0xff]
  %v119 = vld [vmem:[%s1 + $0x2e8] sm:$0xff]
  %v120 = vld [vmem:[%s1 + $0x2f0] sm:$0xff]
  %v121 = vld [vmem:[%s1 + $0x2f8] sm:$0xff]
  %v122 = vld [vmem:[%s1 + $0x300] sm:$0xff]
  %v123 = vld [vmem:[%s1 + $0x308] sm:$0xff]
  %v124 = vld [vmem:[%s1 + $0x310] sm:$0xff]
  %v125 = vld [vmem:[%s1 + $0x318] sm:$0xff]
  %v126 = vld [vmem:[%s1 + $0x320] sm:$0xff]
  %v127 = vld [vmem:[%s1 + $0x328] sm:$0xff]
  %v128 = vld [vmem:[%s1 + $0x330] sm:$0xff]
  %v129 = vld [vmem:[%s1 + $0x338] sm:$0xff]
  %v130 = vld [vmem:[%s1 + $0x340] sm:$0xff]
  %v131 = vld [vmem:[%s1 + $0x348] sm:$0xff]
  %v132 = vld [vmem:[%s1 + $0x350] sm:$0xff]
  %v133 = vld [vmem:[%s1 + $0x358] sm:$0xff]
  %v134 = vld [vmem:[%s1 + $0x360] sm:$0xff]
  %v135 = vld [vmem:[%s1 + $0x368] sm:$0xff]
  %v136 = vld [vmem:[%s1 + $0x370] sm:$0xff]
  %v137 = vld [vmem:[%s1 + $0x378] sm:$0xff]
  %v138 = vld [vmem:[%s1 + $0x380] sm:$0xff]
  %v139 = vld [vmem:[%s1 + $0x388] sm:$0xff]
  %v140 = vld [vmem:[%s1 + $0x390] sm:$0xff]
  %v141 = vld [vmem:[%s1 + $0x398] sm:$0xff]
  %v142 = vld [vmem:[%s1 + $0x3a0] sm:$0xff]
  %v143 = vld [vmem:[%s1 + $0x3a8] sm:$0xff]
  %v144 = vld [vmem:[%s1 + $0x3b0] sm:$0xff]
  %v145 = vld [vmem:[%s1 + $0x3b8] sm:$0xff]
  %v146 = vld [vmem:[%s1 + $0x3c0] sm:$0xff]
  %v147 = vld [vmem:[%s1 + $0x3c8] sm:$0xff]
  %v148 = vld [vmem:[%s1 + $0x3d0] sm:$0xff]
  %v149 = vld [vmem:[%s1 + $0x3d8] sm:$0xff]
  %v150 = vld [vmem:[%s1 + $0x3e0] sm:$0xff]
  %v151 = vld [vmem:[%s1 + $0x3e8] sm:$0xff]
  %v152 = vld [vmem:[%s1 + $0x3f0] sm:$0xff]
  %v153 = vld [vmem:[%s1 + $0x3f8] sm:$0xff]
  %v154 = vld [vmem:[%s1 + $0x400] sm:$0xff]
  %v155 = vld [vmem:[%s1 + $0x408] sm:$0xff]
  %v156 = vld [vmem:[%s1 + $0x410] sm:$0xff]
  %v157 = vld [vmem:[%s1 + $0x418] sm:$0xff]
  %v158 = vld [vmem:[%s1 + $0x420] sm:$0xff]
  %v159 = vld [vmem:[%s1 + $0x428] sm:$0xff]
  %v160 = vld [vmem:[%s1 + $0x430] sm:$0xff]
  %v161 = vld [vmem:[%s1 + $0x438] sm:$0xff]
  %v162 = vld [vmem:[%s1 + $0x440] sm:$0xff]
  %v163 = vld [vmem:[%s1 + $0x448] sm:$0xff]
  %v164 = vld [vmem:[%s1 + $0x450] sm:$0xff]
  %v165 = vld [vmem:[%s1 + $0x458] sm:$0xff]
  %v166 = vld [vmem:[%s1 + $0x460] sm:$0xff]
  %v167 = vld [vmem:[%s1 + $0x468] sm:$0xff]
  %v168 = vld [vmem:[%s1 + $0x470] sm:$0xff]
  %v169 = vld [vmem:[%s1 + $0x478] sm:$0xff]
  %v170 = vld [vmem:[%s2] sm:$0x3]
  %v172 = vlaneseq
  %v173 = vshrl.u32 %v172, 7
  %v174 = vsub.s32 0, %v173
  %v175 = vrot.slane %v170, %v174
  %v176 = vlaneseq
  %v177 = vshrl.u32 %v176, 7
  %v178 = vsub.s32 1, %v177
  %v179 = vrot.slane %v170, %v178
  %v187 = vunpack.c.l.b16 %v21
  %v188 = vunpack.c.h.b16 %v21
  %v189 = vunpack.c.l.b16 %v22
  %v190 = vunpack.c.h.b16 %v22
  %v191 = vunpack.c.l.b16 %v23
  %v192 = vunpack.c.h.b16 %v23
  %v193 = vunpack.c.l.b16 %v24
  %v194 = vunpack.c.h.b16 %v24
  %v195 = vunpack.c.l.b16 %v25
  %v196 = vpack.c.b16 %v187, %v187
  %v197 = vpack.c.b16 %v188, %v188
  %v198 = vpack.c.b16 %v189, %v189
  %v199 = vpack.c.b16 %v190, %v190
  %v200 = vpack.c.b16 %v191, %v191
  %v201 = vpack.c.b16 %v192, %v192
  %v202 = vpack.c.b16 %v193, %v193
  %v203 = vpack.c.b16 %v194, %v194
  %v204 = vpack.c.b16 %v195, %v195
  %v358 = vunpack.c.l.b16 %v26
  %v359 = vunpack.c.h.b16 %v26
  %v360 = vunpack.c.l.b16 %v27
  %v361 = vunpack.c.h.b16 %v27
  %v362 = vunpack.c.l.b16 %v28
  %v363 = vunpack.c.h.b16 %v28
  %v364 = vunpack.c.l.b16 %v29
  %v365 = vunpack.c.h.b16 %v29
  %v366 = vunpack.c.l.b16 %v30
  %v367 = vunpack.c.h.b16 %v30
  %v368 = vunpack.c.l.b16 %v31
  %v369 = vunpack.c.h.b16 %v31
  %v370 = vunpack.c.l.b16 %v32
  %v371 = vunpack.c.h.b16 %v32
  %v372 = vunpack.c.l.b16 %v33
  %v373 = vunpack.c.h.b16 %v33
  %v374 = vunpack.c.l.b16 %v34
  %v375 = vunpack.c.h.b16 %v34
  %v376 = vunpack.c.l.b16 %v35
  %v377 = vunpack.c.h.b16 %v35
  %v378 = vunpack.c.l.b16 %v36
  %v379 = vunpack.c.h.b16 %v36
  %v380 = vunpack.c.l.b16 %v37
  %v381 = vunpack.c.h.b16 %v37
  %v382 = vunpack.c.l.b16 %v38
  %v383 = vunpack.c.h.b16 %v38
  %v384 = vunpack.c.l.b16 %v39
  %v385 = vunpack.c.h.b16 %v39
  %v386 = vunpack.c.l.b16 %v40
  %v387 = vunpack.c.h.b16 %v40
  %v388 = vunpack.c.l.b16 %v41
  %v389 = vunpack.c.h.b16 %v41
  %v390 = vunpack.c.l.b16 %v42
  %v391 = vunpack.c.h.b16 %v42
  %v392 = vunpack.c.l.b16 %v43
  %v393 = vunpack.c.h.b16 %v43
  %v394 = vunpack.c.l.b16 %v44
  %v395 = vunpack.c.h.b16 %v44
  %v396 = vunpack.c.l.b16 %v45
  %v397 = vunpack.c.h.b16 %v45
  %v398 = vunpack.c.l.b16 %v46
  %v399 = vunpack.c.h.b16 %v46
  %v400 = vunpack.c.l.b16 %v47
  %v401 = vunpack.c.h.b16 %v47
  %v402 = vunpack.c.l.b16 %v48
  %v403 = vunpack.c.h.b16 %v48
  %v404 = vunpack.c.l.b16 %v49
  %v405 = vunpack.c.h.b16 %v49
  %v406 = vunpack.c.l.b16 %v50
  %v407 = vunpack.c.h.b16 %v50
  %v408 = vunpack.c.l.b16 %v51
  %v409 = vunpack.c.h.b16 %v51
  %v410 = vunpack.c.l.b16 %v52
  %v411 = vunpack.c.h.b16 %v52
  %v412 = vunpack.c.l.b16 %v53
  %v413 = vunpack.c.h.b16 %v53
  %v414 = vunpack.c.l.b16 %v54
  %v415 = vunpack.c.h.b16 %v54
  %v416 = vunpack.c.l.b16 %v55
  %v417 = vunpack.c.h.b16 %v55
  %v418 = vunpack.c.l.b16 %v56
  %v419 = vunpack.c.h.b16 %v56
  %v420 = vunpack.c.l.b16 %v57
  %v421 = vunpack.c.h.b16 %v57
  %v422 = vunpack.c.l.b16 %v58
  %v423 = vunpack.c.h.b16 %v58
  %v424 = vunpack.c.l.b16 %v59
  %v425 = vunpack.c.h.b16 %v59
  %v426 = vunpack.c.l.b16 %v60
  %v427 = vunpack.c.h.b16 %v60
  %v428 = vunpack.c.l.b16 %v61
  %v429 = vunpack.c.h.b16 %v61
  %v430 = vunpack.c.l.b16 %v62
  %v431 = vunpack.c.h.b16 %v62
  %v432 = vunpack.c.l.b16 %v63
  %v433 = vunpack.c.h.b16 %v63
  %v434 = vunpack.c.l.b16 %v64
  %v435 = vunpack.c.h.b16 %v64
  %v436 = vunpack.c.l.b16 %v65
  %v437 = vunpack.c.h.b16 %v65
  %v438 = vunpack.c.l.b16 %v66
  %v439 = vunpack.c.h.b16 %v66
  %v440 = vunpack.c.l.b16 %v67
  %v441 = vunpack.c.h.b16 %v67
  %v442 = vunpack.c.l.b16 %v68
  %v443 = vunpack.c.h.b16 %v68
  %v444 = vunpack.c.l.b16 %v69
  %v445 = vunpack.c.h.b16 %v69
  %v446 = vunpack.c.l.b16 %v70
  %v447 = vunpack.c.h.b16 %v70
  %v448 = vunpack.c.l.b16 %v71
  %v449 = vunpack.c.h.b16 %v71
  %v450 = vunpack.c.l.b16 %v72
  %v451 = vunpack.c.h.b16 %v72
  %v452 = vunpack.c.l.b16 %v73
  %v453 = vunpack.c.h.b16 %v73
  %v454 = vunpack.c.l.b16 %v74
  %v455 = vunpack.c.h.b16 %v74
  %v456 = vunpack.c.l.b16 %v75
  %v457 = vunpack.c.h.b16 %v75
  %v458 = vunpack.c.l.b16 %v76
  %v459 = vunpack.c.h.b16 %v76
  %v460 = vunpack.c.l.b16 %v77
  %v461 = vunpack.c.h.b16 %v77
  %v462 = vunpack.c.l.b16 %v78
  %v463 = vunpack.c.h.b16 %v78
  %v464 = vunpack.c.l.b16 %v79
  %v465 = vunpack.c.h.b16 %v79
  %v466 = vunpack.c.l.b16 %v80
  %v467 = vunpack.c.h.b16 %v80
  %v468 = vunpack.c.l.b16 %v81
  %v469 = vunpack.c.h.b16 %v81
  %v470 = vunpack.c.l.b16 %v82
  %v471 = vunpack.c.h.b16 %v82
  %v472 = vunpack.c.l.b16 %v83
  %v473 = vunpack.c.h.b16 %v83
  %v474 = vunpack.c.l.b16 %v84
  %v475 = vunpack.c.h.b16 %v84
  %v476 = vunpack.c.l.b16 %v85
  %v477 = vunpack.c.h.b16 %v85
  %v478 = vunpack.c.l.b16 %v86
  %v479 = vunpack.c.h.b16 %v86
  %v480 = vunpack.c.l.b16 %v87
  %v481 = vunpack.c.h.b16 %v87
  %v482 = vunpack.c.l.b16 %v88
  %v483 = vunpack.c.h.b16 %v88
  %v484 = vunpack.c.l.b16 %v89
  %v485 = vunpack.c.h.b16 %v89
  %v486 = vunpack.c.l.b16 %v90
  %v487 = vunpack.c.h.b16 %v90
  %v488 = vunpack.c.l.b16 %v91
  %v489 = vunpack.c.h.b16 %v91
  %v490 = vunpack.c.l.b16 %v92
  %v491 = vunpack.c.h.b16 %v92
  %v492 = vunpack.c.l.b16 %v93
  %v493 = vunpack.c.h.b16 %v93
  %v494 = vunpack.c.l.b16 %v94
  %v495 = vunpack.c.h.b16 %v94
  %v496 = vunpack.c.l.b16 %v95
  %v497 = vunpack.c.h.b16 %v95
  %v498 = vunpack.c.l.b16 %v96
  %v499 = vunpack.c.h.b16 %v96
  %v500 = vunpack.c.l.b16 %v97
  %v501 = vunpack.c.h.b16 %v97
  %v502 = vunpack.c.l.b16 %v98
  %v503 = vunpack.c.h.b16 %v98
  %v504 = vunpack.c.l.b16 %v99
  %v505 = vunpack.c.h.b16 %v99
  %v506 = vunpack.c.l.b16 %v100
  %v507 = vunpack.c.h.b16 %v100
  %v508 = vunpack.c.l.b16 %v101
  %v509 = vunpack.c.h.b16 %v101
  %v510 = vunpack.c.l.b16 %v102
  %v511 = vunpack.c.h.b16 %v102
  %v512 = vunpack.c.l.b16 %v103
  %v513 = vunpack.c.h.b16 %v103
  %v514 = vunpack.c.l.b16 %v104
  %v515 = vunpack.c.h.b16 %v104
  %v516 = vunpack.c.l.b16 %v105
  %v517 = vunpack.c.h.b16 %v105
  %v518 = vunpack.c.l.b16 %v106
  %v519 = vunpack.c.h.b16 %v106
  %v520 = vunpack.c.l.b16 %v107
  %v521 = vunpack.c.h.b16 %v107
  %v522 = vunpack.c.l.b16 %v108
  %v523 = vunpack.c.h.b16 %v108
  %v524 = vunpack.c.l.b16 %v109
  %v525 = vunpack.c.h.b16 %v109
  %v526 = vunpack.c.l.b16 %v110
  %v527 = vunpack.c.h.b16 %v110
  %v528 = vunpack.c.l.b16 %v111
  %v529 = vunpack.c.h.b16 %v111
  %v530 = vunpack.c.l.b16 %v112
  %v531 = vunpack.c.h.b16 %v112
  %v532 = vunpack.c.l.b16 %v113
  %v533 = vunpack.c.h.b16 %v113
  %v534 = vunpack.c.l.b16 %v114
  %v535 = vunpack.c.h.b16 %v114
  %v536 = vunpack.c.l.b16 %v115
  %v537 = vunpack.c.h.b16 %v115
  %v538 = vunpack.c.l.b16 %v116
  %v539 = vunpack.c.h.b16 %v116
  %v540 = vunpack.c.l.b16 %v117
  %v541 = vunpack.c.h.b16 %v117
  %v542 = vunpack.c.l.b16 %v118
  %v543 = vunpack.c.h.b16 %v118
  %v544 = vunpack.c.l.b16 %v119
  %v545 = vunpack.c.h.b16 %v119
  %v546 = vunpack.c.l.b16 %v120
  %v547 = vunpack.c.h.b16 %v120
  %v548 = vunpack.c.l.b16 %v121
  %v549 = vunpack.c.h.b16 %v121
  %v550 = vunpack.c.l.b16 %v122
  %v551 = vunpack.c.h.b16 %v122
  %v552 = vunpack.c.l.b16 %v123
  %v553 = vunpack.c.h.b16 %v123
  %v554 = vunpack.c.l.b16 %v124
  %v555 = vunpack.c.h.b16 %v124
  %v556 = vunpack.c.l.b16 %v125
  %v557 = vunpack.c.h.b16 %v125
  %v558 = vunpack.c.l.b16 %v126
  %v559 = vunpack.c.h.b16 %v126
  %v560 = vunpack.c.l.b16 %v127
  %v561 = vunpack.c.h.b16 %v127
  %v562 = vunpack.c.l.b16 %v128
  %v563 = vunpack.c.h.b16 %v128
  %v564 = vunpack.c.l.b16 %v129
  %v565 = vunpack.c.h.b16 %v129
  %v566 = vunpack.c.l.b16 %v130
  %v567 = vunpack.c.h.b16 %v130
  %v568 = vunpack.c.l.b16 %v131
  %v569 = vunpack.c.h.b16 %v131
  %v570 = vunpack.c.l.b16 %v132
  %v571 = vunpack.c.h.b16 %v132
  %v572 = vunpack.c.l.b16 %v133
  %v573 = vunpack.c.h.b16 %v133
  %v574 = vunpack.c.l.b16 %v134
  %v575 = vunpack.c.h.b16 %v134
  %v576 = vunpack.c.l.b16 %v135
  %v577 = vunpack.c.h.b16 %v135
  %v578 = vunpack.c.l.b16 %v136
  %v579 = vunpack.c.h.b16 %v136
  %v580 = vunpack.c.l.b16 %v137
  %v581 = vunpack.c.h.b16 %v137
  %v582 = vunpack.c.l.b16 %v138
  %v583 = vunpack.c.h.b16 %v138
  %v584 = vunpack.c.l.b16 %v139
  %v585 = vunpack.c.h.b16 %v139
  %v586 = vunpack.c.l.b16 %v140
  %v587 = vunpack.c.h.b16 %v140
  %v588 = vunpack.c.l.b16 %v141
  %v589 = vunpack.c.h.b16 %v141
  %v590 = vunpack.c.l.b16 %v142
  %v591 = vunpack.c.h.b16 %v142
  %v592 = vunpack.c.l.b16 %v143
  %v593 = vunpack.c.h.b16 %v143
  %v594 = vunpack.c.l.b16 %v144
  %v595 = vunpack.c.h.b16 %v144
  %v596 = vunpack.c.l.b16 %v145
  %v597 = vunpack.c.h.b16 %v145
  %v598 = vunpack.c.l.b16 %v146
  %v599 = vunpack.c.h.b16 %v146
  %v600 = vunpack.c.l.b16 %v147
  %v601 = vunpack.c.h.b16 %v147
  %v602 = vunpack.c.l.b16 %v148
  %v603 = vunpack.c.h.b16 %v148
  %v604 = vunpack.c.l.b16 %v149
  %v605 = vunpack.c.h.b16 %v149
  %v606 = vunpack.c.l.b16 %v150
  %v607 = vunpack.c.h.b16 %v150
  %v608 = vunpack.c.l.b16 %v151
  %v609 = vunpack.c.h.b16 %v151
  %v610 = vunpack.c.l.b16 %v152
  %v611 = vunpack.c.h.b16 %v152
  %v612 = vunpack.c.l.b16 %v153
  %v613 = vunpack.c.h.b16 %v153
  %v614 = vunpack.c.l.b16 %v154
  %v615 = vunpack.c.h.b16 %v154
  %v616 = vunpack.c.l.b16 %v155
  %v617 = vunpack.c.h.b16 %v155
  %v618 = vunpack.c.l.b16 %v156
  %v619 = vunpack.c.h.b16 %v156
  %v620 = vunpack.c.l.b16 %v157
  %v621 = vunpack.c.h.b16 %v157
  %v622 = vunpack.c.l.b16 %v158
  %v623 = vunpack.c.h.b16 %v158
  %v624 = vunpack.c.l.b16 %v159
  %v625 = vunpack.c.h.b16 %v159
  %v626 = vunpack.c.l.b16 %v160
  %v627 = vunpack.c.h.b16 %v160
  %v628 = vunpack.c.l.b16 %v161
  %v629 = vunpack.c.h.b16 %v161
  %v630 = vunpack.c.l.b16 %v162
  %v631 = vunpack.c.h.b16 %v162
  %v632 = vunpack.c.l.b16 %v163
  %v633 = vunpack.c.h.b16 %v163
  %v634 = vunpack.c.l.b16 %v164
  %v635 = vunpack.c.h.b16 %v164
  %v636 = vunpack.c.l.b16 %v165
  %v637 = vunpack.c.h.b16 %v165
  %v638 = vunpack.c.l.b16 %v166
  %v639 = vunpack.c.h.b16 %v166
  %v640 = vunpack.c.l.b16 %v167
  %v641 = vunpack.c.h.b16 %v167
  %v642 = vunpack.c.l.b16 %v168
  %v643 = vunpack.c.h.b16 %v168
  %v644 = vunpack.c.l.b16 %v169
  %v645 = vunpack.c.h.b16 %v169
  %v646 = vpack.c.b16 %v360, %v358
  %v647 = vpack.c.b16 %v361, %v359
  %v648 = vpack.c.b16 %v364, %v362
  %v649 = vpack.c.b16 %v365, %v363
  %v650 = vpack.c.b16 %v368, %v366
  %v651 = vpack.c.b16 %v369, %v367
  %v652 = vpack.c.b16 %v372, %v370
  %v653 = vpack.c.b16 %v373, %v371
  %v654 = vpack.c.b16 %v376, %v374
  %v655 = vpack.c.b16 %v377, %v375
  %v656 = vpack.c.b16 %v380, %v378
  %v657 = vpack.c.b16 %v381, %v379
  %v658 = vpack.c.b16 %v384, %v382
  %v659 = vpack.c.b16 %v385, %v383
  %v660 = vpack.c.b16 %v388, %v386
  %v661 = vpack.c.b16 %v389, %v387
  %v662 = vpack.c.b16 %v392, %v390
  %v663 = vpack.c.b16 %v393, %v391
  %v664 = vpack.c.b16 %v396, %v394
  %v665 = vpack.c.b16 %v397, %v395
  %v666 = vpack.c.b16 %v400, %v398
  %v667 = vpack.c.b16 %v401, %v399
  %v668 = vpack.c.b16 %v404, %v402
  %v669 = vpack.c.b16 %v405, %v403
  %v670 = vpack.c.b16 %v408, %v406
  %v671 = vpack.c.b16 %v409, %v407
  %v672 = vpack.c.b16 %v412, %v410
  %v673 = vpack.c.b16 %v413, %v411
  %v674 = vpack.c.b16 %v416, %v414
  %v675 = vpack.c.b16 %v417, %v415
  %v676 = vpack.c.b16 %v420, %v418
  %v677 = vpack.c.b16 %v421, %v419
  %v678 = vpack.c.b16 %v424, %v422
  %v679 = vpack.c.b16 %v425, %v423
  %v680 = vpack.c.b16 %v428, %v426
  %v681 = vpack.c.b16 %v429, %v427
  %v682 = vpack.c.b16 %v432, %v430
  %v683 = vpack.c.b16 %v433, %v431
  %v684 = vpack.c.b16 %v436, %v434
  %v685 = vpack.c.b16 %v437, %v435
  %v686 = vpack.c.b16 %v440, %v438
  %v687 = vpack.c.b16 %v441, %v439
  %v688 = vpack.c.b16 %v444, %v442
  %v689 = vpack.c.b16 %v445, %v443
  %v690 = vpack.c.b16 %v448, %v446
  %v691 = vpack.c.b16 %v449, %v447
  %v692 = vpack.c.b16 %v452, %v450
  %v693 = vpack.c.b16 %v453, %v451
  %v694 = vpack.c.b16 %v456, %v454
  %v695 = vpack.c.b16 %v457, %v455
  %v696 = vpack.c.b16 %v460, %v458
  %v697 = vpack.c.b16 %v461, %v459
  %v698 = vpack.c.b16 %v464, %v462
  %v699 = vpack.c.b16 %v465, %v463
  %v700 = vpack.c.b16 %v468, %v466
  %v701 = vpack.c.b16 %v469, %v467
  %v702 = vpack.c.b16 %v472, %v470
  %v703 = vpack.c.b16 %v473, %v471
  %v704 = vpack.c.b16 %v476, %v474
  %v705 = vpack.c.b16 %v477, %v475
  %v706 = vpack.c.b16 %v480, %v478
  %v707 = vpack.c.b16 %v481, %v479
  %v708 = vpack.c.b16 %v484, %v482
  %v709 = vpack.c.b16 %v485, %v483
  %v710 = vpack.c.b16 %v488, %v486
  %v711 = vpack.c.b16 %v489, %v487
  %v712 = vpack.c.b16 %v492, %v490
  %v713 = vpack.c.b16 %v493, %v491
  %v714 = vpack.c.b16 %v496, %v494
  %v715 = vpack.c.b16 %v497, %v495
  %v716 = vpack.c.b16 %v500, %v498
  %v717 = vpack.c.b16 %v501, %v499
  %v718 = vpack.c.b16 %v504, %v502
  %v719 = vpack.c.b16 %v505, %v503
  %v720 = vpack.c.b16 %v508, %v506
  %v721 = vpack.c.b16 %v509, %v507
  %v722 = vpack.c.b16 %v512, %v510
  %v723 = vpack.c.b16 %v513, %v511
  %v724 = vpack.c.b16 %v516, %v514
  %v725 = vpack.c.b16 %v517, %v515
  %v726 = vpack.c.b16 %v520, %v518
  %v727 = vpack.c.b16 %v521, %v519
  %v728 = vpack.c.b16 %v524, %v522
  %v729 = vpack.c.b16 %v525, %v523
  %v730 = vpack.c.b16 %v528, %v526
  %v731 = vpack.c.b16 %v529, %v527
  %v732 = vpack.c.b16 %v532, %v530
  %v733 = vpack.c.b16 %v533, %v531
  %v734 = vpack.c.b16 %v536, %v534
  %v735 = vpack.c.b16 %v537, %v535
  %v736 = vpack.c.b16 %v540, %v538
  %v737 = vpack.c.b16 %v541, %v539
  %v738 = vpack.c.b16 %v544, %v542
  %v739 = vpack.c.b16 %v545, %v543
  %v740 = vpack.c.b16 %v548, %v546
  %v741 = vpack.c.b16 %v549, %v547
  %v742 = vpack.c.b16 %v552, %v550
  %v743 = vpack.c.b16 %v553, %v551
  %v744 = vpack.c.b16 %v556, %v554
  %v745 = vpack.c.b16 %v557, %v555
  %v746 = vpack.c.b16 %v560, %v558
  %v747 = vpack.c.b16 %v561, %v559
  %v748 = vpack.c.b16 %v564, %v562
  %v749 = vpack.c.b16 %v565, %v563
  %v750 = vpack.c.b16 %v568, %v566
  %v751 = vpack.c.b16 %v569, %v567
  %v752 = vpack.c.b16 %v572, %v570
  %v753 = vpack.c.b16 %v573, %v571
  %v754 = vpack.c.b16 %v576, %v574
  %v755 = vpack.c.b16 %v577, %v575
  %v756 = vpack.c.b16 %v580, %v578
  %v757 = vpack.c.b16 %v581, %v579
  %v758 = vpack.c.b16 %v584, %v582
  %v759 = vpack.c.b16 %v585, %v583
  %v760 = vpack.c.b16 %v588, %v586
  %v761 = vpack.c.b16 %v589, %v587
  %v762 = vpack.c.b16 %v592, %v590
  %v763 = vpack.c.b16 %v593, %v591
  %v764 = vpack.c.b16 %v596, %v594
  %v765 = vpack.c.b16 %v597, %v595
  %v766 = vpack.c.b16 %v600, %v598
  %v767 = vpack.c.b16 %v601, %v599
  %v768 = vpack.c.b16 %v604, %v602
  %v769 = vpack.c.b16 %v605, %v603
  %v770 = vpack.c.b16 %v608, %v606
  %v771 = vpack.c.b16 %v609, %v607
  %v772 = vpack.c.b16 %v612, %v610
  %v773 = vpack.c.b16 %v613, %v611
  %v774 = vpack.c.b16 %v616, %v614
  %v775 = vpack.c.b16 %v617, %v615
  %v776 = vpack.c.b16 %v620, %v618
  %v777 = vpack.c.b16 %v621, %v619
  %v778 = vpack.c.b16 %v624, %v622
  %v779 = vpack.c.b16 %v625, %v623
  %v780 = vpack.c.b16 %v628, %v626
  %v781 = vpack.c.b16 %v629, %v627
  %v782 = vpack.c.b16 %v632, %v630
  %v783 = vpack.c.b16 %v633, %v631
  %v784 = vpack.c.b16 %v636, %v634
  %v785 = vpack.c.b16 %v637, %v635
  %v786 = vpack.c.b16 %v640, %v638
  %v787 = vpack.c.b16 %v641, %v639
  %v788 = vpack.c.b16 %v644, %v642
  %v789 = vpack.c.b16 %v645, %v643
  %934 = vmatprep.subr.bf16.mxu0 %v647
  %935 = vmatpush1.bf16.msra.mxu0 %v646
  %936 = vmatprep.subr.bf16.mxu0 %v649
  %937 = vmatpush1.bf16.msra.mxu0 %v648
  %938 = vmatprep.subr.bf16.mxu0 %v651
  %939 = vmatpush1.bf16.msra.mxu0 %v650
  %940 = vmatprep.subr.bf16.mxu0 %v653
  %941 = vmatpush1.bf16.msra.mxu0 %v652
  %942 = vmatprep.subr.bf16.mxu0 %v655
  %943 = vmatpush1.bf16.msra.mxu0 %v654
  %944 = vmatprep.subr.bf16.mxu0 %v657
  %945 = vmatpush1.bf16.msra.mxu0 %v656
  %946 = vmatprep.subr.bf16.mxu0 %v659
  %947 = vmatpush1.bf16.msra.mxu0 %v658
  %948 = vmatprep.subr.bf16.mxu0 %v661
  %949 = vmatpush1.bf16.msra.mxu0 %v660
  %950 = vmatprep.subr.bf16.mxu0 %v663
  %951 = vmatpush1.bf16.msra.mxu0 %v662
  %952 = vmatprep.subr.bf16.mxu0 %v665
  %953 = vmatpush1.bf16.msra.mxu0 %v664
  %954 = vmatprep.subr.bf16.mxu0 %v667
  %955 = vmatpush1.bf16.msra.mxu0 %v666
  %956 = vmatprep.subr.bf16.mxu0 %v669
  %957 = vmatpush1.bf16.msra.mxu0 %v668
  %958 = vmatprep.subr.bf16.mxu0 %v671
  %959 = vmatpush1.bf16.msra.mxu0 %v670
  %960 = vmatprep.subr.bf16.mxu0 %v673
  %961 = vmatpush1.bf16.msra.mxu0 %v672
  %962 = vmatprep.subr.bf16.mxu0 %v675
  %963 = vmatpush1.bf16.msra.mxu0 %v674
  %964 = vmatprep.subr.bf16.mxu0 %v677
  %965 = vmatpush1.bf16.msra.mxu0 %v676
  %966 = vmatprep.mubr.bf16.mxu0 %v197
  %967 = vmatmul.mubr.bf16.gmra.mrb[0].mxu0 %v196
  %v968 = vpop.f32.mrb[0].mxu0
  %v969 = vadd.f32 %v175, %v968
  %v970 = vpop.f32.mrb[0].mxu0
  %v971 = vadd.f32 %v179, %v970
  %v972 = vpop.f32.mrb[0].mxu0
  %v973 = vpop.f32.mrb[0].mxu0
  %974 = vdwg.mxu0
  %975 = vmatprep.subr.bf16.mxu0 %v679
  %976 = vmatpush1.bf16.msra.mxu0 %v678
  %977 = vmatprep.subr.bf16.mxu0 %v681
  %978 = vmatpush1.bf16.msra.mxu0 %v680
  %979 = vmatprep.subr.bf16.mxu0 %v683
  %980 = vmatpush1.bf16.msra.mxu0 %v682
  %981 = vmatprep.subr.bf16.mxu0 %v685
  %982 = vmatpush1.bf16.msra.mxu0 %v684
  %983 = vmatprep.subr.bf16.mxu0 %v687
  %984 = vmatpush1.bf16.msra.mxu0 %v686
  %985 = vmatprep.subr.bf16.mxu0 %v689
  %986 = vmatpush1.bf16.msra.mxu0 %v688
  %987 = vmatprep.subr.bf16.mxu0 %v691
  %988 = vmatpush1.bf16.msra.mxu0 %v690
  %989 = vmatprep.subr.bf16.mxu0 %v693
  %990 = vmatpush1.bf16.msra.mxu0 %v692
  %991 = vmatprep.subr.bf16.mxu0 %v695
  %992 = vmatpush1.bf16.msra.mxu0 %v694
  %993 = vmatprep.subr.bf16.mxu0 %v697
  %994 = vmatpush1.bf16.msra.mxu0 %v696
  %995 = vmatprep.subr.bf16.mxu0 %v699
  %996 = vmatpush1.bf16.msra.mxu0 %v698
  %997 = vmatprep.subr.bf16.mxu0 %v701
  %998 = vmatpush1.bf16.msra.mxu0 %v700
  %999 = vmatprep.subr.bf16.mxu0 %v703
  %1000 = vmatpush1.bf16.msra.mxu0 %v702
  %1001 = vmatprep.subr.bf16.mxu0 %v705
  %1002 = vmatpush1.bf16.msra.mxu0 %v704
  %1003 = vmatprep.subr.bf16.mxu0 %v707
  %1004 = vmatpush1.bf16.msra.mxu0 %v706
  %1005 = vmatprep.subr.bf16.mxu0 %v709
  %1006 = vmatpush1.bf16.msra.mxu0 %v708
  %1007 = vmatprep.mubr.bf16.mxu0 %v199
  %1008 = vmatmul.mubr.bf16.gmra.mrb[0].mxu0 %v198
  %v1009 = vpop.f32.mrb[0].mxu0
  %v1010 = vadd.f32 %v969, %v1009
  %v1011 = vpop.f32.mrb[0].mxu0
  %v1012 = vadd.f32 %v971, %v1011
  %v1013 = vpop.f32.mrb[0].mxu0
  %v1014 = vpop.f32.mrb[0].mxu0
  %1015 = vdwg.mxu0
  %1016 = vmatprep.subr.bf16.mxu0 %v711
  %1017 = vmatpush1.bf16.msra.mxu0 %v710
  %1018 = vmatprep.subr.bf16.mxu0 %v713
  %1019 = vmatpush1.bf16.msra.mxu0 %v712
  %1020 = vmatprep.subr.bf16.mxu0 %v715
  %1021 = vmatpush1.bf16.msra.mxu0 %v714
  %1022 = vmatprep.subr.bf16.mxu0 %v717
  %1023 = vmatpush1.bf16.msra.mxu0 %v716
  %1024 = vmatprep.subr.bf16.mxu0 %v719
  %1025 = vmatpush1.bf16.msra.mxu0 %v718
  %1026 = vmatprep.subr.bf16.mxu0 %v721
  %1027 = vmatpush1.bf16.msra.mxu0 %v720
  %1028 = vmatprep.subr.bf16.mxu0 %v723
  %1029 = vmatpush1.bf16.msra.mxu0 %v722
  %1030 = vmatprep.subr.bf16.mxu0 %v725
  %1031 = vmatpush1.bf16.msra.mxu0 %v724
  %1032 = vmatprep.subr.bf16.mxu0 %v727
  %1033 = vmatpush1.bf16.msra.mxu0 %v726
  %1034 = vmatprep.subr.bf16.mxu0 %v729
  %1035 = vmatpush1.bf16.msra.mxu0 %v728
  %1036 = vmatprep.subr.bf16.mxu0 %v731
  %1037 = vmatpush1.bf16.msra.mxu0 %v730
  %1038 = vmatprep.subr.bf16.mxu0 %v733
  %1039 = vmatpush1.bf16.msra.mxu0 %v732
  %1040 = vmatprep.subr.bf16.mxu0 %v735
  %1041 = vmatpush1.bf16.msra.mxu0 %v734
  %1042 = vmatprep.subr.bf16.mxu0 %v737
  %1043 = vmatpush1.bf16.msra.mxu0 %v736
  %1044 = vmatprep.subr.bf16.mxu0 %v739
  %1045 = vmatpush1.bf16.msra.mxu0 %v738
  %1046 = vmatprep.subr.bf16.mxu0 %v741
  %1047 = vmatpush1.bf16.msra.mxu0 %v740
  %1048 = vmatprep.mubr.bf16.mxu0 %v201
  %1049 = vmatmul.mubr.bf16.gmra.mrb[0].mxu0 %v200
  %v1050 = vpop.f32.mrb[0].mxu0
  %v1051 = vadd.f32 %v1010, %v1050
  %v1052 = vpop.f32.mrb[0].mxu0
  %v1053 = vadd.f32 %v1012, %v1052
  %v1054 = vpop.f32.mrb[0].mxu0
  %v1055 = vpop.f32.mrb[0].mxu0
  %1056 = vdwg.mxu0
  %1057 = vmatprep.subr.bf16.mxu0 %v743
  %1058 = vmatpush1.bf16.msra.mxu0 %v742
  %1059 = vmatprep.subr.bf16.mxu0 %v745
  %1060 = vmatpush1.bf16.msra.mxu0 %v744
  %1061 = vmatprep.subr.bf16.mxu0 %v747
  %1062 = vmatpush1.bf16.msra.mxu0 %v746
  %1063 = vmatprep.subr.bf16.mxu0 %v749
  %1064 = vmatpush1.bf16.msra.mxu0 %v748
  %1065 = vmatprep.subr.bf16.mxu0 %v751
  %1066 = vmatpush1.bf16.msra.mxu0 %v750
  %1067 = vmatprep.subr.bf16.mxu0 %v753
  %1068 = vmatpush1.bf16.msra.mxu0 %v752
  %1069 = vmatprep.subr.bf16.mxu0 %v755
  %1070 = vmatpush1.bf16.msra.mxu0 %v754
  %1071 = vmatprep.subr.bf16.mxu0 %v757
  %1072 = vmatpush1.bf16.msra.mxu0 %v756
  %1073 = vmatprep.subr.bf16.mxu0 %v759
  %1074 = vmatpush1.bf16.msra.mxu0 %v758
  %1075 = vmatprep.subr.bf16.mxu0 %v761
  %1076 = vmatpush1.bf16.msra.mxu0 %v760
  %1077 = vmatprep.subr.bf16.mxu0 %v763
  %1078 = vmatpush1.bf16.msra.mxu0 %v762
  %1079 = vmatprep.subr.bf16.mxu0 %v765
  %1080 = vmatpush1.bf16.msra.mxu0 %v764
  %1081 = vmatprep.subr.bf16.mxu0 %v767
  %1082 = vmatpush1.bf16.msra.mxu0 %v766
  %1083 = vmatprep.subr.bf16.mxu0 %v769
  %1084 = vmatpush1.bf16.msra.mxu0 %v768
  %1085 = vmatprep.subr.bf16.mxu0 %v771
  %1086 = vmatpush1.bf16.msra.mxu0 %v770
  %1087 = vmatprep.subr.bf16.mxu0 %v773
  %1088 = vmatpush1.bf16.msra.mxu0 %v772
  %1089 = vmatprep.mubr.bf16.mxu0 %v203
  %1090 = vmatmul.mubr.bf16.gmra.mrb[0].mxu0 %v202
  %v1091 = vpop.f32.mrb[0].mxu0
  %v1092 = vadd.f32 %v1051, %v1091
  %v1093 = vpop.f32.mrb[0].mxu0
  %v1094 = vadd.f32 %v1053, %v1093
  %v1095 = vpop.f32.mrb[0].mxu0
  %v1096 = vpop.f32.mrb[0].mxu0
  %1097 = vdwg.mxu0
  %1098 = vmatprep.subr.bf16.mxu0 %v775
  %1099 = vmatpush1.bf16.msra.mxu0 %v774
  %1100 = vmatprep.subr.bf16.mxu0 %v777
  %1101 = vmatpush1.bf16.msra.mxu0 %v776
  %1102 = vmatprep.subr.bf16.mxu0 %v779
  %1103 = vmatpush1.bf16.msra.mxu0 %v778
  %1104 = vmatprep.subr.bf16.mxu0 %v781
  %1105 = vmatpush1.bf16.msra.mxu0 %v780
  %1106 = vmatprep.subr.bf16.mxu0 %v783
  %1107 = vmatpush1.bf16.msra.mxu0 %v782
  %1108 = vmatprep.subr.bf16.mxu0 %v785
  %1109 = vmatpush1.bf16.msra.mxu0 %v784
  %1110 = vmatprep.subr.bf16.mxu0 %v787
  %1111 = vmatpush1.bf16.msra.mxu0 %v786
  %1112 = vmatprep.subr.bf16.mxu0 %v789
  %1113 = vmatpush1.bf16.msra.mxu0 %v788
  %1114 = vmatprep.subr.bf16.mxu0 0
  %1115 = vmatpush1.bf16.msra.mxu0 0
  %1116 = vmatprep.subr.bf16.mxu0 0
  %1117 = vmatpush1.bf16.msra.mxu0 0
  %1118 = vmatprep.subr.bf16.mxu0 0
  %1119 = vmatpush1.bf16.msra.mxu0 0
  %1120 = vmatprep.subr.bf16.mxu0 0
  %1121 = vmatpush1.bf16.msra.mxu0 0
  %1122 = vmatprep.subr.bf16.mxu0 0
  %1123 = vmatpush1.bf16.msra.mxu0 0
  %1124 = vmatprep.subr.bf16.mxu0 0
  %1125 = vmatpush1.bf16.msra.mxu0 0
  %1126 = vmatprep.subr.bf16.mxu0 0
  %1127 = vmatpush1.bf16.msra.mxu0 0
  %1128 = vmatprep.subr.bf16.mxu0 0
  %1129 = vmatpush1.bf16.msra.mxu0 0
  %1130 = vmatprep.mubr.bf16.mxu0 0
  %1131 = vmatmul.mubr.bf16.gmra.mrb[0].mxu0 %v204
  %v1132 = vpop.f32.mrb[0].mxu0
  %v1133 = vadd.f32 %v1092, %v1132
  %v1134 = vpop.f32.mrb[0].mxu0
  %v1135 = vadd.f32 %v1094, %v1134
  %v1136 = vpop.f32.mrb[0].mxu0
  %v1137 = vpop.f32.mrb[0].mxu0
  %1138 = vdwg.mxu0
  %v1139 = vrot.slane %v1133, 4
  %v1140 = vadd.f32 %v1133, %v1139
  %v1141 = vrot.slane %v1140, 2
  %v1142 = vadd.f32 %v1140, %v1141
  %v1143 = vrot.slane %v1142, 1
  %v1144 = vadd.f32 %v1142, %v1143
  %v1145 = vrot.slane %v1135, 4
  %v1146 = vadd.f32 %v1135, %v1145
  %v1147 = vrot.slane %v1146, 2
  %v1148 = vadd.f32 %v1146, %v1147
  %v1149 = vrot.slane %v1148, 1
  %v1150 = vadd.f32 %v1148, %v1149
  %v1151 = vmul.f32 %v1144, 0.125
  %v1152 = vmul.f32 %v1150, 0.125
  %v1153 = vsub.f32 %v1133, %v1151
  %v1154 = vsub.f32 %v1135, %v1152
  %v1155 = vmul.f32 %v1153, %v1153
  %v1156 = vmul.f32 %v1154, %v1154
  %v1157 = vrot.slane %v1155, 4
  %v1158 = vadd.f32 %v1155, %v1157
  %v1159 = vrot.slane %v1158, 2
  %v1160 = vadd.f32 %v1158, %v1159
  %v1161 = vrot.slane %v1160, 1
  %v1162 = vadd.f32 %v1160, %v1161
  %v1163 = vrot.slane %v1156, 4
  %v1164 = vadd.f32 %v1156, %v1163
  %v1165 = vrot.slane %v1164, 2
  %v1166 = vadd.f32 %v1164, %v1165
  %v1167 = vrot.slane %v1166, 1
  %v1168 = vadd.f32 %v1166, %v1167
  %v1169 = vmul.f32 %v1162, 0.125
  %v1170 = vmul.f32 %v1168, 0.125
  %v1171 = vadd.f32 %v1169, 1e-05
  %v1172 = vadd.f32 %v1170, 1e-05
  %v1173 = vrsqrt.pop %v1171
  %v1174 = vrsqrt.pop %v1172
  %v1175 = vmul.f32 %v1153, %v1173
  %v1176 = vmul.f32 %v1154, %v1174
  %v1177 = vld [vmem:[%s3] sm:$0x3]
  %v1179 = vlaneseq
  %v1180 = vshrl.u32 %v1179, 7
  %v1181 = vsub.s32 0, %v1180
  %v1182 = vrot.slane %v1177, %v1181
  %v1183 = vlaneseq
  %v1184 = vshrl.u32 %v1183, 7
  %v1185 = vsub.s32 1, %v1184
  %v1186 = vrot.slane %v1177, %v1185
  %v1189 = vmul.f32 %v1175, %v1182
  %v1190 = vmul.f32 %v1176, %v1186
  %v1191 = vld [vmem:[%s4] sm:$0x3]
  %v1193 = vlaneseq
  %v1194 = vshrl.u32 %v1193, 7
  %v1195 = vsub.s32 0, %v1194
  %v1196 = vrot.slane %v1191, %v1195
  %v1197 = vlaneseq
  %v1198 = vshrl.u32 %v1197, 7
  %v1199 = vsub.s32 1, %v1198
  %v1200 = vrot.slane %v1191, %v1199
  %v1203 = vadd.f32 %v1189, %v1196
  %v1204 = vadd.f32 %v1190, %v1200
  %vm1205 = vcmp.gt.f32.partialorder %v1203, 0.0
  %vm1206 = vcmp.gt.f32.partialorder %v1204, 0.0
  %v1207 = vmul.f32 %v1203, 0.2
  %v1208 = vmul.f32 %v1204, 0.2
  %v1209 = vsel %vm1205, %v1203, %v1207
  %v1210 = vsel %vm1206, %v1204, %v1208
  %v1211 = vpack.c.bf16 %v1209, %v1209
  %v1212 = vpack.c.bf16 %v1210, %v1210
  %v1215 = vunpack.c.l.b16 %v1211
  %v1216 = vunpack.c.l.b16 %v1212
  %v1217 = vpack.c.b16 %v1216, %v1215
  %1219 = vst [vmem:[%s5] sm:$0xff] %v1217
  // Predicated region
  $region22: #{_lambda_.8} parent=0 // pred_check
    _
  $region23: #{_lambda_.8} parent=0 // pred_check_branch
    %1221 = sbr.rel (0) target = $region25
  $region24: #{_lambda_.8} parent=0 // pred_region
    _
  $region25: #{_lambda_.8} parent=0 // pred_fallthru
    _
  // Predicated region
  $region26: #{_lambda_.8} parent=0 // pred_check
    _
  $region27: #{_lambda_.8} parent=0 // pred_check_branch
    %1223 = sbr.rel (0) target = $region29
  $region28: #{_lambda_.8} parent=0 // pred_region
    _
  $region29: #{_lambda_.8} parent=0 // pred_fallthru
    _

// kernel: _lambda_.9
$region0: #{_lambda_.9}
  #allocation0 [shape = 'u32[]', space=smem, size = 0x4, offset = 0x4, fixed_abs, tag = 'smem constant byte address 0x4 - core index']
  #allocation1 [shape = 'u32[144,128]{1,0:T(1,128)}', space=vmem, size = 0x12000, scoped, tag = 'internal scratch']
  %s0 = inlined_call_operand.vmem [shape: bf16[2,2304], index: 0, kind: input, shape index: {}]
  %s1 = inlined_call_operand.vmem [shape: bf16[2304,512], index: 1, kind: input, shape index: {}]
  %s2 = inlined_call_operand.vmem [shape: f32[1,512], index: 2, kind: input, shape index: {}]
  %s3 = inlined_call_operand.vmem [shape: f32[1,512], index: 3, kind: input, shape index: {}]
  %s4 = inlined_call_operand.vmem [shape: f32[1,512], index: 4, kind: input, shape index: {}]
  %s5 = inlined_call_operand.vmem [shape: bf16[512,128], index: 5, kind: input, shape index: {}]
  %s6 = inlined_call_operand.vmem [shape: f32[1,128], index: 6, kind: input, shape index: {}]
  %s7 = inlined_call_operand.vmem [shape: f32[2,128], index: 7, kind: output, shape index: {}]
  %s8 = sld [smem:[#allocation0]]
  $region38: #{_lambda_.9} parent=0
    _
  %s10 = ssub.s32 1, %s8
  %s11 = scalar_select 0, %s10, %s8
  // Predicated region
  $region2: #{_lambda_.9} parent=0 // pred_check
    _
  $region3: #{_lambda_.9} parent=0 // pred_check_branch
    %13 = sbr.rel (0) target = $region5
  $region4: #{_lambda_.9} parent=0 // pred_region
    _
  $region5: #{_lambda_.9} parent=0 // pred_fallthru
    _
  // Predicated region
  $region6: #{_lambda_.9} parent=0 // pred_check
    _
  $region7: #{_lambda_.9} parent=0 // pred_check_branch
    %15 = sbr.rel (0) target = $region9
  $region8: #{_lambda_.9} parent=0 // pred_region
    _
  $region9: #{_lambda_.9} parent=0 // pred_fallthru
    _
  // Predicated region
  $region10: #{_lambda_.9} parent=0 // pred_check
    _
  $region11: #{_lambda_.9} parent=0 // pred_check_branch
    %17 = sbr.rel (0) target = $region13
  $region12: #{_lambda_.9} parent=0 // pred_region
    _
  $region13: #{_lambda_.9} parent=0 // pred_fallthru
    _
  // Predicated region
  $region14: #{_lambda_.9} parent=0 // pred_check
    _
  $region15: #{_lambda_.9} parent=0 // pred_check_branch
    %19 = sbr.rel (0) target = $region17
  $region16: #{_lambda_.9} parent=0 // pred_region
    _
  $region17: #{_lambda_.9} parent=0 // pred_fallthru
    _
  // Predicated region
  $region18: #{_lambda_.9} parent=0 // pred_check
    _
  $region19: #{_lambda_.9} parent=0 // pred_check_branch
    %21 = sbr.rel (0) target = $region21
  $region20: #{_lambda_.9} parent=0 // pred_region
    _
  $region21: #{_lambda_.9} parent=0 // pred_fallthru
    _
  // Predicated region
  $region22: #{_lambda_.9} parent=0 // pred_check
    _
  $region23: #{_lambda_.9} parent=0 // pred_check_branch
    %23 = sbr.rel (0) target = $region25
  $region24: #{_lambda_.9} parent=0 // pred_region
    _
  $region25: #{_lambda_.9} parent=0 // pred_fallthru
    _
  // Predicated region
  $region26: #{_lambda_.9} parent=0 // pred_check
    _
  $region27: #{_lambda_.9} parent=0 // pred_check_branch
    %25 = sbr.rel (0) target = $region29
  $region28: #{_lambda_.9} parent=0 // pred_region
    _
  $region29: #{_lambda_.9} parent=0 // pred_fallthru
    _
  %v27 = vld [vmem:[%s0] sm:$0xff]
  %v28 = vld [vmem:[%s0 + $0x8] sm:$0xff]
  %v29 = vld [vmem:[%s0 + $0x10] sm:$0x3]
  %v30 = vld [vmem:[%s1] sm:$0xff]
  %v31 = vld [vmem:[%s1 + $0x8] sm:$0xff]
  %v32 = vld [vmem:[%s1 + $0x10] sm:$0xff]
  %v33 = vld [vmem:[%s1 + $0x18] sm:$0xff]
  %v34 = vld [vmem:[%s1 + $0x20] sm:$0xff]
  %v35 = vld [vmem:[%s1 + $0x28] sm:$0xff]
  %v36 = vld [vmem:[%s1 + $0x30] sm:$0xff]
  %v37 = vld [vmem:[%s1 + $0x38] sm:$0xff]
  %v38 = vld [vmem:[%s1 + $0x40] sm:$0xff]
  %v39 = vld [vmem:[%s1 + $0x48] sm:$0xff]
  %v40 = vld [vmem:[%s1 + $0x50] sm:$0xff]
  %v41 = vld [vmem:[%s1 + $0x58] sm:$0xff]
  %v42 = vld [vmem:[%s1 + $0x60] sm:$0xff]
  %v43 = vld [vmem:[%s1 + $0x68] sm:$0xff]
  %v44 = vld [vmem:[%s1 + $0x70] sm:$0xff]
  %v45 = vld [vmem:[%s1 + $0x78] sm:$0xff]
  %v46 = vld [vmem:[%s1 + $0x80] sm:$0xff]
  %v47 = vld [vmem:[%s1 + $0x88] sm:$0xff]
  %v48 = vld [vmem:[%s1 + $0x90] sm:$0xff]
  %v49 = vld [vmem:[%s1 + $0x98] sm:$0xff]
  %v50 = vld [vmem:[%s1 + $0xa0] sm:$0xff]
  %v51 = vld [vmem:[%s1 + $0xa8] sm:$0xff]
  %v52 = vld [vmem:[%s1 + $0xb0] sm:$0xff]
  %v53 = vld [vmem:[%s1 + $0xb8] sm:$0xff]
  %v54 = vld [vmem:[%s1 + $0xc0] sm:$0xff]
  %v55 = vld [vmem:[%s1 + $0xc8] sm:$0xff]
  %v56 = vld [vmem:[%s1 + $0xd0] sm:$0xff]
  %v57 = vld [vmem:[%s1 + $0xd8] sm:$0xff]
  %v58 = vld [vmem:[%s1 + $0xe0] sm:$0xff]
  %v59 = vld [vmem:[%s1 + $0xe8] sm:$0xff]
  %v60 = vld [vmem:[%s1 + $0xf0] sm:$0xff]
  %v61 = vld [vmem:[%s1 + $0xf8] sm:$0xff]
  %v62 = vld [vmem:[%s1 + $0x100] sm:$0xff]
  %v63 = vld [vmem:[%s1 + $0x108] sm:$0xff]
  %v64 = vld [vmem:[%s1 + $0x110] sm:$0xff]
  %v65 = vld [vmem:[%s1 + $0x118] sm:$0xff]
  %v66 = vld [vmem:[%s1 + $0x120] sm:$0xff]
  %v67 = vld [vmem:[%s1 + $0x128] sm:$0xff]
  %v68 = vld [vmem:[%s1 + $0x130] sm:$0xff]
  %v69 = vld [vmem:[%s1 + $0x138] sm:$0xff]
  %v70 = vld [vmem:[%s1 + $0x140] sm:$0xff]
  %v71 = vld [vmem:[%s1 + $0x148] sm:$0xff]
  %v72 = vld [vmem:[%s1 + $0x150] sm:$0xff]
  %v73 = vld [vmem:[%s1 + $0x158] sm:$0xff]
  %v74 = vld [vmem:[%s1 + $0x160] sm:$0xff]
  %v75 = vld [vmem:[%s1 + $0x168] sm:$0xff]
  %v76 = vld [vmem:[%s1 + $0x170] sm:$0xff]
  %v77 = vld [vmem:[%s1 + $0x178] sm:$0xff]
  %v78 = vld [vmem:[%s1 + $0x180] sm:$0xff]
  %v79 = vld [vmem:[%s1 + $0x188] sm:$0xff]
  %v80 = vld [vmem:[%s1 + $0x190] sm:$0xff]
  %v81 = vld [vmem:[%s1 + $0x198] sm:$0xff]
  %v82 = vld [vmem:[%s1 + $0x1a0] sm:$0xff]
  %v83 = vld [vmem:[%s1 + $0x1a8] sm:$0xff]
  %v84 = vld [vmem:[%s1 + $0x1b0] sm:$0xff]
  %v85 = vld [vmem:[%s1 + $0x1b8] sm:$0xff]
  %v86 = vld [vmem:[%s1 + $0x1c0] sm:$0xff]
  %v87 = vld [vmem:[%s1 + $0x1c8] sm:$0xff]
  %v88 = vld [vmem:[%s1 + $0x1d0] sm:$0xff]
  %v89 = vld [vmem:[%s1 + $0x1d8] sm:$0xff]
  %v90 = vld [vmem:[%s1 + $0x1e0] sm:$0xff]
  %v91 = vld [vmem:[%s1 + $0x1e8] sm:$0xff]
  %v92 = vld [vmem:[%s1 + $0x1f0] sm:$0xff]
  %v93 = vld [vmem:[%s1 + $0x1f8] sm:$0xff]
  %v94 = vld [vmem:[%s1 + $0x200] sm:$0xff]
  %v95 = vld [vmem:[%s1 + $0x208] sm:$0xff]
  %v96 = vld [vmem:[%s1 + $0x210] sm:$0xff]
  %v97 = vld [vmem:[%s1 + $0x218] sm:$0xff]
  %v98 = vld [vmem:[%s1 + $0x220] sm:$0xff]
  %v99 = vld [vmem:[%s1 + $0x228] sm:$0xff]
  %v100 = vld [vmem:[%s1 + $0x230] sm:$0xff]
  %v101 = vld [vmem:[%s1 + $0x238] sm:$0xff]
  %v102 = vld [vmem:[%s1 + $0x240] sm:$0xff]
  %v103 = vld [vmem:[%s1 + $0x248] sm:$0xff]
  %v104 = vld [vmem:[%s1 + $0x250] sm:$0xff]
  %v105 = vld [vmem:[%s1 + $0x258] sm:$0xff]
  %v106 = vld [vmem:[%s1 + $0x260] sm:$0xff]
  %v107 = vld [vmem:[%s1 + $0x268] sm:$0xff]
  %v108 = vld [vmem:[%s1 + $0x270] sm:$0xff]
  %v109 = vld [vmem:[%s1 + $0x278] sm:$0xff]
  %v110 = vld [vmem:[%s1 + $0x280] sm:$0xff]
  %v111 = vld [vmem:[%s1 + $0x288] sm:$0xff]
  %v112 = vld [vmem:[%s1 + $0x290] sm:$0xff]
  %v113 = vld [vmem:[%s1 + $0x298] sm:$0xff]
  %v114 = vld [vmem:[%s1 + $0x2a0] sm:$0xff]
  %v115 = vld [vmem:[%s1 + $0x2a8] sm:$0xff]
  %v116 = vld [vmem:[%s1 + $0x2b0] sm:$0xff]
  %v117 = vld [vmem:[%s1 + $0x2b8] sm:$0xff]
  %v118 = vld [vmem:[%s1 + $0x2c0] sm:$0xff]
  %v119 = vld [vmem:[%s1 + $0x2c8] sm:$0xff]
  %v120 = vld [vmem:[%s1 + $0x2d0] sm:$0xff]
  %v121 = vld [vmem:[%s1 + $0x2d8] sm:$0xff]
  %v122 = vld [vmem:[%s1 + $0x2e0] sm:$0xff]
  %v123 = vld [vmem:[%s1 + $0x2e8] sm:$0xff]
  %v124 = vld [vmem:[%s1 + $0x2f0] sm:$0xff]
  %v125 = vld [vmem:[%s1 + $0x2f8] sm:$0xff]
  %v126 = vld [vmem:[%s1 + $0x300] sm:$0xff]
  %v127 = vld [vmem:[%s1 + $0x308] sm:$0xff]
  %v128 = vld [vmem:[%s1 + $0x310] sm:$0xff]
  %v129 = vld [vmem:[%s1 + $0x318] sm:$0xff]
  %v130 = vld [vmem:[%s1 + $0x320] sm:$0xff]
  %v131 = vld [vmem:[%s1 + $0x328] sm:$0xff]
  %v132 = vld [vmem:[%s1 + $0x330] sm:$0xff]
  %v133 = vld [vmem:[%s1 + $0x338] sm:$0xff]
  %v134 = vld [vmem:[%s1 + $0x340] sm:$0xff]
  %v135 = vld [vmem:[%s1 + $0x348] sm:$0xff]
  %v136 = vld [vmem:[%s1 + $0x350] sm:$0xff]
  %v137 = vld [vmem:[%s1 + $0x358] sm:$0xff]
  %v138 = vld [vmem:[%s1 + $0x360] sm:$0xff]
  %v139 = vld [vmem:[%s1 + $0x368] sm:$0xff]
  %v140 = vld [vmem:[%s1 + $0x370] sm:$0xff]
  %v141 = vld [vmem:[%s1 + $0x378] sm:$0xff]
  %v142 = vld [vmem:[%s1 + $0x380] sm:$0xff]
  %v143 = vld [vmem:[%s1 + $0x388] sm:$0xff]
  %v144 = vld [vmem:[%s1 + $0x390] sm:$0xff]
  %v145 = vld [vmem:[%s1 + $0x398] sm:$0xff]
  %v146 = vld [vmem:[%s1 + $0x3a0] sm:$0xff]
  %v147 = vld [vmem:[%s1 + $0x3a8] sm:$0xff]
  %v148 = vld [vmem:[%s1 + $0x3b0] sm:$0xff]
  %v149 = vld [vmem:[%s1 + $0x3b8] sm:$0xff]
  %v150 = vld [vmem:[%s1 + $0x3c0] sm:$0xff]
  %v151 = vld [vmem:[%s1 + $0x3c8] sm:$0xff]
  %v152 = vld [vmem:[%s1 + $0x3d0] sm:$0xff]
  %v153 = vld [vmem:[%s1 + $0x3d8] sm:$0xff]
  %v154 = vld [vmem:[%s1 + $0x3e0] sm:$0xff]
  %v155 = vld [vmem:[%s1 + $0x3e8] sm:$0xff]
  %v156 = vld [vmem:[%s1 + $0x3f0] sm:$0xff]
  %v157 = vld [vmem:[%s1 + $0x3f8] sm:$0xff]
  %v158 = vld [vmem:[%s1 + $0x400] sm:$0xff]
  %v159 = vld [vmem:[%s1 + $0x408] sm:$0xff]
  %v160 = vld [vmem:[%s1 + $0x410] sm:$0xff]
  %v161 = vld [vmem:[%s1 + $0x418] sm:$0xff]
  %v162 = vld [vmem:[%s1 + $0x420] sm:$0xff]
  %v163 = vld [vmem:[%s1 + $0x428] sm:$0xff]
  %v164 = vld [vmem:[%s1 + $0x430] sm:$0xff]
  %v165 = vld [vmem:[%s1 + $0x438] sm:$0xff]
  %v166 = vld [vmem:[%s1 + $0x440] sm:$0xff]
  %v167 = vld [vmem:[%s1 + $0x448] sm:$0xff]
  %v168 = vld [vmem:[%s1 + $0x450] sm:$0xff]
  %v169 = vld [vmem:[%s1 + $0x458] sm:$0xff]
  %v170 = vld [vmem:[%s1 + $0x460] sm:$0xff]
  %v171 = vld [vmem:[%s1 + $0x468] sm:$0xff]
  %v172 = vld [vmem:[%s1 + $0x470] sm:$0xff]
  %v173 = vld [vmem:[%s1 + $0x478] sm:$0xff]
  %v174 = vld [vmem:[%s1 + $0x480] sm:$0xff]
  %v175 = vld [vmem:[%s1 + $0x488] sm:$0xff]
  %v176 = vld [vmem:[%s1 + $0x490] sm:$0xff]
  %v177 = vld [vmem:[%s1 + $0x498] sm:$0xff]
  %v178 = vld [vmem:[%s1 + $0x4a0] sm:$0xff]
  %v179 = vld [vmem:[%s1 + $0x4a8] sm:$0xff]
  %v180 = vld [vmem:[%s1 + $0x4b0] sm:$0xff]
  %v181 = vld [vmem:[%s1 + $0x4b8] sm:$0xff]
  %v182 = vld [vmem:[%s1 + $0x4c0] sm:$0xff]
  %v183 = vld [vmem:[%s1 + $0x4c8] sm:$0xff]
  %v184 = vld [vmem:[%s1 + $0x4d0] sm:$0xff]
  %v185 = vld [vmem:[%s1 + $0x4d8] sm:$0xff]
  %v186 = vld [vmem:[%s1 + $0x4e0] sm:$0xff]
  %v187 = vld [vmem:[%s1 + $0x4e8] sm:$0xff]
  %v188 = vld [vmem:[%s1 + $0x4f0] sm:$0xff]
  %v189 = vld [vmem:[%s1 + $0x4f8] sm:$0xff]
  %v190 = vld [vmem:[%s1 + $0x500] sm:$0xff]
  %v191 = vld [vmem:[%s1 + $0x508] sm:$0xff]
  %v192 = vld [vmem:[%s1 + $0x510] sm:$0xff]
  %v193 = vld [vmem:[%s1 + $0x518] sm:$0xff]
  %v194 = vld [vmem:[%s1 + $0x520] sm:$0xff]
  %v195 = vld [vmem:[%s1 + $0x528] sm:$0xff]
  %v196 = vld [vmem:[%s1 + $0x530] sm:$0xff]
  %v197 = vld [vmem:[%s1 + $0x538] sm:$0xff]
  %v198 = vld [vmem:[%s1 + $0x540] sm:$0xff]
  %v199 = vld [vmem:[%s1 + $0x548] sm:$0xff]
  %v200 = vld [vmem:[%s1 + $0x550] sm:$0xff]
  %v201 = vld [vmem:[%s1 + $0x558] sm:$0xff]
  %v202 = vld [vmem:[%s1 + $0x560] sm:$0xff]
  %v203 = vld [vmem:[%s1 + $0x568] sm:$0xff]
  %v204 = vld [vmem:[%s1 + $0x570] sm:$0xff]
  %v205 = vld [vmem:[%s1 + $0x578] sm:$0xff]
  %v206 = vld [vmem:[%s1 + $0x580] sm:$0xff]
  %v207 = vld [vmem:[%s1 + $0x588] sm:$0xff]
  %v208 = vld [vmem:[%s1 + $0x590] sm:$0xff]
  %v209 = vld [vmem:[%s1 + $0x598] sm:$0xff]
  %v210 = vld [vmem:[%s1 + $0x5a0] sm:$0xff]
  %v211 = vld [vmem:[%s1 + $0x5a8] sm:$0xff]
  %v212 = vld [vmem:[%s1 + $0x5b0] sm:$0xff]
  %v213 = vld [vmem:[%s1 + $0x5b8] sm:$0xff]
  %v214 = vld [vmem:[%s1 + $0x5c0] sm:$0xff]
  %v215 = vld [vmem:[%s1 + $0x5c8] sm:$0xff]
  %v216 = vld [vmem:[%s1 + $0x5d0] sm:$0xff]
  %v217 = vld [vmem:[%s1 + $0x5d8] sm:$0xff]
  %v218 = vld [vmem:[%s1 + $0x5e0] sm:$0xff]
  %v219 = vld [vmem:[%s1 + $0x5e8] sm:$0xff]
  %v220 = vld [vmem:[%s1 + $0x5f0] sm:$0xff]
  %v221 = vld [vmem:[%s1 + $0x5f8] sm:$0xff]
  %v222 = vld [vmem:[%s1 + $0x600] sm:$0xff]
  %v223 = vld [vmem:[%s1 + $0x608] sm:$0xff]
  %v224 = vld [vmem:[%s1 + $0x610] sm:$0xff]
  %v225 = vld [vmem:[%s1 + $0x618] sm:$0xff]
  %v226 = vld [vmem:[%s1 + $0x620] sm:$0xff]
  %v227 = vld [vmem:[%s1 + $0x628] sm:$0xff]
  %v228 = vld [vmem:[%s1 + $0x630] sm:$0xff]
  %v229 = vld [vmem:[%s1 + $0x638] sm:$0xff]
  %v230 = vld [vmem:[%s1 + $0x640] sm:$0xff]
  %v231 = vld [vmem:[%s1 + $0x648] sm:$0xff]
  %v232 = vld [vmem:[%s1 + $0x650] sm:$0xff]
  %v233 = vld [vmem:[%s1 + $0x658] sm:$0xff]
  %v234 = vld [vmem:[%s1 + $0x660] sm:$0xff]
  %v235 = vld [vmem:[%s1 + $0x668] sm:$0xff]
  %v236 = vld [vmem:[%s1 + $0x670] sm:$0xff]
  %v237 = vld [vmem:[%s1 + $0x678] sm:$0xff]
  %v238 = vld [vmem:[%s1 + $0x680] sm:$0xff]
  %v239 = vld [vmem:[%s1 + $0x688] sm:$0xff]
  %v240 = vld [vmem:[%s1 + $0x690] sm:$0xff]
  %v241 = vld [vmem:[%s1 + $0x698] sm:$0xff]
  %v242 = vld [vmem:[%s1 + $0x6a0] sm:$0xff]
  %v243 = vld [vmem:[%s1 + $0x6a8] sm:$0xff]
  %v244 = vld [vmem:[%s1 + $0x6b0] sm:$0xff]
  %v245 = vld [vmem:[%s1 + $0x6b8] sm:$0xff]
  %v246 = vld [vmem:[%s1 + $0x6c0] sm:$0xff]
  %v247 = vld [vmem:[%s1 + $0x6c8] sm:$0xff]
  %v248 = vld [vmem:[%s1 + $0x6d0] sm:$0xff]
  %v249 = vld [vmem:[%s1 + $0x6d8] sm:$0xff]
  %v250 = vld [vmem:[%s1 + $0x6e0] sm:$0xff]
  %v251 = vld [vmem:[%s1 + $0x6e8] sm:$0xff]
  %v252 = vld [vmem:[%s1 + $0x6f0] sm:$0xff]
  %v253 = vld [vmem:[%s1 + $0x6f8] sm:$0xff]
  %v254 = vld [vmem:[%s1 + $0x700] sm:$0xff]
  %v255 = vld [vmem:[%s1 + $0x708] sm:$0xff]
  %v256 = vld [vmem:[%s1 + $0x710] sm:$0xff]
  %v257 = vld [vmem:[%s1 + $0x718] sm:$0xff]
  %v258 = vld [vmem:[%s1 + $0x720] sm:$0xff]
  %v259 = vld [vmem:[%s1 + $0x728] sm:$0xff]
  %v260 = vld [vmem:[%s1 + $0x730] sm:$0xff]
  %v261 = vld [vmem:[%s1 + $0x738] sm:$0xff]
  %v262 = vld [vmem:[%s1 + $0x740] sm:$0xff]
  %v263 = vld [vmem:[%s1 + $0x748] sm:$0xff]
  %v264 = vld [vmem:[%s1 + $0x750] sm:$0xff]
  %v265 = vld [vmem:[%s1 + $0x758] sm:$0xff]
  %v266 = vld [vmem:[%s1 + $0x760] sm:$0xff]
  %v267 = vld [vmem:[%s1 + $0x768] sm:$0xff]
  %v268 = vld [vmem:[%s1 + $0x770] sm:$0xff]
  %v269 = vld [vmem:[%s1 + $0x778] sm:$0xff]
  %v270 = vld [vmem:[%s1 + $0x780] sm:$0xff]
  %v271 = vld [vmem:[%s1 + $0x788] sm:$0xff]
  %v272 = vld [vmem:[%s1 + $0x790] sm:$0xff]
  %v273 = vld [vmem:[%s1 + $0x798] sm:$0xff]
  %v274 = vld [vmem:[%s1 + $0x7a0] sm:$0xff]
  %v275 = vld [vmem:[%s1 + $0x7a8] sm:$0xff]
  %v276 = vld [vmem:[%s1 + $0x7b0] sm:$0xff]
  %v277 = vld [vmem:[%s1 + $0x7b8] sm:$0xff]
  %v278 = vld [vmem:[%s1 + $0x7c0] sm:$0xff]
  %v279 = vld [vmem:[%s1 + $0x7c8] sm:$0xff]
  %v280 = vld [vmem:[%s1 + $0x7d0] sm:$0xff]
  %v281 = vld [vmem:[%s1 + $0x7d8] sm:$0xff]
  %v282 = vld [vmem:[%s1 + $0x7e0] sm:$0xff]
  %v283 = vld [vmem:[%s1 + $0x7e8] sm:$0xff]
  %v284 = vld [vmem:[%s1 + $0x7f0] sm:$0xff]
  %v285 = vld [vmem:[%s1 + $0x7f8] sm:$0xff]
  %v286 = vld [vmem:[%s1 + $0x800] sm:$0xff]
  %v287 = vld [vmem:[%s1 + $0x808] sm:$0xff]
  %v288 = vld [vmem:[%s1 + $0x810] sm:$0xff]
  %v289 = vld [vmem:[%s1 + $0x818] sm:$0xff]
  %v290 = vld [vmem:[%s1 + $0x820] sm:$0xff]
  %v291 = vld [vmem:[%s1 + $0x828] sm:$0xff]
  %v292 = vld [vmem:[%s1 + $0x830] sm:$0xff]
  %v293 = vld [vmem:[%s1 + $0x838] sm:$0xff]
  %v294 = vld [vmem:[%s1 + $0x840] sm:$0xff]
  %v295 = vld [vmem:[%s1 + $0x848] sm:$0xff]
  %v296 = vld [vmem:[%s1 + $0x850] sm:$0xff]
  %v297 = vld [vmem:[%s1 + $0x858] sm:$0xff]
  %v298 = vld [vmem:[%s1 + $0x860] sm:$0xff]
  %v299 = vld [vmem:[%s1 + $0x868] sm:$0xff]
  %v300 = vld [vmem:[%s1 + $0x870] sm:$0xff]
  %v301 = vld [vmem:[%s1 + $0x878] sm:$0xff]
  %v302 = vld [vmem:[%s1 + $0x880] sm:$0xff]
  %v303 = vld [vmem:[%s1 + $0x888] sm:$0xff]
  %v304 = vld [vmem:[%s1 + $0x890] sm:$0xff]
  %v305 = vld [vmem:[%s1 + $0x898] sm:$0xff]
  %v306 = vld [vmem:[%s1 + $0x8a0] sm:$0xff]
  %v307 = vld [vmem:[%s1 + $0x8a8] sm:$0xff]
  %v308 = vld [vmem:[%s1 + $0x8b0] sm:$0xff]
  %v309 = vld [vmem:[%s1 + $0x8b8] sm:$0xff]
  %v310 = vld [vmem:[%s1 + $0x8c0] sm:$0xff]
  %v311 = vld [vmem:[%s1 + $0x8c8] sm:$0xff]
  %v312 = vld [vmem:[%s1 + $0x8d0] sm:$0xff]
  %v313 = vld [vmem:[%s1 + $0x8d8] sm:$0xff]
  %v314 = vld [vmem:[%s1 + $0x8e0] sm:$0xff]
  %v315 = vld [vmem:[%s1 + $0x8e8] sm:$0xff]
  %v316 = vld [vmem:[%s1 + $0x8f0] sm:$0xff]
  %v317 = vld [vmem:[%s1 + $0x8f8] sm:$0xff]
  %v318 = vld [vmem:[%s1 + $0x900] sm:$0xff]
  %v319 = vld [vmem:[%s1 + $0x908] sm:$0xff]
  %v320 = vld [vmem:[%s1 + $0x910] sm:$0xff]
  %v321 = vld [vmem:[%s1 + $0x918] sm:$0xff]
  %v322 = vld [vmem:[%s1 + $0x920] sm:$0xff]
  %v323 = vld [vmem:[%s1 + $0x928] sm:$0xff]
  %v324 = vld [vmem:[%s1 + $0x930] sm:$0xff]
  %v325 = vld [vmem:[%s1 + $0x938] sm:$0xff]
  %v326 = vld [vmem:[%s1 + $0x940] sm:$0xff]
  %v327 = vld [vmem:[%s1 + $0x948] sm:$0xff]
  %v328 = vld [vmem:[%s1 + $0x950] sm:$0xff]
  %v329 = vld [vmem:[%s1 + $0x958] sm:$0xff]
  %v330 = vld [vmem:[%s1 + $0x960] sm:$0xff]
  %v331 = vld [vmem:[%s1 + $0x968] sm:$0xff]
  %v332 = vld [vmem:[%s1 + $0x970] sm:$0xff]
  %v333 = vld [vmem:[%s1 + $0x978] sm:$0xff]
  %v334 = vld [vmem:[%s1 + $0x980] sm:$0xff]
  %v335 = vld [vmem:[%s1 + $0x988] sm:$0xff]
  %v336 = vld [vmem:[%s1 + $0x990] sm:$0xff]
  %v337 = vld [vmem:[%s1 + $0x998] sm:$0xff]
  %v338 = vld [vmem:[%s1 + $0x9a0] sm:$0xff]
  %v339 = vld [vmem:[%s1 + $0x9a8] sm:$0xff]
  %v340 = vld [vmem:[%s1 + $0x9b0] sm:$0xff]
  %v341 = vld [vmem:[%s1 + $0x9b8] sm:$0xff]
  %v342 = vld [vmem:[%s1 + $0x9c0] sm:$0xff]
  %v343 = vld [vmem:[%s1 + $0x9c8] sm:$0xff]
  %v344 = vld [vmem:[%s1 + $0x9d0] sm:$0xff]
  %v345 = vld [vmem:[%s1 + $0x9d8] sm:$0xff]
  %v346 = vld [vmem:[%s1 + $0x9e0] sm:$0xff]
  %v347 = vld [vmem:[%s1 + $0x9e8] sm:$0xff]
  %v348 = vld [vmem:[%s1 + $0x9f0] sm:$0xff]
  %v349 = vld [vmem:[%s1 + $0x9f8] sm:$0xff]
  %v350 = vld [vmem:[%s1 + $0xa00] sm:$0xff]
  %v351 = vld [vmem:[%s1 + $0xa08] sm:$0xff]
  %v352 = vld [vmem:[%s1 + $0xa10] sm:$0xff]
  %v353 = vld [vmem:[%s1 + $0xa18] sm:$0xff]
  %v354 = vld [vmem:[%s1 + $0xa20] sm:$0xff]
  %v355 = vld [vmem:[%s1 + $0xa28] sm:$0xff]
  %v356 = vld [vmem:[%s1 + $0xa30] sm:$0xff]
  %v357 = vld [vmem:[%s1 + $0xa38] sm:$0xff]
  %v358 = vld [vmem:[%s1 + $0xa40] sm:$0xff]
  %v359 = vld [vmem:[%s1 + $0xa48] sm:$0xff]
  %v360 = vld [vmem:[%s1 + $0xa50] sm:$0xff]
  %v361 = vld [vmem:[%s1 + $0xa58] sm:$0xff]
  %v362 = vld [vmem:[%s1 + $0xa60] sm:$0xff]
  %v363 = vld [vmem:[%s1 + $0xa68] sm:$0xff]
  %v364 = vld [vmem:[%s1 + $0xa70] sm:$0xff]
  %v365 = vld [vmem:[%s1 + $0xa78] sm:$0xff]
  %v366 = vld [vmem:[%s1 + $0xa80] sm:$0xff]
  %v367 = vld [vmem:[%s1 + $0xa88] sm:$0xff]
  %v368 = vld [vmem:[%s1 + $0xa90] sm:$0xff]
  %v369 = vld [vmem:[%s1 + $0xa98] sm:$0xff]
  %v370 = vld [vmem:[%s1 + $0xaa0] sm:$0xff]
  %v371 = vld [vmem:[%s1 + $0xaa8] sm:$0xff]
  %v372 = vld [vmem:[%s1 + $0xab0] sm:$0xff]
  %v373 = vld [vmem:[%s1 + $0xab8] sm:$0xff]
  %v374 = vld [vmem:[%s1 + $0xac0] sm:$0xff]
  %v375 = vld [vmem:[%s1 + $0xac8] sm:$0xff]
  %v376 = vld [vmem:[%s1 + $0xad0] sm:$0xff]
  %v377 = vld [vmem:[%s1 + $0xad8] sm:$0xff]
  %v378 = vld [vmem:[%s1 + $0xae0] sm:$0xff]
  %v379 = vld [vmem:[%s1 + $0xae8] sm:$0xff]
  %v380 = vld [vmem:[%s1 + $0xaf0] sm:$0xff]
  %v381 = vld [vmem:[%s1 + $0xaf8] sm:$0xff]
  %v382 = vld [vmem:[%s1 + $0xb00] sm:$0xff]
  %v383 = vld [vmem:[%s1 + $0xb08] sm:$0xff]
  %v384 = vld [vmem:[%s1 + $0xb10] sm:$0xff]
  %v385 = vld [vmem:[%s1 + $0xb18] sm:$0xff]
  %v386 = vld [vmem:[%s1 + $0xb20] sm:$0xff]
  %v387 = vld [vmem:[%s1 + $0xb28] sm:$0xff]
  %v388 = vld [vmem:[%s1 + $0xb30] sm:$0xff]
  %v389 = vld [vmem:[%s1 + $0xb38] sm:$0xff]
  %v390 = vld [vmem:[%s1 + $0xb40] sm:$0xff]
  %v391 = vld [vmem:[%s1 + $0xb48] sm:$0xff]
  %v392 = vld [vmem:[%s1 + $0xb50] sm:$0xff]
  %v393 = vld [vmem:[%s1 + $0xb58] sm:$0xff]
  %v394 = vld [vmem:[%s1 + $0xb60] sm:$0xff]
  %v395 = vld [vmem:[%s1 + $0xb68] sm:$0xff]
  %v396 = vld [vmem:[%s1 + $0xb70] sm:$0xff]
  %v397 = vld [vmem:[%s1 + $0xb78] sm:$0xff]
  %v398 = vld [vmem:[%s1 + $0xb80] sm:$0xff]
  %v399 = vld [vmem:[%s1 + $0xb88] sm:$0xff]
  %v400 = vld [vmem:[%s1 + $0xb90] sm:$0xff]
  %v401 = vld [vmem:[%s1 + $0xb98] sm:$0xff]
  %v402 = vld [vmem:[%s1 + $0xba0] sm:$0xff]
  %v403 = vld [vmem:[%s1 + $0xba8] sm:$0xff]
  %v404 = vld [vmem:[%s1 + $0xbb0] sm:$0xff]
  %v405 = vld [vmem:[%s1 + $0xbb8] sm:$0xff]
  %v406 = vld [vmem:[%s1 + $0xbc0] sm:$0xff]
  %v407 = vld [vmem:[%s1 + $0xbc8] sm:$0xff]
  %v408 = vld [vmem:[%s1 + $0xbd0] sm:$0xff]
  %v409 = vld [vmem:[%s1 + $0xbd8] sm:$0xff]
  %v410 = vld [vmem:[%s1 + $0xbe0] sm:$0xff]
  %v411 = vld [vmem:[%s1 + $0xbe8] sm:$0xff]
  %v412 = vld [vmem:[%s1 + $0xbf0] sm:$0xff]
  %v413 = vld [vmem:[%s1 + $0xbf8] sm:$0xff]
  %v414 = vld [vmem:[%s1 + $0xc00] sm:$0xff]
  %v415 = vld [vmem:[%s1 + $0xc08] sm:$0xff]
  %v416 = vld [vmem:[%s1 + $0xc10] sm:$0xff]
  %v417 = vld [vmem:[%s1 + $0xc18] sm:$0xff]
  %v418 = vld [vmem:[%s1 + $0xc20] sm:$0xff]
  %v419 = vld [vmem:[%s1 + $0xc28] sm:$0xff]
  %v420 = vld [vmem:[%s1 + $0xc30] sm:$0xff]
  %v421 = vld [vmem:[%s1 + $0xc38] sm:$0xff]
  %v422 = vld [vmem:[%s1 + $0xc40] sm:$0xff]
  %v423 = vld [vmem:[%s1 + $0xc48] sm:$0xff]
  %v424 = vld [vmem:[%s1 + $0xc50] sm:$0xff]
  %v425 = vld [vmem:[%s1 + $0xc58] sm:$0xff]
  %v426 = vld [vmem:[%s1 + $0xc60] sm:$0xff]
  %v427 = vld [vmem:[%s1 + $0xc68] sm:$0xff]
  %v428 = vld [vmem:[%s1 + $0xc70] sm:$0xff]
  %v429 = vld [vmem:[%s1 + $0xc78] sm:$0xff]
  %v430 = vld [vmem:[%s1 + $0xc80] sm:$0xff]
  %v431 = vld [vmem:[%s1 + $0xc88] sm:$0xff]
  %v432 = vld [vmem:[%s1 + $0xc90] sm:$0xff]
  %v433 = vld [vmem:[%s1 + $0xc98] sm:$0xff]
  %v434 = vld [vmem:[%s1 + $0xca0] sm:$0xff]
  %v435 = vld [vmem:[%s1 + $0xca8] sm:$0xff]
  %v436 = vld [vmem:[%s1 + $0xcb0] sm:$0xff]
  %v437 = vld [vmem:[%s1 + $0xcb8] sm:$0xff]
  %v438 = vld [vmem:[%s1 + $0xcc0] sm:$0xff]
  %v439 = vld [vmem:[%s1 + $0xcc8] sm:$0xff]
  %v440 = vld [vmem:[%s1 + $0xcd0] sm:$0xff]
  %v441 = vld [vmem:[%s1 + $0xcd8] sm:$0xff]
  %v442 = vld [vmem:[%s1 + $0xce0] sm:$0xff]
  %v443 = vld [vmem:[%s1 + $0xce8] sm:$0xff]
  %v444 = vld [vmem:[%s1 + $0xcf0] sm:$0xff]
  %v445 = vld [vmem:[%s1 + $0xcf8] sm:$0xff]
  %v446 = vld [vmem:[%s1 + $0xd00] sm:$0xff]
  %v447 = vld [vmem:[%s1 + $0xd08] sm:$0xff]
  %v448 = vld [vmem:[%s1 + $0xd10] sm:$0xff]
  %v449 = vld [vmem:[%s1 + $0xd18] sm:$0xff]
  %v450 = vld [vmem:[%s1 + $0xd20] sm:$0xff]
  %v451 = vld [vmem:[%s1 + $0xd28] sm:$0xff]
  %v452 = vld [vmem:[%s1 + $0xd30] sm:$0xff]
  %v453 = vld [vmem:[%s1 + $0xd38] sm:$0xff]
  %v454 = vld [vmem:[%s1 + $0xd40] sm:$0xff]
  %v455 = vld [vmem:[%s1 + $0xd48] sm:$0xff]
  %v456 = vld [vmem:[%s1 + $0xd50] sm:$0xff]
  %v457 = vld [vmem:[%s1 + $0xd58] sm:$0xff]
  %v458 = vld [vmem:[%s1 + $0xd60] sm:$0xff]
  %v459 = vld [vmem:[%s1 + $0xd68] sm:$0xff]
  %v460 = vld [vmem:[%s1 + $0xd70] sm:$0xff]
  %v461 = vld [vmem:[%s1 + $0xd78] sm:$0xff]
  %v462 = vld [vmem:[%s1 + $0xd80] sm:$0xff]
  %v463 = vld [vmem:[%s1 + $0xd88] sm:$0xff]
  %v464 = vld [vmem:[%s1 + $0xd90] sm:$0xff]
  %v465 = vld [vmem:[%s1 + $0xd98] sm:$0xff]
  %v466 = vld [vmem:[%s1 + $0xda0] sm:$0xff]
  %v467 = vld [vmem:[%s1 + $0xda8] sm:$0xff]
  %v468 = vld [vmem:[%s1 + $0xdb0] sm:$0xff]
  %v469 = vld [vmem:[%s1 + $0xdb8] sm:$0xff]
  %v470 = vld [vmem:[%s1 + $0xdc0] sm:$0xff]
  %v471 = vld [vmem:[%s1 + $0xdc8] sm:$0xff]
  %v472 = vld [vmem:[%s1 + $0xdd0] sm:$0xff]
  %v473 = vld [vmem:[%s1 + $0xdd8] sm:$0xff]
  %v474 = vld [vmem:[%s1 + $0xde0] sm:$0xff]
  %v475 = vld [vmem:[%s1 + $0xde8] sm:$0xff]
  %v476 = vld [vmem:[%s1 + $0xdf0] sm:$0xff]
  %v477 = vld [vmem:[%s1 + $0xdf8] sm:$0xff]
  %v478 = vld [vmem:[%s1 + $0xe00] sm:$0xff]
  %v479 = vld [vmem:[%s1 + $0xe08] sm:$0xff]
  %v480 = vld [vmem:[%s1 + $0xe10] sm:$0xff]
  %v481 = vld [vmem:[%s1 + $0xe18] sm:$0xff]
  %v482 = vld [vmem:[%s1 + $0xe20] sm:$0xff]
  %v483 = vld [vmem:[%s1 + $0xe28] sm:$0xff]
  %v484 = vld [vmem:[%s1 + $0xe30] sm:$0xff]
  %v485 = vld [vmem:[%s1 + $0xe38] sm:$0xff]
  %v486 = vld [vmem:[%s1 + $0xe40] sm:$0xff]
  %v487 = vld [vmem:[%s1 + $0xe48] sm:$0xff]
  %v488 = vld [vmem:[%s1 + $0xe50] sm:$0xff]
  %v489 = vld [vmem:[%s1 + $0xe58] sm:$0xff]
  %v490 = vld [vmem:[%s1 + $0xe60] sm:$0xff]
  %v491 = vld [vmem:[%s1 + $0xe68] sm:$0xff]
  %v492 = vld [vmem:[%s1 + $0xe70] sm:$0xff]
  %v493 = vld [vmem:[%s1 + $0xe78] sm:$0xff]
  %v494 = vld [vmem:[%s1 + $0xe80] sm:$0xff]
  %v495 = vld [vmem:[%s1 + $0xe88] sm:$0xff]
  %v496 = vld [vmem:[%s1 + $0xe90] sm:$0xff]
  %v497 = vld [vmem:[%s1 + $0xe98] sm:$0xff]
  %v498 = vld [vmem:[%s1 + $0xea0] sm:$0xff]
  %v499 = vld [vmem:[%s1 + $0xea8] sm:$0xff]
  %v500 = vld [vmem:[%s1 + $0xeb0] sm:$0xff]
  %v501 = vld [vmem:[%s1 + $0xeb8] sm:$0xff]
  %v502 = vld [vmem:[%s1 + $0xec0] sm:$0xff]
  %v503 = vld [vmem:[%s1 + $0xec8] sm:$0xff]
  %v504 = vld [vmem:[%s1 + $0xed0] sm:$0xff]
  %v505 = vld [vmem:[%s1 + $0xed8] sm:$0xff]
  %v506 = vld [vmem:[%s1 + $0xee0] sm:$0xff]
  %v507 = vld [vmem:[%s1 + $0xee8] sm:$0xff]
  %v508 = vld [vmem:[%s1 + $0xef0] sm:$0xff]
  %v509 = vld [vmem:[%s1 + $0xef8] sm:$0xff]
  %v510 = vld [vmem:[%s1 + $0xf00] sm:$0xff]
  %v511 = vld [vmem:[%s1 + $0xf08] sm:$0xff]
  %v512 = vld [vmem:[%s1 + $0xf10] sm:$0xff]
  %v513 = vld [vmem:[%s1 + $0xf18] sm:$0xff]
  %v514 = vld [vmem:[%s1 + $0xf20] sm:$0xff]
  %v515 = vld [vmem:[%s1 + $0xf28] sm:$0xff]
  %v516 = vld [vmem:[%s1 + $0xf30] sm:$0xff]
  %v517 = vld [vmem:[%s1 + $0xf38] sm:$0xff]
  %v518 = vld [vmem:[%s1 + $0xf40] sm:$0xff]
  %v519 = vld [vmem:[%s1 + $0xf48] sm:$0xff]
  %v520 = vld [vmem:[%s1 + $0xf50] sm:$0xff]
  %v521 = vld [vmem:[%s1 + $0xf58] sm:$0xff]
  %v522 = vld [vmem:[%s1 + $0xf60] sm:$0xff]
  %v523 = vld [vmem:[%s1 + $0xf68] sm:$0xff]
  %v524 = vld [vmem:[%s1 + $0xf70] sm:$0xff]
  %v525 = vld [vmem:[%s1 + $0xf78] sm:$0xff]
  %v526 = vld [vmem:[%s1 + $0xf80] sm:$0xff]
  %v527 = vld [vmem:[%s1 + $0xf88] sm:$0xff]
  %v528 = vld [vmem:[%s1 + $0xf90] sm:$0xff]
  %v529 = vld [vmem:[%s1 + $0xf98] sm:$0xff]
  %v530 = vld [vmem:[%s1 + $0xfa0] sm:$0xff]
  %v531 = vld [vmem:[%s1 + $0xfa8] sm:$0xff]
  %v532 = vld [vmem:[%s1 + $0xfb0] sm:$0xff]
  %v533 = vld [vmem:[%s1 + $0xfb8] sm:$0xff]
  %v534 = vld [vmem:[%s1 + $0xfc0] sm:$0xff]
  %v535 = vld [vmem:[%s1 + $0xfc8] sm:$0xff]
  %v536 = vld [vmem:[%s1 + $0xfd0] sm:$0xff]
  %v537 = vld [vmem:[%s1 + $0xfd8] sm:$0xff]
  %v538 = vld [vmem:[%s1 + $0xfe0] sm:$0xff]
  %v539 = vld [vmem:[%s1 + $0xfe8] sm:$0xff]
  %v540 = vld [vmem:[%s1 + $0xff0] sm:$0xff]
  %v541 = vld [vmem:[%s1 + $0xff8] sm:$0xff]
  %v542 = vld [vmem:[%s1 + $0x1000] sm:$0xff]
  %v543 = vld [vmem:[%s1 + $0x1008] sm:$0xff]
  %v544 = vld [vmem:[%s1 + $0x1010] sm:$0xff]
  %v545 = vld [vmem:[%s1 + $0x1018] sm:$0xff]
  %v546 = vld [vmem:[%s1 + $0x1020] sm:$0xff]
  %v547 = vld [vmem:[%s1 + $0x1028] sm:$0xff]
  %v548 = vld [vmem:[%s1 + $0x1030] sm:$0xff]
  %v549 = vld [vmem:[%s1 + $0x1038] sm:$0xff]
  %v550 = vld [vmem:[%s1 + $0x1040] sm:$0xff]
  %v551 = vld [vmem:[%s1 + $0x1048] sm:$0xff]
  %v552 = vld [vmem:[%s1 + $0x1050] sm:$0xff]
  %v553 = vld [vmem:[%s1 + $0x1058] sm:$0xff]
  %v554 = vld [vmem:[%s1 + $0x1060] sm:$0xff]
  %v555 = vld [vmem:[%s1 + $0x1068] sm:$0xff]
  %v556 = vld [vmem:[%s1 + $0x1070] sm:$0xff]
  %v557 = vld [vmem:[%s1 + $0x1078] sm:$0xff]
  %v558 = vld [vmem:[%s1 + $0x1080] sm:$0xff]
  %v559 = vld [vmem:[%s1 + $0x1088] sm:$0xff]
  %v560 = vld [vmem:[%s1 + $0x1090] sm:$0xff]
  %v561 = vld [vmem:[%s1 + $0x1098] sm:$0xff]
  %v562 = vld [vmem:[%s1 + $0x10a0] sm:$0xff]
  %v563 = vld [vmem:[%s1 + $0x10a8] sm:$0xff]
  %v564 = vld [vmem:[%s1 + $0x10b0] sm:$0xff]
  %v565 = vld [vmem:[%s1 + $0x10b8] sm:$0xff]
  %v566 = vld [vmem:[%s1 + $0x10c0] sm:$0xff]
  %v567 = vld [vmem:[%s1 + $0x10c8] sm:$0xff]
  %v568 = vld [vmem:[%s1 + $0x10d0] sm:$0xff]
  %v569 = vld [vmem:[%s1 + $0x10d8] sm:$0xff]
  %v570 = vld [vmem:[%s1 + $0x10e0] sm:$0xff]
  %v571 = vld [vmem:[%s1 + $0x10e8] sm:$0xff]
  %v572 = vld [vmem:[%s1 + $0x10f0] sm:$0xff]
  %v573 = vld [vmem:[%s1 + $0x10f8] sm:$0xff]
  %v574 = vld [vmem:[%s1 + $0x1100] sm:$0xff]
  %v575 = vld [vmem:[%s1 + $0x1108] sm:$0xff]
  %v576 = vld [vmem:[%s1 + $0x1110] sm:$0xff]
  %v577 = vld [vmem:[%s1 + $0x1118] sm:$0xff]
  %v578 = vld [vmem:[%s1 + $0x1120] sm:$0xff]
  %v579 = vld [vmem:[%s1 + $0x1128] sm:$0xff]
  %v580 = vld [vmem:[%s1 + $0x1130] sm:$0xff]
  %v581 = vld [vmem:[%s1 + $0x1138] sm:$0xff]
  %v582 = vld [vmem:[%s1 + $0x1140] sm:$0xff]
  %v583 = vld [vmem:[%s1 + $0x1148] sm:$0xff]
  %v584 = vld [vmem:[%s1 + $0x1150] sm:$0xff]
  %v585 = vld [vmem:[%s1 + $0x1158] sm:$0xff]
  %v586 = vld [vmem:[%s1 + $0x1160] sm:$0xff]
  %v587 = vld [vmem:[%s1 + $0x1168] sm:$0xff]
  %v588 = vld [vmem:[%s1 + $0x1170] sm:$0xff]
  %v589 = vld [vmem:[%s1 + $0x1178] sm:$0xff]
  %v590 = vld [vmem:[%s1 + $0x1180] sm:$0xff]
  %v591 = vld [vmem:[%s1 + $0x1188] sm:$0xff]
  %v592 = vld [vmem:[%s1 + $0x1190] sm:$0xff]
  %v593 = vld [vmem:[%s1 + $0x1198] sm:$0xff]
  %v594 = vld [vmem:[%s1 + $0x11a0] sm:$0xff]
  %v595 = vld [vmem:[%s1 + $0x11a8] sm:$0xff]
  %v596 = vld [vmem:[%s1 + $0x11b0] sm:$0xff]
  %v597 = vld [vmem:[%s1 + $0x11b8] sm:$0xff]
  %v598 = vld [vmem:[%s1 + $0x11c0] sm:$0xff]
  %v599 = vld [vmem:[%s1 + $0x11c8] sm:$0xff]
  %v600 = vld [vmem:[%s1 + $0x11d0] sm:$0xff]
  %v601 = vld [vmem:[%s1 + $0x11d8] sm:$0xff]
  %v602 = vld [vmem:[%s1 + $0x11e0] sm:$0xff]
  %v603 = vld [vmem:[%s1 + $0x11e8] sm:$0xff]
  %v604 = vld [vmem:[%s1 + $0x11f0] sm:$0xff]
  %v605 = vld [vmem:[%s1 + $0x11f8] sm:$0xff]
  %v606 = vld [vmem:[%s2] sm:$0xf]
  %v608 = vlaneseq
  %v609 = vshrl.u32 %v608, 7
  %v610 = vsub.s32 0, %v609
  %v611 = vrot.slane %v606, %v610
  %v612 = vlaneseq
  %v613 = vshrl.u32 %v612, 7
  %v614 = vsub.s32 1, %v613
  %v615 = vrot.slane %v606, %v614
  %v616 = vlaneseq
  %v617 = vshrl.u32 %v616, 7
  %v618 = vsub.s32 2, %v617
  %v619 = vrot.slane %v606, %v618
  %v620 = vlaneseq
  %v621 = vshrl.u32 %v620, 7
  %v622 = vsub.s32 3, %v621
  %v623 = vrot.slane %v606, %v622
  %v631 = vcombine.high %v27, %v27
  %v633 = vunpack.c.l.s4 1966171168
  %v634 = vunpack.c.0.s8 %v633
  %v635 = vlaneseq
  %v636 = vshrl.u32 %v635, 7
  %v637 = vsub.s32 %v634, %v636
  %v638 = vrot.slane %v27, %v637
  %v640 = vunpack.c.l.s4 1966171168
  %v641 = vunpack.c.0.s8 %v640
  %v642 = vlaneseq
  %v643 = vshrl.u32 %v642, 7
  %v644 = vsub.s32 %v641, %v643
  %v645 = vrot.slane %v631, %v644
  %v646 = vcombine.high %v638, %v638
  %v647 = vcombine.high %v645, %v645
  %v649 = vunpack.c.l.s4 1966171168
  %v650 = vunpack.c.0.s8 %v649
  %v651 = vlaneseq
  %v652 = vshrl.u32 %v651, 7
  %v653 = vsub.s32 %v650, %v652
  %v654 = vrot.slane %v638, %v653
  %v656 = vunpack.c.l.s4 1966171168
  %v657 = vunpack.c.0.s8 %v656
  %v658 = vlaneseq
  %v659 = vshrl.u32 %v658, 7
  %v660 = vsub.s32 %v657, %v659
  %v661 = vrot.slane %v645, %v660
  %v663 = vunpack.c.l.s4 1966171168
  %v664 = vunpack.c.0.s8 %v663
  %v665 = vlaneseq
  %v666 = vshrl.u32 %v665, 7
  %v667 = vsub.s32 %v664, %v666
  %v668 = vrot.slane %v646, %v667
  %v670 = vunpack.c.l.s4 1966171168
  %v671 = vunpack.c.0.s8 %v670
  %v672 = vlaneseq
  %v673 = vshrl.u32 %v672, 7
  %v674 = vsub.s32 %v671, %v673
  %v675 = vrot.slane %v647, %v674
  %v676 = vcombine.high %v654, %v654
  %v677 = vcombine.high %v661, %v661
  %v678 = vcombine.high %v668, %v668
  %v679 = vcombine.high %v675, %v675
  %v680 = vcombine.high %v28, %v28
  %v682 = vunpack.c.l.s4 1966171168
  %v683 = vunpack.c.0.s8 %v682
  %v684 = vlaneseq
  %v685 = vshrl.u32 %v684, 7
  %v686 = vsub.s32 %v683, %v685
  %v687 = vrot.slane %v28, %v686
  %v689 = vunpack.c.l.s4 1966171168
  %v690 = vunpack.c.0.s8 %v689
  %v691 = vlaneseq
  %v692 = vshrl.u32 %v691, 7
  %v693 = vsub.s32 %v690, %v692
  %v694 = vrot.slane %v680, %v693
  %v695 = vcombine.high %v687, %v687
  %v696 = vcombine.high %v694, %v694
  %v698 = vunpack.c.l.s4 1966171168
  %v699 = vunpack.c.0.s8 %v698
  %v700 = vlaneseq
  %v701 = vshrl.u32 %v700, 7
  %v702 = vsub.s32 %v699, %v701
  %v703 = vrot.slane %v687, %v702
  %v705 = vunpack.c.l.s4 1966171168
  %v706 = vunpack.c.0.s8 %v705
  %v707 = vlaneseq
  %v708 = vshrl.u32 %v707, 7
  %v709 = vsub.s32 %v706, %v708
  %v710 = vrot.slane %v694, %v709
  %v712 = vunpack.c.l.s4 1966171168
  %v713 = vunpack.c.0.s8 %v712
  %v714 = vlaneseq
  %v715 = vshrl.u32 %v714, 7
  %v716 = vsub.s32 %v713, %v715
  %v717 = vrot.slane %v695, %v716
  %v719 = vunpack.c.l.s4 1966171168
  %v720 = vunpack.c.0.s8 %v719
  %v721 = vlaneseq
  %v722 = vshrl.u32 %v721, 7
  %v723 = vsub.s32 %v720, %v722
  %v724 = vrot.slane %v696, %v723
  %v725 = vcombine.high %v703, %v703
  %v726 = vcombine.high %v710, %v710
  %v727 = vcombine.high %v717, %v717
  %v728 = vcombine.high %v724, %v724
  %v730 = vunpack.c.l.s4 1966171168
  %v731 = vunpack.c.0.s8 %v730
  %v732 = vlaneseq
  %v733 = vshrl.u32 %v732, 7
  %v734 = vsub.s32 %v731, %v733
  %v735 = vrot.slane %v29, %v734
  %v736 = vcombine.high %v735, %v735
  %v738 = vunpack.c.l.s4 1966171168
  %v739 = vunpack.c.0.s8 %v738
  %v740 = vlaneseq
  %v741 = vshrl.u32 %v740, 7
  %v742 = vsub.s32 %v739, %v741
  %v743 = vrot.slane %v735, %v742
  %v745 = vunpack.c.l.s4 1966171168
  %v746 = vunpack.c.0.s8 %v745
  %v747 = vlaneseq
  %v748 = vshrl.u32 %v747, 7
  %v749 = vsub.s32 %v746, %v748
  %v750 = vrot.slane %v736, %v749
  %v1345 = vunpack.c.l.b16 %v30
  %v1346 = vunpack.c.h.b16 %v30
  %v1347 = vunpack.c.l.b16 %v31
  %v1348 = vunpack.c.h.b16 %v31
  %v1349 = vunpack.c.l.b16 %v32
  %v1350 = vunpack.c.h.b16 %v32
  %v1351 = vunpack.c.l.b16 %v33
  %v1352 = vunpack.c.h.b16 %v33
  %v1353 = vunpack.c.l.b16 %v34
  %v1354 = vunpack.c.h.b16 %v34
  %v1355 = vunpack.c.l.b16 %v35
  %v1356 = vunpack.c.h.b16 %v35
  %v1357 = vunpack.c.l.b16 %v36
  %v1358 = vunpack.c.h.b16 %v36
  %v1359 = vunpack.c.l.b16 %v37
  %v1360 = vunpack.c.h.b16 %v37
  %v1361 = vunpack.c.l.b16 %v38
  %v1362 = vunpack.c.h.b16 %v38
  %v1363 = vunpack.c.l.b16 %v39
  %v1364 = vunpack.c.h.b16 %v39
  %v1365 = vunpack.c.l.b16 %v40
  %v1366 = vunpack.c.h.b16 %v40
  %v1367 = vunpack.c.l.b16 %v41
  %v1368 = vunpack.c.h.b16 %v41
  %v1369 = vunpack.c.l.b16 %v42
  %v1370 = vunpack.c.h.b16 %v42
  %v1371 = vunpack.c.l.b16 %v43
  %v1372 = vunpack.c.h.b16 %v43
  %v1373 = vunpack.c.l.b16 %v44
  %v1374 = vunpack.c.h.b16 %v44
  %v1375 = vunpack.c.l.b16 %v45
  %v1376 = vunpack.c.h.b16 %v45
  %v1377 = vunpack.c.l.b16 %v46
  %v1378 = vunpack.c.h.b16 %v46
  %v1379 = vunpack.c.l.b16 %v47
  %v1380 = vunpack.c.h.b16 %v47
  %v1381 = vunpack.c.l.b16 %v48
  %v1382 = vunpack.c.h.b16 %v48
  %v1383 = vunpack.c.l.b16 %v49
  %v1384 = vunpack.c.h.b16 %v49
  %v1385 = vunpack.c.l.b16 %v50
  %v1386 = vunpack.c.h.b16 %v50
  %v1387 = vunpack.c.l.b16 %v51
  %v1388 = vunpack.c.h.b16 %v51
  %v1389 = vunpack.c.l.b16 %v52
  %v1390 = vunpack.c.h.b16 %v52
  %v1391 = vunpack.c.l.b16 %v53
  %v1392 = vunpack.c.h.b16 %v53
  %v1393 = vunpack.c.l.b16 %v54
  %v1394 = vunpack.c.h.b16 %v54
  %v1395 = vunpack.c.l.b16 %v55
  %v1396 = vunpack.c.h.b16 %v55
  %v1397 = vunpack.c.l.b16 %v56
  %v1398 = vunpack.c.h.b16 %v56
  %v1399 = vunpack.c.l.b16 %v57
  %v1400 = vunpack.c.h.b16 %v57
  %v1401 = vunpack.c.l.b16 %v58
  %v1402 = vunpack.c.h.b16 %v58
  %v1403 = vunpack.c.l.b16 %v59
  %v1404 = vunpack.c.h.b16 %v59
  %v1405 = vunpack.c.l.b16 %v60
  %v1406 = vunpack.c.h.b16 %v60
  %v1407 = vunpack.c.l.b16 %v61
  %v1408 = vunpack.c.h.b16 %v61
  %v1409 = vunpack.c.l.b16 %v62
  %v1410 = vunpack.c.h.b16 %v62
  %v1411 = vunpack.c.l.b16 %v63
  %v1412 = vunpack.c.h.b16 %v63
  %v1413 = vunpack.c.l.b16 %v64
  %v1414 = vunpack.c.h.b16 %v64
  %v1415 = vunpack.c.l.b16 %v65
  %v1416 = vunpack.c.h.b16 %v65
  %v1417 = vunpack.c.l.b16 %v66
  %v1418 = vunpack.c.h.b16 %v66
  %v1419 = vunpack.c.l.b16 %v67
  %v1420 = vunpack.c.h.b16 %v67
  %v1421 = vunpack.c.l.b16 %v68
  %v1422 = vunpack.c.h.b16 %v68
  %v1423 = vunpack.c.l.b16 %v69
  %v1424 = vunpack.c.h.b16 %v69
  %v1425 = vunpack.c.l.b16 %v70
  %v1426 = vunpack.c.h.b16 %v70
  %v1427 = vunpack.c.l.b16 %v71
  %v1428 = vunpack.c.h.b16 %v71
  %v1429 = vunpack.c.l.b16 %v72
  %v1430 = vunpack.c.h.b16 %v72
  %v1431 = vunpack.c.l.b16 %v73
  %v1432 = vunpack.c.h.b16 %v73
  %v1433 = vunpack.c.l.b16 %v74
  %v1434 = vunpack.c.h.b16 %v74
  %v1435 = vunpack.c.l.b16 %v75
  %v1436 = vunpack.c.h.b16 %v75
  %v1437 = vunpack.c.l.b16 %v76
  %v1438 = vunpack.c.h.b16 %v76
  %v1439 = vunpack.c.l.b16 %v77
  %v1440 = vunpack.c.h.b16 %v77
  %v1441 = vunpack.c.l.b16 %v78
  %v1442 = vunpack.c.h.b16 %v78
  %v1443 = vunpack.c.l.b16 %v79
  %v1444 = vunpack.c.h.b16 %v79
  %v1445 = vunpack.c.l.b16 %v80
  %v1446 = vunpack.c.h.b16 %v80
  %v1447 = vunpack.c.l.b16 %v81
  %v1448 = vunpack.c.h.b16 %v81
  %v1449 = vunpack.c.l.b16 %v82
  %v1450 = vunpack.c.h.b16 %v82
  %v1451 = vunpack.c.l.b16 %v83
  %v1452 = vunpack.c.h.b16 %v83
  %v1453 = vunpack.c.l.b16 %v84
  %v1454 = vunpack.c.h.b16 %v84
  %v1455 = vunpack.c.l.b16 %v85
  %v1456 = vunpack.c.h.b16 %v85
  %v1457 = vunpack.c.l.b16 %v86
  %v1458 = vunpack.c.h.b16 %v86
  %v1459 = vunpack.c.l.b16 %v87
  %v1460 = vunpack.c.h.b16 %v87
  %v1461 = vunpack.c.l.b16 %v88
  %v1462 = vunpack.c.h.b16 %v88
  %v1463 = vunpack.c.l.b16 %v89
  %v1464 = vunpack.c.h.b16 %v89
  %v1465 = vunpack.c.l.b16 %v90
  %v1466 = vunpack.c.h.b16 %v90
  %v1467 = vunpack.c.l.b16 %v91
  %v1468 = vunpack.c.h.b16 %v91
  %v1469 = vunpack.c.l.b16 %v92
  %v1470 = vunpack.c.h.b16 %v92
  %v1471 = vunpack.c.l.b16 %v93
  %v1472 = vunpack.c.h.b16 %v93
  %v1473 = vunpack.c.l.b16 %v94
  %v1474 = vunpack.c.h.b16 %v94
  %v1475 = vunpack.c.l.b16 %v95
  %v1476 = vunpack.c.h.b16 %v95
  %v1477 = vunpack.c.l.b16 %v96
  %v1478 = vunpack.c.h.b16 %v96
  %v1479 = vunpack.c.l.b16 %v97
  %v1480 = vunpack.c.h.b16 %v97
  %v1481 = vunpack.c.l.b16 %v98
  %v1482 = vunpack.c.h.b16 %v98
  %v1483 = vunpack.c.l.b16 %v99
  %v1484 = vunpack.c.h.b16 %v99
  %v1485 = vunpack.c.l.b16 %v100
  %v1486 = vunpack.c.h.b16 %v100
  %v1487 = vunpack.c.l.b16 %v101
  %v1488 = vunpack.c.h.b16 %v101
  %v1489 = vunpack.c.l.b16 %v102
  %v1490 = vunpack.c.h.b16 %v102
  %v1491 = vunpack.c.l.b16 %v103
  %v1492 = vunpack.c.h.b16 %v103
  %v1493 = vunpack.c.l.b16 %v104
  %v1494 = vunpack.c.h.b16 %v104
  %v1495 = vunpack.c.l.b16 %v105
  %v1496 = vunpack.c.h.b16 %v105
  %v1497 = vunpack.c.l.b16 %v106
  %v1498 = vunpack.c.h.b16 %v106
  %v1499 = vunpack.c.l.b16 %v107
  %v1500 = vunpack.c.h.b16 %v107
  %v1501 = vunpack.c.l.b16 %v108
  %v1502 = vunpack.c.h.b16 %v108
  %v1503 = vunpack.c.l.b16 %v109
  %v1504 = vunpack.c.h.b16 %v109
  %v1505 = vunpack.c.l.b16 %v110
  %v1506 = vunpack.c.h.b16 %v110
  %v1507 = vunpack.c.l.b16 %v111
  %v1508 = vunpack.c.h.b16 %v111
  %v1509 = vunpack.c.l.b16 %v112
  %v1510 = vunpack.c.h.b16 %v112
  %v1511 = vunpack.c.l.b16 %v113
  %v1512 = vunpack.c.h.b16 %v113
  %v1513 = vunpack.c.l.b16 %v114
  %v1514 = vunpack.c.h.b16 %v114
  %v1515 = vunpack.c.l.b16 %v115
  %v1516 = vunpack.c.h.b16 %v115
  %v1517 = vunpack.c.l.b16 %v116
  %v1518 = vunpack.c.h.b16 %v116
  %v1519 = vunpack.c.l.b16 %v117
  %v1520 = vunpack.c.h.b16 %v117
  %v1521 = vunpack.c.l.b16 %v118
  %v1522 = vunpack.c.h.b16 %v118
  %v1523 = vunpack.c.l.b16 %v119
  %v1524 = vunpack.c.h.b16 %v119
  %v1525 = vunpack.c.l.b16 %v120
  %v1526 = vunpack.c.h.b16 %v120
  %v1527 = vunpack.c.l.b16 %v121
  %v1528 = vunpack.c.h.b16 %v121
  %v1529 = vunpack.c.l.b16 %v122
  %v1530 = vunpack.c.h.b16 %v122
  %v1531 = vunpack.c.l.b16 %v123
  %v1532 = vunpack.c.h.b16 %v123
  %v1533 = vunpack.c.l.b16 %v124
  %v1534 = vunpack.c.h.b16 %v124
  %v1535 = vunpack.c.l.b16 %v125
  %v1536 = vunpack.c.h.b16 %v125
  %v1537 = vunpack.c.l.b16 %v126
  %v1538 = vunpack.c.h.b16 %v126
  %v1539 = vunpack.c.l.b16 %v127
  %v1540 = vunpack.c.h.b16 %v127
  %v1541 = vunpack.c.l.b16 %v128
  %v1542 = vunpack.c.h.b16 %v128
  %v1543 = vunpack.c.l.b16 %v129
  %v1544 = vunpack.c.h.b16 %v129
  %v1545 = vunpack.c.l.b16 %v130
  %v1546 = vunpack.c.h.b16 %v130
  %v1547 = vunpack.c.l.b16 %v131
  %v1548 = vunpack.c.h.b16 %v131
  %v1549 = vunpack.c.l.b16 %v132
  %v1550 = vunpack.c.h.b16 %v132
  %v1551 = vunpack.c.l.b16 %v133
  %v1552 = vunpack.c.h.b16 %v133
  %v1553 = vunpack.c.l.b16 %v134
  %v1554 = vunpack.c.h.b16 %v134
  %v1555 = vunpack.c.l.b16 %v135
  %v1556 = vunpack.c.h.b16 %v135
  %v1557 = vunpack.c.l.b16 %v136
  %v1558 = vunpack.c.h.b16 %v136
  %v1559 = vunpack.c.l.b16 %v137
  %v1560 = vunpack.c.h.b16 %v137
  %v1561 = vunpack.c.l.b16 %v138
  %v1562 = vunpack.c.h.b16 %v138
  %v1563 = vunpack.c.l.b16 %v139
  %v1564 = vunpack.c.h.b16 %v139
  %v1565 = vunpack.c.l.b16 %v140
  %v1566 = vunpack.c.h.b16 %v140
  %v1567 = vunpack.c.l.b16 %v141
  %v1568 = vunpack.c.h.b16 %v141
  %v1569 = vunpack.c.l.b16 %v142
  %v1570 = vunpack.c.h.b16 %v142
  %v1571 = vunpack.c.l.b16 %v143
  %v1572 = vunpack.c.h.b16 %v143
  %v1573 = vunpack.c.l.b16 %v144
  %v1574 = vunpack.c.h.b16 %v144
  %v1575 = vunpack.c.l.b16 %v145
  %v1576 = vunpack.c.h.b16 %v145
  %v1577 = vunpack.c.l.b16 %v146
  %v1578 = vunpack.c.h.b16 %v146
  %v1579 = vunpack.c.l.b16 %v147
  %v1580 = vunpack.c.h.b16 %v147
  %v1581 = vunpack.c.l.b16 %v148
  %v1582 = vunpack.c.h.b16 %v148
  %v1583 = vunpack.c.l.b16 %v149
  %v1584 = vunpack.c.h.b16 %v149
  %v1585 = vunpack.c.l.b16 %v150
  %v1586 = vunpack.c.h.b16 %v150
  %v1587 = vunpack.c.l.b16 %v151
  %v1588 = vunpack.c.h.b16 %v151
  %v1589 = vunpack.c.l.b16 %v152
  %v1590 = vunpack.c.h.b16 %v152
  %v1591 = vunpack.c.l.b16 %v153
  %v1592 = vunpack.c.h.b16 %v153
  %v1593 = vunpack.c.l.b16 %v154
  %v1594 = vunpack.c.h.b16 %v154
  %v1595 = vunpack.c.l.b16 %v155
  %v1596 = vunpack.c.h.b16 %v155
  %v1597 = vunpack.c.l.b16 %v156
  %v1598 = vunpack.c.h.b16 %v156
  %v1599 = vunpack.c.l.b16 %v157
  %v1600 = vunpack.c.h.b16 %v157
  %v1601 = vunpack.c.l.b16 %v158
  %v1602 = vunpack.c.h.b16 %v158
  %v1603 = vunpack.c.l.b16 %v159
  %v1604 = vunpack.c.h.b16 %v159
  %v1605 = vunpack.c.l.b16 %v160
  %v1606 = vunpack.c.h.b16 %v160
  %v1607 = vunpack.c.l.b16 %v161
  %v1608 = vunpack.c.h.b16 %v161
  %v1609 = vunpack.c.l.b16 %v162
  %v1610 = vunpack.c.h.b16 %v162
  %v1611 = vunpack.c.l.b16 %v163
  %v1612 = vunpack.c.h.b16 %v163
  %v1613 = vunpack.c.l.b16 %v164
  %v1614 = vunpack.c.h.b16 %v164
  %v1615 = vunpack.c.l.b16 %v165
  %v1616 = vunpack.c.h.b16 %v165
  %v1617 = vunpack.c.l.b16 %v166
  %v1618 = vunpack.c.h.b16 %v166
  %v1619 = vunpack.c.l.b16 %v167
  %v1620 = vunpack.c.h.b16 %v167
  %v1621 = vunpack.c.l.b16 %v168
  %v1622 = vunpack.c.h.b16 %v168
  %v1623 = vunpack.c.l.b16 %v169
  %v1624 = vunpack.c.h.b16 %v169
  %v1625 = vunpack.c.l.b16 %v170
  %v1626 = vunpack.c.h.b16 %v170
  %v1627 = vunpack.c.l.b16 %v171
  %v1628 = vunpack.c.h.b16 %v171
  %v1629 = vunpack.c.l.b16 %v172
  %v1630 = vunpack.c.h.b16 %v172
  %v1631 = vunpack.c.l.b16 %v173
  %v1632 = vunpack.c.h.b16 %v173
  %v1633 = vunpack.c.l.b16 %v174
  %v1634 = vunpack.c.h.b16 %v174
  %v1635 = vunpack.c.l.b16 %v175
  %v1636 = vunpack.c.h.b16 %v175
  %v1637 = vunpack.c.l.b16 %v176
  %v1638 = vunpack.c.h.b16 %v176
  %v1639 = vunpack.c.l.b16 %v177
  %v1640 = vunpack.c.h.b16 %v177
  %v1641 = vunpack.c.l.b16 %v178
  %v1642 = vunpack.c.h.b16 %v178
  %v1643 = vunpack.c.l.b16 %v179
  %v1644 = vunpack.c.h.b16 %v179
  %v1645 = vunpack.c.l.b16 %v180
  %v1646 = vunpack.c.h.b16 %v180
  %v1647 = vunpack.c.l.b16 %v181
  %v1648 = vunpack.c.h.b16 %v181
  %v1649 = vunpack.c.l.b16 %v182
  %v1650 = vunpack.c.h.b16 %v182
  %v1651 = vunpack.c.l.b16 %v183
  %v1652 = vunpack.c.h.b16 %v183
  %v1653 = vunpack.c.l.b16 %v184
  %v1654 = vunpack.c.h.b16 %v184
  %v1655 = vunpack.c.l.b16 %v185
  %v1656 = vunpack.c.h.b16 %v185
  %v1657 = vunpack.c.l.b16 %v186
  %v1658 = vunpack.c.h.b16 %v186
  %v1659 = vunpack.c.l.b16 %v187
  %v1660 = vunpack.c.h.b16 %v187
  %v1661 = vunpack.c.l.b16 %v188
  %v1662 = vunpack.c.h.b16 %v188
  %v1663 = vunpack.c.l.b16 %v189
  %v1664 = vunpack.c.h.b16 %v189
  %v1665 = vunpack.c.l.b16 %v190
  %v1666 = vunpack.c.h.b16 %v190
  %v1667 = vunpack.c.l.b16 %v191
  %v1668 = vunpack.c.h.b16 %v191
  %v1669 = vunpack.c.l.b16 %v192
  %v1670 = vunpack.c.h.b16 %v192
  %v1671 = vunpack.c.l.b16 %v193
  %v1672 = vunpack.c.h.b16 %v193
  %v1673 = vunpack.c.l.b16 %v194
  %v1674 = vunpack.c.h.b16 %v194
  %v1675 = vunpack.c.l.b16 %v195
  %v1676 = vunpack.c.h.b16 %v195
  %v1677 = vunpack.c.l.b16 %v196
  %v1678 = vunpack.c.h.b16 %v196
  %v1679 = vunpack.c.l.b16 %v197
  %v1680 = vunpack.c.h.b16 %v197
  %v1681 = vunpack.c.l.b16 %v198
  %v1682 = vunpack.c.h.b16 %v198
  %v1683 = vunpack.c.l.b16 %v199
  %v1684 = vunpack.c.h.b16 %v199
  %v1685 = vunpack.c.l.b16 %v200
  %v1686 = vunpack.c.h.b16 %v200
  %v1687 = vunpack.c.l.b16 %v201
  %v1688 = vunpack.c.h.b16 %v201
  %v1689 = vunpack.c.l.b16 %v202
  %v1690 = vunpack.c.h.b16 %v202
  %v1691 = vunpack.c.l.b16 %v203
  %v1692 = vunpack.c.h.b16 %v203
  %v1693 = vunpack.c.l.b16 %v204
  %v1694 = vunpack.c.h.b16 %v204
  %v1695 = vunpack.c.l.b16 %v205
  %v1696 = vunpack.c.h.b16 %v205
  %v1697 = vunpack.c.l.b16 %v206
  %v1698 = vunpack.c.h.b16 %v206
  %v1699 = vunpack.c.l.b16 %v207
  %v1700 = vunpack.c.h.b16 %v207
  %v1701 = vunpack.c.l.b16 %v208
  %v1702 = vunpack.c.h.b16 %v208
  %v1703 = vunpack.c.l.b16 %v209
  %v1704 = vunpack.c.h.b16 %v209
  %v1705 = vunpack.c.l.b16 %v210
  %v1706 = vunpack.c.h.b16 %v210
  %v1707 = vunpack.c.l.b16 %v211
  %v1708 = vunpack.c.h.b16 %v211
  %v1709 = vunpack.c.l.b16 %v212
  %v1710 = vunpack.c.h.b16 %v212
  %v1711 = vunpack.c.l.b16 %v213
  %v1712 = vunpack.c.h.b16 %v213
  %v1713 = vunpack.c.l.b16 %v214
  %v1714 = vunpack.c.h.b16 %v214
  %v1715 = vunpack.c.l.b16 %v215
  %v1716 = vunpack.c.h.b16 %v215
  %v1717 = vunpack.c.l.b16 %v216
  %v1718 = vunpack.c.h.b16 %v216
  %v1719 = vunpack.c.l.b16 %v217
  %v1720 = vunpack.c.h.b16 %v217
  %v1721 = vunpack.c.l.b16 %v218
  %v1722 = vunpack.c.h.b16 %v218
  %v1723 = vunpack.c.l.b16 %v219
  %v1724 = vunpack.c.h.b16 %v219
  %v1725 = vunpack.c.l.b16 %v220
  %v1726 = vunpack.c.h.b16 %v220
  %v1727 = vunpack.c.l.b16 %v221
  %v1728 = vunpack.c.h.b16 %v221
  %v1729 = vunpack.c.l.b16 %v222
  %v1730 = vunpack.c.h.b16 %v222
  %v1731 = vunpack.c.l.b16 %v223
  %v1732 = vunpack.c.h.b16 %v223
  %v1733 = vunpack.c.l.b16 %v224
  %v1734 = vunpack.c.h.b16 %v224
  %v1735 = vunpack.c.l.b16 %v225
  %v1736 = vunpack.c.h.b16 %v225
  %v1737 = vunpack.c.l.b16 %v226
  %v1738 = vunpack.c.h.b16 %v226
  %v1739 = vunpack.c.l.b16 %v227
  %v1740 = vunpack.c.h.b16 %v227
  %v1741 = vunpack.c.l.b16 %v228
  %v1742 = vunpack.c.h.b16 %v228
  %v1743 = vunpack.c.l.b16 %v229
  %v1744 = vunpack.c.h.b16 %v229
  %v1745 = vunpack.c.l.b16 %v230
  %v1746 = vunpack.c.h.b16 %v230
  %v1747 = vunpack.c.l.b16 %v231
  %v1748 = vunpack.c.h.b16 %v231
  %v1749 = vunpack.c.l.b16 %v232
  %v1750 = vunpack.c.h.b16 %v232
  %v1751 = vunpack.c.l.b16 %v233
  %v1752 = vunpack.c.h.b16 %v233
  %v1753 = vunpack.c.l.b16 %v234
  %v1754 = vunpack.c.h.b16 %v234
  %v1755 = vunpack.c.l.b16 %v235
  %v1756 = vunpack.c.h.b16 %v235
  %v1757 = vunpack.c.l.b16 %v236
  %v1758 = vunpack.c.h.b16 %v236
  %v1759 = vunpack.c.l.b16 %v237
  %v1760 = vunpack.c.h.b16 %v237
  %v1761 = vunpack.c.l.b16 %v238
  %v1762 = vunpack.c.h.b16 %v238
  %v1763 = vunpack.c.l.b16 %v239
  %v1764 = vunpack.c.h.b16 %v239
  %v1765 = vunpack.c.l.b16 %v240
  %v1766 = vunpack.c.h.b16 %v240
  %v1767 = vunpack.c.l.b16 %v241
  %v1768 = vunpack.c.h.b16 %v241
  %v1769 = vunpack.c.l.b16 %v242
  %v1770 = vunpack.c.h.b16 %v242
  %v1771 = vunpack.c.l.b16 %v243
  %v1772 = vunpack.c.h.b16 %v243
  %v1773 = vunpack.c.l.b16 %v244
  %v1774 = vunpack.c.h.b16 %v244
  %v1775 = vunpack.c.l.b16 %v245
  %v1776 = vunpack.c.h.b16 %v245
  %v1777 = vunpack.c.l.b16 %v246
  %v1778 = vunpack.c.h.b16 %v246
  %v1779 = vunpack.c.l.b16 %v247
  %v1780 = vunpack.c.h.b16 %v247
  %v1781 = vunpack.c.l.b16 %v248
  %v1782 = vunpack.c.h.b16 %v248
  %v1783 = vunpack.c.l.b16 %v249
  %v1784 = vunpack.c.h.b16 %v249
  %v1785 = vunpack.c.l.b16 %v250
  %v1786 = vunpack.c.h.b16 %v250
  %v1787 = vunpack.c.l.b16 %v251
  %v1788 = vunpack.c.h.b16 %v251
  %v1789 = vunpack.c.l.b16 %v252
  %v1790 = vunpack.c.h.b16 %v252
  %v1791 = vunpack.c.l.b16 %v253
  %v1792 = vunpack.c.h.b16 %v253
  %v1793 = vunpack.c.l.b16 %v254
  %v1794 = vunpack.c.h.b16 %v254
  %v1795 = vunpack.c.l.b16 %v255
  %v1796 = vunpack.c.h.b16 %v255
  %v1797 = vunpack.c.l.b16 %v256
  %v1798 = vunpack.c.h.b16 %v256
  %v1799 = vunpack.c.l.b16 %v257
  %v1800 = vunpack.c.h.b16 %v257
  %v1801 = vunpack.c.l.b16 %v258
  %v1802 = vunpack.c.h.b16 %v258
  %v1803 = vunpack.c.l.b16 %v259
  %v1804 = vunpack.c.h.b16 %v259
  %v1805 = vunpack.c.l.b16 %v260
  %v1806 = vunpack.c.h.b16 %v260
  %v1807 = vunpack.c.l.b16 %v261
  %v1808 = vunpack.c.h.b16 %v261
  %v1809 = vunpack.c.l.b16 %v262
  %v1810 = vunpack.c.h.b16 %v262
  %v1811 = vunpack.c.l.b16 %v263
  %v1812 = vunpack.c.h.b16 %v263
  %v1813 = vunpack.c.l.b16 %v264
  %v1814 = vunpack.c.h.b16 %v264
  %v1815 = vunpack.c.l.b16 %v265
  %v1816 = vunpack.c.h.b16 %v265
  %v1817 = vunpack.c.l.b16 %v266
  %v1818 = vunpack.c.h.b16 %v266
  %v1819 = vunpack.c.l.b16 %v267
  %v1820 = vunpack.c.h.b16 %v267
  %v1821 = vunpack.c.l.b16 %v268
  %v1822 = vunpack.c.h.b16 %v268
  %v1823 = vunpack.c.l.b16 %v269
  %v1824 = vunpack.c.h.b16 %v269
  %v1825 = vunpack.c.l.b16 %v270
  %v1826 = vunpack.c.h.b16 %v270
  %v1827 = vunpack.c.l.b16 %v271
  %v1828 = vunpack.c.h.b16 %v271
  %v1829 = vunpack.c.l.b16 %v272
  %v1830 = vunpack.c.h.b16 %v272
  %v1831 = vunpack.c.l.b16 %v273
  %v1832 = vunpack.c.h.b16 %v273
  %v1833 = vunpack.c.l.b16 %v274
  %v1834 = vunpack.c.h.b16 %v274
  %v1835 = vunpack.c.l.b16 %v275
  %v1836 = vunpack.c.h.b16 %v275
  %v1837 = vunpack.c.l.b16 %v276
  %v1838 = vunpack.c.h.b16 %v276
  %v1839 = vunpack.c.l.b16 %v277
  %v1840 = vunpack.c.h.b16 %v277
  %v1841 = vunpack.c.l.b16 %v278
  %v1842 = vunpack.c.h.b16 %v278
  %v1843 = vunpack.c.l.b16 %v279
  %v1844 = vunpack.c.h.b16 %v279
  %v1845 = vunpack.c.l.b16 %v280
  %v1846 = vunpack.c.h.b16 %v280
  %v1847 = vunpack.c.l.b16 %v281
  %v1848 = vunpack.c.h.b16 %v281
  %v1849 = vunpack.c.l.b16 %v282
  %v1850 = vunpack.c.h.b16 %v282
  %v1851 = vunpack.c.l.b16 %v283
  %v1852 = vunpack.c.h.b16 %v283
  %v1853 = vunpack.c.l.b16 %v284
  %v1854 = vunpack.c.h.b16 %v284
  %v1855 = vunpack.c.l.b16 %v285
  %v1856 = vunpack.c.h.b16 %v285
  %v1857 = vunpack.c.l.b16 %v286
  %v1858 = vunpack.c.h.b16 %v286
  %v1859 = vunpack.c.l.b16 %v287
  %v1860 = vunpack.c.h.b16 %v287
  %v1861 = vunpack.c.l.b16 %v288
  %v1862 = vunpack.c.h.b16 %v288
  %v1863 = vunpack.c.l.b16 %v289
  %v1864 = vunpack.c.h.b16 %v289
  %v1865 = vunpack.c.l.b16 %v290
  %v1866 = vunpack.c.h.b16 %v290
  %v1867 = vunpack.c.l.b16 %v291
  %v1868 = vunpack.c.h.b16 %v291
  %v1869 = vunpack.c.l.b16 %v292
  %v1870 = vunpack.c.h.b16 %v292
  %v1871 = vunpack.c.l.b16 %v293
  %v1872 = vunpack.c.h.b16 %v293
  %v1873 = vunpack.c.l.b16 %v294
  %v1874 = vunpack.c.h.b16 %v294
  %v1875 = vunpack.c.l.b16 %v295
  %v1876 = vunpack.c.h.b16 %v295
  %v1877 = vunpack.c.l.b16 %v296
  %v1878 = vunpack.c.h.b16 %v296
  %v1879 = vunpack.c.l.b16 %v297
  %v1880 = vunpack.c.h.b16 %v297
  %v1881 = vunpack.c.l.b16 %v298
  %v1882 = vunpack.c.h.b16 %v298
  %v1883 = vunpack.c.l.b16 %v299
  %v1884 = vunpack.c.h.b16 %v299
  %v1885 = vunpack.c.l.b16 %v300
  %v1886 = vunpack.c.h.b16 %v300
  %v1887 = vunpack.c.l.b16 %v301
  %v1888 = vunpack.c.h.b16 %v301
  %v1889 = vunpack.c.l.b16 %v302
  %v1890 = vunpack.c.h.b16 %v302
  %v1891 = vunpack.c.l.b16 %v303
  %v1892 = vunpack.c.h.b16 %v303
  %v1893 = vunpack.c.l.b16 %v304
  %v1894 = vunpack.c.h.b16 %v304
  %v1895 = vunpack.c.l.b16 %v305
  %v1896 = vunpack.c.h.b16 %v305
  %v1897 = vunpack.c.l.b16 %v306
  %v1898 = vunpack.c.h.b16 %v306
  %v1899 = vunpack.c.l.b16 %v307
  %v1900 = vunpack.c.h.b16 %v307
  %v1901 = vunpack.c.l.b16 %v308
  %v1902 = vunpack.c.h.b16 %v308
  %v1903 = vunpack.c.l.b16 %v309
  %v1904 = vunpack.c.h.b16 %v309
  %v1905 = vunpack.c.l.b16 %v310
  %v1906 = vunpack.c.h.b16 %v310
  %v1907 = vunpack.c.l.b16 %v311
  %v1908 = vunpack.c.h.b16 %v311
  %v1909 = vunpack.c.l.b16 %v312
  %v1910 = vunpack.c.h.b16 %v312
  %v1911 = vunpack.c.l.b16 %v313
  %v1912 = vunpack.c.h.b16 %v313
  %v1913 = vunpack.c.l.b16 %v314
  %v1914 = vunpack.c.h.b16 %v314
  %v1915 = vunpack.c.l.b16 %v315
  %v1916 = vunpack.c.h.b16 %v315
  %v1917 = vunpack.c.l.b16 %v316
  %v1918 = vunpack.c.h.b16 %v316
  %v1919 = vunpack.c.l.b16 %v317
  %v1920 = vunpack.c.h.b16 %v317
  %v1921 = vunpack.c.l.b16 %v318
  %v1922 = vunpack.c.h.b16 %v318
  %v1923 = vunpack.c.l.b16 %v319
  %v1924 = vunpack.c.h.b16 %v319
  %v1925 = vunpack.c.l.b16 %v320
  %v1926 = vunpack.c.h.b16 %v320
  %v1927 = vunpack.c.l.b16 %v321
  %v1928 = vunpack.c.h.b16 %v321
  %v1929 = vunpack.c.l.b16 %v322
  %v1930 = vunpack.c.h.b16 %v322
  %v1931 = vunpack.c.l.b16 %v323
  %v1932 = vunpack.c.h.b16 %v323
  %v1933 = vunpack.c.l.b16 %v324
  %v1934 = vunpack.c.h.b16 %v324
  %v1935 = vunpack.c.l.b16 %v325
  %v1936 = vunpack.c.h.b16 %v325
  %v1937 = vunpack.c.l.b16 %v326
  %v1938 = vunpack.c.h.b16 %v326
  %v1939 = vunpack.c.l.b16 %v327
  %v1940 = vunpack.c.h.b16 %v327
  %v1941 = vunpack.c.l.b16 %v328
  %v1942 = vunpack.c.h.b16 %v328
  %v1943 = vunpack.c.l.b16 %v329
  %v1944 = vunpack.c.h.b16 %v329
  %v1945 = vunpack.c.l.b16 %v330
  %v1946 = vunpack.c.h.b16 %v330
  %v1947 = vunpack.c.l.b16 %v331
  %v1948 = vunpack.c.h.b16 %v331
  %v1949 = vunpack.c.l.b16 %v332
  %v1950 = vunpack.c.h.b16 %v332
  %v1951 = vunpack.c.l.b16 %v333
  %v1952 = vunpack.c.h.b16 %v333
  %v1953 = vunpack.c.l.b16 %v334
  %v1954 = vunpack.c.h.b16 %v334
  %v1955 = vunpack.c.l.b16 %v335
  %v1956 = vunpack.c.h.b16 %v335
  %v1957 = vunpack.c.l.b16 %v336
  %v1958 = vunpack.c.h.b16 %v336
  %v1959 = vunpack.c.l.b16 %v337
  %v1960 = vunpack.c.h.b16 %v337
  %v1961 = vunpack.c.l.b16 %v338
  %v1962 = vunpack.c.h.b16 %v338
  %v1963 = vunpack.c.l.b16 %v339
  %v1964 = vunpack.c.h.b16 %v339
  %v1965 = vunpack.c.l.b16 %v340
  %v1966 = vunpack.c.h.b16 %v340
  %v1967 = vunpack.c.l.b16 %v341
  %v1968 = vunpack.c.h.b16 %v341
  %v1969 = vunpack.c.l.b16 %v342
  %v1970 = vunpack.c.h.b16 %v342
  %v1971 = vunpack.c.l.b16 %v343
  %v1972 = vunpack.c.h.b16 %v343
  %v1973 = vunpack.c.l.b16 %v344
  %v1974 = vunpack.c.h.b16 %v344
  %v1975 = vunpack.c.l.b16 %v345
  %v1976 = vunpack.c.h.b16 %v345
  %v1977 = vunpack.c.l.b16 %v346
  %v1978 = vunpack.c.h.b16 %v346
  %v1979 = vunpack.c.l.b16 %v347
  %v1980 = vunpack.c.h.b16 %v347
  %v1981 = vunpack.c.l.b16 %v348
  %v1982 = vunpack.c.h.b16 %v348
  %v1983 = vunpack.c.l.b16 %v349
  %v1984 = vunpack.c.h.b16 %v349
  %v1985 = vunpack.c.l.b16 %v350
  %v1986 = vunpack.c.h.b16 %v350
  %v1987 = vunpack.c.l.b16 %v351
  %v1988 = vunpack.c.h.b16 %v351
  %v1989 = vunpack.c.l.b16 %v352
  %v1990 = vunpack.c.h.b16 %v352
  %v1991 = vunpack.c.l.b16 %v353
  %v1992 = vunpack.c.h.b16 %v353
  %v1993 = vunpack.c.l.b16 %v354
  %v1994 = vunpack.c.h.b16 %v354
  %v1995 = vunpack.c.l.b16 %v355
  %v1996 = vunpack.c.h.b16 %v355
  %v1997 = vunpack.c.l.b16 %v356
  %v1998 = vunpack.c.h.b16 %v356
  %v1999 = vunpack.c.l.b16 %v357
  %v2000 = vunpack.c.h.b16 %v357
  %v2001 = vunpack.c.l.b16 %v358
  %v2002 = vunpack.c.h.b16 %v358
  %v2003 = vunpack.c.l.b16 %v359
  %v2004 = vunpack.c.h.b16 %v359
  %v2005 = vunpack.c.l.b16 %v360
  %v2006 = vunpack.c.h.b16 %v360
  %v2007 = vunpack.c.l.b16 %v361
  %v2008 = vunpack.c.h.b16 %v361
  %v2009 = vunpack.c.l.b16 %v362
  %v2010 = vunpack.c.h.b16 %v362
  %v2011 = vunpack.c.l.b16 %v363
  %v2012 = vunpack.c.h.b16 %v363
  %v2013 = vunpack.c.l.b16 %v364
  %v2014 = vunpack.c.h.b16 %v364
  %v2015 = vunpack.c.l.b16 %v365
  %v2016 = vunpack.c.h.b16 %v365
  %v2017 = vunpack.c.l.b16 %v366
  %v2018 = vunpack.c.h.b16 %v366
  %v2019 = vunpack.c.l.b16 %v367
  %v2020 = vunpack.c.h.b16 %v367
  %v2021 = vunpack.c.l.b16 %v368
  %v2022 = vunpack.c.h.b16 %v368
  %v2023 = vunpack.c.l.b16 %v369
  %v2024 = vunpack.c.h.b16 %v369
  %v2025 = vunpack.c.l.b16 %v370
  %v2026 = vunpack.c.h.b16 %v370
  %v2027 = vunpack.c.l.b16 %v371
  %v2028 = vunpack.c.h.b16 %v371
  %v2029 = vunpack.c.l.b16 %v372
  %v2030 = vunpack.c.h.b16 %v372
  %v2031 = vunpack.c.l.b16 %v373
  %v2032 = vunpack.c.h.b16 %v373
  %v2033 = vunpack.c.l.b16 %v374
  %v2034 = vunpack.c.h.b16 %v374
  %v2035 = vunpack.c.l.b16 %v375
  %v2036 = vunpack.c.h.b16 %v375
  %v2037 = vunpack.c.l.b16 %v376
  %v2038 = vunpack.c.h.b16 %v376
  %v2039 = vunpack.c.l.b16 %v377
  %v2040 = vunpack.c.h.b16 %v377
  %v2041 = vunpack.c.l.b16 %v378
  %v2042 = vunpack.c.h.b16 %v378
  %v2043 = vunpack.c.l.b16 %v379
  %v2044 = vunpack.c.h.b16 %v379
  %v2045 = vunpack.c.l.b16 %v380
  %v2046 = vunpack.c.h.b16 %v380
  %v2047 = vunpack.c.l.b16 %v381
  %v2048 = vunpack.c.h.b16 %v381
  %v2049 = vunpack.c.l.b16 %v382
  %v2050 = vunpack.c.h.b16 %v382
  %v2051 = vunpack.c.l.b16 %v383
  %v2052 = vunpack.c.h.b16 %v383
  %v2053 = vunpack.c.l.b16 %v384
  %v2054 = vunpack.c.h.b16 %v384
  %v2055 = vunpack.c.l.b16 %v385
  %v2056 = vunpack.c.h.b16 %v385
  %v2057 = vunpack.c.l.b16 %v386
  %v2058 = vunpack.c.h.b16 %v386
  %v2059 = vunpack.c.l.b16 %v387
  %v2060 = vunpack.c.h.b16 %v387
  %v2061 = vunpack.c.l.b16 %v388
  %v2062 = vunpack.c.h.b16 %v388
  %v2063 = vunpack.c.l.b16 %v389
  %v2064 = vunpack.c.h.b16 %v389
  %v2065 = vunpack.c.l.b16 %v390
  %v2066 = vunpack.c.h.b16 %v390
  %v2067 = vunpack.c.l.b16 %v391
  %v2068 = vunpack.c.h.b16 %v391
  %v2069 = vunpack.c.l.b16 %v392
  %v2070 = vunpack.c.h.b16 %v392
  %v2071 = vunpack.c.l.b16 %v393
  %v2072 = vunpack.c.h.b16 %v393
  %v2073 = vunpack.c.l.b16 %v394
  %v2074 = vunpack.c.h.b16 %v394
  %v2075 = vunpack.c.l.b16 %v395
  %v2076 = vunpack.c.h.b16 %v395
  %v2077 = vunpack.c.l.b16 %v396
  %v2078 = vunpack.c.h.b16 %v396
  %v2079 = vunpack.c.l.b16 %v397
  %v2080 = vunpack.c.h.b16 %v397
  %v2081 = vunpack.c.l.b16 %v398
  %v2082 = vunpack.c.h.b16 %v398
  %v2083 = vunpack.c.l.b16 %v399
  %v2084 = vunpack.c.h.b16 %v399
  %v2085 = vunpack.c.l.b16 %v400
  %v2086 = vunpack.c.h.b16 %v400
  %v2087 = vunpack.c.l.b16 %v401
  %v2088 = vunpack.c.h.b16 %v401
  %v2089 = vunpack.c.l.b16 %v402
  %v2090 = vunpack.c.h.b16 %v402
  %v2091 = vunpack.c.l.b16 %v403
  %v2092 = vunpack.c.h.b16 %v403
  %v2093 = vunpack.c.l.b16 %v404
  %v2094 = vunpack.c.h.b16 %v404
  %v2095 = vunpack.c.l.b16 %v405
  %v2096 = vunpack.c.h.b16 %v405
  %v2097 = vunpack.c.l.b16 %v406
  %v2098 = vunpack.c.h.b16 %v406
  %v2099 = vunpack.c.l.b16 %v407
  %v2100 = vunpack.c.h.b16 %v407
  %v2101 = vunpack.c.l.b16 %v408
  %v2102 = vunpack.c.h.b16 %v408
  %v2103 = vunpack.c.l.b16 %v409
  %v2104 = vunpack.c.h.b16 %v409
  %v2105 = vunpack.c.l.b16 %v410
  %v2106 = vunpack.c.h.b16 %v410
  %v2107 = vunpack.c.l.b16 %v411
  %v2108 = vunpack.c.h.b16 %v411
  %v2109 = vunpack.c.l.b16 %v412
  %v2110 = vunpack.c.h.b16 %v412
  %v2111 = vunpack.c.l.b16 %v413
  %v2112 = vunpack.c.h.b16 %v413
  %v2113 = vunpack.c.l.b16 %v414
  %v2114 = vunpack.c.h.b16 %v414
  %v2115 = vunpack.c.l.b16 %v415
  %v2116 = vunpack.c.h.b16 %v415
  %v2117 = vunpack.c.l.b16 %v416
  %v2118 = vunpack.c.h.b16 %v416
  %v2119 = vunpack.c.l.b16 %v417
  %v2120 = vunpack.c.h.b16 %v417
  %v2121 = vunpack.c.l.b16 %v418
  %v2122 = vunpack.c.h.b16 %v418
  %v2123 = vunpack.c.l.b16 %v419
  %v2124 = vunpack.c.h.b16 %v419
  %v2125 = vunpack.c.l.b16 %v420
  %v2126 = vunpack.c.h.b16 %v420
  %v2127 = vunpack.c.l.b16 %v421
  %v2128 = vunpack.c.h.b16 %v421
  %v2129 = vunpack.c.l.b16 %v422
  %v2130 = vunpack.c.h.b16 %v422
  %v2131 = vunpack.c.l.b16 %v423
  %v2132 = vunpack.c.h.b16 %v423
  %v2133 = vunpack.c.l.b16 %v424
  %v2134 = vunpack.c.h.b16 %v424
  %v2135 = vunpack.c.l.b16 %v425
  %v2136 = vunpack.c.h.b16 %v425
  %v2137 = vunpack.c.l.b16 %v426
  %v2138 = vunpack.c.h.b16 %v426
  %v2139 = vunpack.c.l.b16 %v427
  %v2140 = vunpack.c.h.b16 %v427
  %v2141 = vunpack.c.l.b16 %v428
  %v2142 = vunpack.c.h.b16 %v428
  %v2143 = vunpack.c.l.b16 %v429
  %v2144 = vunpack.c.h.b16 %v429
  %v2145 = vunpack.c.l.b16 %v430
  %v2146 = vunpack.c.h.b16 %v430
  %v2147 = vunpack.c.l.b16 %v431
  %v2148 = vunpack.c.h.b16 %v431
  %v2149 = vunpack.c.l.b16 %v432
  %v2150 = vunpack.c.h.b16 %v432
  %v2151 = vunpack.c.l.b16 %v433
  %v2152 = vunpack.c.h.b16 %v433
  %v2153 = vunpack.c.l.b16 %v434
  %v2154 = vunpack.c.h.b16 %v434
  %v2155 = vunpack.c.l.b16 %v435
  %v2156 = vunpack.c.h.b16 %v435
  %v2157 = vunpack.c.l.b16 %v436
  %v2158 = vunpack.c.h.b16 %v436
  %v2159 = vunpack.c.l.b16 %v437
  %v2160 = vunpack.c.h.b16 %v437
  %v2161 = vunpack.c.l.b16 %v438
  %v2162 = vunpack.c.h.b16 %v438
  %v2163 = vunpack.c.l.b16 %v439
  %v2164 = vunpack.c.h.b16 %v439
  %v2165 = vunpack.c.l.b16 %v440
  %v2166 = vunpack.c.h.b16 %v440
  %v2167 = vunpack.c.l.b16 %v441
  %v2168 = vunpack.c.h.b16 %v441
  %v2169 = vunpack.c.l.b16 %v442
  %v2170 = vunpack.c.h.b16 %v442
  %v2171 = vunpack.c.l.b16 %v443
  %v2172 = vunpack.c.h.b16 %v443
  %v2173 = vunpack.c.l.b16 %v444
  %v2174 = vunpack.c.h.b16 %v444
  %v2175 = vunpack.c.l.b16 %v445
  %v2176 = vunpack.c.h.b16 %v445
  %v2177 = vunpack.c.l.b16 %v446
  %v2178 = vunpack.c.h.b16 %v446
  %v2179 = vunpack.c.l.b16 %v447
  %v2180 = vunpack.c.h.b16 %v447
  %v2181 = vunpack.c.l.b16 %v448
  %v2182 = vunpack.c.h.b16 %v448
  %v2183 = vunpack.c.l.b16 %v449
  %v2184 = vunpack.c.h.b16 %v449
  %v2185 = vunpack.c.l.b16 %v450
  %v2186 = vunpack.c.h.b16 %v450
  %v2187 = vunpack.c.l.b16 %v451
  %v2188 = vunpack.c.h.b16 %v451
  %v2189 = vunpack.c.l.b16 %v452
  %v2190 = vunpack.c.h.b16 %v452
  %v2191 = vunpack.c.l.b16 %v453
  %v2192 = vunpack.c.h.b16 %v453
  %v2193 = vunpack.c.l.b16 %v454
  %v2194 = vunpack.c.h.b16 %v454
  %v2195 = vunpack.c.l.b16 %v455
  %v2196 = vunpack.c.h.b16 %v455
  %v2197 = vunpack.c.l.b16 %v456
  %v2198 = vunpack.c.h.b16 %v456
  %v2199 = vunpack.c.l.b16 %v457
  %v2200 = vunpack.c.h.b16 %v457
  %v2201 = vunpack.c.l.b16 %v458
  %v2202 = vunpack.c.h.b16 %v458
  %v2203 = vunpack.c.l.b16 %v459
  %v2204 = vunpack.c.h.b16 %v459
  %v2205 = vunpack.c.l.b16 %v460
  %v2206 = vunpack.c.h.b16 %v460
  %v2207 = vunpack.c.l.b16 %v461
  %v2208 = vunpack.c.h.b16 %v461
  %v2209 = vunpack.c.l.b16 %v462
  %v2210 = vunpack.c.h.b16 %v462
  %v2211 = vunpack.c.l.b16 %v463
  %v2212 = vunpack.c.h.b16 %v463
  %v2213 = vunpack.c.l.b16 %v464
  %v2214 = vunpack.c.h.b16 %v464
  %v2215 = vunpack.c.l.b16 %v465
  %v2216 = vunpack.c.h.b16 %v465
  %v2217 = vunpack.c.l.b16 %v466
  %v2218 = vunpack.c.h.b16 %v466
  %v2219 = vunpack.c.l.b16 %v467
  %v2220 = vunpack.c.h.b16 %v467
  %v2221 = vunpack.c.l.b16 %v468
  %v2222 = vunpack.c.h.b16 %v468
  %v2223 = vunpack.c.l.b16 %v469
  %v2224 = vunpack.c.h.b16 %v469
  %v2225 = vunpack.c.l.b16 %v470
  %v2226 = vunpack.c.h.b16 %v470
  %v2227 = vunpack.c.l.b16 %v471
  %v2228 = vunpack.c.h.b16 %v471
  %v2229 = vunpack.c.l.b16 %v472
  %v2230 = vunpack.c.h.b16 %v472
  %v2231 = vunpack.c.l.b16 %v473
  %v2232 = vunpack.c.h.b16 %v473
  %v2233 = vunpack.c.l.b16 %v474
  %v2234 = vunpack.c.h.b16 %v474
  %v2235 = vunpack.c.l.b16 %v475
  %v2236 = vunpack.c.h.b16 %v475
  %v2237 = vunpack.c.l.b16 %v476
  %v2238 = vunpack.c.h.b16 %v476
  %v2239 = vunpack.c.l.b16 %v477
  %v2240 = vunpack.c.h.b16 %v477
  %v2241 = vunpack.c.l.b16 %v478
  %v2242 = vunpack.c.h.b16 %v478
  %v2243 = vunpack.c.l.b16 %v479
  %v2244 = vunpack.c.h.b16 %v479
  %v2245 = vunpack.c.l.b16 %v480
  %v2246 = vunpack.c.h.b16 %v480
  %v2247 = vunpack.c.l.b16 %v481
  %v2248 = vunpack.c.h.b16 %v481
  %v2249 = vunpack.c.l.b16 %v482
  %v2250 = vunpack.c.h.b16 %v482
  %v2251 = vunpack.c.l.b16 %v483
  %v2252 = vunpack.c.h.b16 %v483
  %v2253 = vunpack.c.l.b16 %v484
  %v2254 = vunpack.c.h.b16 %v484
  %v2255 = vunpack.c.l.b16 %v485
  %v2256 = vunpack.c.h.b16 %v485
  %v2257 = vunpack.c.l.b16 %v486
  %v2258 = vunpack.c.h.b16 %v486
  %v2259 = vunpack.c.l.b16 %v487
  %v2260 = vunpack.c.h.b16 %v487
  %v2261 = vunpack.c.l.b16 %v488
  %v2262 = vunpack.c.h.b16 %v488
  %v2263 = vunpack.c.l.b16 %v489
  %v2264 = vunpack.c.h.b16 %v489
  %v2265 = vunpack.c.l.b16 %v490
  %v2266 = vunpack.c.h.b16 %v490
  %v2267 = vunpack.c.l.b16 %v491
  %v2268 = vunpack.c.h.b16 %v491
  %v2269 = vunpack.c.l.b16 %v492
  %v2270 = vunpack.c.h.b16 %v492
  %v2271 = vunpack.c.l.b16 %v493
  %v2272 = vunpack.c.h.b16 %v493
  %v2273 = vunpack.c.l.b16 %v494
  %v2274 = vunpack.c.h.b16 %v494
  %v2275 = vunpack.c.l.b16 %v495
  %v2276 = vunpack.c.h.b16 %v495
  %v2277 = vunpack.c.l.b16 %v496
  %v2278 = vunpack.c.h.b16 %v496
  %v2279 = vunpack.c.l.b16 %v497
  %v2280 = vunpack.c.h.b16 %v497
  %v2281 = vunpack.c.l.b16 %v498
  %v2282 = vunpack.c.h.b16 %v498
  %v2283 = vunpack.c.l.b16 %v499
  %v2284 = vunpack.c.h.b16 %v499
  %v2285 = vunpack.c.l.b16 %v500
  %v2286 = vunpack.c.h.b16 %v500
  %v2287 = vunpack.c.l.b16 %v501
  %v2288 = vunpack.c.h.b16 %v501
  %v2289 = vunpack.c.l.b16 %v502
  %v2290 = vunpack.c.h.b16 %v502
  %v2291 = vunpack.c.l.b16 %v503
  %v2292 = vunpack.c.h.b16 %v503
  %v2293 = vunpack.c.l.b16 %v504
  %v2294 = vunpack.c.h.b16 %v504
  %v2295 = vunpack.c.l.b16 %v505
  %v2296 = vunpack.c.h.b16 %v505
  %v2297 = vunpack.c.l.b16 %v506
  %v2298 = vunpack.c.h.b16 %v506
  %v2299 = vunpack.c.l.b16 %v507
  %v2300 = vunpack.c.h.b16 %v507
  %v2301 = vunpack.c.l.b16 %v508
  %v2302 = vunpack.c.h.b16 %v508
  %v2303 = vunpack.c.l.b16 %v509
  %v2304 = vunpack.c.h.b16 %v509
  %v2305 = vunpack.c.l.b16 %v510
  %v2306 = vunpack.c.h.b16 %v510
  %v2307 = vunpack.c.l.b16 %v511
  %v2308 = vunpack.c.h.b16 %v511
  %v2309 = vunpack.c.l.b16 %v512
  %v2310 = vunpack.c.h.b16 %v512
  %v2311 = vunpack.c.l.b16 %v513
  %v2312 = vunpack.c.h.b16 %v513
  %v2313 = vunpack.c.l.b16 %v514
  %v2314 = vunpack.c.h.b16 %v514
  %v2315 = vunpack.c.l.b16 %v515
  %v2316 = vunpack.c.h.b16 %v515
  %v2317 = vunpack.c.l.b16 %v516
  %v2318 = vunpack.c.h.b16 %v516
  %v2319 = vunpack.c.l.b16 %v517
  %v2320 = vunpack.c.h.b16 %v517
  %v2321 = vunpack.c.l.b16 %v518
  %v2322 = vunpack.c.h.b16 %v518
  %v2323 = vunpack.c.l.b16 %v519
  %v2324 = vunpack.c.h.b16 %v519
  %v2325 = vunpack.c.l.b16 %v520
  %v2326 = vunpack.c.h.b16 %v520
  %v2327 = vunpack.c.l.b16 %v521
  %v2328 = vunpack.c.h.b16 %v521
  %v2329 = vunpack.c.l.b16 %v522
  %v2330 = vunpack.c.h.b16 %v522
  %v2331 = vunpack.c.l.b16 %v523
  %v2332 = vunpack.c.h.b16 %v523
  %v2333 = vunpack.c.l.b16 %v524
  %v2334 = vunpack.c.h.b16 %v524
  %v2335 = vunpack.c.l.b16 %v525
  %v2336 = vunpack.c.h.b16 %v525
  %v2337 = vunpack.c.l.b16 %v526
  %v2338 = vunpack.c.h.b16 %v526
  %v2339 = vunpack.c.l.b16 %v527
  %v2340 = vunpack.c.h.b16 %v527
  %v2341 = vunpack.c.l.b16 %v528
  %v2342 = vunpack.c.h.b16 %v528
  %v2343 = vunpack.c.l.b16 %v529
  %v2344 = vunpack.c.h.b16 %v529
  %v2345 = vunpack.c.l.b16 %v530
  %v2346 = vunpack.c.h.b16 %v530
  %v2347 = vunpack.c.l.b16 %v531
  %v2348 = vunpack.c.h.b16 %v531
  %v2349 = vunpack.c.l.b16 %v532
  %v2350 = vunpack.c.h.b16 %v532
  %v2351 = vunpack.c.l.b16 %v533
  %v2352 = vunpack.c.h.b16 %v533
  %v2353 = vunpack.c.l.b16 %v534
  %v2354 = vunpack.c.h.b16 %v534
  %v2355 = vunpack.c.l.b16 %v535
  %v2356 = vunpack.c.h.b16 %v535
  %v2357 = vunpack.c.l.b16 %v536
  %v2358 = vunpack.c.h.b16 %v536
  %v2359 = vunpack.c.l.b16 %v537
  %v2360 = vunpack.c.h.b16 %v537
  %v2361 = vunpack.c.l.b16 %v538
  %v2362 = vunpack.c.h.b16 %v538
  %v2363 = vunpack.c.l.b16 %v539
  %v2364 = vunpack.c.h.b16 %v539
  %v2365 = vunpack.c.l.b16 %v540
  %v2366 = vunpack.c.h.b16 %v540
  %v2367 = vunpack.c.l.b16 %v541
  %v2368 = vunpack.c.h.b16 %v541
  %v2369 = vunpack.c.l.b16 %v542
  %v2370 = vunpack.c.h.b16 %v542
  %v2371 = vunpack.c.l.b16 %v543
  %v2372 = vunpack.c.h.b16 %v543
  %v2373 = vunpack.c.l.b16 %v544
  %v2374 = vunpack.c.h.b16 %v544
  %v2375 = vunpack.c.l.b16 %v545
  %v2376 = vunpack.c.h.b16 %v545
  %v2377 = vunpack.c.l.b16 %v546
  %v2378 = vunpack.c.h.b16 %v546
  %v2379 = vunpack.c.l.b16 %v547
  %v2380 = vunpack.c.h.b16 %v547
  %v2381 = vunpack.c.l.b16 %v548
  %v2382 = vunpack.c.h.b16 %v548
  %v2383 = vunpack.c.l.b16 %v549
  %v2384 = vunpack.c.h.b16 %v549
  %v2385 = vunpack.c.l.b16 %v550
  %v2386 = vunpack.c.h.b16 %v550
  %v2387 = vunpack.c.l.b16 %v551
  %v2388 = vunpack.c.h.b16 %v551
  %v2389 = vunpack.c.l.b16 %v552
  %v2390 = vunpack.c.h.b16 %v552
  %v2391 = vunpack.c.l.b16 %v553
  %v2392 = vunpack.c.h.b16 %v553
  %v2393 = vunpack.c.l.b16 %v554
  %v2394 = vunpack.c.h.b16 %v554
  %v2395 = vunpack.c.l.b16 %v555
  %v2396 = vunpack.c.h.b16 %v555
  %v2397 = vunpack.c.l.b16 %v556
  %v2398 = vunpack.c.h.b16 %v556
  %v2399 = vunpack.c.l.b16 %v557
  %v2400 = vunpack.c.h.b16 %v557
  %v2401 = vunpack.c.l.b16 %v558
  %v2402 = vunpack.c.h.b16 %v558
  %v2403 = vunpack.c.l.b16 %v559
  %v2404 = vunpack.c.h.b16 %v559
  %v2405 = vunpack.c.l.b16 %v560
  %v2406 = vunpack.c.h.b16 %v560
  %v2407 = vunpack.c.l.b16 %v561
  %v2408 = vunpack.c.h.b16 %v561
  %v2409 = vunpack.c.l.b16 %v562
  %v2410 = vunpack.c.h.b16 %v562
  %v2411 = vunpack.c.l.b16 %v563
  %v2412 = vunpack.c.h.b16 %v563
  %v2413 = vunpack.c.l.b16 %v564
  %v2414 = vunpack.c.h.b16 %v564
  %v2415 = vunpack.c.l.b16 %v565
  %v2416 = vunpack.c.h.b16 %v565
  %v2417 = vunpack.c.l.b16 %v566
  %v2418 = vunpack.c.h.b16 %v566
  %v2419 = vunpack.c.l.b16 %v567
  %v2420 = vunpack.c.h.b16 %v567
  %v2421 = vunpack.c.l.b16 %v568
  %v2422 = vunpack.c.h.b16 %v568
  %v2423 = vunpack.c.l.b16 %v569
  %v2424 = vunpack.c.h.b16 %v569
  %v2425 = vunpack.c.l.b16 %v570
  %v2426 = vunpack.c.h.b16 %v570
  %v2427 = vunpack.c.l.b16 %v571
  %v2428 = vunpack.c.h.b16 %v571
  %v2429 = vunpack.c.l.b16 %v572
  %v2430 = vunpack.c.h.b16 %v572
  %v2431 = vunpack.c.l.b16 %v573
  %v2432 = vunpack.c.h.b16 %v573
  %v2433 = vunpack.c.l.b16 %v574
  %v2434 = vunpack.c.h.b16 %v574
  %v2435 = vunpack.c.l.b16 %v575
  %v2436 = vunpack.c.h.b16 %v575
  %v2437 = vunpack.c.l.b16 %v576
  %v2438 = vunpack.c.h.b16 %v576
  %v2439 = vunpack.c.l.b16 %v577
  %v2440 = vunpack.c.h.b16 %v577
  %v2441 = vunpack.c.l.b16 %v578
  %v2442 = vunpack.c.h.b16 %v578
  %v2443 = vunpack.c.l.b16 %v579
  %v2444 = vunpack.c.h.b16 %v579
  %v2445 = vunpack.c.l.b16 %v580
  %v2446 = vunpack.c.h.b16 %v580
  %v2447 = vunpack.c.l.b16 %v581
  %v2448 = vunpack.c.h.b16 %v581
  %v2449 = vunpack.c.l.b16 %v582
  %v2450 = vunpack.c.h.b16 %v582
  %v2451 = vunpack.c.l.b16 %v583
  %v2452 = vunpack.c.h.b16 %v583
  %v2453 = vunpack.c.l.b16 %v584
  %v2454 = vunpack.c.h.b16 %v584
  %v2455 = vunpack.c.l.b16 %v585
  %v2456 = vunpack.c.h.b16 %v585
  %v2457 = vunpack.c.l.b16 %v586
  %v2458 = vunpack.c.h.b16 %v586
  %v2459 = vunpack.c.l.b16 %v587
  %v2460 = vunpack.c.h.b16 %v587
  %v2461 = vunpack.c.l.b16 %v588
  %v2462 = vunpack.c.h.b16 %v588
  %v2463 = vunpack.c.l.b16 %v589
  %v2464 = vunpack.c.h.b16 %v589
  %v2465 = vunpack.c.l.b16 %v590
  %v2466 = vunpack.c.h.b16 %v590
  %v2467 = vunpack.c.l.b16 %v591
  %v2468 = vunpack.c.h.b16 %v591
  %v2469 = vunpack.c.l.b16 %v592
  %v2470 = vunpack.c.h.b16 %v592
  %v2471 = vunpack.c.l.b16 %v593
  %v2472 = vunpack.c.h.b16 %v593
  %v2473 = vunpack.c.l.b16 %v594
  %v2474 = vunpack.c.h.b16 %v594
  %v2475 = vunpack.c.l.b16 %v595
  %v2476 = vunpack.c.h.b16 %v595
  %v2477 = vunpack.c.l.b16 %v596
  %v2478 = vunpack.c.h.b16 %v596
  %v2479 = vunpack.c.l.b16 %v597
  %v2480 = vunpack.c.h.b16 %v597
  %v2481 = vunpack.c.l.b16 %v598
  %v2482 = vunpack.c.h.b16 %v598
  %v2483 = vunpack.c.l.b16 %v599
  %v2484 = vunpack.c.h.b16 %v599
  %v2485 = vunpack.c.l.b16 %v600
  %v2486 = vunpack.c.h.b16 %v600
  %v2487 = vunpack.c.l.b16 %v601
  %v2488 = vunpack.c.h.b16 %v601
  %v2489 = vunpack.c.l.b16 %v602
  %v2490 = vunpack.c.h.b16 %v602
  %v2491 = vunpack.c.l.b16 %v603
  %v2492 = vunpack.c.h.b16 %v603
  %v2493 = vunpack.c.l.b16 %v604
  %v2494 = vunpack.c.h.b16 %v604
  %v2495 = vunpack.c.l.b16 %v605
  %v2496 = vunpack.c.h.b16 %v605
  %v2497 = vpack.c.b16 %v1349, %v1345
  %v2498 = vpack.c.b16 %v1350, %v1346
  %v2499 = vpack.c.b16 %v1351, %v1347
  %v2500 = vpack.c.b16 %v1352, %v1348
  %v2501 = vpack.c.b16 %v1357, %v1353
  %v2502 = vpack.c.b16 %v1358, %v1354
  %v2503 = vpack.c.b16 %v1359, %v1355
  %v2504 = vpack.c.b16 %v1360, %v1356
  %v2505 = vpack.c.b16 %v1365, %v1361
  %v2506 = vpack.c.b16 %v1366, %v1362
  %v2507 = vpack.c.b16 %v1367, %v1363
  %v2508 = vpack.c.b16 %v1368, %v1364
  %v2509 = vpack.c.b16 %v1373, %v1369
  %v2510 = vpack.c.b16 %v1374, %v1370
  %v2511 = vpack.c.b16 %v1375, %v1371
  %v2512 = vpack.c.b16 %v1376, %v1372
  %v2513 = vpack.c.b16 %v1381, %v1377
  %v2514 = vpack.c.b16 %v1382, %v1378
  %v2515 = vpack.c.b16 %v1383, %v1379
  %v2516 = vpack.c.b16 %v1384, %v1380
  %v2517 = vpack.c.b16 %v1389, %v1385
  %v2518 = vpack.c.b16 %v1390, %v1386
  %v2519 = vpack.c.b16 %v1391, %v1387
  %v2520 = vpack.c.b16 %v1392, %v1388
  %v2521 = vpack.c.b16 %v1397, %v1393
  %v2522 = vpack.c.b16 %v1398, %v1394
  %v2523 = vpack.c.b16 %v1399, %v1395
  %v2524 = vpack.c.b16 %v1400, %v1396
  %v2525 = vpack.c.b16 %v1405, %v1401
  %v2526 = vpack.c.b16 %v1406, %v1402
  %v2527 = vpack.c.b16 %v1407, %v1403
  %v2528 = vpack.c.b16 %v1408, %v1404
  %v2529 = vpack.c.b16 %v1413, %v1409
  %v2530 = vpack.c.b16 %v1414, %v1410
  %v2531 = vpack.c.b16 %v1415, %v1411
  %v2532 = vpack.c.b16 %v1416, %v1412
  %v2533 = vpack.c.b16 %v1421, %v1417
  %v2534 = vpack.c.b16 %v1422, %v1418
  %v2535 = vpack.c.b16 %v1423, %v1419
  %v2536 = vpack.c.b16 %v1424, %v1420
  %v2537 = vpack.c.b16 %v1429, %v1425
  %v2538 = vpack.c.b16 %v1430, %v1426
  %v2539 = vpack.c.b16 %v1431, %v1427
  %v2540 = vpack.c.b16 %v1432, %v1428
  %v2541 = vpack.c.b16 %v1437, %v1433
  %v2542 = vpack.c.b16 %v1438, %v1434
  %v2543 = vpack.c.b16 %v1439, %v1435
  %v2544 = vpack.c.b16 %v1440, %v1436
  %v2545 = vpack.c.b16 %v1445, %v1441
  %v2546 = vpack.c.b16 %v1446, %v1442
  %v2547 = vpack.c.b16 %v1447, %v1443
  %v2548 = vpack.c.b16 %v1448, %v1444
  %v2549 = vpack.c.b16 %v1453, %v1449
  %v2550 = vpack.c.b16 %v1454, %v1450
  %v2551 = vpack.c.b16 %v1455, %v1451
  %v2552 = vpack.c.b16 %v1456, %v1452
  %v2553 = vpack.c.b16 %v1461, %v1457
  %v2554 = vpack.c.b16 %v1462, %v1458
  %v2555 = vpack.c.b16 %v1463, %v1459
  %v2556 = vpack.c.b16 %v1464, %v1460
  %v2557 = vpack.c.b16 %v1469, %v1465
  %v2558 = vpack.c.b16 %v1470, %v1466
  %v2559 = vpack.c.b16 %v1471, %v1467
  %v2560 = vpack.c.b16 %v1472, %v1468
  %v2561 = vpack.c.b16 %v1477, %v1473
  %v2562 = vpack.c.b16 %v1478, %v1474
  %v2563 = vpack.c.b16 %v1479, %v1475
  %v2564 = vpack.c.b16 %v1480, %v1476
  %v2565 = vpack.c.b16 %v1485, %v1481
  %v2566 = vpack.c.b16 %v1486, %v1482
  %v2567 = vpack.c.b16 %v1487, %v1483
  %v2568 = vpack.c.b16 %v1488, %v1484
  %v2569 = vpack.c.b16 %v1493, %v1489
  %v2570 = vpack.c.b16 %v1494, %v1490
  %v2571 = vpack.c.b16 %v1495, %v1491
  %v2572 = vpack.c.b16 %v1496, %v1492
  %v2573 = vpack.c.b16 %v1501, %v1497
  %v2574 = vpack.c.b16 %v1502, %v1498
  %v2575 = vpack.c.b16 %v1503, %v1499
  %v2576 = vpack.c.b16 %v1504, %v1500
  %v2577 = vpack.c.b16 %v1509, %v1505
  %v2578 = vpack.c.b16 %v1510, %v1506
  %v2579 = vpack.c.b16 %v1511, %v1507
  %v2580 = vpack.c.b16 %v1512, %v1508
  %v2581 = vpack.c.b16 %v1517, %v1513
  %v2582 = vpack.c.b16 %v1518, %v1514
  %v2583 = vpack.c.b16 %v1519, %v1515
  %v2584 = vpack.c.b16 %v1520, %v1516
  %v2585 = vpack.c.b16 %v1525, %v1521
  %v2586 = vpack.c.b16 %v1526, %v1522
  %v2587 = vpack.c.b16 %v1527, %v1523
  %v2588 = vpack.c.b16 %v1528, %v1524
  %v2589 = vpack.c.b16 %v1533, %v1529
  %v2590 = vpack.c.b16 %v1534, %v1530
  %v2591 = vpack.c.b16 %v1535, %v1531
  %v2592 = vpack.c.b16 %v1536, %v1532
  %v2593 = vpack.c.b16 %v1541, %v1537
  %v2594 = vpack.c.b16 %v1542, %v1538
  %v2595 = vpack.c.b16 %v1543, %v1539
  %v2596 = vpack.c.b16 %v1544, %v1540
  %v2597 = vpack.c.b16 %v1549, %v1545
  %v2598 = vpack.c.b16 %v1550, %v1546
  %v2599 = vpack.c.b16 %v1551, %v1547
  %v2600 = vpack.c.b16 %v1552, %v1548
  %v2601 = vpack.c.b16 %v1557, %v1553
  %v2602 = vpack.c.b16 %v1558, %v1554
  %v2603 = vpack.c.b16 %v1559, %v1555
  %v2604 = vpack.c.b16 %v1560, %v1556
  %v2605 = vpack.c.b16 %v1565, %v1561
  %v2606 = vpack.c.b16 %v1566, %v1562
  %v2607 = vpack.c.b16 %v1567, %v1563
  %v2608 = vpack.c.b16 %v1568, %v1564
  %v2609 = vpack.c.b16 %v1573, %v1569
  %v2610 = vpack.c.b16 %v1574, %v1570
  %v2611 = vpack.c.b16 %v1575, %v1571
  %v2612 = vpack.c.b16 %v1576, %v1572
  %v2613 = vpack.c.b16 %v1581, %v1577
  %v2614 = vpack.c.b16 %v1582, %v1578
  %v2615 = vpack.c.b16 %v1583, %v1579
  %v2616 = vpack.c.b16 %v1584, %v1580
  %v2617 = vpack.c.b16 %v1589, %v1585
  %v2618 = vpack.c.b16 %v1590, %v1586
  %v2619 = vpack.c.b16 %v1591, %v1587
  %v2620 = vpack.c.b16 %v1592, %v1588
  %v2621 = vpack.c.b16 %v1597, %v1593
  %v2622 = vpack.c.b16 %v1598, %v1594
  %v2623 = vpack.c.b16 %v1599, %v1595
  %v2624 = vpack.c.b16 %v1600, %v1596
  %v2625 = vpack.c.b16 %v1605, %v1601
  %v2626 = vpack.c.b16 %v1606, %v1602
  %v2627 = vpack.c.b16 %v1607, %v1603
  %v2628 = vpack.c.b16 %v1608, %v1604
  %v2629 = vpack.c.b16 %v1613, %v1609
  %v2630 = vpack.c.b16 %v1614, %v1610
  %v2631 = vpack.c.b16 %v1615, %v1611
  %v2632 = vpack.c.b16 %v1616, %v1612
  %v2633 = vpack.c.b16 %v1621, %v1617
  %v2634 = vpack.c.b16 %v1622, %v1618
  %v2635 = vpack.c.b16 %v1623, %v1619
  %v2636 = vpack.c.b16 %v1624, %v1620
  %v2637 = vpack.c.b16 %v1629, %v1625
  %v2638 = vpack.c.b16 %v1630, %v1626
  %v2639 = vpack.c.b16 %v1631, %v1627
  %v2640 = vpack.c.b16 %v1632, %v1628
  %v2641 = vpack.c.b16 %v1637, %v1633
  %v2642 = vpack.c.b16 %v1638, %v1634
  %v2643 = vpack.c.b16 %v1639, %v1635
  %v2644 = vpack.c.b16 %v1640, %v1636
  %v2645 = vpack.c.b16 %v1645, %v1641
  %v2646 = vpack.c.b16 %v1646, %v1642
  %v2647 = vpack.c.b16 %v1647, %v1643
  %v2648 = vpack.c.b16 %v1648, %v1644
  %v2649 = vpack.c.b16 %v1653, %v1649
  %v2650 = vpack.c.b16 %v1654, %v1650
  %v2651 = vpack.c.b16 %v1655, %v1651
  %v2652 = vpack.c.b16 %v1656, %v1652
  %v2653 = vpack.c.b16 %v1661, %v1657
  %v2654 = vpack.c.b16 %v1662, %v1658
  %v2655 = vpack.c.b16 %v1663, %v1659
  %v2656 = vpack.c.b16 %v1664, %v1660
  %v2657 = vpack.c.b16 %v1669, %v1665
  %v2658 = vpack.c.b16 %v1670, %v1666
  %v2659 = vpack.c.b16 %v1671, %v1667
  %v2660 = vpack.c.b16 %v1672, %v1668
  %v2661 = vpack.c.b16 %v1677, %v1673
  %v2662 = vpack.c.b16 %v1678, %v1674
  %v2663 = vpack.c.b16 %v1679, %v1675
  %v2664 = vpack.c.b16 %v1680, %v1676
  %v2665 = vpack.c.b16 %v1685, %v1681
  %v2666 = vpack.c.b16 %v1686, %v1682
  %v2667 = vpack.c.b16 %v1687, %v1683
  %v2668 = vpack.c.b16 %v1688, %v1684
  %v2669 = vpack.c.b16 %v1693, %v1689
  %v2670 = vpack.c.b16 %v1694, %v1690
  %v2671 = vpack.c.b16 %v1695, %v1691
  %v2672 = vpack.c.b16 %v1696, %v1692
  %v2673 = vpack.c.b16 %v1701, %v1697
  %v2674 = vpack.c.b16 %v1702, %v1698
  %v2675 = vpack.c.b16 %v1703, %v1699
  %v2676 = vpack.c.b16 %v1704, %v1700
  %v2677 = vpack.c.b16 %v1709, %v1705
  %v2678 = vpack.c.b16 %v1710, %v1706
  %v2679 = vpack.c.b16 %v1711, %v1707
  %v2680 = vpack.c.b16 %v1712, %v1708
  %v2681 = vpack.c.b16 %v1717, %v1713
  %v2682 = vpack.c.b16 %v1718, %v1714
  %v2683 = vpack.c.b16 %v1719, %v1715
  %v2684 = vpack.c.b16 %v1720, %v1716
  %v2685 = vpack.c.b16 %v1725, %v1721
  %v2686 = vpack.c.b16 %v1726, %v1722
  %v2687 = vpack.c.b16 %v1727, %v1723
  %v2688 = vpack.c.b16 %v1728, %v1724
  %v2689 = vpack.c.b16 %v1733, %v1729
  %v2690 = vpack.c.b16 %v1734, %v1730
  %v2691 = vpack.c.b16 %v1735, %v1731
  %v2692 = vpack.c.b16 %v1736, %v1732
  %v2693 = vpack.c.b16 %v1741, %v1737
  %v2694 = vpack.c.b16 %v1742, %v1738
  %v2695 = vpack.c.b16 %v1743, %v1739
  %v2696 = vpack.c.b16 %v1744, %v1740
  %v2697 = vpack.c.b16 %v1749, %v1745
  %v2698 = vpack.c.b16 %v1750, %v1746
  %v2699 = vpack.c.b16 %v1751, %v1747
  %v2700 = vpack.c.b16 %v1752, %v1748
  %v2701 = vpack.c.b16 %v1757, %v1753
  %v2702 = vpack.c.b16 %v1758, %v1754
  %v2703 = vpack.c.b16 %v1759, %v1755
  %v2704 = vpack.c.b16 %v1760, %v1756
  %v2705 = vpack.c.b16 %v1765, %v1761
  %v2706 = vpack.c.b16 %v1766, %v1762
  %v2707 = vpack.c.b16 %v1767, %v1763
  %v2708 = vpack.c.b16 %v1768, %v1764
  %v2709 = vpack.c.b16 %v1773, %v1769
  %v2710 = vpack.c.b16 %v1774, %v1770
  %v2711 = vpack.c.b16 %v1775, %v1771
  %v2712 = vpack.c.b16 %v1776, %v1772
  %v2713 = vpack.c.b16 %v1781, %v1777
  %v2714 = vpack.c.b16 %v1782, %v1778
  %v2715 = vpack.c.b16 %v1783, %v1779
  %v2716 = vpack.c.b16 %v1784, %v1780
  %v2717 = vpack.c.b16 %v1789, %v1785
  %v2718 = vpack.c.b16 %v1790, %v1786
  %v2719 = vpack.c.b16 %v1791, %v1787
  %v2720 = vpack.c.b16 %v1792, %v1788
  %v2721 = vpack.c.b16 %v1797, %v1793
  %v2722 = vpack.c.b16 %v1798, %v1794
  %v2723 = vpack.c.b16 %v1799, %v1795
  %v2724 = vpack.c.b16 %v1800, %v1796
  %v2725 = vpack.c.b16 %v1805, %v1801
  %v2726 = vpack.c.b16 %v1806, %v1802
  %v2727 = vpack.c.b16 %v1807, %v1803
  %v2728 = vpack.c.b16 %v1808, %v1804
  %v2729 = vpack.c.b16 %v1813, %v1809
  %v2730 = vpack.c.b16 %v1814, %v1810
  %v2731 = vpack.c.b16 %v1815, %v1811
  %v2732 = vpack.c.b16 %v1816, %v1812
  %v2733 = vpack.c.b16 %v1821, %v1817
  %v2734 = vpack.c.b16 %v1822, %v1818
  %v2735 = vpack.c.b16 %v1823, %v1819
  %v2736 = vpack.c.b16 %v1824, %v1820
  %v2737 = vpack.c.b16 %v1829, %v1825
  %v2738 = vpack.c.b16 %v1830, %v1826
  %v2739 = vpack.c.b16 %v1831, %v1827
  %v2740 = vpack.c.b16 %v1832, %v1828
  %v2741 = vpack.c.b16 %v1837, %v1833
  %v2742 = vpack.c.b16 %v1838, %v1834
  %v2743 = vpack.c.b16 %v1839, %v1835
  %v2744 = vpack.c.b16 %v1840, %v1836
  %v2745 = vpack.c.b16 %v1845, %v1841
  %v2746 = vpack.c.b16 %v1846, %v1842
  %v2747 = vpack.c.b16 %v1847, %v1843
  %v2748 = vpack.c.b16 %v1848, %v1844
  %v2749 = vpack.c.b16 %v1853, %v1849
  %v2750 = vpack.c.b16 %v1854, %v1850
  %v2751 = vpack.c.b16 %v1855, %v1851
  %v2752 = vpack.c.b16 %v1856, %v1852
  %v2753 = vpack.c.b16 %v1861, %v1857
  %v2754 = vpack.c.b16 %v1862, %v1858
  %v2755 = vpack.c.b16 %v1863, %v1859
  %v2756 = vpack.c.b16 %v1864, %v1860
  %v2757 = vpack.c.b16 %v1869, %v1865
  %v2758 = vpack.c.b16 %v1870, %v1866
  %v2759 = vpack.c.b16 %v1871, %v1867
  %v2760 = vpack.c.b16 %v1872, %v1868
  %v2761 = vpack.c.b16 %v1877, %v1873
  %v2762 = vpack.c.b16 %v1878, %v1874
  %v2763 = vpack.c.b16 %v1879, %v1875
  %v2764 = vpack.c.b16 %v1880, %v1876
  %v2765 = vpack.c.b16 %v1885, %v1881
  %v2766 = vpack.c.b16 %v1886, %v1882
  %v2767 = vpack.c.b16 %v1887, %v1883
  %v2768 = vpack.c.b16 %v1888, %v1884
  %v2769 = vpack.c.b16 %v1893, %v1889
  %v2770 = vpack.c.b16 %v1894, %v1890
  %v2771 = vpack.c.b16 %v1895, %v1891
  %v2772 = vpack.c.b16 %v1896, %v1892
  %v2773 = vpack.c.b16 %v1901, %v1897
  %v2774 = vpack.c.b16 %v1902, %v1898
  %v2775 = vpack.c.b16 %v1903, %v1899
  %v2776 = vpack.c.b16 %v1904, %v1900
  %v2777 = vpack.c.b16 %v1909, %v1905
  %v2778 = vpack.c.b16 %v1910, %v1906
  %v2779 = vpack.c.b16 %v1911, %v1907
  %v2780 = vpack.c.b16 %v1912, %v1908
  %v2781 = vpack.c.b16 %v1917, %v1913
  %v2782 = vpack.c.b16 %v1918, %v1914
  %v2783 = vpack.c.b16 %v1919, %v1915
  %v2784 = vpack.c.b16 %v1920, %v1916
  %v2785 = vpack.c.b16 %v1925, %v1921
  %v2786 = vpack.c.b16 %v1926, %v1922
  %v2787 = vpack.c.b16 %v1927, %v1923
  %v2788 = vpack.c.b16 %v1928, %v1924
  %v2789 = vpack.c.b16 %v1933, %v1929
  %v2790 = vpack.c.b16 %v1934, %v1930
  %v2791 = vpack.c.b16 %v1935, %v1931
  %v2792 = vpack.c.b16 %v1936, %v1932
  %v2793 = vpack.c.b16 %v1941, %v1937
  %v2794 = vpack.c.b16 %v1942, %v1938
  %v2795 = vpack.c.b16 %v1943, %v1939
  %v2796 = vpack.c.b16 %v1944, %v1940
  %v2797 = vpack.c.b16 %v1949, %v1945
  %v2798 = vpack.c.b16 %v1950, %v1946
  %v2799 = vpack.c.b16 %v1951, %v1947
  %v2800 = vpack.c.b16 %v1952, %v1948
  %v2801 = vpack.c.b16 %v1957, %v1953
  %v2802 = vpack.c.b16 %v1958, %v1954
  %v2803 = vpack.c.b16 %v1959, %v1955
  %v2804 = vpack.c.b16 %v1960, %v1956
  %v2805 = vpack.c.b16 %v1965, %v1961
  %v2806 = vpack.c.b16 %v1966, %v1962
  %v2807 = vpack.c.b16 %v1967, %v1963
  %v2808 = vpack.c.b16 %v1968, %v1964
  %v2809 = vpack.c.b16 %v1973, %v1969
  %v2810 = vpack.c.b16 %v1974, %v1970
  %v2811 = vpack.c.b16 %v1975, %v1971
  %v2812 = vpack.c.b16 %v1976, %v1972
  %v2813 = vpack.c.b16 %v1981, %v1977
  %v2814 = vpack.c.b16 %v1982, %v1978
  %v2815 = vpack.c.b16 %v1983, %v1979
  %v2816 = vpack.c.b16 %v1984, %v1980
  %v2817 = vpack.c.b16 %v1989, %v1985
  %v2818 = vpack.c.b16 %v1990, %v1986
  %v2819 = vpack.c.b16 %v1991, %v1987
  %v2820 = vpack.c.b16 %v1992, %v1988
  %v2821 = vpack.c.b16 %v1997, %v1993
  %v2822 = vpack.c.b16 %v1998, %v1994
  %v2823 = vpack.c.b16 %v1999, %v1995
  %v2824 = vpack.c.b16 %v2000, %v1996
  %v2825 = vpack.c.b16 %v2005, %v2001
  %v2826 = vpack.c.b16 %v2006, %v2002
  %v2827 = vpack.c.b16 %v2007, %v2003
  %v2828 = vpack.c.b16 %v2008, %v2004
  %v2829 = vpack.c.b16 %v2013, %v2009
  %v2830 = vpack.c.b16 %v2014, %v2010
  %v2831 = vpack.c.b16 %v2015, %v2011
  %v2832 = vpack.c.b16 %v2016, %v2012
  %v2833 = vpack.c.b16 %v2021, %v2017
  %v2834 = vpack.c.b16 %v2022, %v2018
  %v2835 = vpack.c.b16 %v2023, %v2019
  %v2836 = vpack.c.b16 %v2024, %v2020
  %v2837 = vpack.c.b16 %v2029, %v2025
  %v2838 = vpack.c.b16 %v2030, %v2026
  %v2839 = vpack.c.b16 %v2031, %v2027
  %v2840 = vpack.c.b16 %v2032, %v2028
  %v2841 = vpack.c.b16 %v2037, %v2033
  %v2842 = vpack.c.b16 %v2038, %v2034
  %v2843 = vpack.c.b16 %v2039, %v2035
  %v2844 = vpack.c.b16 %v2040, %v2036
  %v2845 = vpack.c.b16 %v2045, %v2041
  %v2846 = vpack.c.b16 %v2046, %v2042
  %v2847 = vpack.c.b16 %v2047, %v2043
  %v2848 = vpack.c.b16 %v2048, %v2044
  %v2849 = vpack.c.b16 %v2053, %v2049
  %v2850 = vpack.c.b16 %v2054, %v2050
  %v2851 = vpack.c.b16 %v2055, %v2051
  %v2852 = vpack.c.b16 %v2056, %v2052
  %v2853 = vpack.c.b16 %v2061, %v2057
  %v2854 = vpack.c.b16 %v2062, %v2058
  %v2855 = vpack.c.b16 %v2063, %v2059
  %v2856 = vpack.c.b16 %v2064, %v2060
  %v2857 = vpack.c.b16 %v2069, %v2065
  %v2858 = vpack.c.b16 %v2070, %v2066
  %v2859 = vpack.c.b16 %v2071, %v2067
  %v2860 = vpack.c.b16 %v2072, %v2068
  %v2861 = vpack.c.b16 %v2077, %v2073
  %v2862 = vpack.c.b16 %v2078, %v2074
  %v2863 = vpack.c.b16 %v2079, %v2075
  %v2864 = vpack.c.b16 %v2080, %v2076
  %v2865 = vpack.c.b16 %v2085, %v2081
  %v2866 = vpack.c.b16 %v2086, %v2082
  %v2867 = vpack.c.b16 %v2087, %v2083
  %v2868 = vpack.c.b16 %v2088, %v2084
  %v2869 = vpack.c.b16 %v2093, %v2089
  %v2870 = vpack.c.b16 %v2094, %v2090
  %v2871 = vpack.c.b16 %v2095, %v2091
  %v2872 = vpack.c.b16 %v2096, %v2092
  %v2873 = vpack.c.b16 %v2101, %v2097
  %v2874 = vpack.c.b16 %v2102, %v2098
  %v2875 = vpack.c.b16 %v2103, %v2099
  %v2876 = vpack.c.b16 %v2104, %v2100
  %v2877 = vpack.c.b16 %v2109, %v2105
  %v2878 = vpack.c.b16 %v2110, %v2106
  %v2879 = vpack.c.b16 %v2111, %v2107
  %v2880 = vpack.c.b16 %v2112, %v2108
  %v2881 = vpack.c.b16 %v2117, %v2113
  %v2882 = vpack.c.b16 %v2118, %v2114
  %v2883 = vpack.c.b16 %v2119, %v2115
  %v2884 = vpack.c.b16 %v2120, %v2116
  %v2885 = vpack.c.b16 %v2125, %v2121
  %v2886 = vpack.c.b16 %v2126, %v2122
  %v2887 = vpack.c.b16 %v2127, %v2123
  %v2888 = vpack.c.b16 %v2128, %v2124
  %v2889 = vpack.c.b16 %v2133, %v2129
  %v2890 = vpack.c.b16 %v2134, %v2130
  %v2891 = vpack.c.b16 %v2135, %v2131
  %v2892 = vpack.c.b16 %v2136, %v2132
  %v2893 = vpack.c.b16 %v2141, %v2137
  %v2894 = vpack.c.b16 %v2142, %v2138
  %v2895 = vpack.c.b16 %v2143, %v2139
  %v2896 = vpack.c.b16 %v2144, %v2140
  %v2897 = vpack.c.b16 %v2149, %v2145
  %v2898 = vpack.c.b16 %v2150, %v2146
  %v2899 = vpack.c.b16 %v2151, %v2147
  %v2900 = vpack.c.b16 %v2152, %v2148
  %v2901 = vpack.c.b16 %v2157, %v2153
  %v2902 = vpack.c.b16 %v2158, %v2154
  %v2903 = vpack.c.b16 %v2159, %v2155
  %v2904 = vpack.c.b16 %v2160, %v2156
  %v2905 = vpack.c.b16 %v2165, %v2161
  %v2906 = vpack.c.b16 %v2166, %v2162
  %v2907 = vpack.c.b16 %v2167, %v2163
  %v2908 = vpack.c.b16 %v2168, %v2164
  %v2909 = vpack.c.b16 %v2173, %v2169
  %v2910 = vpack.c.b16 %v2174, %v2170
  %v2911 = vpack.c.b16 %v2175, %v2171
  %v2912 = vpack.c.b16 %v2176, %v2172
  %v2913 = vpack.c.b16 %v2181, %v2177
  %v2914 = vpack.c.b16 %v2182, %v2178
  %v2915 = vpack.c.b16 %v2183, %v2179
  %v2916 = vpack.c.b16 %v2184, %v2180
  %v2917 = vpack.c.b16 %v2189, %v2185
  %v2918 = vpack.c.b16 %v2190, %v2186
  %v2919 = vpack.c.b16 %v2191, %v2187
  %v2920 = vpack.c.b16 %v2192, %v2188
  %v2921 = vpack.c.b16 %v2197, %v2193
  %v2922 = vpack.c.b16 %v2198, %v2194
  %v2923 = vpack.c.b16 %v2199, %v2195
  %v2924 = vpack.c.b16 %v2200, %v2196
  %v2925 = vpack.c.b16 %v2205, %v2201
  %v2926 = vpack.c.b16 %v2206, %v2202
  %v2927 = vpack.c.b16 %v2207, %v2203
  %v2928 = vpack.c.b16 %v2208, %v2204
  %v2929 = vpack.c.b16 %v2213, %v2209
  %v2930 = vpack.c.b16 %v2214, %v2210
  %v2931 = vpack.c.b16 %v2215, %v2211
  %v2932 = vpack.c.b16 %v2216, %v2212
  %v2933 = vpack.c.b16 %v2221, %v2217
  %v2934 = vpack.c.b16 %v2222, %v2218
  %v2935 = vpack.c.b16 %v2223, %v2219
  %v2936 = vpack.c.b16 %v2224, %v2220
  %v2937 = vpack.c.b16 %v2229, %v2225
  %v2938 = vpack.c.b16 %v2230, %v2226
  %v2939 = vpack.c.b16 %v2231, %v2227
  %v2940 = vpack.c.b16 %v2232, %v2228
  %v2941 = vpack.c.b16 %v2237, %v2233
  %v2942 = vpack.c.b16 %v2238, %v2234
  %v2943 = vpack.c.b16 %v2239, %v2235
  %v2944 = vpack.c.b16 %v2240, %v2236
  %v2945 = vpack.c.b16 %v2245, %v2241
  %v2946 = vpack.c.b16 %v2246, %v2242
  %v2947 = vpack.c.b16 %v2247, %v2243
  %v2948 = vpack.c.b16 %v2248, %v2244
  %v2949 = vpack.c.b16 %v2253, %v2249
  %v2950 = vpack.c.b16 %v2254, %v2250
  %v2951 = vpack.c.b16 %v2255, %v2251
  %v2952 = vpack.c.b16 %v2256, %v2252
  %v2953 = vpack.c.b16 %v2261, %v2257
  %v2954 = vpack.c.b16 %v2262, %v2258
  %v2955 = vpack.c.b16 %v2263, %v2259
  %v2956 = vpack.c.b16 %v2264, %v2260
  %v2957 = vpack.c.b16 %v2269, %v2265
  %v2958 = vpack.c.b16 %v2270, %v2266
  %v2959 = vpack.c.b16 %v2271, %v2267
  %v2960 = vpack.c.b16 %v2272, %v2268
  %v2961 = vpack.c.b16 %v2277, %v2273
  %v2962 = vpack.c.b16 %v2278, %v2274
  %v2963 = vpack.c.b16 %v2279, %v2275
  %v2964 = vpack.c.b16 %v2280, %v2276
  %v2965 = vpack.c.b16 %v2285, %v2281
  %v2966 = vpack.c.b16 %v2286, %v2282
  %v2967 = vpack.c.b16 %v2287, %v2283
  %v2968 = vpack.c.b16 %v2288, %v2284
  %v2969 = vpack.c.b16 %v2293, %v2289
  %v2970 = vpack.c.b16 %v2294, %v2290
  %v2971 = vpack.c.b16 %v2295, %v2291
  %v2972 = vpack.c.b16 %v2296, %v2292
  %v2973 = vpack.c.b16 %v2301, %v2297
  %v2974 = vpack.c.b16 %v2302, %v2298
  %v2975 = vpack.c.b16 %v2303, %v2299
  %v2976 = vpack.c.b16 %v2304, %v2300
  %v2977 = vpack.c.b16 %v2309, %v2305
  %v2978 = vpack.c.b16 %v2310, %v2306
  %v2979 = vpack.c.b16 %v2311, %v2307
  %v2980 = vpack.c.b16 %v2312, %v2308
  %v2981 = vpack.c.b16 %v2317, %v2313
  %v2982 = vpack.c.b16 %v2318, %v2314
  %v2983 = vpack.c.b16 %v2319, %v2315
  %v2984 = vpack.c.b16 %v2320, %v2316
  %v2985 = vpack.c.b16 %v2325, %v2321
  %v2986 = vpack.c.b16 %v2326, %v2322
  %v2987 = vpack.c.b16 %v2327, %v2323
  %v2988 = vpack.c.b16 %v2328, %v2324
  %v2989 = vpack.c.b16 %v2333, %v2329
  %v2990 = vpack.c.b16 %v2334, %v2330
  %v2991 = vpack.c.b16 %v2335, %v2331
  %v2992 = vpack.c.b16 %v2336, %v2332
  %v2993 = vpack.c.b16 %v2341, %v2337
  %v2994 = vpack.c.b16 %v2342, %v2338
  %v2995 = vpack.c.b16 %v2343, %v2339
  %v2996 = vpack.c.b16 %v2344, %v2340
  %v2997 = vpack.c.b16 %v2349, %v2345
  %v2998 = vpack.c.b16 %v2350, %v2346
  %v2999 = vpack.c.b16 %v2351, %v2347
  %v3000 = vpack.c.b16 %v2352, %v2348
  %v3001 = vpack.c.b16 %v2357, %v2353
  %v3002 = vpack.c.b16 %v2358, %v2354
  %v3003 = vpack.c.b16 %v2359, %v2355
  %v3004 = vpack.c.b16 %v2360, %v2356
  %v3005 = vpack.c.b16 %v2365, %v2361
  %v3006 = vpack.c.b16 %v2366, %v2362
  %v3007 = vpack.c.b16 %v2367, %v2363
  %v3008 = vpack.c.b16 %v2368, %v2364
  %v3009 = vpack.c.b16 %v2373, %v2369
  %v3010 = vpack.c.b16 %v2374, %v2370
  %v3011 = vpack.c.b16 %v2375, %v2371
  %v3012 = vpack.c.b16 %v2376, %v2372
  %v3013 = vpack.c.b16 %v2381, %v2377
  %v3014 = vpack.c.b16 %v2382, %v2378
  %v3015 = vpack.c.b16 %v2383, %v2379
  %v3016 = vpack.c.b16 %v2384, %v2380
  %v3017 = vpack.c.b16 %v2389, %v2385
  %v3018 = vpack.c.b16 %v2390, %v2386
  %v3019 = vpack.c.b16 %v2391, %v2387
  %v3020 = vpack.c.b16 %v2392, %v2388
  %v3021 = vpack.c.b16 %v2397, %v2393
  %v3022 = vpack.c.b16 %v2398, %v2394
  %v3023 = vpack.c.b16 %v2399, %v2395
  %v3024 = vpack.c.b16 %v2400, %v2396
  %v3025 = vpack.c.b16 %v2405, %v2401
  %v3026 = vpack.c.b16 %v2406, %v2402
  %v3027 = vpack.c.b16 %v2407, %v2403
  %v3028 = vpack.c.b16 %v2408, %v2404
  %v3029 = vpack.c.b16 %v2413, %v2409
  %v3030 = vpack.c.b16 %v2414, %v2410
  %v3031 = vpack.c.b16 %v2415, %v2411
  %v3032 = vpack.c.b16 %v2416, %v2412
  %v3033 = vpack.c.b16 %v2421, %v2417
  %v3034 = vpack.c.b16 %v2422, %v2418
  %v3035 = vpack.c.b16 %v2423, %v2419
  %v3036 = vpack.c.b16 %v2424, %v2420
  %v3037 = vpack.c.b16 %v2429, %v2425
  %v3038 = vpack.c.b16 %v2430, %v2426
  %v3039 = vpack.c.b16 %v2431, %v2427
  %v3040 = vpack.c.b16 %v2432, %v2428
  %v3041 = vpack.c.b16 %v2437, %v2433
  %v3042 = vpack.c.b16 %v2438, %v2434
  %v3043 = vpack.c.b16 %v2439, %v2435
  %v3044 = vpack.c.b16 %v2440, %v2436
  %v3045 = vpack.c.b16 %v2445, %v2441
  %v3046 = vpack.c.b16 %v2446, %v2442
  %v3047 = vpack.c.b16 %v2447, %v2443
  %v3048 = vpack.c.b16 %v2448, %v2444
  %v3049 = vpack.c.b16 %v2453, %v2449
  %v3050 = vpack.c.b16 %v2454, %v2450
  %v3051 = vpack.c.b16 %v2455, %v2451
  %v3052 = vpack.c.b16 %v2456, %v2452
  %v3053 = vpack.c.b16 %v2461, %v2457
  %v3054 = vpack.c.b16 %v2462, %v2458
  %v3055 = vpack.c.b16 %v2463, %v2459
  %v3056 = vpack.c.b16 %v2464, %v2460
  %v3057 = vpack.c.b16 %v2469, %v2465
  %v3058 = vpack.c.b16 %v2470, %v2466
  %v3059 = vpack.c.b16 %v2471, %v2467
  %v3060 = vpack.c.b16 %v2472, %v2468
  %v3061 = vpack.c.b16 %v2477, %v2473
  %v3062 = vpack.c.b16 %v2478, %v2474
  %v3063 = vpack.c.b16 %v2479, %v2475
  %v3064 = vpack.c.b16 %v2480, %v2476
  %v3065 = vpack.c.b16 %v2485, %v2481
  %v3066 = vpack.c.b16 %v2486, %v2482
  %v3067 = vpack.c.b16 %v2487, %v2483
  %v3068 = vpack.c.b16 %v2488, %v2484
  %v3069 = vpack.c.b16 %v2493, %v2489
  %v3070 = vpack.c.b16 %v2494, %v2490
  %v3071 = vpack.c.b16 %v2495, %v2491
  %v3072 = vpack.c.b16 %v2496, %v2492
  %3649 = vmatprep.subr.bf16.mxu0 %v2498
  %3650 = vmatpush1.bf16.msra.mxu0 %v2497
  %3651 = vmatprep.subr.bf16.mxu0 %v2502
  %3652 = vmatpush1.bf16.msra.mxu0 %v2501
  %3653 = vmatprep.subr.bf16.mxu0 %v2506
  %3654 = vmatpush1.bf16.msra.mxu0 %v2505
  %3655 = vmatprep.subr.bf16.mxu0 %v2510
  %3656 = vmatpush1.bf16.msra.mxu0 %v2509
  %3657 = vmatprep.subr.bf16.mxu0 %v2514
  %3658 = vmatpush1.bf16.msra.mxu0 %v2513
  %3659 = vmatprep.subr.bf16.mxu0 %v2518
  %3660 = vmatpush1.bf16.msra.mxu0 %v2517
  %3661 = vmatprep.subr.bf16.mxu0 %v2522
  %3662 = vmatpush1.bf16.msra.mxu0 %v2521
  %3663 = vmatprep.subr.bf16.mxu0 %v2526
  %3664 = vmatpush1.bf16.msra.mxu0 %v2525
  %3665 = vmatprep.subr.bf16.mxu0 %v2530
  %3666 = vmatpush1.bf16.msra.mxu0 %v2529
  %3667 = vmatprep.subr.bf16.mxu0 %v2534
  %3668 = vmatpush1.bf16.msra.mxu0 %v2533
  %3669 = vmatprep.subr.bf16.mxu0 %v2538
  %3670 = vmatpush1.bf16.msra.mxu0 %v2537
  %3671 = vmatprep.subr.bf16.mxu0 %v2542
  %3672 = vmatpush1.bf16.msra.mxu0 %v2541
  %3673 = vmatprep.subr.bf16.mxu0 %v2546
  %3674 = vmatpush1.bf16.msra.mxu0 %v2545
  %3675 = vmatprep.subr.bf16.mxu0 %v2550
  %3676 = vmatpush1.bf16.msra.mxu0 %v2549
  %3677 = vmatprep.subr.bf16.mxu0 %v2554
  %3678 = vmatpush1.bf16.msra.mxu0 %v2553
  %3679 = vmatprep.subr.bf16.mxu0 %v2558
  %3680 = vmatpush1.bf16.msra.mxu0 %v2557
  %3681 = vmatprep.mubr.bf16.mxu0 %v668
  %3682 = vmatmul.mubr.bf16.gmra.mrb[0].mxu0 %v654
  %v3683 = vpop.f32.mrb[0].mxu0
  %v3684 = vadd.f32 %v611, %v3683
  %v3685 = vpop.f32.mrb[0].mxu0
  %v3686 = vadd.f32 %v615, %v3685
  %v3687 = vpop.f32.mrb[0].mxu0
  %v3688 = vpop.f32.mrb[0].mxu0
  %3689 = vdwg.mxu0
  %3690 = vmatprep.subr.bf16.mxu0 %v2562
  %3691 = vmatpush1.bf16.msra.mxu0 %v2561
  %3692 = vmatprep.subr.bf16.mxu0 %v2566
  %3693 = vmatpush1.bf16.msra.mxu0 %v2565
  %3694 = vmatprep.subr.bf16.mxu0 %v2570
  %3695 = vmatpush1.bf16.msra.mxu0 %v2569
  %3696 = vmatprep.subr.bf16.mxu0 %v2574
  %3697 = vmatpush1.bf16.msra.mxu0 %v2573
  %3698 = vmatprep.subr.bf16.mxu0 %v2578
  %3699 = vmatpush1.bf16.msra.mxu0 %v2577
  %3700 = vmatprep.subr.bf16.mxu0 %v2582
  %3701 = vmatpush1.bf16.msra.mxu0 %v2581
  %3702 = vmatprep.subr.bf16.mxu0 %v2586
  %3703 = vmatpush1.bf16.msra.mxu0 %v2585
  %3704 = vmatprep.subr.bf16.mxu0 %v2590
  %3705 = vmatpush1.bf16.msra.mxu0 %v2589
  %3706 = vmatprep.subr.bf16.mxu0 %v2594
  %3707 = vmatpush1.bf16.msra.mxu0 %v2593
  %3708 = vmatprep.subr.bf16.mxu0 %v2598
  %3709 = vmatpush1.bf16.msra.mxu0 %v2597
  %3710 = vmatprep.subr.bf16.mxu0 %v2602
  %3711 = vmatpush1.bf16.msra.mxu0 %v2601
  %3712 = vmatprep.subr.bf16.mxu0 %v2606
  %3713 = vmatpush1.bf16.msra.mxu0 %v2605
  %3714 = vmatprep.subr.bf16.mxu0 %v2610
  %3715 = vmatpush1.bf16.msra.mxu0 %v2609
  %3716 = vmatprep.subr.bf16.mxu0 %v2614
  %3717 = vmatpush1.bf16.msra.mxu0 %v2613
  %3718 = vmatprep.subr.bf16.mxu0 %v2618
  %3719 = vmatpush1.bf16.msra.mxu0 %v2617
  %3720 = vmatprep.subr.bf16.mxu0 %v2622
  %3721 = vmatpush1.bf16.msra.mxu0 %v2621
  %3722 = vmatprep.mubr.bf16.mxu0 %v678
  %3723 = vmatmul.mubr.bf16.gmra.mrb[0].mxu0 %v676
  %v3724 = vpop.f32.mrb[0].mxu0
  %v3725 = vadd.f32 %v3684, %v3724
  %v3726 = vpop.f32.mrb[0].mxu0
  %v3727 = vadd.f32 %v3686, %v3726
  %v3728 = vpop.f32.mrb[0].mxu0
  %v3729 = vpop.f32.mrb[0].mxu0
  %3730 = vdwg.mxu0
  %3731 = vmatprep.subr.bf16.mxu0 %v2626
  %3732 = vmatpush1.bf16.msra.mxu0 %v2625
  %3733 = vmatprep.subr.bf16.mxu0 %v2630
  %3734 = vmatpush1.bf16.msra.mxu0 %v2629
  %3735 = vmatprep.subr.bf16.mxu0 %v2634
  %3736 = vmatpush1.bf16.msra.mxu0 %v2633
  %3737 = vmatprep.subr.bf16.mxu0 %v2638
  %3738 = vmatpush1.bf16.msra.mxu0 %v2637
  %3739 = vmatprep.subr.bf16.mxu0 %v2642
  %3740 = vmatpush1.bf16.msra.mxu0 %v2641
  %3741 = vmatprep.subr.bf16.mxu0 %v2646
  %3742 = vmatpush1.bf16.msra.mxu0 %v2645
  %3743 = vmatprep.subr.bf16.mxu0 %v2650
  %3744 = vmatpush1.bf16.msra.mxu0 %v2649
  %3745 = vmatprep.subr.bf16.mxu0 %v2654
  %3746 = vmatpush1.bf16.msra.mxu0 %v2653
  %3747 = vmatprep.subr.bf16.mxu0 %v2658
  %3748 = vmatpush1.bf16.msra.mxu0 %v2657
  %3749 = vmatprep.subr.bf16.mxu0 %v2662
  %3750 = vmatpush1.bf16.msra.mxu0 %v2661
  %3751 = vmatprep.subr.bf16.mxu0 %v2666
  %3752 = vmatpush1.bf16.msra.mxu0 %v2665
  %3753 = vmatprep.subr.bf16.mxu0 %v2670
  %3754 = vmatpush1.bf16.msra.mxu0 %v2669
  %3755 = vmatprep.subr.bf16.mxu0 %v2674
  %3756 = vmatpush1.bf16.msra.mxu0 %v2673
  %3757 = vmatprep.subr.bf16.mxu0 %v2678
  %3758 = vmatpush1.bf16.msra.mxu0 %v2677
  %3759 = vmatprep.subr.bf16.mxu0 %v2682
  %3760 = vmatpush1.bf16.msra.mxu0 %v2681
  %3761 = vmatprep.subr.bf16.mxu0 %v2686
  %3762 = vmatpush1.bf16.msra.mxu0 %v2685
  %3763 = vmatprep.mubr.bf16.mxu0 %v675
  %3764 = vmatmul.mubr.bf16.gmra.mrb[0].mxu0 %v661
  %v3765 = vpop.f32.mrb[0].mxu0
  %v3766 = vadd.f32 %v3725, %v3765
  %v3767 = vpop.f32.mrb[0].mxu0
  %v3768 = vadd.f32 %v3727, %v3767
  %v3769 = vpop.f32.mrb[0].mxu0
  %v3770 = vpop.f32.mrb[0].mxu0
  %3771 = vdwg.mxu0
  %3772 = vmatprep.subr.bf16.mxu0 %v2690
  %3773 = vmatpush1.bf16.msra.mxu0 %v2689
  %3774 = vmatprep.subr.bf16.mxu0 %v2694
  %3775 = vmatpush1.bf16.msra.mxu0 %v2693
  %3776 = vmatprep.subr.bf16.mxu0 %v2698
  %3777 = vmatpush1.bf16.msra.mxu0 %v2697
  %3778 = vmatprep.subr.bf16.mxu0 %v2702
  %3779 = vmatpush1.bf16.msra.mxu0 %v2701
  %3780 = vmatprep.subr.bf16.mxu0 %v2706
  %3781 = vmatpush1.bf16.msra.mxu0 %v2705
  %3782 = vmatprep.subr.bf16.mxu0 %v2710
  %3783 = vmatpush1.bf16.msra.mxu0 %v2709
  %3784 = vmatprep.subr.bf16.mxu0 %v2714
  %3785 = vmatpush1.bf16.msra.mxu0 %v2713
  %3786 = vmatprep.subr.bf16.mxu0 %v2718
  %3787 = vmatpush1.bf16.msra.mxu0 %v2717
  %3788 = vmatprep.subr.bf16.mxu0 %v2722
  %3789 = vmatpush1.bf16.msra.mxu0 %v2721
  %3790 = vmatprep.subr.bf16.mxu0 %v2726
  %3791 = vmatpush1.bf16.msra.mxu0 %v2725
  %3792 = vmatprep.subr.bf16.mxu0 %v2730
  %3793 = vmatpush1.bf16.msra.mxu0 %v2729
  %3794 = vmatprep.subr.bf16.mxu0 %v2734
  %3795 = vmatpush1.bf16.msra.mxu0 %v2733
  %3796 = vmatprep.subr.bf16.mxu0 %v2738
  %3797 = vmatpush1.bf16.msra.mxu0 %v2737
  %3798 = vmatprep.subr.bf16.mxu0 %v2742
  %3799 = vmatpush1.bf16.msra.mxu0 %v2741
  %3800 = vmatprep.subr.bf16.mxu0 %v2746
  %3801 = vmatpush1.bf16.msra.mxu0 %v2745
  %3802 = vmatprep.subr.bf16.mxu0 %v2750
  %3803 = vmatpush1.bf16.msra.mxu0 %v2749
  %3804 = vmatprep.mubr.bf16.mxu0 %v679
  %3805 = vmatmul.mubr.bf16.gmra.mrb[0].mxu0 %v677
  %v3806 = vpop.f32.mrb[0].mxu0
  %v3807 = vadd.f32 %v3766, %v3806
  %v3808 = vpop.f32.mrb[0].mxu0
  %v3809 = vadd.f32 %v3768, %v3808
  %v3810 = vpop.f32.mrb[0].mxu0
  %v3811 = vpop.f32.mrb[0].mxu0
  %3812 = vdwg.mxu0
  %3813 = vmatprep.subr.bf16.mxu0 %v2754
  %3814 = vmatpush1.bf16.msra.mxu0 %v2753
  %3815 = vmatprep.subr.bf16.mxu0 %v2758
  %3816 = vmatpush1.bf16.msra.mxu0 %v2757
  %3817 = vmatprep.subr.bf16.mxu0 %v2762
  %3818 = vmatpush1.bf16.msra.mxu0 %v2761
  %3819 = vmatprep.subr.bf16.mxu0 %v2766
  %3820 = vmatpush1.bf16.msra.mxu0 %v2765
  %3821 = vmatprep.subr.bf16.mxu0 %v2770
  %3822 = vmatpush1.bf16.msra.mxu0 %v2769
  %3823 = vmatprep.subr.bf16.mxu0 %v2774
  %3824 = vmatpush1.bf16.msra.mxu0 %v2773
  %3825 = vmatprep.subr.bf16.mxu0 %v2778
  %3826 = vmatpush1.bf16.msra.mxu0 %v2777
  %3827 = vmatprep.subr.bf16.mxu0 %v2782
  %3828 = vmatpush1.bf16.msra.mxu0 %v2781
  %3829 = vmatprep.subr.bf16.mxu0 %v2786
  %3830 = vmatpush1.bf16.msra.mxu0 %v2785
  %3831 = vmatprep.subr.bf16.mxu0 %v2790
  %3832 = vmatpush1.bf16.msra.mxu0 %v2789
  %3833 = vmatprep.subr.bf16.mxu0 %v2794
  %3834 = vmatpush1.bf16.msra.mxu0 %v2793
  %3835 = vmatprep.subr.bf16.mxu0 %v2798
  %3836 = vmatpush1.bf16.msra.mxu0 %v2797
  %3837 = vmatprep.subr.bf16.mxu0 %v2802
  %3838 = vmatpush1.bf16.msra.mxu0 %v2801
  %3839 = vmatprep.subr.bf16.mxu0 %v2806
  %3840 = vmatpush1.bf16.msra.mxu0 %v2805
  %3841 = vmatprep.subr.bf16.mxu0 %v2810
  %3842 = vmatpush1.bf16.msra.mxu0 %v2809
  %3843 = vmatprep.subr.bf16.mxu0 %v2814
  %3844 = vmatpush1.bf16.msra.mxu0 %v2813
  %3845 = vmatprep.mubr.bf16.mxu0 %v717
  %3846 = vmatmul.mubr.bf16.gmra.mrb[0].mxu0 %v703
  %v3847 = vpop.f32.mrb[0].mxu0
  %v3848 = vadd.f32 %v3807, %v3847
  %v3849 = vpop.f32.mrb[0].mxu0
  %v3850 = vadd.f32 %v3809, %v3849
  %v3851 = vpop.f32.mrb[0].mxu0
  %v3852 = vpop.f32.mrb[0].mxu0
  %3853 = vdwg.mxu0
  %3854 = vmatprep.subr.bf16.mxu0 %v2818
  %3855 = vmatpush1.bf16.msra.mxu0 %v2817
  %3856 = vmatprep.subr.bf16.mxu0 %v2822
  %3857 = vmatpush1.bf16.msra.mxu0 %v2821
  %3858 = vmatprep.subr.bf16.mxu0 %v2826
  %3859 = vmatpush1.bf16.msra.mxu0 %v2825
  %3860 = vmatprep.subr.bf16.mxu0 %v2830
  %3861 = vmatpush1.bf16.msra.mxu0 %v2829
  %3862 = vmatprep.subr.bf16.mxu0 %v2834
  %3863 = vmatpush1.bf16.msra.mxu0 %v2833
  %3864 = vmatprep.subr.bf16.mxu0 %v2838
  %3865 = vmatpush1.bf16.msra.mxu0 %v2837
  %3866 = vmatprep.subr.bf16.mxu0 %v2842
  %3867 = vmatpush1.bf16.msra.mxu0 %v2841
  %3868 = vmatprep.subr.bf16.mxu0 %v2846
  %3869 = vmatpush1.bf16.msra.mxu0 %v2845
  %3870 = vmatprep.subr.bf16.mxu0 %v2850
  %3871 = vmatpush1.bf16.msra.mxu0 %v2849
  %3872 = vmatprep.subr.bf16.mxu0 %v2854
  %3873 = vmatpush1.bf16.msra.mxu0 %v2853
  %3874 = vmatprep.subr.bf16.mxu0 %v2858
  %3875 = vmatpush1.bf16.msra.mxu0 %v2857
  %3876 = vmatprep.subr.bf16.mxu0 %v2862
  %3877 = vmatpush1.bf16.msra.mxu0 %v2861
  %3878 = vmatprep.subr.bf16.mxu0 %v2866
  %3879 = vmatpush1.bf16.msra.mxu0 %v2865
  %3880 = vmatprep.subr.bf16.mxu0 %v2870
  %3881 = vmatpush1.bf16.msra.mxu0 %v2869
  %3882 = vmatprep.subr.bf16.mxu0 %v2874
  %3883 = vmatpush1.bf16.msra.mxu0 %v2873
  %3884 = vmatprep.subr.bf16.mxu0 %v2878
  %3885 = vmatpush1.bf16.msra.mxu0 %v2877
  %3886 = vmatprep.mubr.bf16.mxu0 %v727
  %3887 = vmatmul.mubr.bf16.gmra.mrb[0].mxu0 %v725
  %v3888 = vpop.f32.mrb[0].mxu0
  %v3889 = vadd.f32 %v3848, %v3888
  %v3890 = vpop.f32.mrb[0].mxu0
  %v3891 = vadd.f32 %v3850, %v3890
  %v3892 = vpop.f32.mrb[0].mxu0
  %v3893 = vpop.f32.mrb[0].mxu0
  %3894 = vdwg.mxu0
  %3895 = vmatprep.subr.bf16.mxu0 %v2882
  %3896 = vmatpush1.bf16.msra.mxu0 %v2881
  %3897 = vmatprep.subr.bf16.mxu0 %v2886
  %3898 = vmatpush1.bf16.msra.mxu0 %v2885
  %3899 = vmatprep.subr.bf16.mxu0 %v2890
  %3900 = vmatpush1.bf16.msra.mxu0 %v2889
  %3901 = vmatprep.subr.bf16.mxu0 %v2894
  %3902 = vmatpush1.bf16.msra.mxu0 %v2893
  %3903 = vmatprep.subr.bf16.mxu0 %v2898
  %3904 = vmatpush1.bf16.msra.mxu0 %v2897
  %3905 = vmatprep.subr.bf16.mxu0 %v2902
  %3906 = vmatpush1.bf16.msra.mxu0 %v2901
  %3907 = vmatprep.subr.bf16.mxu0 %v2906
  %3908 = vmatpush1.bf16.msra.mxu0 %v2905
  %3909 = vmatprep.subr.bf16.mxu0 %v2910
  %3910 = vmatpush1.bf16.msra.mxu0 %v2909
  %3911 = vmatprep.subr.bf16.mxu0 %v2914
  %3912 = vmatpush1.bf16.msra.mxu0 %v2913
  %3913 = vmatprep.subr.bf16.mxu0 %v2918
  %3914 = vmatpush1.bf16.msra.mxu0 %v2917
  %3915 = vmatprep.subr.bf16.mxu0 %v2922
  %3916 = vmatpush1.bf16.msra.mxu0 %v2921
  %3917 = vmatprep.subr.bf16.mxu0 %v2926
  %3918 = vmatpush1.bf16.msra.mxu0 %v2925
  %3919 = vmatprep.subr.bf16.mxu0 %v2930
  %3920 = vmatpush1.bf16.msra.mxu0 %v2929
  %3921 = vmatprep.subr.bf16.mxu0 %v2934
  %3922 = vmatpush1.bf16.msra.mxu0 %v2933
  %3923 = vmatprep.subr.bf16.mxu0 %v2938
  %3924 = vmatpush1.bf16.msra.mxu0 %v2937
  %3925 = vmatprep.subr.bf16.mxu0 %v2942
  %3926 = vmatpush1.bf16.msra.mxu0 %v2941
  %3927 = vmatprep.mubr.bf16.mxu0 %v724
  %3928 = vmatmul.mubr.bf16.gmra.mrb[0].mxu0 %v710
  %v3929 = vpop.f32.mrb[0].mxu0
  %v3930 = vadd.f32 %v3889, %v3929
  %v3931 = vpop.f32.mrb[0].mxu0
  %v3932 = vadd.f32 %v3891, %v3931
  %v3933 = vpop.f32.mrb[0].mxu0
  %v3934 = vpop.f32.mrb[0].mxu0
  %3935 = vdwg.mxu0
  %3936 = vmatprep.subr.bf16.mxu0 %v2946
  %3937 = vmatpush1.bf16.msra.mxu0 %v2945
  %3938 = vmatprep.subr.bf16.mxu0 %v2950
  %3939 = vmatpush1.bf16.msra.mxu0 %v2949
  %3940 = vmatprep.subr.bf16.mxu0 %v2954
  %3941 = vmatpush1.bf16.msra.mxu0 %v2953
  %3942 = vmatprep.subr.bf16.mxu0 %v2958
  %3943 = vmatpush1.bf16.msra.mxu0 %v2957
  %3944 = vmatprep.subr.bf16.mxu0 %v2962
  %3945 = vmatpush1.bf16.msra.mxu0 %v2961
  %3946 = vmatprep.subr.bf16.mxu0 %v2966
  %3947 = vmatpush1.bf16.msra.mxu0 %v2965
  %3948 = vmatprep.subr.bf16.mxu0 %v2970
  %3949 = vmatpush1.bf16.msra.mxu0 %v2969
  %3950 = vmatprep.subr.bf16.mxu0 %v2974
  %3951 = vmatpush1.bf16.msra.mxu0 %v2973
  %3952 = vmatprep.subr.bf16.mxu0 %v2978
  %3953 = vmatpush1.bf16.msra.mxu0 %v2977
  %3954 = vmatprep.subr.bf16.mxu0 %v2982
  %3955 = vmatpush1.bf16.msra.mxu0 %v2981
  %3956 = vmatprep.subr.bf16.mxu0 %v2986
  %3957 = vmatpush1.bf16.msra.mxu0 %v2985
  %3958 = vmatprep.subr.bf16.mxu0 %v2990
  %3959 = vmatpush1.bf16.msra.mxu0 %v2989
  %3960 = vmatprep.subr.bf16.mxu0 %v2994
  %3961 = vmatpush1.bf16.msra.mxu0 %v2993
  %3962 = vmatprep.subr.bf16.mxu0 %v2998
  %3963 = vmatpush1.bf16.msra.mxu0 %v2997
  %3964 = vmatprep.subr.bf16.mxu0 %v3002
  %3965 = vmatpush1.bf16.msra.mxu0 %v3001
  %3966 = vmatprep.subr.bf16.mxu0 %v3006
  %3967 = vmatpush1.bf16.msra.mxu0 %v3005
  %3968 = vmatprep.mubr.bf16.mxu0 %v728
  %3969 = vmatmul.mubr.bf16.gmra.mrb[0].mxu0 %v726
  %v3970 = vpop.f32.mrb[0].mxu0
  %v3971 = vadd.f32 %v3930, %v3970
  %v3972 = vpop.f32.mrb[0].mxu0
  %v3973 = vadd.f32 %v3932, %v3972
  %v3974 = vpop.f32.mrb[0].mxu0
  %v3975 = vpop.f32.mrb[0].mxu0
  %3976 = vdwg.mxu0
  %3977 = vmatprep.subr.bf16.mxu0 %v3010
  %3978 = vmatpush1.bf16.msra.mxu0 %v3009
  %3979 = vmatprep.subr.bf16.mxu0 %v3014
  %3980 = vmatpush1.bf16.msra.mxu0 %v3013
  %3981 = vmatprep.subr.bf16.mxu0 %v3018
  %3982 = vmatpush1.bf16.msra.mxu0 %v3017
  %3983 = vmatprep.subr.bf16.mxu0 %v3022
  %3984 = vmatpush1.bf16.msra.mxu0 %v3021
  %3985 = vmatprep.subr.bf16.mxu0 %v3026
  %3986 = vmatpush1.bf16.msra.mxu0 %v3025
  %3987 = vmatprep.subr.bf16.mxu0 %v3030
  %3988 = vmatpush1.bf16.msra.mxu0 %v3029
  %3989 = vmatprep.subr.bf16.mxu0 %v3034
  %3990 = vmatpush1.bf16.msra.mxu0 %v3033
  %3991 = vmatprep.subr.bf16.mxu0 %v3038
  %3992 = vmatpush1.bf16.msra.mxu0 %v3037
  %3993 = vmatprep.subr.bf16.mxu0 %v3042
  %3994 = vmatpush1.bf16.msra.mxu0 %v3041
  %3995 = vmatprep.subr.bf16.mxu0 %v3046
  %3996 = vmatpush1.bf16.msra.mxu0 %v3045
  %3997 = vmatprep.subr.bf16.mxu0 %v3050
  %3998 = vmatpush1.bf16.msra.mxu0 %v3049
  %3999 = vmatprep.subr.bf16.mxu0 %v3054
  %4000 = vmatpush1.bf16.msra.mxu0 %v3053
  %4001 = vmatprep.subr.bf16.mxu0 %v3058
  %4002 = vmatpush1.bf16.msra.mxu0 %v3057
  %4003 = vmatprep.subr.bf16.mxu0 %v3062
  %4004 = vmatpush1.bf16.msra.mxu0 %v3061
  %4005 = vmatprep.subr.bf16.mxu0 %v3066
  %4006 = vmatpush1.bf16.msra.mxu0 %v3065
  %4007 = vmatprep.subr.bf16.mxu0 %v3070
  %4008 = vmatpush1.bf16.msra.mxu0 %v3069
  %4009 = vmatprep.mubr.bf16.mxu0 %v750
  %4010 = vmatmul.mubr.bf16.gmra.mrb[0].mxu0 %v743
  %v4011 = vpop.f32.mrb[0].mxu0
  %v4012 = vadd.f32 %v3971, %v4011
  %v4013 = vpop.f32.mrb[0].mxu0
  %v4014 = vadd.f32 %v3973, %v4013
  %v4015 = vpop.f32.mrb[0].mxu0
  %v4016 = vpop.f32.mrb[0].mxu0
  %4017 = vdwg.mxu0
  %4018 = vmatprep.subr.bf16.mxu0 %v2500
  %4019 = vmatpush1.bf16.msra.mxu0 %v2499
  %4020 = vmatprep.subr.bf16.mxu0 %v2504
  %4021 = vmatpush1.bf16.msra.mxu0 %v2503
  %4022 = vmatprep.subr.bf16.mxu0 %v2508
  %4023 = vmatpush1.bf16.msra.mxu0 %v2507
  %4024 = vmatprep.subr.bf16.mxu0 %v2512
  %4025 = vmatpush1.bf16.msra.mxu0 %v2511
  %4026 = vmatprep.subr.bf16.mxu0 %v2516
  %4027 = vmatpush1.bf16.msra.mxu0 %v2515
  %4028 = vmatprep.subr.bf16.mxu0 %v2520
  %4029 = vmatpush1.bf16.msra.mxu0 %v2519
  %4030 = vmatprep.subr.bf16.mxu0 %v2524
  %4031 = vmatpush1.bf16.msra.mxu0 %v2523
  %4032 = vmatprep.subr.bf16.mxu0 %v2528
  %4033 = vmatpush1.bf16.msra.mxu0 %v2527
  %4034 = vmatprep.subr.bf16.mxu0 %v2532
  %4035 = vmatpush1.bf16.msra.mxu0 %v2531
  %4036 = vmatprep.subr.bf16.mxu0 %v2536
  %4037 = vmatpush1.bf16.msra.mxu0 %v2535
  %4038 = vmatprep.subr.bf16.mxu0 %v2540
  %4039 = vmatpush1.bf16.msra.mxu0 %v2539
  %4040 = vmatprep.subr.bf16.mxu0 %v2544
  %4041 = vmatpush1.bf16.msra.mxu0 %v2543
  %4042 = vmatprep.subr.bf16.mxu0 %v2548
  %4043 = vmatpush1.bf16.msra.mxu0 %v2547
  %4044 = vmatprep.subr.bf16.mxu0 %v2552
  %4045 = vmatpush1.bf16.msra.mxu0 %v2551
  %4046 = vmatprep.subr.bf16.mxu0 %v2556
  %4047 = vmatpush1.bf16.msra.mxu0 %v2555
  %4048 = vmatprep.subr.bf16.mxu0 %v2560
  %4049 = vmatpush1.bf16.msra.mxu0 %v2559
  %4050 = vmatprep.mubr.bf16.mxu0 %v668
  %4051 = vmatmul.mubr.bf16.gmra.mrb[0].mxu0 %v654
  %v4052 = vpop.f32.mrb[0].mxu0
  %v4053 = vadd.f32 %v619, %v4052
  %v4054 = vpop.f32.mrb[0].mxu0
  %v4055 = vadd.f32 %v623, %v4054
  %v4056 = vpop.f32.mrb[0].mxu0
  %v4057 = vpop.f32.mrb[0].mxu0
  %4058 = vdwg.mxu0
  %4059 = vmatprep.subr.bf16.mxu0 %v2564
  %4060 = vmatpush1.bf16.msra.mxu0 %v2563
  %4061 = vmatprep.subr.bf16.mxu0 %v2568
  %4062 = vmatpush1.bf16.msra.mxu0 %v2567
  %4063 = vmatprep.subr.bf16.mxu0 %v2572
  %4064 = vmatpush1.bf16.msra.mxu0 %v2571
  %4065 = vmatprep.subr.bf16.mxu0 %v2576
  %4066 = vmatpush1.bf16.msra.mxu0 %v2575
  %4067 = vmatprep.subr.bf16.mxu0 %v2580
  %4068 = vmatpush1.bf16.msra.mxu0 %v2579
  %4069 = vmatprep.subr.bf16.mxu0 %v2584
  %4070 = vmatpush1.bf16.msra.mxu0 %v2583
  %4071 = vmatprep.subr.bf16.mxu0 %v2588
  %4072 = vmatpush1.bf16.msra.mxu0 %v2587
  %4073 = vmatprep.subr.bf16.mxu0 %v2592
  %4074 = vmatpush1.bf16.msra.mxu0 %v2591
  %4075 = vmatprep.subr.bf16.mxu0 %v2596
  %4076 = vmatpush1.bf16.msra.mxu0 %v2595
  %4077 = vmatprep.subr.bf16.mxu0 %v2600
  %4078 = vmatpush1.bf16.msra.mxu0 %v2599
  %4079 = vmatprep.subr.bf16.mxu0 %v2604
  %4080 = vmatpush1.bf16.msra.mxu0 %v2603
  %4081 = vmatprep.subr.bf16.mxu0 %v2608
  %4082 = vmatpush1.bf16.msra.mxu0 %v2607
  %4083 = vmatprep.subr.bf16.mxu0 %v2612
  %4084 = vmatpush1.bf16.msra.mxu0 %v2611
  %4085 = vmatprep.subr.bf16.mxu0 %v2616
  %4086 = vmatpush1.bf16.msra.mxu0 %v2615
  %4087 = vmatprep.subr.bf16.mxu0 %v2620
  %4088 = vmatpush1.bf16.msra.mxu0 %v2619
  %4089 = vmatprep.subr.bf16.mxu0 %v2624
  %4090 = vmatpush1.bf16.msra.mxu0 %v2623
  %4091 = vmatprep.mubr.bf16.mxu0 %v678
  %4092 = vmatmul.mubr.bf16.gmra.mrb[0].mxu0 %v676
  %v4093 = vpop.f32.mrb[0].mxu0
  %v4094 = vadd.f32 %v4053, %v4093
  %v4095 = vpop.f32.mrb[0].mxu0
  %v4096 = vadd.f32 %v4055, %v4095
  %v4097 = vpop.f32.mrb[0].mxu0
  %v4098 = vpop.f32.mrb[0].mxu0
  %4099 = vdwg.mxu0
  %4100 = vmatprep.subr.bf16.mxu0 %v2628
  %4101 = vmatpush1.bf16.msra.mxu0 %v2627
  %4102 = vmatprep.subr.bf16.mxu0 %v2632
  %4103 = vmatpush1.bf16.msra.mxu0 %v2631
  %4104 = vmatprep.subr.bf16.mxu0 %v2636
  %4105 = vmatpush1.bf16.msra.mxu0 %v2635
  %4106 = vmatprep.subr.bf16.mxu0 %v2640
  %4107 = vmatpush1.bf16.msra.mxu0 %v2639
  %4108 = vmatprep.subr.bf16.mxu0 %v2644
  %4109 = vmatpush1.bf16.msra.mxu0 %v2643
  %4110 = vmatprep.subr.bf16.mxu0 %v2648
  %4111 = vmatpush1.bf16.msra.mxu0 %v2647
  %4112 = vmatprep.subr.bf16.mxu0 %v2652
  %4113 = vmatpush1.bf16.msra.mxu0 %v2651
  %4114 = vmatprep.subr.bf16.mxu0 %v2656
  %4115 = vmatpush1.bf16.msra.mxu0 %v2655
  %4116 = vmatprep.subr.bf16.mxu0 %v2660
  %4117 = vmatpush1.bf16.msra.mxu0 %v2659
  %4118 = vmatprep.subr.bf16.mxu0 %v2664
  %4119 = vmatpush1.bf16.msra.mxu0 %v2663
  %4120 = vmatprep.subr.bf16.mxu0 %v2668
  %4121 = vmatpush1.bf16.msra.mxu0 %v2667
  %4122 = vmatprep.subr.bf16.mxu0 %v2672
  %4123 = vmatpush1.bf16.msra.mxu0 %v2671
  %4124 = vmatprep.subr.bf16.mxu0 %v2676
  %4125 = vmatpush1.bf16.msra.mxu0 %v2675
  %4126 = vmatprep.subr.bf16.mxu0 %v2680
  %4127 = vmatpush1.bf16.msra.mxu0 %v2679
  %4128 = vmatprep.subr.bf16.mxu0 %v2684
  %4129 = vmatpush1.bf16.msra.mxu0 %v2683
  %4130 = vmatprep.subr.bf16.mxu0 %v2688
  %4131 = vmatpush1.bf16.msra.mxu0 %v2687
  %4132 = vmatprep.mubr.bf16.mxu0 %v675
  %4133 = vmatmul.mubr.bf16.gmra.mrb[0].mxu0 %v661
  %v4134 = vpop.f32.mrb[0].mxu0
  %v4135 = vadd.f32 %v4094, %v4134
  %v4136 = vpop.f32.mrb[0].mxu0
  %v4137 = vadd.f32 %v4096, %v4136
  %v4138 = vpop.f32.mrb[0].mxu0
  %v4139 = vpop.f32.mrb[0].mxu0
  %4140 = vdwg.mxu0
  %4141 = vmatprep.subr.bf16.mxu0 %v2692
  %4142 = vmatpush1.bf16.msra.mxu0 %v2691
  %4143 = vmatprep.subr.bf16.mxu0 %v2696
  %4144 = vmatpush1.bf16.msra.mxu0 %v2695
  %4145 = vmatprep.subr.bf16.mxu0 %v2700
  %4146 = vmatpush1.bf16.msra.mxu0 %v2699
  %4147 = vmatprep.subr.bf16.mxu0 %v2704
  %4148 = vmatpush1.bf16.msra.mxu0 %v2703
  %4149 = vmatprep.subr.bf16.mxu0 %v2708
  %4150 = vmatpush1.bf16.msra.mxu0 %v2707
  %4151 = vmatprep.subr.bf16.mxu0 %v2712
  %4152 = vmatpush1.bf16.msra.mxu0 %v2711
  %4153 = vmatprep.subr.bf16.mxu0 %v2716
  %4154 = vmatpush1.bf16.msra.mxu0 %v2715
  %4155 = vmatprep.subr.bf16.mxu0 %v2720
  %4156 = vmatpush1.bf16.msra.mxu0 %v2719
  %4157 = vmatprep.subr.bf16.mxu0 %v2724
  %4158 = vmatpush1.bf16.msra.mxu0 %v2723
  %4159 = vmatprep.subr.bf16.mxu0 %v2728
  %4160 = vmatpush1.bf16.msra.mxu0 %v2727
  %4161 = vmatprep.subr.bf16.mxu0 %v2732
  %4162 = vmatpush1.bf16.msra.mxu0 %v2731
  %4163 = vmatprep.subr.bf16.mxu0 %v2736
  %4164 = vmatpush1.bf16.msra.mxu0 %v2735
  %4165 = vmatprep.subr.bf16.mxu0 %v2740
  %4166 = vmatpush1.bf16.msra.mxu0 %v2739
  %4167 = vmatprep.subr.bf16.mxu0 %v2744
  %4168 = vmatpush1.bf16.msra.mxu0 %v2743
  %4169 = vmatprep.subr.bf16.mxu0 %v2748
  %4170 = vmatpush1.bf16.msra.mxu0 %v2747
  %4171 = vmatprep.subr.bf16.mxu0 %v2752
  %4172 = vmatpush1.bf16.msra.mxu0 %v2751
  %4173 = vmatprep.mubr.bf16.mxu0 %v679
  %4174 = vmatmul.mubr.bf16.gmra.mrb[0].mxu0 %v677
  %v4175 = vpop.f32.mrb[0].mxu0
  %v4176 = vadd.f32 %v4135, %v4175
  %v4177 = vpop.f32.mrb[0].mxu0
  %v4178 = vadd.f32 %v4137, %v4177
  %v4179 = vpop.f32.mrb[0].mxu0
  %v4180 = vpop.f32.mrb[0].mxu0
  %4181 = vdwg.mxu0
  %4182 = vmatprep.subr.bf16.mxu0 %v2756
  %4183 = vmatpush1.bf16.msra.mxu0 %v2755
  %4184 = vmatprep.subr.bf16.mxu0 %v2760
  %4185 = vmatpush1.bf16.msra.mxu0 %v2759
  %4186 = vmatprep.subr.bf16.mxu0 %v2764
  %4187 = vmatpush1.bf16.msra.mxu0 %v2763
  %4188 = vmatprep.subr.bf16.mxu0 %v2768
  %4189 = vmatpush1.bf16.msra.mxu0 %v2767
  %4190 = vmatprep.subr.bf16.mxu0 %v2772
  %4191 = vmatpush1.bf16.msra.mxu0 %v2771
  %4192 = vmatprep.subr.bf16.mxu0 %v2776
  %4193 = vmatpush1.bf16.msra.mxu0 %v2775
  %4194 = vmatprep.subr.bf16.mxu0 %v2780
  %4195 = vmatpush1.bf16.msra.mxu0 %v2779
  %4196 = vmatprep.subr.bf16.mxu0 %v2784
  %4197 = vmatpush1.bf16.msra.mxu0 %v2783
  %4198 = vmatprep.subr.bf16.mxu0 %v2788
  %4199 = vmatpush1.bf16.msra.mxu0 %v2787
  %4200 = vmatprep.subr.bf16.mxu0 %v2792
  %4201 = vmatpush1.bf16.msra.mxu0 %v2791
  %4202 = vmatprep.subr.bf16.mxu0 %v2796
  %4203 = vmatpush1.bf16.msra.mxu0 %v2795
  %4204 = vmatprep.subr.bf16.mxu0 %v2800
  %4205 = vmatpush1.bf16.msra.mxu0 %v2799
  %4206 = vmatprep.subr.bf16.mxu0 %v2804
  %4207 = vmatpush1.bf16.msra.mxu0 %v2803
  %4208 = vmatprep.subr.bf16.mxu0 %v2808
  %4209 = vmatpush1.bf16.msra.mxu0 %v2807
  %4210 = vmatprep.subr.bf16.mxu0 %v2812
  %4211 = vmatpush1.bf16.msra.mxu0 %v2811
  %4212 = vmatprep.subr.bf16.mxu0 %v2816
  %4213 = vmatpush1.bf16.msra.mxu0 %v2815
  %4214 = vmatprep.mubr.bf16.mxu0 %v717
  %4215 = vmatmul.mubr.bf16.gmra.mrb[0].mxu0 %v703
  %v4216 = vpop.f32.mrb[0].mxu0
  %v4217 = vadd.f32 %v4176, %v4216
  %v4218 = vpop.f32.mrb[0].mxu0
  %v4219 = vadd.f32 %v4178, %v4218
  %v4220 = vpop.f32.mrb[0].mxu0
  %v4221 = vpop.f32.mrb[0].mxu0
  %4222 = vdwg.mxu0
  %4223 = vmatprep.subr.bf16.mxu0 %v2820
  %4224 = vmatpush1.bf16.msra.mxu0 %v2819
  %4225 = vmatprep.subr.bf16.mxu0 %v2824
  %4226 = vmatpush1.bf16.msra.mxu0 %v2823
  %4227 = vmatprep.subr.bf16.mxu0 %v2828
  %4228 = vmatpush1.bf16.msra.mxu0 %v2827
  %4229 = vmatprep.subr.bf16.mxu0 %v2832
  %4230 = vmatpush1.bf16.msra.mxu0 %v2831
  %4231 = vmatprep.subr.bf16.mxu0 %v2836
  %4232 = vmatpush1.bf16.msra.mxu0 %v2835
  %4233 = vmatprep.subr.bf16.mxu0 %v2840
  %4234 = vmatpush1.bf16.msra.mxu0 %v2839
  %4235 = vmatprep.subr.bf16.mxu0 %v2844
  %4236 = vmatpush1.bf16.msra.mxu0 %v2843
  %4237 = vmatprep.subr.bf16.mxu0 %v2848
  %4238 = vmatpush1.bf16.msra.mxu0 %v2847
  %4239 = vmatprep.subr.bf16.mxu0 %v2852
  %4240 = vmatpush1.bf16.msra.mxu0 %v2851
  %4241 = vmatprep.subr.bf16.mxu0 %v2856
  %4242 = vmatpush1.bf16.msra.mxu0 %v2855
  %4243 = vmatprep.subr.bf16.mxu0 %v2860
  %4244 = vmatpush1.bf16.msra.mxu0 %v2859
  %4245 = vmatprep.subr.bf16.mxu0 %v2864
  %4246 = vmatpush1.bf16.msra.mxu0 %v2863
  %4247 = vmatprep.subr.bf16.mxu0 %v2868
  %4248 = vmatpush1.bf16.msra.mxu0 %v2867
  %4249 = vmatprep.subr.bf16.mxu0 %v2872
  %4250 = vmatpush1.bf16.msra.mxu0 %v2871
  %4251 = vmatprep.subr.bf16.mxu0 %v2876
  %4252 = vmatpush1.bf16.msra.mxu0 %v2875
  %4253 = vmatprep.subr.bf16.mxu0 %v2880
  %4254 = vmatpush1.bf16.msra.mxu0 %v2879
  %4255 = vmatprep.mubr.bf16.mxu0 %v727
  %4256 = vmatmul.mubr.bf16.gmra.mrb[0].mxu0 %v725
  %v4257 = vpop.f32.mrb[0].mxu0
  %v4258 = vadd.f32 %v4217, %v4257
  %v4259 = vpop.f32.mrb[0].mxu0
  %v4260 = vadd.f32 %v4219, %v4259
  %v4261 = vpop.f32.mrb[0].mxu0
  %v4262 = vpop.f32.mrb[0].mxu0
  %4263 = vdwg.mxu0
  %4264 = vmatprep.subr.bf16.mxu0 %v2884
  %4265 = vmatpush1.bf16.msra.mxu0 %v2883
  %4266 = vmatprep.subr.bf16.mxu0 %v2888
  %4267 = vmatpush1.bf16.msra.mxu0 %v2887
  %4268 = vmatprep.subr.bf16.mxu0 %v2892
  %4269 = vmatpush1.bf16.msra.mxu0 %v2891
  %4270 = vmatprep.subr.bf16.mxu0 %v2896
  %4271 = vmatpush1.bf16.msra.mxu0 %v2895
  %4272 = vmatprep.subr.bf16.mxu0 %v2900
  %4273 = vmatpush1.bf16.msra.mxu0 %v2899
  %4274 = vmatprep.subr.bf16.mxu0 %v2904
  %4275 = vmatpush1.bf16.msra.mxu0 %v2903
  %4276 = vmatprep.subr.bf16.mxu0 %v2908
  %4277 = vmatpush1.bf16.msra.mxu0 %v2907
  %4278 = vmatprep.subr.bf16.mxu0 %v2912
  %4279 = vmatpush1.bf16.msra.mxu0 %v2911
  %4280 = vmatprep.subr.bf16.mxu0 %v2916
  %4281 = vmatpush1.bf16.msra.mxu0 %v2915
  %4282 = vmatprep.subr.bf16.mxu0 %v2920
  %4283 = vmatpush1.bf16.msra.mxu0 %v2919
  %4284 = vmatprep.subr.bf16.mxu0 %v2924
  %4285 = vmatpush1.bf16.msra.mxu0 %v2923
  %4286 = vmatprep.subr.bf16.mxu0 %v2928
  %4287 = vmatpush1.bf16.msra.mxu0 %v2927
  %4288 = vmatprep.subr.bf16.mxu0 %v2932
  %4289 = vmatpush1.bf16.msra.mxu0 %v2931
  %4290 = vmatprep.subr.bf16.mxu0 %v2936
  %4291 = vmatpush1.bf16.msra.mxu0 %v2935
  %4292 = vmatprep.subr.bf16.mxu0 %v2940
  %4293 = vmatpush1.bf16.msra.mxu0 %v2939
  %4294 = vmatprep.subr.bf16.mxu0 %v2944
  %4295 = vmatpush1.bf16.msra.mxu0 %v2943
  %4296 = vmatprep.mubr.bf16.mxu0 %v724
  %4297 = vmatmul.mubr.bf16.gmra.mrb[0].mxu0 %v710
  %v4298 = vpop.f32.mrb[0].mxu0
  %v4299 = vadd.f32 %v4258, %v4298
  %v4300 = vpop.f32.mrb[0].mxu0
  %v4301 = vadd.f32 %v4260, %v4300
  %v4302 = vpop.f32.mrb[0].mxu0
  %v4303 = vpop.f32.mrb[0].mxu0
  %4304 = vdwg.mxu0
  %4305 = vmatprep.subr.bf16.mxu0 %v2948
  %4306 = vmatpush1.bf16.msra.mxu0 %v2947
  %4307 = vmatprep.subr.bf16.mxu0 %v2952
  %4308 = vmatpush1.bf16.msra.mxu0 %v2951
  %4309 = vmatprep.subr.bf16.mxu0 %v2956
  %4310 = vmatpush1.bf16.msra.mxu0 %v2955
  %4311 = vmatprep.subr.bf16.mxu0 %v2960
  %4312 = vmatpush1.bf16.msra.mxu0 %v2959
  %4313 = vmatprep.subr.bf16.mxu0 %v2964
  %4314 = vmatpush1.bf16.msra.mxu0 %v2963
  %4315 = vmatprep.subr.bf16.mxu0 %v2968
  %4316 = vmatpush1.bf16.msra.mxu0 %v2967
  %4317 = vmatprep.subr.bf16.mxu0 %v2972
  %4318 = vmatpush1.bf16.msra.mxu0 %v2971
  %4319 = vmatprep.subr.bf16.mxu0 %v2976
  %4320 = vmatpush1.bf16.msra.mxu0 %v2975
  %4321 = vmatprep.subr.bf16.mxu0 %v2980
  %4322 = vmatpush1.bf16.msra.mxu0 %v2979
  %4323 = vmatprep.subr.bf16.mxu0 %v2984
  %4324 = vmatpush1.bf16.msra.mxu0 %v2983
  %4325 = vmatprep.subr.bf16.mxu0 %v2988
  %4326 = vmatpush1.bf16.msra.mxu0 %v2987
  %4327 = vmatprep.subr.bf16.mxu0 %v2992
  %4328 = vmatpush1.bf16.msra.mxu0 %v2991
  %4329 = vmatprep.subr.bf16.mxu0 %v2996
  %4330 = vmatpush1.bf16.msra.mxu0 %v2995
  %4331 = vmatprep.subr.bf16.mxu0 %v3000
  %4332 = vmatpush1.bf16.msra.mxu0 %v2999
  %4333 = vmatprep.subr.bf16.mxu0 %v3004
  %4334 = vmatpush1.bf16.msra.mxu0 %v3003
  %4335 = vmatprep.subr.bf16.mxu0 %v3008
  %4336 = vmatpush1.bf16.msra.mxu0 %v3007
  %4337 = vmatprep.mubr.bf16.mxu0 %v728
  %4338 = vmatmul.mubr.bf16.gmra.mrb[0].mxu0 %v726
  %v4339 = vpop.f32.mrb[0].mxu0
  %v4340 = vadd.f32 %v4299, %v4339
  %v4341 = vpop.f32.mrb[0].mxu0
  %v4342 = vadd.f32 %v4301, %v4341
  %v4343 = vpop.f32.mrb[0].mxu0
  %v4344 = vpop.f32.mrb[0].mxu0
  %4345 = vdwg.mxu0
  %4346 = vmatprep.subr.bf16.mxu0 %v3012
  %4347 = vmatpush1.bf16.msra.mxu0 %v3011
  %4348 = vmatprep.subr.bf16.mxu0 %v3016
  %4349 = vmatpush1.bf16.msra.mxu0 %v3015
  %4350 = vmatprep.subr.bf16.mxu0 %v3020
  %4351 = vmatpush1.bf16.msra.mxu0 %v3019
  %4352 = vmatprep.subr.bf16.mxu0 %v3024
  %4353 = vmatpush1.bf16.msra.mxu0 %v3023
  %4354 = vmatprep.subr.bf16.mxu0 %v3028
  %4355 = vmatpush1.bf16.msra.mxu0 %v3027
  %4356 = vmatprep.subr.bf16.mxu0 %v3032
  %4357 = vmatpush1.bf16.msra.mxu0 %v3031
  %4358 = vmatprep.subr.bf16.mxu0 %v3036
  %4359 = vmatpush1.bf16.msra.mxu0 %v3035
  %4360 = vmatprep.subr.bf16.mxu0 %v3040
  %4361 = vmatpush1.bf16.msra.mxu0 %v3039
  %4362 = vmatprep.subr.bf16.mxu0 %v3044
  %4363 = vmatpush1.bf16.msra.mxu0 %v3043
  %4364 = vmatprep.subr.bf16.mxu0 %v3048
  %4365 = vmatpush1.bf16.msra.mxu0 %v3047
  %4366 = vmatprep.subr.bf16.mxu0 %v3052
  %4367 = vmatpush1.bf16.msra.mxu0 %v3051
  %4368 = vmatprep.subr.bf16.mxu0 %v3056
  %4369 = vmatpush1.bf16.msra.mxu0 %v3055
  %4370 = vmatprep.subr.bf16.mxu0 %v3060
  %4371 = vmatpush1.bf16.msra.mxu0 %v3059
  %4372 = vmatprep.subr.bf16.mxu0 %v3064
  %4373 = vmatpush1.bf16.msra.mxu0 %v3063
  %4374 = vmatprep.subr.bf16.mxu0 %v3068
  %4375 = vmatpush1.bf16.msra.mxu0 %v3067
  %4376 = vmatprep.subr.bf16.mxu0 %v3072
  %4377 = vmatpush1.bf16.msra.mxu0 %v3071
  %4378 = vmatprep.mubr.bf16.mxu0 %v750
  %4379 = vmatmul.mubr.bf16.gmra.mrb[0].mxu0 %v743
  %v4380 = vpop.f32.mrb[0].mxu0
  %v4381 = vadd.f32 %v4340, %v4380
  %v4382 = vpop.f32.mrb[0].mxu0
  %v4383 = vadd.f32 %v4342, %v4382
  %v4384 = vpop.f32.mrb[0].mxu0
  %v4385 = vpop.f32.mrb[0].mxu0
  %4386 = vdwg.mxu0
  %vm4387 = vcmask 1041408
  %v4388 = vsel %vm4387, %v4012, 0.0
  %v4389 = vrot.slane %v4388, 4
  %v4390 = vadd.f32 %v4388, %v4389
  %v4391 = vrot.slane %v4390, 2
  %v4392 = vadd.f32 %v4390, %v4391
  %v4393 = vrot.slane %v4392, 1
  %v4394 = vadd.f32 %v4392, %v4393
  %v4395 = vsel %vm4387, %v4014, 0.0
  %v4396 = vrot.slane %v4395, 4
  %v4397 = vadd.f32 %v4395, %v4396
  %v4398 = vrot.slane %v4397, 2
  %v4399 = vadd.f32 %v4397, %v4398
  %v4400 = vrot.slane %v4399, 1
  %v4401 = vadd.f32 %v4399, %v4400
  %v4402 = vsel %vm4387, %v4381, 0.0
  %v4403 = vrot.slane %v4402, 4
  %v4404 = vadd.f32 %v4402, %v4403
  %v4405 = vrot.slane %v4404, 2
  %v4406 = vadd.f32 %v4404, %v4405
  %v4407 = vrot.slane %v4406, 1
  %v4408 = vadd.f32 %v4406, %v4407
  %v4409 = vsel %vm4387, %v4383, 0.0
  %v4410 = vrot.slane %v4409, 4
  %v4411 = vadd.f32 %v4409, %v4410
  %v4412 = vrot.slane %v4411, 2
  %v4413 = vadd.f32 %v4411, %v4412
  %v4414 = vrot.slane %v4413, 1
  %v4415 = vadd.f32 %v4413, %v4414
  %v4416 = vmul.f32 %v4394, 0.5
  %v4417 = vmul.f32 %v4401, 0.5
  %v4418 = vmul.f32 %v4408, 0.5
  %v4419 = vmul.f32 %v4415, 0.5
  %v4420 = vsub.f32 %v4012, %v4416
  %v4421 = vsub.f32 %v4014, %v4417
  %v4422 = vsub.f32 %v4381, %v4418
  %v4423 = vsub.f32 %v4383, %v4419
  %v4424 = vmul.f32 %v4420, %v4420
  %v4425 = vmul.f32 %v4421, %v4421
  %v4426 = vmul.f32 %v4422, %v4422
  %v4427 = vmul.f32 %v4423, %v4423
  %v4428 = vsel %vm4387, %v4424, 0.0
  %v4429 = vrot.slane %v4428, 4
  %v4430 = vadd.f32 %v4428, %v4429
  %v4431 = vrot.slane %v4430, 2
  %v4432 = vadd.f32 %v4430, %v4431
  %v4433 = vrot.slane %v4432, 1
  %v4434 = vadd.f32 %v4432, %v4433
  %v4435 = vsel %vm4387, %v4425, 0.0
  %v4436 = vrot.slane %v4435, 4
  %v4437 = vadd.f32 %v4435, %v4436
  %v4438 = vrot.slane %v4437, 2
  %v4439 = vadd.f32 %v4437, %v4438
  %v4440 = vrot.slane %v4439, 1
  %v4441 = vadd.f32 %v4439, %v4440
  %v4442 = vsel %vm4387, %v4426, 0.0
  %v4443 = vrot.slane %v4442, 4
  %v4444 = vadd.f32 %v4442, %v4443
  %v4445 = vrot.slane %v4444, 2
  %v4446 = vadd.f32 %v4444, %v4445
  %v4447 = vrot.slane %v4446, 1
  %v4448 = vadd.f32 %v4446, %v4447
  %v4449 = vsel %vm4387, %v4427, 0.0
  %v4450 = vrot.slane %v4449, 4
  %v4451 = vadd.f32 %v4449, %v4450
  %v4452 = vrot.slane %v4451, 2
  %v4453 = vadd.f32 %v4451, %v4452
  %v4454 = vrot.slane %v4453, 1
  %v4455 = vadd.f32 %v4453, %v4454
  %v4456 = vmul.f32 %v4434, 0.5
  %v4457 = vmul.f32 %v4441, 0.5
  %v4458 = vmul.f32 %v4448, 0.5
  %v4459 = vmul.f32 %v4455, 0.5
  %v4460 = vadd.f32 %v4456, 1e-05
  %v4461 = vadd.f32 %v4457, 1e-05
  %v4462 = vadd.f32 %v4458, 1e-05
  %v4463 = vadd.f32 %v4459, 1e-05
  %v4464 = vrsqrt.pop %v4460
  %v4465 = vrsqrt.pop %v4461
  %v4466 = vrsqrt.pop %v4462
  %v4467 = vrsqrt.pop %v4463
  %v4468 = vmul.f32 %v4420, %v4464
  %v4469 = vmul.f32 %v4421, %v4465
  %v4470 = vmul.f32 %v4422, %v4466
  %v4471 = vmul.f32 %v4423, %v4467
  %v4472 = vld [vmem:[%s3] sm:$0xf]
  %v4474 = vlaneseq
  %v4475 = vshrl.u32 %v4474, 7
  %v4476 = vsub.s32 0, %v4475
  %v4477 = vrot.slane %v4472, %v4476
  %v4478 = vlaneseq
  %v4479 = vshrl.u32 %v4478, 7
  %v4480 = vsub.s32 1, %v4479
  %v4481 = vrot.slane %v4472, %v4480
  %v4482 = vlaneseq
  %v4483 = vshrl.u32 %v4482, 7
  %v4484 = vsub.s32 2, %v4483
  %v4485 = vrot.slane %v4472, %v4484
  %v4486 = vlaneseq
  %v4487 = vshrl.u32 %v4486, 7
  %v4488 = vsub.s32 3, %v4487
  %v4489 = vrot.slane %v4472, %v4488
  %v4494 = vmul.f32 %v4468, %v4477
  %v4495 = vmul.f32 %v4469, %v4481
  %v4496 = vmul.f32 %v4470, %v4485
  %v4497 = vmul.f32 %v4471, %v4489
  %v4498 = vld [vmem:[%s4] sm:$0xf]
  %v4500 = vlaneseq
  %v4501 = vshrl.u32 %v4500, 7
  %v4502 = vsub.s32 0, %v4501
  %v4503 = vrot.slane %v4498, %v4502
  %v4504 = vlaneseq
  %v4505 = vshrl.u32 %v4504, 7
  %v4506 = vsub.s32 1, %v4505
  %v4507 = vrot.slane %v4498, %v4506
  %v4508 = vlaneseq
  %v4509 = vshrl.u32 %v4508, 7
  %v4510 = vsub.s32 2, %v4509
  %v4511 = vrot.slane %v4498, %v4510
  %v4512 = vlaneseq
  %v4513 = vshrl.u32 %v4512, 7
  %v4514 = vsub.s32 3, %v4513
  %v4515 = vrot.slane %v4498, %v4514
  %v4520 = vadd.f32 %v4494, %v4503
  %v4521 = vadd.f32 %v4495, %v4507
  %v4522 = vadd.f32 %v4496, %v4511
  %v4523 = vadd.f32 %v4497, %v4515
  %vm4524 = vcmp.gt.f32.partialorder %v4520, 0.0
  %vm4525 = vcmp.gt.f32.partialorder %v4521, 0.0
  %vm4526 = vcmp.gt.f32.partialorder %v4522, 0.0
  %vm4527 = vcmp.gt.f32.partialorder %v4523, 0.0
  %v4528 = vmul.f32 %v4520, 0.2
  %v4529 = vmul.f32 %v4521, 0.2
  %v4530 = vmul.f32 %v4522, 0.2
  %v4531 = vmul.f32 %v4523, 0.2
  %v4532 = vsel %vm4524, %v4520, %v4528
  %v4533 = vsel %vm4525, %v4521, %v4529
  %v4534 = vsel %vm4526, %v4522, %v4530
  %v4535 = vsel %vm4527, %v4523, %v4531
  %v4536 = vpack.c.bf16 %v4532, %v4532
  %v4537 = vpack.c.bf16 %v4533, %v4533
  %v4538 = vpack.c.bf16 %v4534, %v4534
  %v4539 = vpack.c.bf16 %v4535, %v4535
  %v4540 = vld [vmem:[%s5] sm:$0xf]
  %v4541 = vld [vmem:[%s5 + $0x4] sm:$0xf]
  %v4542 = vld [vmem:[%s5 + $0x8] sm:$0xf]
  %v4543 = vld [vmem:[%s5 + $0xc] sm:$0xf]
  %v4544 = vld [vmem:[%s5 + $0x10] sm:$0xf]
  %v4545 = vld [vmem:[%s5 + $0x14] sm:$0xf]
  %v4546 = vld [vmem:[%s5 + $0x18] sm:$0xf]
  %v4547 = vld [vmem:[%s5 + $0x1c] sm:$0xf]
  %v4548 = vld [vmem:[%s5 + $0x20] sm:$0xf]
  %v4549 = vld [vmem:[%s5 + $0x24] sm:$0xf]
  %v4550 = vld [vmem:[%s5 + $0x28] sm:$0xf]
  %v4551 = vld [vmem:[%s5 + $0x2c] sm:$0xf]
  %v4552 = vld [vmem:[%s5 + $0x30] sm:$0xf]
  %v4553 = vld [vmem:[%s5 + $0x34] sm:$0xf]
  %v4554 = vld [vmem:[%s5 + $0x38] sm:$0xf]
  %v4555 = vld [vmem:[%s5 + $0x3c] sm:$0xf]
  %v4556 = vld [vmem:[%s5 + $0x40] sm:$0xf]
  %v4557 = vld [vmem:[%s5 + $0x44] sm:$0xf]
  %v4558 = vld [vmem:[%s5 + $0x48] sm:$0xf]
  %v4559 = vld [vmem:[%s5 + $0x4c] sm:$0xf]
  %v4560 = vld [vmem:[%s5 + $0x50] sm:$0xf]
  %v4561 = vld [vmem:[%s5 + $0x54] sm:$0xf]
  %v4562 = vld [vmem:[%s5 + $0x58] sm:$0xf]
  %v4563 = vld [vmem:[%s5 + $0x5c] sm:$0xf]
  %v4564 = vld [vmem:[%s5 + $0x60] sm:$0xf]
  %v4565 = vld [vmem:[%s5 + $0x64] sm:$0xf]
  %v4566 = vld [vmem:[%s5 + $0x68] sm:$0xf]
  %v4567 = vld [vmem:[%s5 + $0x6c] sm:$0xf]
  %v4568 = vld [vmem:[%s5 + $0x70] sm:$0xf]
  %v4569 = vld [vmem:[%s5 + $0x74] sm:$0xf]
  %v4570 = vld [vmem:[%s5 + $0x78] sm:$0xf]
  %v4571 = vld [vmem:[%s5 + $0x7c] sm:$0xf]
  %v4572 = vld [vmem:[%s5 + $0x80] sm:$0xf]
  %v4573 = vld [vmem:[%s5 + $0x84] sm:$0xf]
  %v4574 = vld [vmem:[%s5 + $0x88] sm:$0xf]
  %v4575 = vld [vmem:[%s5 + $0x8c] sm:$0xf]
  %v4576 = vld [vmem:[%s5 + $0x90] sm:$0xf]
  %v4577 = vld [vmem:[%s5 + $0x94] sm:$0xf]
  %v4578 = vld [vmem:[%s5 + $0x98] sm:$0xf]
  %v4579 = vld [vmem:[%s5 + $0x9c] sm:$0xf]
  %v4580 = vld [vmem:[%s5 + $0xa0] sm:$0xf]
  %v4581 = vld [vmem:[%s5 + $0xa4] sm:$0xf]
  %v4582 = vld [vmem:[%s5 + $0xa8] sm:$0xf]
  %v4583 = vld [vmem:[%s5 + $0xac] sm:$0xf]
  %v4584 = vld [vmem:[%s5 + $0xb0] sm:$0xf]
  %v4585 = vld [vmem:[%s5 + $0xb4] sm:$0xf]
  %v4586 = vld [vmem:[%s5 + $0xb8] sm:$0xf]
  %v4587 = vld [vmem:[%s5 + $0xbc] sm:$0xf]
  %v4588 = vld [vmem:[%s5 + $0xc0] sm:$0xf]
  %v4589 = vld [vmem:[%s5 + $0xc4] sm:$0xf]
  %v4590 = vld [vmem:[%s5 + $0xc8] sm:$0xf]
  %v4591 = vld [vmem:[%s5 + $0xcc] sm:$0xf]
  %v4592 = vld [vmem:[%s5 + $0xd0] sm:$0xf]
  %v4593 = vld [vmem:[%s5 + $0xd4] sm:$0xf]
  %v4594 = vld [vmem:[%s5 + $0xd8] sm:$0xf]
  %v4595 = vld [vmem:[%s5 + $0xdc] sm:$0xf]
  %v4596 = vld [vmem:[%s5 + $0xe0] sm:$0xf]
  %v4597 = vld [vmem:[%s5 + $0xe4] sm:$0xf]
  %v4598 = vld [vmem:[%s5 + $0xe8] sm:$0xf]
  %v4599 = vld [vmem:[%s5 + $0xec] sm:$0xf]
  %v4600 = vld [vmem:[%s5 + $0xf0] sm:$0xf]
  %v4601 = vld [vmem:[%s5 + $0xf4] sm:$0xf]
  %v4602 = vld [vmem:[%s5 + $0xf8] sm:$0xf]
  %v4603 = vld [vmem:[%s5 + $0xfc] sm:$0xf]
  %v4604 = vld [vmem:[%s6] sm:$0x1]
  %v4606 = vlaneseq
  %v4607 = vshrl.u32 %v4606, 7
  %v4608 = vsub.s32 0, %v4607
  %v4609 = vrot.slane %v4604, %v4608
  %v4675 = vunpack.c.l.b16 %v4540
  %v4676 = vunpack.c.l.b16 %v4541
  %v4677 = vunpack.c.l.b16 %v4542
  %v4678 = vunpack.c.l.b16 %v4543
  %v4679 = vunpack.c.l.b16 %v4544
  %v4680 = vunpack.c.l.b16 %v4545
  %v4681 = vunpack.c.l.b16 %v4546
  %v4682 = vunpack.c.l.b16 %v4547
  %v4683 = vunpack.c.l.b16 %v4548
  %v4684 = vunpack.c.l.b16 %v4549
  %v4685 = vunpack.c.l.b16 %v4550
  %v4686 = vunpack.c.l.b16 %v4551
  %v4687 = vunpack.c.l.b16 %v4552
  %v4688 = vunpack.c.l.b16 %v4553
  %v4689 = vunpack.c.l.b16 %v4554
  %v4690 = vunpack.c.l.b16 %v4555
  %v4691 = vunpack.c.l.b16 %v4556
  %v4692 = vunpack.c.l.b16 %v4557
  %v4693 = vunpack.c.l.b16 %v4558
  %v4694 = vunpack.c.l.b16 %v4559
  %v4695 = vunpack.c.l.b16 %v4560
  %v4696 = vunpack.c.l.b16 %v4561
  %v4697 = vunpack.c.l.b16 %v4562
  %v4698 = vunpack.c.l.b16 %v4563
  %v4699 = vunpack.c.l.b16 %v4564
  %v4700 = vunpack.c.l.b16 %v4565
  %v4701 = vunpack.c.l.b16 %v4566
  %v4702 = vunpack.c.l.b16 %v4567
  %v4703 = vunpack.c.l.b16 %v4568
  %v4704 = vunpack.c.l.b16 %v4569
  %v4705 = vunpack.c.l.b16 %v4570
  %v4706 = vunpack.c.l.b16 %v4571
  %v4707 = vunpack.c.l.b16 %v4572
  %v4708 = vunpack.c.l.b16 %v4573
  %v4709 = vunpack.c.l.b16 %v4574
  %v4710 = vunpack.c.l.b16 %v4575
  %v4711 = vunpack.c.l.b16 %v4576
  %v4712 = vunpack.c.l.b16 %v4577
  %v4713 = vunpack.c.l.b16 %v4578
  %v4714 = vunpack.c.l.b16 %v4579
  %v4715 = vunpack.c.l.b16 %v4580
  %v4716 = vunpack.c.l.b16 %v4581
  %v4717 = vunpack.c.l.b16 %v4582
  %v4718 = vunpack.c.l.b16 %v4583
  %v4719 = vunpack.c.l.b16 %v4584
  %v4720 = vunpack.c.l.b16 %v4585
  %v4721 = vunpack.c.l.b16 %v4586
  %v4722 = vunpack.c.l.b16 %v4587
  %v4723 = vunpack.c.l.b16 %v4588
  %v4724 = vunpack.c.l.b16 %v4589
  %v4725 = vunpack.c.l.b16 %v4590
  %v4726 = vunpack.c.l.b16 %v4591
  %v4727 = vunpack.c.l.b16 %v4592
  %v4728 = vunpack.c.l.b16 %v4593
  %v4729 = vunpack.c.l.b16 %v4594
  %v4730 = vunpack.c.l.b16 %v4595
  %v4731 = vunpack.c.l.b16 %v4596
  %v4732 = vunpack.c.l.b16 %v4597
  %v4733 = vunpack.c.l.b16 %v4598
  %v4734 = vunpack.c.l.b16 %v4599
  %v4735 = vunpack.c.l.b16 %v4600
  %v4736 = vunpack.c.l.b16 %v4601
  %v4737 = vunpack.c.l.b16 %v4602
  %v4738 = vunpack.c.l.b16 %v4603
  %v4739 = vpack.c.b16 %v4676, %v4675
  %v4740 = vpack.c.b16 %v4678, %v4677
  %v4741 = vpack.c.b16 %v4680, %v4679
  %v4742 = vpack.c.b16 %v4682, %v4681
  %v4743 = vpack.c.b16 %v4684, %v4683
  %v4744 = vpack.c.b16 %v4686, %v4685
  %v4745 = vpack.c.b16 %v4688, %v4687
  %v4746 = vpack.c.b16 %v4690, %v4689
  %v4747 = vpack.c.b16 %v4692, %v4691
  %v4748 = vpack.c.b16 %v4694, %v4693
  %v4749 = vpack.c.b16 %v4696, %v4695
  %v4750 = vpack.c.b16 %v4698, %v4697
  %v4751 = vpack.c.b16 %v4700, %v4699
  %v4752 = vpack.c.b16 %v4702, %v4701
  %v4753 = vpack.c.b16 %v4704, %v4703
  %v4754 = vpack.c.b16 %v4706, %v4705
  %v4755 = vpack.c.b16 %v4708, %v4707
  %v4756 = vpack.c.b16 %v4710, %v4709
  %v4757 = vpack.c.b16 %v4712, %v4711
  %v4758 = vpack.c.b16 %v4714, %v4713
  %v4759 = vpack.c.b16 %v4716, %v4715
  %v4760 = vpack.c.b16 %v4718, %v4717
  %v4761 = vpack.c.b16 %v4720, %v4719
  %v4762 = vpack.c.b16 %v4722, %v4721
  %v4763 = vpack.c.b16 %v4724, %v4723
  %v4764 = vpack.c.b16 %v4726, %v4725
  %v4765 = vpack.c.b16 %v4728, %v4727
  %v4766 = vpack.c.b16 %v4730, %v4729
  %v4767 = vpack.c.b16 %v4732, %v4731
  %v4768 = vpack.c.b16 %v4734, %v4733
  %v4769 = vpack.c.b16 %v4736, %v4735
  %v4770 = vpack.c.b16 %v4738, %v4737
  %4803 = vmatprep.subr.bf16.mxu0 0
  %4804 = vmatpush1.bf16.msra.mxu0 %v4739
  %4805 = vmatprep.subr.bf16.mxu0 0
  %4806 = vmatpush1.bf16.msra.mxu0 %v4740
  %4807 = vmatprep.subr.bf16.mxu0 0
  %4808 = vmatpush1.bf16.msra.mxu0 %v4741
  %4809 = vmatprep.subr.bf16.mxu0 0
  %4810 = vmatpush1.bf16.msra.mxu0 %v4742
  %4811 = vmatprep.subr.bf16.mxu0 0
  %4812 = vmatpush1.bf16.msra.mxu0 %v4743
  %4813 = vmatprep.subr.bf16.mxu0 0
  %4814 = vmatpush1.bf16.msra.mxu0 %v4744
  %4815 = vmatprep.subr.bf16.mxu0 0
  %4816 = vmatpush1.bf16.msra.mxu0 %v4745
  %4817 = vmatprep.subr.bf16.mxu0 0
  %4818 = vmatpush1.bf16.msra.mxu0 %v4746
  %4819 = vmatprep.subr.bf16.mxu0 0
  %4820 = vmatpush1.bf16.msra.mxu0 %v4747
  %4821 = vmatprep.subr.bf16.mxu0 0
  %4822 = vmatpush1.bf16.msra.mxu0 %v4748
  %4823 = vmatprep.subr.bf16.mxu0 0
  %4824 = vmatpush1.bf16.msra.mxu0 %v4749
  %4825 = vmatprep.subr.bf16.mxu0 0
  %4826 = vmatpush1.bf16.msra.mxu0 %v4750
  %4827 = vmatprep.subr.bf16.mxu0 0
  %4828 = vmatpush1.bf16.msra.mxu0 %v4751
  %4829 = vmatprep.subr.bf16.mxu0 0
  %4830 = vmatpush1.bf16.msra.mxu0 %v4752
  %4831 = vmatprep.subr.bf16.mxu0 0
  %4832 = vmatpush1.bf16.msra.mxu0 %v4753
  %4833 = vmatprep.subr.bf16.mxu0 0
  %4834 = vmatpush1.bf16.msra.mxu0 %v4754
  %4835 = vmatprep.mubr.bf16.mxu0 %v4537
  %4836 = vmatmul.mubr.bf16.gmra.mrb[0].mxu0 %v4536
  %v4837 = vpop.f32.mrb[0].mxu0
  %v4838 = vadd.f32 %v4609, %v4837
  %v4839 = vpop.f32.mrb[0].mxu0
  %v4840 = vpop.f32.mrb[0].mxu0
  %v4841 = vpop.f32.mrb[0].mxu0
  %4842 = vdwg.mxu0
  %4843 = vmatprep.subr.bf16.mxu0 0
  %4844 = vmatpush1.bf16.msra.mxu0 %v4755
  %4845 = vmatprep.subr.bf16.mxu0 0
  %4846 = vmatpush1.bf16.msra.mxu0 %v4756
  %4847 = vmatprep.subr.bf16.mxu0 0
  %4848 = vmatpush1.bf16.msra.mxu0 %v4757
  %4849 = vmatprep.subr.bf16.mxu0 0
  %4850 = vmatpush1.bf16.msra.mxu0 %v4758
  %4851 = vmatprep.subr.bf16.mxu0 0
  %4852 = vmatpush1.bf16.msra.mxu0 %v4759
  %4853 = vmatprep.subr.bf16.mxu0 0
  %4854 = vmatpush1.bf16.msra.mxu0 %v4760
  %4855 = vmatprep.subr.bf16.mxu0 0
  %4856 = vmatpush1.bf16.msra.mxu0 %v4761
  %4857 = vmatprep.subr.bf16.mxu0 0
  %4858 = vmatpush1.bf16.msra.mxu0 %v4762
  %4859 = vmatprep.subr.bf16.mxu0 0
  %4860 = vmatpush1.bf16.msra.mxu0 %v4763
  %4861 = vmatprep.subr.bf16.mxu0 0
  %4862 = vmatpush1.bf16.msra.mxu0 %v4764
  %4863 = vmatprep.subr.bf16.mxu0 0
  %4864 = vmatpush1.bf16.msra.mxu0 %v4765
  %4865 = vmatprep.subr.bf16.mxu0 0
  %4866 = vmatpush1.bf16.msra.mxu0 %v4766
  %4867 = vmatprep.subr.bf16.mxu0 0
  %4868 = vmatpush1.bf16.msra.mxu0 %v4767
  %4869 = vmatprep.subr.bf16.mxu0 0
  %4870 = vmatpush1.bf16.msra.mxu0 %v4768
  %4871 = vmatprep.subr.bf16.mxu0 0
  %4872 = vmatpush1.bf16.msra.mxu0 %v4769
  %4873 = vmatprep.subr.bf16.mxu0 0
  %4874 = vmatpush1.bf16.msra.mxu0 %v4770
  %4875 = vmatprep.mubr.bf16.mxu0 %v4539
  %4876 = vmatmul.mubr.bf16.gmra.mrb[0].mxu0 %v4538
  %v4877 = vpop.f32.mrb[0].mxu0
  %v4878 = vadd.f32 %v4838, %v4877
  %v4879 = vpop.f32.mrb[0].mxu0
  %v4880 = vpop.f32.mrb[0].mxu0
  %v4881 = vpop.f32.mrb[0].mxu0
  %4882 = vdwg.mxu0
  %4883 = vst [vmem:[%s7] sm:$0x3] %v4878
  // Predicated region
  $region30: #{_lambda_.9} parent=0 // pred_check
    _
  $region31: #{_lambda_.9} parent=0 // pred_check_branch
    %4885 = sbr.rel (0) target = $region33
  $region32: #{_lambda_.9} parent=0 // pred_region
    _
  $region33: #{_lambda_.9} parent=0 // pred_fallthru
    _
  // Predicated region
  $region34: #{_lambda_.9} parent=0 // pred_check
    _
  $region35: #{_lambda_.9} parent=0 // pred_check_branch
    %4887 = sbr.rel (0) target = $region37
  $region36: #{_lambda_.9} parent=0 // pred_region
    _
  $region37: #{_lambda_.9} parent=0 // pred_fallthru
    _

</llo_original>
